<compile_context>
chip_gen: v5e
topology: v5e:2x2
jax: 0.10.0
libtpu: 0.0.40
codegen_flags: <defaults>
</compile_context>

<pallas_src>
import functools

import jax
import jax.numpy as jnp
from jax.experimental import pallas as pl
from jax.experimental.pallas import tpu as pltpu

# ---------------------------------------------------------------------------
# LeNet architecture constants (3 x 32 x 32 input is implied by fc1 = 16*5*5).
# ---------------------------------------------------------------------------
IN_C, IN_H, IN_W = 3, 32, 32
K = 5                                            # conv kernel size
C1, C2 = 6, 16                                   # conv output channels
OH1, OW1 = IN_H - K + 1, IN_W - K + 1            # 28, 28
PH1, PW1 = OH1 // 2, OW1 // 2                    # 14, 14
OH2, OW2 = PH1 - K + 1, PW1 - K + 1              # 10, 10
PH2, PW2 = OH2 // 2, OW2 // 2                    # 5, 5
FC1_OUT, FC2_OUT, FC3_OUT = 120, 84, 10
FC_PAD = 128                                     # lane-dense padded FC width

TB = 8                                           # images per grid step
NROWS = TB * IN_H                                # 256 slab rows per grid step


# ---------------------------------------------------------------------------
# Fused LeNet kernel.  One grid step = TB images stacked along sublanes:
# image t occupies slab rows t*32 .. t*32+31; each row is a (W*C) lane vector
# with channels fastest.  All per-image row bookkeeping is done with sublane
# shifts; rows outside the valid per-image range carry garbage that is never
# read by valid rows and is dropped by the final 0/1 selection matmul.
# ---------------------------------------------------------------------------
def _lenet_kernel(x_ref, m1_ref, b1_ref, c1_ref, m2_ref, b2_ref, c2_ref,
                  w1_ref, bf1_ref, w2_ref, bf2_ref, w3_ref, bf3_ref, sel_ref,
                  o_ref):
    f32, bf16 = jnp.float32, jnp.bfloat16
    dot = functools.partial(jnp.dot, preferred_element_type=f32)

    def shift_up(a, k):
        # b[r, :] = a[r + k, :] for r < NROWS - k; the wrapped bottom k rows
        # are garbage but only land in rows that are already invalid.
        if k == 0:
            return a
        return jnp.concatenate([a[k:, :], a[:k, :]], axis=0)

    x = x_ref[...]                                           # (NROWS, 96) f32

    # conv1 + bias + ReLU: (NROWS, 96) -> (NROWS, 168); valid rows t*32+(0..27).
    acc = dot(x.astype(bf16), m1_ref[0])
    for kh in range(1, K):
        acc = acc + dot(shift_up(x, kh).astype(bf16), m1_ref[kh])
    a1 = jnp.maximum(acc + b1_ref[...], 0.0)

    # pool1 (2x2 stride 2): rows via sublane shift+max, cols via 0/1 matmuls.
    z = jnp.maximum(a1, shift_up(a1, 1)).astype(bf16)        # valid rows t*32+2p
    p1 = jnp.maximum(dot(z, c1_ref[0]), dot(z, c1_ref[1]))   # (NROWS, 84)

    # conv2 + bias + ReLU (valid row stride is now 2).
    acc = dot(p1.astype(bf16), m2_ref[0])
    for kh in range(1, K):
        acc = acc + dot(shift_up(p1, 2 * kh).astype(bf16), m2_ref[kh])
    a2 = jnp.maximum(acc + b2_ref[...], 0.0)                 # valid rows t*32+2*ph

    # pool2 (valid row stride 2 -> 4).
    z = jnp.maximum(a2, shift_up(a2, 2)).astype(bf16)
    p2 = jnp.maximum(dot(z, c2_ref[0]), dot(z, c2_ref[1]))   # (NROWS, 80), rows t*32+4q

    # fc1 + ReLU: contract the 5 pooled rows per image via 5 shifted matmuls
    # against the pre-permuted (5, 80, 128) weight (replaces .view(-1, 400)).
    h = dot(p2.astype(bf16), w1_ref[0])
    for q in range(1, PH2):
        h = h + dot(shift_up(p2, 4 * q).astype(bf16), w1_ref[q])
    h = jnp.maximum(h + bf1_ref[...], 0.0).astype(bf16)      # valid rows t*32

    # Compact the TB valid rows (one per image), then batch-dense fc2 / fc3.
    hd = dot(sel_ref[...], h)                                # (TB, 128)
    hd = jnp.maximum(dot(hd.astype(bf16), w2_ref[...]) + bf2_ref[...], 0.0)
    o_ref[...] = (dot(hd.astype(bf16), w3_ref[...]) + bf3_ref[...]).astype(o_ref.dtype)


# ---------------------------------------------------------------------------
# One-time weight packing (outside jit): banded conv matmul weights, pooling
# column-selection matrices, pre-permuted + lane-padded FC weights (bf16), and
# the (TB, NROWS) 0/1 row-compaction matrix.
# ---------------------------------------------------------------------------
def _conv_banded(w, w_in):
    """PyTorch conv weight (O, C, k, k) -> (k, w_in*C, OW*O) banded matrices M
    so the kh-contribution of the conv is A_shifted_by_kh @ M[kh] for the
    (H, W*C) activation layout:  M[kh, w*C+c, ow*O+o] = w[o, c, kh, w-ow]."""
    f = jnp.float32
    o, c, k, _ = w.shape
    ow = w_in - k + 1
    kw_i, w_i, ow_i = jnp.arange(k), jnp.arange(w_in), jnp.arange(ow)
    shift = (w_i[None, :, None] == (ow_i[None, None, :] + kw_i[:, None, None]))
    m = jnp.einsum("kwv,ochk->hwcvo", shift.astype(f), w.astype(f))
    return m.reshape(k, w_in * c, ow * o)


def _pool_col_mat(w_in, c):
    """0/1 matrices so that  col_pool(Z) = max_dw(Z @ C[dw])  implements the
    width half of 2x2 / stride-2 max pooling on the (H, W*C) layout."""
    f = jnp.float32
    pw = w_in // 2
    d, ww, qq = jnp.arange(2), jnp.arange(w_in), jnp.arange(pw)
    wsel = (ww[None, :, None] == (2 * qq[None, None, :] + d[:, None, None])).astype(f)
    csel = jnp.einsum("dwp,ce->dwcpe", wsel, jnp.eye(c, dtype=f))
    return csel.reshape(2, w_in * c, pw * c)


def pack_params(params):
    f, bf = jnp.float32, jnp.bfloat16
    m1 = _conv_banded(params["conv1_w"], IN_W).astype(bf)            # (5, 96, 168)
    b1 = jnp.tile(params["conv1_b"].astype(f), OW1).reshape(1, OW1 * C1)
    c1 = _pool_col_mat(OW1, C1).astype(bf)                           # (2, 168, 84)
    m2 = _conv_banded(params["conv2_w"], PW1).astype(bf)             # (5, 84, 160)
    b2 = jnp.tile(params["conv2_b"].astype(f), OW2).reshape(1, OW2 * C2)
    c2 = _pool_col_mat(OW2, C2).astype(bf)                           # (2, 160, 80)

    # fc1: PyTorch flatten order is (c, h, w); our pool2 layout is (h, w*C+c).
    w1 = params["fc1_w"].astype(f).reshape(FC1_OUT, C2, PH2, PW2)
    w1 = w1.transpose(2, 3, 1, 0).reshape(PH2, PW2 * C2, FC1_OUT)    # (5, 80, 120)
    w1 = jnp.pad(w1, ((0, 0), (0, 0), (0, FC_PAD - FC1_OUT))).astype(bf)
    bf1 = jnp.pad(params["fc1_b"].astype(f), (0, FC_PAD - FC1_OUT)).reshape(1, FC_PAD)

    w2 = jnp.pad(params["fc2_w"].astype(f).T,
                 ((0, FC_PAD - FC1_OUT), (0, FC_PAD - FC2_OUT))).astype(bf)
    bf2 = jnp.pad(params["fc2_b"].astype(f), (0, FC_PAD - FC2_OUT)).reshape(1, FC_PAD)

    w3 = jnp.pad(params["fc3_w"].astype(f).T,
                 ((0, FC_PAD - FC2_OUT), (0, FC_PAD - FC3_OUT))).astype(bf)
    bf3 = jnp.pad(params["fc3_b"].astype(f), (0, FC_PAD - FC3_OUT)).reshape(1, FC_PAD)

    # 0/1 matrix that picks slab row t*IN_H (fc1 result row of image t).
    sel = (jnp.arange(NROWS)[None, :] ==
           (jnp.arange(TB) * IN_H)[:, None]).astype(bf)              # (TB, NROWS)

    return (m1, b1, c1, m2, b2, c2, w1, bf1, w2, bf2, w3, bf3, sel)


# ---------------------------------------------------------------------------
# Forward pass: one input layout transform + one fused pallas_call.
# ---------------------------------------------------------------------------
@jax.jit
def lenet_forward(packed, x):
    """x: (B, 3, 32, 32) float32 -> logits (B, 10)."""
    b = x.shape[0]
    n_tiles = pl.cdiv(b, TB)
    if n_tiles > 1 and n_tiles % 2 == 1:
        n_tiles += 1                 # even grid => both v7x TensorCores busy
    bp = n_tiles * TB

    # NCHW -> sublane-stacked (B*32, 96) slab with channels fastest along lanes.
    # TODO(synk): fold this transpose into the kernel (3 per-channel banded
    # matmuls for conv1) if it ever shows up in profiles at large batch.
    xl = x.astype(jnp.float32).transpose(0, 2, 3, 1).reshape(b * IN_H, IN_W * IN_C)
    if bp > b:
        xl = jnp.pad(xl, ((0, (bp - b) * IN_H), (0, 0)))

    (m1, b1, c1, m2, b2, c2, w1, bf1, w2, bf2, w3, bf3, sel) = packed

    def resident(a):  # full-array block, constant across the batch grid axis
        return pl.BlockSpec(a.shape, lambda i, _nd=a.ndim: (0,) * _nd)

    out = pl.pallas_call(
        _lenet_kernel,
        out_shape=jax.ShapeDtypeStruct((bp, FC_PAD), jnp.float32),
        grid=(n_tiles,),
        in_specs=[
            pl.BlockSpec((NROWS, IN_W * IN_C), lambda i: (i, 0)),   # stacked imgs
            resident(m1), resident(b1), resident(c1),
            resident(m2), resident(b2), resident(c2),
            resident(w1), resident(bf1), resident(w2), resident(bf2),
            resident(w3), resident(bf3), resident(sel),
        ],
        out_specs=pl.BlockSpec((TB, FC_PAD), lambda i: (i, 0)),
        compiler_params=pltpu.CompilerParams(
            dimension_semantics=("parallel",)),
    )(xl, m1, b1, c1, m2, b2, c2, w1, bf1, w2, bf2, w3, bf3, sel)

    return out[:b, :FC3_OUT]


# ---------------------------------------------------------------------------
# Pure-JAX reference (PyTorch semantics) and synthetic parameters.
# ---------------------------------------------------------------------------
def lenet_reference(params, x):
    dn = ("NCHW", "OIHW", "NCHW")
    hp = jax.lax.Precision.HIGHEST

    def conv_relu(y, w, bias):
        y = jax.lax.conv_general_dilated(y, w, (1, 1), "VALID",
                                         dimension_numbers=dn, precision=hp)
        return jax.nn.relu(y + bias[None, :, None, None])

    def pool(y):
        return jnp.maximum(
            jnp.maximum(y[:, :, 0::2, 0::2], y[:, :, 0::2, 1::2]),
            jnp.maximum(y[:, :, 1::2, 0::2], y[:, :, 1::2, 1::2]))

    y = pool(conv_relu(x, params["conv1_w"], params["conv1_b"]))
    y = pool(conv_relu(y, params["conv2_w"], params["conv2_b"]))
    y = y.reshape(y.shape[0], -1)
    y = jax.nn.relu(jnp.dot(y, params["fc1_w"].T, precision=hp) + params["fc1_b"])
    y = jax.nn.relu(jnp.dot(y, params["fc2_w"].T, precision=hp) + params["fc2_b"])
    return jnp.dot(y, params["fc3_w"].T, precision=hp) + params["fc3_b"]


def init_params(key):
    """Deterministic synthetic parameters with PyTorch-convention shapes."""
    ks = jax.random.split(key, 10)
    f = jnp.float32

    def rnd(k, shape, scale):
        return jax.random.normal(k, shape, dtype=f) * scale

    return {
        "conv1_w": rnd(ks[0], (C1, IN_C, K, K), 0.1),
        "conv1_b": rnd(ks[1], (C1,), 0.1),
        "conv2_w": rnd(ks[2], (C2, C1, K, K), 0.1),
        "conv2_b": rnd(ks[3], (C2,), 0.1),
        "fc1_w": rnd(ks[4], (FC1_OUT, C2 * PH2 * PW2), 0.05),  # (out, in)
        "fc1_b": rnd(ks[5], (FC1_OUT,), 0.05),
        "fc2_w": rnd(ks[6], (FC2_OUT, FC1_OUT), 0.05),
        "fc2_b": rnd(ks[7], (FC2_OUT,), 0.05),
        "fc3_w": rnd(ks[8], (FC3_OUT, FC2_OUT), 0.05),
        "fc3_b": rnd(ks[9], (FC3_OUT,), 0.05),
    }


if __name__ == "__main__":
    key = jax.random.PRNGKey(0)
    pkey, xkey = jax.random.split(key)
    params = init_params(pkey)
    packed = pack_params(params)          # one-time packing, outside jit

    x = jax.random.normal(xkey, (2, IN_C, IN_H, IN_W), dtype=jnp.float32)

    out = jax.block_until_ready(lenet_forward(packed, x))
    assert out.shape == (2, FC3_OUT), out.shape
    assert out.dtype == jnp.float32, out.dtype

    ref = jax.block_until_ready(jax.jit(lenet_reference)(params, x))
    err = float(jnp.max(jnp.abs(out - ref)))
    # bf16 operands with f32 accumulation: expected |err| ~ 1e-3 on ~0.1-1 logits.
    assert err < 5e-2, f"max abs error vs f32 reference: {err}"

    print("KERNEL_OK")
</pallas_src>

<mosaic_0001>
module attributes {stable_mosaic.version = 11 : i64} {
  func.func @_lenet_kernel(%arg0: i32, %arg1: memref<256x96xf32, #tpu.memory_space<vmem>>, %arg2: memref<5x96x168xbf16, #tpu.memory_space<vmem>>, %arg3: memref<1x168xf32, #tpu.memory_space<vmem>>, %arg4: memref<2x168x84xbf16, #tpu.memory_space<vmem>>, %arg5: memref<5x84x160xbf16, #tpu.memory_space<vmem>>, %arg6: memref<1x160xf32, #tpu.memory_space<vmem>>, %arg7: memref<2x160x80xbf16, #tpu.memory_space<vmem>>, %arg8: memref<5x80x128xbf16, #tpu.memory_space<vmem>>, %arg9: memref<1x128xf32, #tpu.memory_space<vmem>>, %arg10: memref<128x128xbf16, #tpu.memory_space<vmem>>, %arg11: memref<1x128xf32, #tpu.memory_space<vmem>>, %arg12: memref<128x128xbf16, #tpu.memory_space<vmem>>, %arg13: memref<1x128xf32, #tpu.memory_space<vmem>>, %arg14: memref<8x256xbf16, #tpu.memory_space<vmem>>, %arg15: memref<8x128xf32, #tpu.memory_space<vmem>>) attributes {dimension_semantics = [#tpu.dimension_semantics<parallel>], iteration_bounds = array<i64: 1>, scalar_prefetch = 0 : i64, scratch_operands = 0 : i64, tpu.core_type = #tpu.core_type<tc>, window_params = [{transform_indices = @transform_0, window_bounds = array<i64: 256, 96>}, {pipeline_mode = #tpu.pipeline_mode<synchronous>, transform_indices = @transform_1, window_bounds = array<i64: 5, 96, 168>}, {pipeline_mode = #tpu.pipeline_mode<synchronous>, transform_indices = @transform_2, window_bounds = array<i64: 1, 168>}, {pipeline_mode = #tpu.pipeline_mode<synchronous>, transform_indices = @transform_3, window_bounds = array<i64: 2, 168, 84>}, {pipeline_mode = #tpu.pipeline_mode<synchronous>, transform_indices = @transform_4, window_bounds = array<i64: 5, 84, 160>}, {pipeline_mode = #tpu.pipeline_mode<synchronous>, transform_indices = @transform_5, window_bounds = array<i64: 1, 160>}, {pipeline_mode = #tpu.pipeline_mode<synchronous>, transform_indices = @transform_6, window_bounds = array<i64: 2, 160, 80>}, {pipeline_mode = #tpu.pipeline_mode<synchronous>, transform_indices = @transform_7, window_bounds = array<i64: 5, 80, 128>}, {pipeline_mode = #tpu.pipeline_mode<synchronous>, transform_indices = @transform_8, window_bounds = array<i64: 1, 128>}, {pipeline_mode = #tpu.pipeline_mode<synchronous>, transform_indices = @transform_9, window_bounds = array<i64: 128, 128>}, {pipeline_mode = #tpu.pipeline_mode<synchronous>, transform_indices = @transform_10, window_bounds = array<i64: 1, 128>}, {pipeline_mode = #tpu.pipeline_mode<synchronous>, transform_indices = @transform_11, window_bounds = array<i64: 128, 128>}, {pipeline_mode = #tpu.pipeline_mode<synchronous>, transform_indices = @transform_12, window_bounds = array<i64: 1, 128>}, {pipeline_mode = #tpu.pipeline_mode<synchronous>, transform_indices = @transform_13, window_bounds = array<i64: 8, 256>}, {transform_indices = @transform_14, window_bounds = array<i64: 8, 128>}]} {
    %c0 = arith.constant 0 : index
    %c0_0 = arith.constant 0 : index
    %0 = vector.load %arg1[%c0, %c0_0] : memref<256x96xf32, #tpu.memory_space<vmem>>, vector<256x96xf32>
    %1 = arith.truncf %0 : vector<256x96xf32> to vector<256x96xbf16>
    %c0_1 = arith.constant 0 : index
    %c0_2 = arith.constant 0 : index
    %c0_3 = arith.constant 0 : index
    %2 = vector.load %arg2[%c0_1, %c0_2, %c0_3] : memref<5x96x168xbf16, #tpu.memory_space<vmem>>, vector<1x96x168xbf16>
    %3 = vector.shape_cast %2 : vector<1x96x168xbf16> to vector<96x168xbf16>
    %cst = arith.constant dense<0.000000e+00> : vector<256x168xf32>
    %4 = tpu.matmul %1, %3, %cst {dimension_numbers = #tpu.dot_dimension_numbers<[1], [0], [0], [1], [0, 0, 1, 1], [], []>} : vector<256x96xbf16>, vector<96x168xbf16>, vector<256x168xf32> -> vector<256x168xf32>
    %5 = vector.extract_strided_slice %0 {offsets = [1, 0], sizes = [255, 96], strides = [1, 1]} : vector<256x96xf32> to vector<255x96xf32>
    %6 = vector.extract_strided_slice %0 {offsets = [0, 0], sizes = [1, 96], strides = [1, 1]} : vector<256x96xf32> to vector<1x96xf32>
    %7 = tpu.concatenate %5, %6 in 0 : vector<255x96xf32>, vector<1x96xf32> -> vector<256x96xf32>
    %8 = arith.truncf %7 : vector<256x96xf32> to vector<256x96xbf16>
    %c1 = arith.constant 1 : index
    %c0_4 = arith.constant 0 : index
    %c0_5 = arith.constant 0 : index
    %9 = vector.load %arg2[%c1, %c0_4, %c0_5] : memref<5x96x168xbf16, #tpu.memory_space<vmem>>, vector<1x96x168xbf16>
    %10 = vector.shape_cast %9 : vector<1x96x168xbf16> to vector<96x168xbf16>
    %cst_6 = arith.constant dense<0.000000e+00> : vector<256x168xf32>
    %11 = tpu.matmul %8, %10, %cst_6 {dimension_numbers = #tpu.dot_dimension_numbers<[1], [0], [0], [1], [0, 0, 1, 1], [], []>} : vector<256x96xbf16>, vector<96x168xbf16>, vector<256x168xf32> -> vector<256x168xf32>
    %12 = arith.addf %4, %11 : vector<256x168xf32>
    %13 = vector.extract_strided_slice %0 {offsets = [2, 0], sizes = [254, 96], strides = [1, 1]} : vector<256x96xf32> to vector<254x96xf32>
    %14 = vector.extract_strided_slice %0 {offsets = [0, 0], sizes = [2, 96], strides = [1, 1]} : vector<256x96xf32> to vector<2x96xf32>
    %15 = tpu.concatenate %13, %14 in 0 : vector<254x96xf32>, vector<2x96xf32> -> vector<256x96xf32>
    %16 = arith.truncf %15 : vector<256x96xf32> to vector<256x96xbf16>
    %c2 = arith.constant 2 : index
    %c0_7 = arith.constant 0 : index
    %c0_8 = arith.constant 0 : index
    %17 = vector.load %arg2[%c2, %c0_7, %c0_8] : memref<5x96x168xbf16, #tpu.memory_space<vmem>>, vector<1x96x168xbf16>
    %18 = vector.shape_cast %17 : vector<1x96x168xbf16> to vector<96x168xbf16>
    %cst_9 = arith.constant dense<0.000000e+00> : vector<256x168xf32>
    %19 = tpu.matmul %16, %18, %cst_9 {dimension_numbers = #tpu.dot_dimension_numbers<[1], [0], [0], [1], [0, 0, 1, 1], [], []>} : vector<256x96xbf16>, vector<96x168xbf16>, vector<256x168xf32> -> vector<256x168xf32>
    %20 = arith.addf %12, %19 : vector<256x168xf32>
    %21 = vector.extract_strided_slice %0 {offsets = [3, 0], sizes = [253, 96], strides = [1, 1]} : vector<256x96xf32> to vector<253x96xf32>
    %22 = vector.extract_strided_slice %0 {offsets = [0, 0], sizes = [3, 96], strides = [1, 1]} : vector<256x96xf32> to vector<3x96xf32>
    %23 = tpu.concatenate %21, %22 in 0 : vector<253x96xf32>, vector<3x96xf32> -> vector<256x96xf32>
    %24 = arith.truncf %23 : vector<256x96xf32> to vector<256x96xbf16>
    %c3 = arith.constant 3 : index
    %c0_10 = arith.constant 0 : index
    %c0_11 = arith.constant 0 : index
    %25 = vector.load %arg2[%c3, %c0_10, %c0_11] : memref<5x96x168xbf16, #tpu.memory_space<vmem>>, vector<1x96x168xbf16>
    %26 = vector.shape_cast %25 : vector<1x96x168xbf16> to vector<96x168xbf16>
    %cst_12 = arith.constant dense<0.000000e+00> : vector<256x168xf32>
    %27 = tpu.matmul %24, %26, %cst_12 {dimension_numbers = #tpu.dot_dimension_numbers<[1], [0], [0], [1], [0, 0, 1, 1], [], []>} : vector<256x96xbf16>, vector<96x168xbf16>, vector<256x168xf32> -> vector<256x168xf32>
    %28 = arith.addf %20, %27 : vector<256x168xf32>
    %29 = vector.extract_strided_slice %0 {offsets = [4, 0], sizes = [252, 96], strides = [1, 1]} : vector<256x96xf32> to vector<252x96xf32>
    %30 = vector.extract_strided_slice %0 {offsets = [0, 0], sizes = [4, 96], strides = [1, 1]} : vector<256x96xf32> to vector<4x96xf32>
    %31 = tpu.concatenate %29, %30 in 0 : vector<252x96xf32>, vector<4x96xf32> -> vector<256x96xf32>
    %32 = arith.truncf %31 : vector<256x96xf32> to vector<256x96xbf16>
    %c4 = arith.constant 4 : index
    %c0_13 = arith.constant 0 : index
    %c0_14 = arith.constant 0 : index
    %33 = vector.load %arg2[%c4, %c0_13, %c0_14] : memref<5x96x168xbf16, #tpu.memory_space<vmem>>, vector<1x96x168xbf16>
    %34 = vector.shape_cast %33 : vector<1x96x168xbf16> to vector<96x168xbf16>
    %cst_15 = arith.constant dense<0.000000e+00> : vector<256x168xf32>
    %35 = tpu.matmul %32, %34, %cst_15 {dimension_numbers = #tpu.dot_dimension_numbers<[1], [0], [0], [1], [0, 0, 1, 1], [], []>} : vector<256x96xbf16>, vector<96x168xbf16>, vector<256x168xf32> -> vector<256x168xf32>
    %36 = arith.addf %28, %35 : vector<256x168xf32>
    %c0_16 = arith.constant 0 : index
    %c0_17 = arith.constant 0 : index
    %37 = vector.load %arg3[%c0_16, %c0_17] : memref<1x168xf32, #tpu.memory_space<vmem>>, vector<1x168xf32>
    %38 = vector.broadcast %37 : vector<1x168xf32> to vector<256x168xf32>
    %39 = arith.addf %36, %38 : vector<256x168xf32>
    %cst_18 = arith.constant 0.000000e+00 : f32
    %40 = vector.broadcast %cst_18 : f32 to vector<256x168xf32>
    %41 = arith.maximumf %39, %40 : vector<256x168xf32>
    %42 = vector.extract_strided_slice %41 {offsets = [1, 0], sizes = [255, 168], strides = [1, 1]} : vector<256x168xf32> to vector<255x168xf32>
    %43 = vector.extract_strided_slice %41 {offsets = [0, 0], sizes = [1, 168], strides = [1, 1]} : vector<256x168xf32> to vector<1x168xf32>
    %44 = tpu.concatenate %42, %43 in 0 : vector<255x168xf32>, vector<1x168xf32> -> vector<256x168xf32>
    %45 = arith.maximumf %41, %44 : vector<256x168xf32>
    %46 = arith.truncf %45 : vector<256x168xf32> to vector<256x168xbf16>
    %c0_19 = arith.constant 0 : index
    %c0_20 = arith.constant 0 : index
    %c0_21 = arith.constant 0 : index
    %47 = vector.load %arg4[%c0_19, %c0_20, %c0_21] : memref<2x168x84xbf16, #tpu.memory_space<vmem>>, vector<1x168x84xbf16>
    %48 = vector.shape_cast %47 : vector<1x168x84xbf16> to vector<168x84xbf16>
    %cst_22 = arith.constant dense<0.000000e+00> : vector<256x84xf32>
    %49 = tpu.matmul %46, %48, %cst_22 {dimension_numbers = #tpu.dot_dimension_numbers<[1], [0], [0], [1], [0, 0, 1, 1], [], []>} : vector<256x168xbf16>, vector<168x84xbf16>, vector<256x84xf32> -> vector<256x84xf32>
    %c1_23 = arith.constant 1 : index
    %c0_24 = arith.constant 0 : index
    %c0_25 = arith.constant 0 : index
    %50 = vector.load %arg4[%c1_23, %c0_24, %c0_25] : memref<2x168x84xbf16, #tpu.memory_space<vmem>>, vector<1x168x84xbf16>
    %51 = vector.shape_cast %50 : vector<1x168x84xbf16> to vector<168x84xbf16>
    %cst_26 = arith.constant dense<0.000000e+00> : vector<256x84xf32>
    %52 = tpu.matmul %46, %51, %cst_26 {dimension_numbers = #tpu.dot_dimension_numbers<[1], [0], [0], [1], [0, 0, 1, 1], [], []>} : vector<256x168xbf16>, vector<168x84xbf16>, vector<256x84xf32> -> vector<256x84xf32>
    %53 = arith.maximumf %49, %52 : vector<256x84xf32>
    %54 = arith.truncf %53 : vector<256x84xf32> to vector<256x84xbf16>
    %c0_27 = arith.constant 0 : index
    %c0_28 = arith.constant 0 : index
    %c0_29 = arith.constant 0 : index
    %55 = vector.load %arg5[%c0_27, %c0_28, %c0_29] : memref<5x84x160xbf16, #tpu.memory_space<vmem>>, vector<1x84x160xbf16>
    %56 = vector.shape_cast %55 : vector<1x84x160xbf16> to vector<84x160xbf16>
    %cst_30 = arith.constant dense<0.000000e+00> : vector<256x160xf32>
    %57 = tpu.matmul %54, %56, %cst_30 {dimension_numbers = #tpu.dot_dimension_numbers<[1], [0], [0], [1], [0, 0, 1, 1], [], []>} : vector<256x84xbf16>, vector<84x160xbf16>, vector<256x160xf32> -> vector<256x160xf32>
    %58 = vector.extract_strided_slice %53 {offsets = [2, 0], sizes = [254, 84], strides = [1, 1]} : vector<256x84xf32> to vector<254x84xf32>
    %59 = vector.extract_strided_slice %53 {offsets = [0, 0], sizes = [2, 84], strides = [1, 1]} : vector<256x84xf32> to vector<2x84xf32>
    %60 = tpu.concatenate %58, %59 in 0 : vector<254x84xf32>, vector<2x84xf32> -> vector<256x84xf32>
    %61 = arith.truncf %60 : vector<256x84xf32> to vector<256x84xbf16>
    %c1_31 = arith.constant 1 : index
    %c0_32 = arith.constant 0 : index
    %c0_33 = arith.constant 0 : index
    %62 = vector.load %arg5[%c1_31, %c0_32, %c0_33] : memref<5x84x160xbf16, #tpu.memory_space<vmem>>, vector<1x84x160xbf16>
    %63 = vector.shape_cast %62 : vector<1x84x160xbf16> to vector<84x160xbf16>
    %cst_34 = arith.constant dense<0.000000e+00> : vector<256x160xf32>
    %64 = tpu.matmul %61, %63, %cst_34 {dimension_numbers = #tpu.dot_dimension_numbers<[1], [0], [0], [1], [0, 0, 1, 1], [], []>} : vector<256x84xbf16>, vector<84x160xbf16>, vector<256x160xf32> -> vector<256x160xf32>
    %65 = arith.addf %57, %64 : vector<256x160xf32>
    %66 = vector.extract_strided_slice %53 {offsets = [4, 0], sizes = [252, 84], strides = [1, 1]} : vector<256x84xf32> to vector<252x84xf32>
    %67 = vector.extract_strided_slice %53 {offsets = [0, 0], sizes = [4, 84], strides = [1, 1]} : vector<256x84xf32> to vector<4x84xf32>
    %68 = tpu.concatenate %66, %67 in 0 : vector<252x84xf32>, vector<4x84xf32> -> vector<256x84xf32>
    %69 = arith.truncf %68 : vector<256x84xf32> to vector<256x84xbf16>
    %c2_35 = arith.constant 2 : index
    %c0_36 = arith.constant 0 : index
    %c0_37 = arith.constant 0 : index
    %70 = vector.load %arg5[%c2_35, %c0_36, %c0_37] : memref<5x84x160xbf16, #tpu.memory_space<vmem>>, vector<1x84x160xbf16>
    %71 = vector.shape_cast %70 : vector<1x84x160xbf16> to vector<84x160xbf16>
    %cst_38 = arith.constant dense<0.000000e+00> : vector<256x160xf32>
    %72 = tpu.matmul %69, %71, %cst_38 {dimension_numbers = #tpu.dot_dimension_numbers<[1], [0], [0], [1], [0, 0, 1, 1], [], []>} : vector<256x84xbf16>, vector<84x160xbf16>, vector<256x160xf32> -> vector<256x160xf32>
    %73 = arith.addf %65, %72 : vector<256x160xf32>
    %74 = vector.extract_strided_slice %53 {offsets = [6, 0], sizes = [250, 84], strides = [1, 1]} : vector<256x84xf32> to vector<250x84xf32>
    %75 = vector.extract_strided_slice %53 {offsets = [0, 0], sizes = [6, 84], strides = [1, 1]} : vector<256x84xf32> to vector<6x84xf32>
    %76 = tpu.concatenate %74, %75 in 0 : vector<250x84xf32>, vector<6x84xf32> -> vector<256x84xf32>
    %77 = arith.truncf %76 : vector<256x84xf32> to vector<256x84xbf16>
    %c3_39 = arith.constant 3 : index
    %c0_40 = arith.constant 0 : index
    %c0_41 = arith.constant 0 : index
    %78 = vector.load %arg5[%c3_39, %c0_40, %c0_41] : memref<5x84x160xbf16, #tpu.memory_space<vmem>>, vector<1x84x160xbf16>
    %79 = vector.shape_cast %78 : vector<1x84x160xbf16> to vector<84x160xbf16>
    %cst_42 = arith.constant dense<0.000000e+00> : vector<256x160xf32>
    %80 = tpu.matmul %77, %79, %cst_42 {dimension_numbers = #tpu.dot_dimension_numbers<[1], [0], [0], [1], [0, 0, 1, 1], [], []>} : vector<256x84xbf16>, vector<84x160xbf16>, vector<256x160xf32> -> vector<256x160xf32>
    %81 = arith.addf %73, %80 : vector<256x160xf32>
    %82 = vector.extract_strided_slice %53 {offsets = [8, 0], sizes = [248, 84], strides = [1, 1]} : vector<256x84xf32> to vector<248x84xf32>
    %83 = vector.extract_strided_slice %53 {offsets = [0, 0], sizes = [8, 84], strides = [1, 1]} : vector<256x84xf32> to vector<8x84xf32>
    %84 = tpu.concatenate %82, %83 in 0 : vector<248x84xf32>, vector<8x84xf32> -> vector<256x84xf32>
    %85 = arith.truncf %84 : vector<256x84xf32> to vector<256x84xbf16>
    %c4_43 = arith.constant 4 : index
    %c0_44 = arith.constant 0 : index
    %c0_45 = arith.constant 0 : index
    %86 = vector.load %arg5[%c4_43, %c0_44, %c0_45] : memref<5x84x160xbf16, #tpu.memory_space<vmem>>, vector<1x84x160xbf16>
    %87 = vector.shape_cast %86 : vector<1x84x160xbf16> to vector<84x160xbf16>
    %cst_46 = arith.constant dense<0.000000e+00> : vector<256x160xf32>
    %88 = tpu.matmul %85, %87, %cst_46 {dimension_numbers = #tpu.dot_dimension_numbers<[1], [0], [0], [1], [0, 0, 1, 1], [], []>} : vector<256x84xbf16>, vector<84x160xbf16>, vector<256x160xf32> -> vector<256x160xf32>
    %89 = arith.addf %81, %88 : vector<256x160xf32>
    %c0_47 = arith.constant 0 : index
    %c0_48 = arith.constant 0 : index
    %90 = vector.load %arg6[%c0_47, %c0_48] : memref<1x160xf32, #tpu.memory_space<vmem>>, vector<1x160xf32>
    %91 = vector.broadcast %90 : vector<1x160xf32> to vector<256x160xf32>
    %92 = arith.addf %89, %91 : vector<256x160xf32>
    %cst_49 = arith.constant 0.000000e+00 : f32
    %93 = vector.broadcast %cst_49 : f32 to vector<256x160xf32>
    %94 = arith.maximumf %92, %93 : vector<256x160xf32>
    %95 = vector.extract_strided_slice %94 {offsets = [2, 0], sizes = [254, 160], strides = [1, 1]} : vector<256x160xf32> to vector<254x160xf32>
    %96 = vector.extract_strided_slice %94 {offsets = [0, 0], sizes = [2, 160], strides = [1, 1]} : vector<256x160xf32> to vector<2x160xf32>
    %97 = tpu.concatenate %95, %96 in 0 : vector<254x160xf32>, vector<2x160xf32> -> vector<256x160xf32>
    %98 = arith.maximumf %94, %97 : vector<256x160xf32>
    %99 = arith.truncf %98 : vector<256x160xf32> to vector<256x160xbf16>
    %c0_50 = arith.constant 0 : index
    %c0_51 = arith.constant 0 : index
    %c0_52 = arith.constant 0 : index
    %100 = vector.load %arg7[%c0_50, %c0_51, %c0_52] : memref<2x160x80xbf16, #tpu.memory_space<vmem>>, vector<1x160x80xbf16>
    %101 = vector.shape_cast %100 : vector<1x160x80xbf16> to vector<160x80xbf16>
    %cst_53 = arith.constant dense<0.000000e+00> : vector<256x80xf32>
    %102 = tpu.matmul %99, %101, %cst_53 {dimension_numbers = #tpu.dot_dimension_numbers<[1], [0], [0], [1], [0, 0, 1, 1], [], []>} : vector<256x160xbf16>, vector<160x80xbf16>, vector<256x80xf32> -> vector<256x80xf32>
    %c1_54 = arith.constant 1 : index
    %c0_55 = arith.constant 0 : index
    %c0_56 = arith.constant 0 : index
    %103 = vector.load %arg7[%c1_54, %c0_55, %c0_56] : memref<2x160x80xbf16, #tpu.memory_space<vmem>>, vector<1x160x80xbf16>
    %104 = vector.shape_cast %103 : vector<1x160x80xbf16> to vector<160x80xbf16>
    %cst_57 = arith.constant dense<0.000000e+00> : vector<256x80xf32>
    %105 = tpu.matmul %99, %104, %cst_57 {dimension_numbers = #tpu.dot_dimension_numbers<[1], [0], [0], [1], [0, 0, 1, 1], [], []>} : vector<256x160xbf16>, vector<160x80xbf16>, vector<256x80xf32> -> vector<256x80xf32>
    %106 = arith.maximumf %102, %105 : vector<256x80xf32>
    %107 = arith.truncf %106 : vector<256x80xf32> to vector<256x80xbf16>
    %c0_58 = arith.constant 0 : index
    %c0_59 = arith.constant 0 : index
    %c0_60 = arith.constant 0 : index
    %108 = vector.load %arg8[%c0_58, %c0_59, %c0_60] : memref<5x80x128xbf16, #tpu.memory_space<vmem>>, vector<1x80x128xbf16>
    %109 = vector.shape_cast %108 : vector<1x80x128xbf16> to vector<80x128xbf16>
    %cst_61 = arith.constant dense<0.000000e+00> : vector<256x128xf32>
    %110 = tpu.matmul %107, %109, %cst_61 {dimension_numbers = #tpu.dot_dimension_numbers<[1], [0], [0], [1], [0, 0, 1, 1], [], []>} : vector<256x80xbf16>, vector<80x128xbf16>, vector<256x128xf32> -> vector<256x128xf32>
    %111 = vector.extract_strided_slice %106 {offsets = [4, 0], sizes = [252, 80], strides = [1, 1]} : vector<256x80xf32> to vector<252x80xf32>
    %112 = vector.extract_strided_slice %106 {offsets = [0, 0], sizes = [4, 80], strides = [1, 1]} : vector<256x80xf32> to vector<4x80xf32>
    %113 = tpu.concatenate %111, %112 in 0 : vector<252x80xf32>, vector<4x80xf32> -> vector<256x80xf32>
    %114 = arith.truncf %113 : vector<256x80xf32> to vector<256x80xbf16>
    %c1_62 = arith.constant 1 : index
    %c0_63 = arith.constant 0 : index
    %c0_64 = arith.constant 0 : index
    %115 = vector.load %arg8[%c1_62, %c0_63, %c0_64] : memref<5x80x128xbf16, #tpu.memory_space<vmem>>, vector<1x80x128xbf16>
    %116 = vector.shape_cast %115 : vector<1x80x128xbf16> to vector<80x128xbf16>
    %cst_65 = arith.constant dense<0.000000e+00> : vector<256x128xf32>
    %117 = tpu.matmul %114, %116, %cst_65 {dimension_numbers = #tpu.dot_dimension_numbers<[1], [0], [0], [1], [0, 0, 1, 1], [], []>} : vector<256x80xbf16>, vector<80x128xbf16>, vector<256x128xf32> -> vector<256x128xf32>
    %118 = arith.addf %110, %117 : vector<256x128xf32>
    %119 = vector.extract_strided_slice %106 {offsets = [8, 0], sizes = [248, 80], strides = [1, 1]} : vector<256x80xf32> to vector<248x80xf32>
    %120 = vector.extract_strided_slice %106 {offsets = [0, 0], sizes = [8, 80], strides = [1, 1]} : vector<256x80xf32> to vector<8x80xf32>
    %121 = tpu.concatenate %119, %120 in 0 : vector<248x80xf32>, vector<8x80xf32> -> vector<256x80xf32>
    %122 = arith.truncf %121 : vector<256x80xf32> to vector<256x80xbf16>
    %c2_66 = arith.constant 2 : index
    %c0_67 = arith.constant 0 : index
    %c0_68 = arith.constant 0 : index
    %123 = vector.load %arg8[%c2_66, %c0_67, %c0_68] : memref<5x80x128xbf16, #tpu.memory_space<vmem>>, vector<1x80x128xbf16>
    %124 = vector.shape_cast %123 : vector<1x80x128xbf16> to vector<80x128xbf16>
    %cst_69 = arith.constant dense<0.000000e+00> : vector<256x128xf32>
    %125 = tpu.matmul %122, %124, %cst_69 {dimension_numbers = #tpu.dot_dimension_numbers<[1], [0], [0], [1], [0, 0, 1, 1], [], []>} : vector<256x80xbf16>, vector<80x128xbf16>, vector<256x128xf32> -> vector<256x128xf32>
    %126 = arith.addf %118, %125 : vector<256x128xf32>
    %127 = vector.extract_strided_slice %106 {offsets = [12, 0], sizes = [244, 80], strides = [1, 1]} : vector<256x80xf32> to vector<244x80xf32>
    %128 = vector.extract_strided_slice %106 {offsets = [0, 0], sizes = [12, 80], strides = [1, 1]} : vector<256x80xf32> to vector<12x80xf32>
    %129 = tpu.concatenate %127, %128 in 0 : vector<244x80xf32>, vector<12x80xf32> -> vector<256x80xf32>
    %130 = arith.truncf %129 : vector<256x80xf32> to vector<256x80xbf16>
    %c3_70 = arith.constant 3 : index
    %c0_71 = arith.constant 0 : index
    %c0_72 = arith.constant 0 : index
    %131 = vector.load %arg8[%c3_70, %c0_71, %c0_72] : memref<5x80x128xbf16, #tpu.memory_space<vmem>>, vector<1x80x128xbf16>
    %132 = vector.shape_cast %131 : vector<1x80x128xbf16> to vector<80x128xbf16>
    %cst_73 = arith.constant dense<0.000000e+00> : vector<256x128xf32>
    %133 = tpu.matmul %130, %132, %cst_73 {dimension_numbers = #tpu.dot_dimension_numbers<[1], [0], [0], [1], [0, 0, 1, 1], [], []>} : vector<256x80xbf16>, vector<80x128xbf16>, vector<256x128xf32> -> vector<256x128xf32>
    %134 = arith.addf %126, %133 : vector<256x128xf32>
    %135 = vector.extract_strided_slice %106 {offsets = [16, 0], sizes = [240, 80], strides = [1, 1]} : vector<256x80xf32> to vector<240x80xf32>
    %136 = vector.extract_strided_slice %106 {offsets = [0, 0], sizes = [16, 80], strides = [1, 1]} : vector<256x80xf32> to vector<16x80xf32>
    %137 = tpu.concatenate %135, %136 in 0 : vector<240x80xf32>, vector<16x80xf32> -> vector<256x80xf32>
    %138 = arith.truncf %137 : vector<256x80xf32> to vector<256x80xbf16>
    %c4_74 = arith.constant 4 : index
    %c0_75 = arith.constant 0 : index
    %c0_76 = arith.constant 0 : index
    %139 = vector.load %arg8[%c4_74, %c0_75, %c0_76] : memref<5x80x128xbf16, #tpu.memory_space<vmem>>, vector<1x80x128xbf16>
    %140 = vector.shape_cast %139 : vector<1x80x128xbf16> to vector<80x128xbf16>
    %cst_77 = arith.constant dense<0.000000e+00> : vector<256x128xf32>
    %141 = tpu.matmul %138, %140, %cst_77 {dimension_numbers = #tpu.dot_dimension_numbers<[1], [0], [0], [1], [0, 0, 1, 1], [], []>} : vector<256x80xbf16>, vector<80x128xbf16>, vector<256x128xf32> -> vector<256x128xf32>
    %142 = arith.addf %134, %141 : vector<256x128xf32>
    %c0_78 = arith.constant 0 : index
    %c0_79 = arith.constant 0 : index
    %143 = vector.load %arg9[%c0_78, %c0_79] : memref<1x128xf32, #tpu.memory_space<vmem>>, vector<1x128xf32>
    %144 = vector.broadcast %143 : vector<1x128xf32> to vector<256x128xf32>
    %145 = arith.addf %142, %144 : vector<256x128xf32>
    %cst_80 = arith.constant 0.000000e+00 : f32
    %146 = vector.broadcast %cst_80 : f32 to vector<256x128xf32>
    %147 = arith.maximumf %145, %146 : vector<256x128xf32>
    %148 = arith.truncf %147 : vector<256x128xf32> to vector<256x128xbf16>
    %c0_81 = arith.constant 0 : index
    %c0_82 = arith.constant 0 : index
    %149 = vector.load %arg14[%c0_81, %c0_82] : memref<8x256xbf16, #tpu.memory_space<vmem>>, vector<8x256xbf16>
    %cst_83 = arith.constant dense<0.000000e+00> : vector<8x128xf32>
    %150 = tpu.matmul %149, %148, %cst_83 {dimension_numbers = #tpu.dot_dimension_numbers<[1], [0], [0], [1], [0, 0, 1, 1], [], []>} : vector<8x256xbf16>, vector<256x128xbf16>, vector<8x128xf32> -> vector<8x128xf32>
    %151 = arith.truncf %150 : vector<8x128xf32> to vector<8x128xbf16>
    %c0_84 = arith.constant 0 : index
    %c0_85 = arith.constant 0 : index
    %152 = vector.load %arg10[%c0_84, %c0_85] : memref<128x128xbf16, #tpu.memory_space<vmem>>, vector<128x128xbf16>
    %cst_86 = arith.constant dense<0.000000e+00> : vector<8x128xf32>
    %153 = tpu.matmul %151, %152, %cst_86 {dimension_numbers = #tpu.dot_dimension_numbers<[1], [0], [0], [1], [0, 0, 1, 1], [], []>} : vector<8x128xbf16>, vector<128x128xbf16>, vector<8x128xf32> -> vector<8x128xf32>
    %c0_87 = arith.constant 0 : index
    %c0_88 = arith.constant 0 : index
    %154 = vector.load %arg11[%c0_87, %c0_88] : memref<1x128xf32, #tpu.memory_space<vmem>>, vector<1x128xf32>
    %155 = vector.broadcast %154 : vector<1x128xf32> to vector<8x128xf32>
    %156 = arith.addf %153, %155 : vector<8x128xf32>
    %cst_89 = arith.constant 0.000000e+00 : f32
    %157 = vector.broadcast %cst_89 : f32 to vector<8x128xf32>
    %158 = arith.maximumf %156, %157 : vector<8x128xf32>
    %159 = arith.truncf %158 : vector<8x128xf32> to vector<8x128xbf16>
    %c0_90 = arith.constant 0 : index
    %c0_91 = arith.constant 0 : index
    %160 = vector.load %arg12[%c0_90, %c0_91] : memref<128x128xbf16, #tpu.memory_space<vmem>>, vector<128x128xbf16>
    %cst_92 = arith.constant dense<0.000000e+00> : vector<8x128xf32>
    %161 = tpu.matmul %159, %160, %cst_92 {dimension_numbers = #tpu.dot_dimension_numbers<[1], [0], [0], [1], [0, 0, 1, 1], [], []>} : vector<8x128xbf16>, vector<128x128xbf16>, vector<8x128xf32> -> vector<8x128xf32>
    %c0_93 = arith.constant 0 : index
    %c0_94 = arith.constant 0 : index
    %162 = vector.load %arg13[%c0_93, %c0_94] : memref<1x128xf32, #tpu.memory_space<vmem>>, vector<1x128xf32>
    %163 = vector.broadcast %162 : vector<1x128xf32> to vector<8x128xf32>
    %164 = arith.addf %161, %163 : vector<8x128xf32>
    %c0_95 = arith.constant 0 : index
    %c0_96 = arith.constant 0 : index
    %165 = vector.load %arg15[%c0_95, %c0_96] : memref<8x128xf32, #tpu.memory_space<vmem>>, vector<8x128xf32>
    tpu.vector_store %arg15[%c0_95, %c0_96], %164 {strides = array<i32>} : memref<8x128xf32, #tpu.memory_space<vmem>>, vector<8x128xf32>,
    return
  }
  func.func @transform_0(%arg0: i32) -> (i32, i32) {
    %c0_i32 = arith.constant 0 : i32
    %c0_i32_0 = arith.constant 0 : i32
    return %arg0, %c0_i32 : i32, i32
  }
  func.func @transform_1(%arg0: i32) -> (i32, i32, i32) {
    %c0_i32 = arith.constant 0 : i32
    %c0_i32_0 = arith.constant 0 : i32
    %c0_i32_1 = arith.constant 0 : i32
    %c0_i32_2 = arith.constant 0 : i32
    return %c0_i32, %c0_i32_0, %c0_i32_1 : i32, i32, i32
  }
  func.func @transform_2(%arg0: i32) -> (i32, i32) {
    %c0_i32 = arith.constant 0 : i32
    %c0_i32_0 = arith.constant 0 : i32
    %c0_i32_1 = arith.constant 0 : i32
    return %c0_i32, %c0_i32_0 : i32, i32
  }
  func.func @transform_3(%arg0: i32) -> (i32, i32, i32) {
    %c0_i32 = arith.constant 0 : i32
    %c0_i32_0 = arith.constant 0 : i32
    %c0_i32_1 = arith.constant 0 : i32
    %c0_i32_2 = arith.constant 0 : i32
    return %c0_i32, %c0_i32_0, %c0_i32_1 : i32, i32, i32
  }
  func.func @transform_4(%arg0: i32) -> (i32, i32, i32) {
    %c0_i32 = arith.constant 0 : i32
    %c0_i32_0 = arith.constant 0 : i32
    %c0_i32_1 = arith.constant 0 : i32
    %c0_i32_2 = arith.constant 0 : i32
    return %c0_i32, %c0_i32_0, %c0_i32_1 : i32, i32, i32
  }
  func.func @transform_5(%arg0: i32) -> (i32, i32) {
    %c0_i32 = arith.constant 0 : i32
    %c0_i32_0 = arith.constant 0 : i32
    %c0_i32_1 = arith.constant 0 : i32
    return %c0_i32, %c0_i32_0 : i32, i32
  }
  func.func @transform_6(%arg0: i32) -> (i32, i32, i32) {
    %c0_i32 = arith.constant 0 : i32
    %c0_i32_0 = arith.constant 0 : i32
    %c0_i32_1 = arith.constant 0 : i32
    %c0_i32_2 = arith.constant 0 : i32
    return %c0_i32, %c0_i32_0, %c0_i32_1 : i32, i32, i32
  }
  func.func @transform_7(%arg0: i32) -> (i32, i32, i32) {
    %c0_i32 = arith.constant 0 : i32
    %c0_i32_0 = arith.constant 0 : i32
    %c0_i32_1 = arith.constant 0 : i32
    %c0_i32_2 = arith.constant 0 : i32
    return %c0_i32, %c0_i32_0, %c0_i32_1 : i32, i32, i32
  }
  func.func @transform_8(%arg0: i32) -> (i32, i32) {
    %c0_i32 = arith.constant 0 : i32
    %c0_i32_0 = arith.constant 0 : i32
    %c0_i32_1 = arith.constant 0 : i32
    return %c0_i32, %c0_i32_0 : i32, i32
  }
  func.func @transform_9(%arg0: i32) -> (i32, i32) {
    %c0_i32 = arith.constant 0 : i32
    %c0_i32_0 = arith.constant 0 : i32
    %c0_i32_1 = arith.constant 0 : i32
    return %c0_i32, %c0_i32_0 : i32, i32
  }
  func.func @transform_10(%arg0: i32) -> (i32, i32) {
    %c0_i32 = arith.constant 0 : i32
    %c0_i32_0 = arith.constant 0 : i32
    %c0_i32_1 = arith.constant 0 : i32
    return %c0_i32, %c0_i32_0 : i32, i32
  }
  func.func @transform_11(%arg0: i32) -> (i32, i32) {
    %c0_i32 = arith.constant 0 : i32
    %c0_i32_0 = arith.constant 0 : i32
    %c0_i32_1 = arith.constant 0 : i32
    return %c0_i32, %c0_i32_0 : i32, i32
  }
  func.func @transform_12(%arg0: i32) -> (i32, i32) {
    %c0_i32 = arith.constant 0 : i32
    %c0_i32_0 = arith.constant 0 : i32
    %c0_i32_1 = arith.constant 0 : i32
    return %c0_i32, %c0_i32_0 : i32, i32
  }
  func.func @transform_13(%arg0: i32) -> (i32, i32) {
    %c0_i32 = arith.constant 0 : i32
    %c0_i32_0 = arith.constant 0 : i32
    %c0_i32_1 = arith.constant 0 : i32
    return %c0_i32, %c0_i32_0 : i32, i32
  }
  func.func @transform_14(%arg0: i32) -> (i32, i32) {
    %c0_i32 = arith.constant 0 : i32
    %c0_i32_0 = arith.constant 0 : i32
    return %arg0, %c0_i32 : i32, i32
  }
}

</mosaic_0001>

<llo_original>
// kernel: lenet_forward.1
$region0: #{lenet_forward.1}
  #allocation0 [shape = 'u32[]', space=smem, size = 0x4, offset = 0x4, fixed_abs, tag = 'smem constant byte address 0x4 - core index']
  #allocation1 [shape = 'u32[72,128]{1,0:T(1,128)}', space=vmem, size = 0x9000, scoped, tag = 'internal scratch']
  %s0 = inlined_call_operand.vmem [shape: f32[256,96], index: 0, kind: input, shape index: {}]
  %s1 = inlined_call_operand.vmem [shape: bf16[5,96,168], index: 1, kind: input, shape index: {}]
  %s2 = inlined_call_operand.vmem [shape: f32[1,168], index: 2, kind: input, shape index: {}]
  %s3 = inlined_call_operand.vmem [shape: bf16[2,168,84], index: 3, kind: input, shape index: {}]
  %s4 = inlined_call_operand.vmem [shape: bf16[5,84,160], index: 4, kind: input, shape index: {}]
  %s5 = inlined_call_operand.vmem [shape: f32[1,160], index: 5, kind: input, shape index: {}]
  %s6 = inlined_call_operand.vmem [shape: bf16[2,160,80], index: 6, kind: input, shape index: {}]
  %s7 = inlined_call_operand.vmem [shape: bf16[5,80,128], index: 7, kind: input, shape index: {}]
  %s8 = inlined_call_operand.vmem [shape: f32[1,128], index: 8, kind: input, shape index: {}]
  %s9 = inlined_call_operand.vmem [shape: bf16[128,128], index: 9, kind: input, shape index: {}]
  %s10 = inlined_call_operand.vmem [shape: f32[1,128], index: 10, kind: input, shape index: {}]
  %s11 = inlined_call_operand.vmem [shape: bf16[128,128], index: 11, kind: input, shape index: {}]
  %s12 = inlined_call_operand.vmem [shape: f32[1,128], index: 12, kind: input, shape index: {}]
  %s13 = inlined_call_operand.vmem [shape: bf16[8,256], index: 13, kind: input, shape index: {}]
  %s14 = inlined_call_operand.vmem [shape: f32[8,128], index: 14, kind: output, shape index: {}]
  %s15 = sld [smem:[#allocation0]]
  $region66: #{lenet_forward.1} parent=0
    _
  %s17 = ssub.s32 1, %s15
  %s18 = scalar_select 0, %s17, %s15
  // Predicated region
  $region2: #{lenet_forward.1} parent=0 // pred_check
    _
  $region3: #{lenet_forward.1} parent=0 // pred_check_branch
    %20 = sbr.rel (0) target = $region5
  $region4: #{lenet_forward.1} parent=0 // pred_region
    _
  $region5: #{lenet_forward.1} parent=0 // pred_fallthru
    _
  // Predicated region
  $region6: #{lenet_forward.1} parent=0 // pred_check
    _
  $region7: #{lenet_forward.1} parent=0 // pred_check_branch
    %22 = sbr.rel (0) target = $region9
  $region8: #{lenet_forward.1} parent=0 // pred_region
    _
  $region9: #{lenet_forward.1} parent=0 // pred_fallthru
    _
  // Predicated region
  $region10: #{lenet_forward.1} parent=0 // pred_check
    _
  $region11: #{lenet_forward.1} parent=0 // pred_check_branch
    %24 = sbr.rel (0) target = $region13
  $region12: #{lenet_forward.1} parent=0 // pred_region
    _
  $region13: #{lenet_forward.1} parent=0 // pred_fallthru
    _
  // Predicated region
  $region14: #{lenet_forward.1} parent=0 // pred_check
    _
  $region15: #{lenet_forward.1} parent=0 // pred_check_branch
    %26 = sbr.rel (0) target = $region17
  $region16: #{lenet_forward.1} parent=0 // pred_region
    _
  $region17: #{lenet_forward.1} parent=0 // pred_fallthru
    _
  // Predicated region
  $region18: #{lenet_forward.1} parent=0 // pred_check
    _
  $region19: #{lenet_forward.1} parent=0 // pred_check_branch
    %28 = sbr.rel (0) target = $region21
  $region20: #{lenet_forward.1} parent=0 // pred_region
    _
  $region21: #{lenet_forward.1} parent=0 // pred_fallthru
    _
  // Predicated region
  $region22: #{lenet_forward.1} parent=0 // pred_check
    _
  $region23: #{lenet_forward.1} parent=0 // pred_check_branch
    %30 = sbr.rel (0) target = $region25
  $region24: #{lenet_forward.1} parent=0 // pred_region
    _
  $region25: #{lenet_forward.1} parent=0 // pred_fallthru
    _
  // Predicated region
  $region26: #{lenet_forward.1} parent=0 // pred_check
    _
  $region27: #{lenet_forward.1} parent=0 // pred_check_branch
    %32 = sbr.rel (0) target = $region29
  $region28: #{lenet_forward.1} parent=0 // pred_region
    _
  $region29: #{lenet_forward.1} parent=0 // pred_fallthru
    _
  // Predicated region
  $region30: #{lenet_forward.1} parent=0 // pred_check
    _
  $region31: #{lenet_forward.1} parent=0 // pred_check_branch
    %34 = sbr.rel (0) target = $region33
  $region32: #{lenet_forward.1} parent=0 // pred_region
    _
  $region33: #{lenet_forward.1} parent=0 // pred_fallthru
    _
  // Predicated region
  $region34: #{lenet_forward.1} parent=0 // pred_check
    _
  $region35: #{lenet_forward.1} parent=0 // pred_check_branch
    %36 = sbr.rel (0) target = $region37
  $region36: #{lenet_forward.1} parent=0 // pred_region
    _
  $region37: #{lenet_forward.1} parent=0 // pred_fallthru
    _
  // Predicated region
  $region38: #{lenet_forward.1} parent=0 // pred_check
    _
  $region39: #{lenet_forward.1} parent=0 // pred_check_branch
    %38 = sbr.rel (0) target = $region41
  $region40: #{lenet_forward.1} parent=0 // pred_region
    _
  $region41: #{lenet_forward.1} parent=0 // pred_fallthru
    _
  // Predicated region
  $region42: #{lenet_forward.1} parent=0 // pred_check
    _
  $region43: #{lenet_forward.1} parent=0 // pred_check_branch
    %40 = sbr.rel (0) target = $region45
  $region44: #{lenet_forward.1} parent=0 // pred_region
    _
  $region45: #{lenet_forward.1} parent=0 // pred_fallthru
    _
  // Predicated region
  $region46: #{lenet_forward.1} parent=0 // pred_check
    _
  $region47: #{lenet_forward.1} parent=0 // pred_check_branch
    %42 = sbr.rel (0) target = $region49
  $region48: #{lenet_forward.1} parent=0 // pred_region
    _
  $region49: #{lenet_forward.1} parent=0 // pred_fallthru
    _
  // Predicated region
  $region50: #{lenet_forward.1} parent=0 // pred_check
    _
  $region51: #{lenet_forward.1} parent=0 // pred_check_branch
    %44 = sbr.rel (0) target = $region53
  $region52: #{lenet_forward.1} parent=0 // pred_region
    _
  $region53: #{lenet_forward.1} parent=0 // pred_fallthru
    _
  // Predicated region
  $region54: #{lenet_forward.1} parent=0 // pred_check
    _
  $region55: #{lenet_forward.1} parent=0 // pred_check_branch
    %46 = sbr.rel (0) target = $region57
  $region56: #{lenet_forward.1} parent=0 // pred_region
    _
  $region57: #{lenet_forward.1} parent=0 // pred_fallthru
    _
  %v48 = vld [vmem:[%s0] sm:$0xff]
  %v49 = vld [vmem:[%s0 + $0x8] sm:$0xff]
  %v50 = vld [vmem:[%s0 + $0x10] sm:$0xff]
  %v51 = vld [vmem:[%s0 + $0x18] sm:$0xff]
  %v52 = vld [vmem:[%s0 + $0x20] sm:$0xff]
  %v53 = vld [vmem:[%s0 + $0x28] sm:$0xff]
  %v54 = vld [vmem:[%s0 + $0x30] sm:$0xff]
  %v55 = vld [vmem:[%s0 + $0x38] sm:$0xff]
  %v56 = vld [vmem:[%s0 + $0x40] sm:$0xff]
  %v57 = vld [vmem:[%s0 + $0x48] sm:$0xff]
  %v58 = vld [vmem:[%s0 + $0x50] sm:$0xff]
  %v59 = vld [vmem:[%s0 + $0x58] sm:$0xff]
  %v60 = vld [vmem:[%s0 + $0x60] sm:$0xff]
  %v61 = vld [vmem:[%s0 + $0x68] sm:$0xff]
  %v62 = vld [vmem:[%s0 + $0x70] sm:$0xff]
  %v63 = vld [vmem:[%s0 + $0x78] sm:$0xff]
  %v64 = vld [vmem:[%s0 + $0x80] sm:$0xff]
  %v65 = vld [vmem:[%s0 + $0x88] sm:$0xff]
  %v66 = vld [vmem:[%s0 + $0x90] sm:$0xff]
  %v67 = vld [vmem:[%s0 + $0x98] sm:$0xff]
  %v68 = vld [vmem:[%s0 + $0xa0] sm:$0xff]
  %v69 = vld [vmem:[%s0 + $0xa8] sm:$0xff]
  %v70 = vld [vmem:[%s0 + $0xb0] sm:$0xff]
  %v71 = vld [vmem:[%s0 + $0xb8] sm:$0xff]
  %v72 = vld [vmem:[%s0 + $0xc0] sm:$0xff]
  %v73 = vld [vmem:[%s0 + $0xc8] sm:$0xff]
  %v74 = vld [vmem:[%s0 + $0xd0] sm:$0xff]
  %v75 = vld [vmem:[%s0 + $0xd8] sm:$0xff]
  %v76 = vld [vmem:[%s0 + $0xe0] sm:$0xff]
  %v77 = vld [vmem:[%s0 + $0xe8] sm:$0xff]
  %v78 = vld [vmem:[%s0 + $0xf0] sm:$0xff]
  %v79 = vld [vmem:[%s0 + $0xf8] sm:$0xff]
  %v80 = vpack.c.bf16 %v49, %v48
  %v81 = vpack.c.bf16 %v51, %v50
  %v82 = vpack.c.bf16 %v53, %v52
  %v83 = vpack.c.bf16 %v55, %v54
  %v84 = vpack.c.bf16 %v57, %v56
  %v85 = vpack.c.bf16 %v59, %v58
  %v86 = vpack.c.bf16 %v61, %v60
  %v87 = vpack.c.bf16 %v63, %v62
  %v88 = vpack.c.bf16 %v65, %v64
  %v89 = vpack.c.bf16 %v67, %v66
  %v90 = vpack.c.bf16 %v69, %v68
  %v91 = vpack.c.bf16 %v71, %v70
  %v92 = vpack.c.bf16 %v73, %v72
  %v93 = vpack.c.bf16 %v75, %v74
  %v94 = vpack.c.bf16 %v77, %v76
  %v95 = vpack.c.bf16 %v79, %v78
  %v96 = vld [vmem:[%s1] sm:$0xff]
  %v97 = vld [vmem:[%s1 + $0x8] sm:$0xff]
  %v98 = vld [vmem:[%s1 + $0x10] sm:$0xff]
  %v99 = vld [vmem:[%s1 + $0x18] sm:$0xff]
  %v100 = vld [vmem:[%s1 + $0x20] sm:$0xff]
  %v101 = vld [vmem:[%s1 + $0x28] sm:$0xff]
  %v102 = vld [vmem:[%s1 + $0x30] sm:$0xff]
  %v103 = vld [vmem:[%s1 + $0x38] sm:$0xff]
  %v104 = vld [vmem:[%s1 + $0x40] sm:$0xff]
  %v105 = vld [vmem:[%s1 + $0x48] sm:$0xff]
  %v106 = vld [vmem:[%s1 + $0x50] sm:$0xff]
  %v107 = vld [vmem:[%s1 + $0x58] sm:$0xff]
  %vm140 = vcmask 1046528
  %v141 = vrot.slane %v48, 1
  %v142 = vrot.slane %v49, 1
  %v143 = vsel %vm140, %v141, %v142
  %v144 = vrot.slane %v50, 1
  %v145 = vsel %vm140, %v142, %v144
  %v146 = vrot.slane %v51, 1
  %v147 = vsel %vm140, %v144, %v146
  %v148 = vrot.slane %v52, 1
  %v149 = vsel %vm140, %v146, %v148
  %v150 = vrot.slane %v53, 1
  %v151 = vsel %vm140, %v148, %v150
  %v152 = vrot.slane %v54, 1
  %v153 = vsel %vm140, %v150, %v152
  %v154 = vrot.slane %v55, 1
  %v155 = vsel %vm140, %v152, %v154
  %v156 = vrot.slane %v56, 1
  %v157 = vsel %vm140, %v154, %v156
  %v158 = vrot.slane %v57, 1
  %v159 = vsel %vm140, %v156, %v158
  %v160 = vrot.slane %v58, 1
  %v161 = vsel %vm140, %v158, %v160
  %v162 = vrot.slane %v59, 1
  %v163 = vsel %vm140, %v160, %v162
  %v164 = vrot.slane %v60, 1
  %v165 = vsel %vm140, %v162, %v164
  %v166 = vrot.slane %v61, 1
  %v167 = vsel %vm140, %v164, %v166
  %v168 = vrot.slane %v62, 1
  %v169 = vsel %vm140, %v166, %v168
  %v170 = vrot.slane %v63, 1
  %v171 = vsel %vm140, %v168, %v170
  %v172 = vrot.slane %v64, 1
  %v173 = vsel %vm140, %v170, %v172
  %v174 = vrot.slane %v65, 1
  %v175 = vsel %vm140, %v172, %v174
  %v176 = vrot.slane %v66, 1
  %v177 = vsel %vm140, %v174, %v176
  %v178 = vrot.slane %v67, 1
  %v179 = vsel %vm140, %v176, %v178
  %v180 = vrot.slane %v68, 1
  %v181 = vsel %vm140, %v178, %v180
  %v182 = vrot.slane %v69, 1
  %v183 = vsel %vm140, %v180, %v182
  %v184 = vrot.slane %v70, 1
  %v185 = vsel %vm140, %v182, %v184
  %v186 = vrot.slane %v71, 1
  %v187 = vsel %vm140, %v184, %v186
  %v188 = vrot.slane %v72, 1
  %v189 = vsel %vm140, %v186, %v188
  %v190 = vrot.slane %v73, 1
  %v191 = vsel %vm140, %v188, %v190
  %v192 = vrot.slane %v74, 1
  %v193 = vsel %vm140, %v190, %v192
  %v194 = vrot.slane %v75, 1
  %v195 = vsel %vm140, %v192, %v194
  %v196 = vrot.slane %v76, 1
  %v197 = vsel %vm140, %v194, %v196
  %v198 = vrot.slane %v77, 1
  %v199 = vsel %vm140, %v196, %v198
  %v200 = vrot.slane %v78, 1
  %v201 = vsel %vm140, %v198, %v200
  %v202 = vrot.slane %v79, 1
  %v203 = vsel %vm140, %v200, %v202
  %v237 = vsel %vm140, %v202, %v141
  %v238 = vpack.c.bf16 %v145, %v143
  %v239 = vpack.c.bf16 %v149, %v147
  %v240 = vpack.c.bf16 %v153, %v151
  %v241 = vpack.c.bf16 %v157, %v155
  %v242 = vpack.c.bf16 %v161, %v159
  %v243 = vpack.c.bf16 %v165, %v163
  %v244 = vpack.c.bf16 %v169, %v167
  %v245 = vpack.c.bf16 %v173, %v171
  %v246 = vpack.c.bf16 %v177, %v175
  %v247 = vpack.c.bf16 %v181, %v179
  %v248 = vpack.c.bf16 %v185, %v183
  %v249 = vpack.c.bf16 %v189, %v187
  %v250 = vpack.c.bf16 %v193, %v191
  %v251 = vpack.c.bf16 %v197, %v195
  %v252 = vpack.c.bf16 %v201, %v199
  %v253 = vpack.c.bf16 %v237, %v203
  %s254 = scalar_lea.vmem %s1, 96
  %v255 = vld [vmem:[%s254] sm:$0xff]
  %v256 = vld [vmem:[%s254 + $0x8] sm:$0xff]
  %v257 = vld [vmem:[%s254 + $0x10] sm:$0xff]
  %v258 = vld [vmem:[%s254 + $0x18] sm:$0xff]
  %v259 = vld [vmem:[%s254 + $0x20] sm:$0xff]
  %v260 = vld [vmem:[%s254 + $0x28] sm:$0xff]
  %v261 = vld [vmem:[%s254 + $0x30] sm:$0xff]
  %v262 = vld [vmem:[%s254 + $0x38] sm:$0xff]
  %v263 = vld [vmem:[%s254 + $0x40] sm:$0xff]
  %v264 = vld [vmem:[%s254 + $0x48] sm:$0xff]
  %v265 = vld [vmem:[%s254 + $0x50] sm:$0xff]
  %v266 = vld [vmem:[%s254 + $0x58] sm:$0xff]
  %v279 = vunpack.c.l.b16 %v255
  %v280 = vunpack.c.h.b16 %v255
  %v281 = vunpack.c.l.b16 %v256
  %v282 = vunpack.c.h.b16 %v256
  %v283 = vunpack.c.l.b16 %v257
  %v284 = vunpack.c.h.b16 %v257
  %v285 = vunpack.c.l.b16 %v258
  %v286 = vunpack.c.h.b16 %v258
  %v287 = vunpack.c.l.b16 %v259
  %v288 = vunpack.c.h.b16 %v259
  %v289 = vunpack.c.l.b16 %v260
  %v290 = vunpack.c.h.b16 %v260
  %v291 = vunpack.c.l.b16 %v261
  %v292 = vunpack.c.h.b16 %v261
  %v293 = vunpack.c.l.b16 %v262
  %v294 = vunpack.c.h.b16 %v262
  %v295 = vunpack.c.l.b16 %v263
  %v296 = vunpack.c.h.b16 %v263
  %v297 = vunpack.c.l.b16 %v264
  %v298 = vunpack.c.h.b16 %v264
  %v299 = vunpack.c.l.b16 %v265
  %v300 = vunpack.c.h.b16 %v265
  %v301 = vunpack.c.l.b16 %v266
  %v302 = vunpack.c.h.b16 %v266
  %v303 = vpack.c.b16 %v281, %v279
  %v304 = vpack.c.b16 %v282, %v280
  %v305 = vpack.c.b16 %v285, %v283
  %v306 = vpack.c.b16 %v286, %v284
  %v307 = vpack.c.b16 %v289, %v287
  %v308 = vpack.c.b16 %v290, %v288
  %v309 = vpack.c.b16 %v293, %v291
  %v310 = vpack.c.b16 %v294, %v292
  %v311 = vpack.c.b16 %v297, %v295
  %v312 = vpack.c.b16 %v298, %v296
  %v313 = vpack.c.b16 %v301, %v299
  %v314 = vpack.c.b16 %v302, %v300
  %vm327 = vcmask 785408
  %v329 = vsel %vm327, %v238, 0
  %v332 = vsel %vm327, %v239, 0
  %v335 = vsel %vm327, %v240, 0
  %v338 = vsel %vm327, %v241, 0
  %v341 = vsel %vm327, %v242, 0
  %v344 = vsel %vm327, %v243, 0
  %v347 = vsel %vm327, %v244, 0
  %v350 = vsel %vm327, %v245, 0
  %v353 = vsel %vm327, %v246, 0
  %v356 = vsel %vm327, %v247, 0
  %v359 = vsel %vm327, %v248, 0
  %v362 = vsel %vm327, %v249, 0
  %v365 = vsel %vm327, %v250, 0
  %v368 = vsel %vm327, %v251, 0
  %v371 = vsel %vm327, %v252, 0
  %v374 = vsel %vm327, %v253, 0
  %376 = vmatpush.bf16.msra.mxu0 0
  %377 = vmatpush.bf16.msra.mxu0 0
  %378 = vmatpush.bf16.msra.mxu0 %v313
  %379 = vmatpush.bf16.msra.mxu0 %v311
  %380 = vmatpush.bf16.msra.mxu0 %v309
  %381 = vmatpush.bf16.msra.mxu0 %v307
  %382 = vmatpush.bf16.msra.mxu0 %v305
  %383 = vmatpush.bf16.msra.mxu0 %v303
  %384 = vmatmul.bf16.gmra.mxu0 %v329
  %v385 = vpop.f32.mrf.mxu0
  %v386 = vadd.f32 0.0, %v385
  %v387 = vpop.f32.mrf.mxu0
  %v388 = vadd.f32 0.0, %v387
  %389 = vmatmul.bf16.gmra.mxu0 %v332
  %v390 = vpop.f32.mrf.mxu0
  %v391 = vadd.f32 0.0, %v390
  %v392 = vpop.f32.mrf.mxu0
  %v393 = vadd.f32 0.0, %v392
  %394 = vmatmul.bf16.gmra.mxu0 %v335
  %v395 = vpop.f32.mrf.mxu0
  %v396 = vadd.f32 0.0, %v395
  %v397 = vpop.f32.mrf.mxu0
  %v398 = vadd.f32 0.0, %v397
  %399 = vmatmul.bf16.gmra.mxu0 %v338
  %v400 = vpop.f32.mrf.mxu0
  %v401 = vadd.f32 0.0, %v400
  %v402 = vpop.f32.mrf.mxu0
  %v403 = vadd.f32 0.0, %v402
  %404 = vmatmul.bf16.gmra.mxu0 %v341
  %v405 = vpop.f32.mrf.mxu0
  %v406 = vadd.f32 0.0, %v405
  %v407 = vpop.f32.mrf.mxu0
  %v408 = vadd.f32 0.0, %v407
  %409 = vmatmul.bf16.gmra.mxu0 %v344
  %v410 = vpop.f32.mrf.mxu0
  %v411 = vadd.f32 0.0, %v410
  %v412 = vpop.f32.mrf.mxu0
  %v413 = vadd.f32 0.0, %v412
  %414 = vmatmul.bf16.gmra.mxu0 %v347
  %v415 = vpop.f32.mrf.mxu0
  %v416 = vadd.f32 0.0, %v415
  %v417 = vpop.f32.mrf.mxu0
  %v418 = vadd.f32 0.0, %v417
  %419 = vmatmul.bf16.gmra.mxu0 %v350
  %v420 = vpop.f32.mrf.mxu0
  %v421 = vadd.f32 0.0, %v420
  %v422 = vpop.f32.mrf.mxu0
  %v423 = vadd.f32 0.0, %v422
  %424 = vmatmul.bf16.gmra.mxu0 %v353
  %v425 = vpop.f32.mrf.mxu0
  %v426 = vadd.f32 0.0, %v425
  %v427 = vpop.f32.mrf.mxu0
  %v428 = vadd.f32 0.0, %v427
  %429 = vmatmul.bf16.gmra.mxu0 %v356
  %v430 = vpop.f32.mrf.mxu0
  %v431 = vadd.f32 0.0, %v430
  %v432 = vpop.f32.mrf.mxu0
  %v433 = vadd.f32 0.0, %v432
  %434 = vmatmul.bf16.gmra.mxu0 %v359
  %v435 = vpop.f32.mrf.mxu0
  %v436 = vadd.f32 0.0, %v435
  %v437 = vpop.f32.mrf.mxu0
  %v438 = vadd.f32 0.0, %v437
  %439 = vmatmul.bf16.gmra.mxu0 %v362
  %v440 = vpop.f32.mrf.mxu0
  %v441 = vadd.f32 0.0, %v440
  %v442 = vpop.f32.mrf.mxu0
  %v443 = vadd.f32 0.0, %v442
  %444 = vmatmul.bf16.gmra.mxu0 %v365
  %v445 = vpop.f32.mrf.mxu0
  %v446 = vadd.f32 0.0, %v445
  %v447 = vpop.f32.mrf.mxu0
  %v448 = vadd.f32 0.0, %v447
  %449 = vmatmul.bf16.gmra.mxu0 %v368
  %v450 = vpop.f32.mrf.mxu0
  %v451 = vadd.f32 0.0, %v450
  %v452 = vpop.f32.mrf.mxu0
  %v453 = vadd.f32 0.0, %v452
  %454 = vmatmul.bf16.gmra.mxu0 %v371
  %v455 = vpop.f32.mrf.mxu0
  %v456 = vadd.f32 0.0, %v455
  %v457 = vpop.f32.mrf.mxu0
  %v458 = vadd.f32 0.0, %v457
  %459 = vmatmul.bf16.gmra.mxu0 %v374
  %v460 = vpop.f32.mrf.mxu0
  %v461 = vadd.f32 0.0, %v460
  %v462 = vpop.f32.mrf.mxu0
  %v463 = vadd.f32 0.0, %v462
  %464 = vdwg.mxu0
  %465 = vmatpush.bf16.msra.mxu0 0
  %466 = vmatpush.bf16.msra.mxu0 0
  %467 = vmatpush.bf16.msra.mxu0 %v314
  %468 = vmatpush.bf16.msra.mxu0 %v312
  %469 = vmatpush.bf16.msra.mxu0 %v310
  %470 = vmatpush.bf16.msra.mxu0 %v308
  %471 = vmatpush.bf16.msra.mxu0 %v306
  %472 = vmatpush.bf16.msra.mxu0 %v304
  %473 = vmatmul.bf16.gmra.mxu0 %v329
  %v474 = vpop.f32.mrf.mxu0
  %v475 = vadd.f32 0.0, %v474
  %v476 = vpop.f32.mrf.mxu0
  %v477 = vadd.f32 0.0, %v476
  %478 = vmatmul.bf16.gmra.mxu0 %v332
  %v479 = vpop.f32.mrf.mxu0
  %v480 = vadd.f32 0.0, %v479
  %v481 = vpop.f32.mrf.mxu0
  %v482 = vadd.f32 0.0, %v481
  %483 = vmatmul.bf16.gmra.mxu0 %v335
  %v484 = vpop.f32.mrf.mxu0
  %v485 = vadd.f32 0.0, %v484
  %v486 = vpop.f32.mrf.mxu0
  %v487 = vadd.f32 0.0, %v486
  %488 = vmatmul.bf16.gmra.mxu0 %v338
  %v489 = vpop.f32.mrf.mxu0
  %v490 = vadd.f32 0.0, %v489
  %v491 = vpop.f32.mrf.mxu0
  %v492 = vadd.f32 0.0, %v491
  %493 = vmatmul.bf16.gmra.mxu0 %v341
  %v494 = vpop.f32.mrf.mxu0
  %v495 = vadd.f32 0.0, %v494
  %v496 = vpop.f32.mrf.mxu0
  %v497 = vadd.f32 0.0, %v496
  %498 = vmatmul.bf16.gmra.mxu0 %v344
  %v499 = vpop.f32.mrf.mxu0
  %v500 = vadd.f32 0.0, %v499
  %v501 = vpop.f32.mrf.mxu0
  %v502 = vadd.f32 0.0, %v501
  %503 = vmatmul.bf16.gmra.mxu0 %v347
  %v504 = vpop.f32.mrf.mxu0
  %v505 = vadd.f32 0.0, %v504
  %v506 = vpop.f32.mrf.mxu0
  %v507 = vadd.f32 0.0, %v506
  %508 = vmatmul.bf16.gmra.mxu0 %v350
  %v509 = vpop.f32.mrf.mxu0
  %v510 = vadd.f32 0.0, %v509
  %v511 = vpop.f32.mrf.mxu0
  %v512 = vadd.f32 0.0, %v511
  %513 = vmatmul.bf16.gmra.mxu0 %v353
  %v514 = vpop.f32.mrf.mxu0
  %v515 = vadd.f32 0.0, %v514
  %v516 = vpop.f32.mrf.mxu0
  %v517 = vadd.f32 0.0, %v516
  %518 = vmatmul.bf16.gmra.mxu0 %v356
  %v519 = vpop.f32.mrf.mxu0
  %v520 = vadd.f32 0.0, %v519
  %v521 = vpop.f32.mrf.mxu0
  %v522 = vadd.f32 0.0, %v521
  %523 = vmatmul.bf16.gmra.mxu0 %v359
  %v524 = vpop.f32.mrf.mxu0
  %v525 = vadd.f32 0.0, %v524
  %v526 = vpop.f32.mrf.mxu0
  %v527 = vadd.f32 0.0, %v526
  %528 = vmatmul.bf16.gmra.mxu0 %v362
  %v529 = vpop.f32.mrf.mxu0
  %v530 = vadd.f32 0.0, %v529
  %v531 = vpop.f32.mrf.mxu0
  %v532 = vadd.f32 0.0, %v531
  %533 = vmatmul.bf16.gmra.mxu0 %v365
  %v534 = vpop.f32.mrf.mxu0
  %v535 = vadd.f32 0.0, %v534
  %v536 = vpop.f32.mrf.mxu0
  %v537 = vadd.f32 0.0, %v536
  %538 = vmatmul.bf16.gmra.mxu0 %v368
  %v539 = vpop.f32.mrf.mxu0
  %v540 = vadd.f32 0.0, %v539
  %v541 = vpop.f32.mrf.mxu0
  %v542 = vadd.f32 0.0, %v541
  %543 = vmatmul.bf16.gmra.mxu0 %v371
  %v544 = vpop.f32.mrf.mxu0
  %v545 = vadd.f32 0.0, %v544
  %v546 = vpop.f32.mrf.mxu0
  %v547 = vadd.f32 0.0, %v546
  %548 = vmatmul.bf16.gmra.mxu0 %v374
  %v549 = vpop.f32.mrf.mxu0
  %v550 = vadd.f32 0.0, %v549
  %v551 = vpop.f32.mrf.mxu0
  %v552 = vadd.f32 0.0, %v551
  %553 = vdwg.mxu0
  %v566 = vunpack.c.l.b16 %v96
  %v567 = vunpack.c.h.b16 %v96
  %v568 = vunpack.c.l.b16 %v97
  %v569 = vunpack.c.h.b16 %v97
  %v570 = vunpack.c.l.b16 %v98
  %v571 = vunpack.c.h.b16 %v98
  %v572 = vunpack.c.l.b16 %v99
  %v573 = vunpack.c.h.b16 %v99
  %v574 = vunpack.c.l.b16 %v100
  %v575 = vunpack.c.h.b16 %v100
  %v576 = vunpack.c.l.b16 %v101
  %v577 = vunpack.c.h.b16 %v101
  %v578 = vunpack.c.l.b16 %v102
  %v579 = vunpack.c.h.b16 %v102
  %v580 = vunpack.c.l.b16 %v103
  %v581 = vunpack.c.h.b16 %v103
  %v582 = vunpack.c.l.b16 %v104
  %v583 = vunpack.c.h.b16 %v104
  %v584 = vunpack.c.l.b16 %v105
  %v585 = vunpack.c.h.b16 %v105
  %v586 = vunpack.c.l.b16 %v106
  %v587 = vunpack.c.h.b16 %v106
  %v588 = vunpack.c.l.b16 %v107
  %v589 = vunpack.c.h.b16 %v107
  %v590 = vpack.c.b16 %v568, %v566
  %v591 = vpack.c.b16 %v569, %v567
  %v592 = vpack.c.b16 %v572, %v570
  %v593 = vpack.c.b16 %v573, %v571
  %v594 = vpack.c.b16 %v576, %v574
  %v595 = vpack.c.b16 %v577, %v575
  %v596 = vpack.c.b16 %v580, %v578
  %v597 = vpack.c.b16 %v581, %v579
  %v598 = vpack.c.b16 %v584, %v582
  %v599 = vpack.c.b16 %v585, %v583
  %v600 = vpack.c.b16 %v588, %v586
  %v601 = vpack.c.b16 %v589, %v587
  %v615 = vsel %vm327, %v80, 0
  %v618 = vsel %vm327, %v81, 0
  %v621 = vsel %vm327, %v82, 0
  %v624 = vsel %vm327, %v83, 0
  %v627 = vsel %vm327, %v84, 0
  %v630 = vsel %vm327, %v85, 0
  %v633 = vsel %vm327, %v86, 0
  %v636 = vsel %vm327, %v87, 0
  %v639 = vsel %vm327, %v88, 0
  %v642 = vsel %vm327, %v89, 0
  %v645 = vsel %vm327, %v90, 0
  %v648 = vsel %vm327, %v91, 0
  %v651 = vsel %vm327, %v92, 0
  %v654 = vsel %vm327, %v93, 0
  %v657 = vsel %vm327, %v94, 0
  %v660 = vsel %vm327, %v95, 0
  %662 = vmatpush.bf16.msra.mxu0 0
  %663 = vmatpush.bf16.msra.mxu0 0
  %664 = vmatpush.bf16.msra.mxu0 %v600
  %665 = vmatpush.bf16.msra.mxu0 %v598
  %666 = vmatpush.bf16.msra.mxu0 %v596
  %667 = vmatpush.bf16.msra.mxu0 %v594
  %668 = vmatpush.bf16.msra.mxu0 %v592
  %669 = vmatpush.bf16.msra.mxu0 %v590
  %670 = vmatmul.bf16.gmra.mxu0 %v615
  %v671 = vpop.f32.mrf.mxu0
  %v672 = vadd.f32 %v386, %v671
  %v673 = vpop.f32.mrf.mxu0
  %v674 = vadd.f32 %v388, %v673
  %675 = vmatmul.bf16.gmra.mxu0 %v618
  %v676 = vpop.f32.mrf.mxu0
  %v677 = vadd.f32 %v391, %v676
  %v678 = vpop.f32.mrf.mxu0
  %v679 = vadd.f32 %v393, %v678
  %680 = vmatmul.bf16.gmra.mxu0 %v621
  %v681 = vpop.f32.mrf.mxu0
  %v682 = vadd.f32 %v396, %v681
  %v683 = vpop.f32.mrf.mxu0
  %v684 = vadd.f32 %v398, %v683
  %685 = vmatmul.bf16.gmra.mxu0 %v624
  %v686 = vpop.f32.mrf.mxu0
  %v687 = vadd.f32 %v401, %v686
  %v688 = vpop.f32.mrf.mxu0
  %v689 = vadd.f32 %v403, %v688
  %690 = vmatmul.bf16.gmra.mxu0 %v627
  %v691 = vpop.f32.mrf.mxu0
  %v692 = vadd.f32 %v406, %v691
  %v693 = vpop.f32.mrf.mxu0
  %v694 = vadd.f32 %v408, %v693
  %695 = vmatmul.bf16.gmra.mxu0 %v630
  %v696 = vpop.f32.mrf.mxu0
  %v697 = vadd.f32 %v411, %v696
  %v698 = vpop.f32.mrf.mxu0
  %v699 = vadd.f32 %v413, %v698
  %700 = vmatmul.bf16.gmra.mxu0 %v633
  %v701 = vpop.f32.mrf.mxu0
  %v702 = vadd.f32 %v416, %v701
  %v703 = vpop.f32.mrf.mxu0
  %v704 = vadd.f32 %v418, %v703
  %705 = vmatmul.bf16.gmra.mxu0 %v636
  %v706 = vpop.f32.mrf.mxu0
  %v707 = vadd.f32 %v421, %v706
  %v708 = vpop.f32.mrf.mxu0
  %v709 = vadd.f32 %v423, %v708
  %710 = vmatmul.bf16.gmra.mxu0 %v639
  %v711 = vpop.f32.mrf.mxu0
  %v712 = vadd.f32 %v426, %v711
  %v713 = vpop.f32.mrf.mxu0
  %v714 = vadd.f32 %v428, %v713
  %715 = vmatmul.bf16.gmra.mxu0 %v642
  %v716 = vpop.f32.mrf.mxu0
  %v717 = vadd.f32 %v431, %v716
  %v718 = vpop.f32.mrf.mxu0
  %v719 = vadd.f32 %v433, %v718
  %720 = vmatmul.bf16.gmra.mxu0 %v645
  %v721 = vpop.f32.mrf.mxu0
  %v722 = vadd.f32 %v436, %v721
  %v723 = vpop.f32.mrf.mxu0
  %v724 = vadd.f32 %v438, %v723
  %725 = vmatmul.bf16.gmra.mxu0 %v648
  %v726 = vpop.f32.mrf.mxu0
  %v727 = vadd.f32 %v441, %v726
  %v728 = vpop.f32.mrf.mxu0
  %v729 = vadd.f32 %v443, %v728
  %730 = vmatmul.bf16.gmra.mxu0 %v651
  %v731 = vpop.f32.mrf.mxu0
  %v732 = vadd.f32 %v446, %v731
  %v733 = vpop.f32.mrf.mxu0
  %v734 = vadd.f32 %v448, %v733
  %735 = vmatmul.bf16.gmra.mxu0 %v654
  %v736 = vpop.f32.mrf.mxu0
  %v737 = vadd.f32 %v451, %v736
  %v738 = vpop.f32.mrf.mxu0
  %v739 = vadd.f32 %v453, %v738
  %740 = vmatmul.bf16.gmra.mxu0 %v657
  %v741 = vpop.f32.mrf.mxu0
  %v742 = vadd.f32 %v456, %v741
  %v743 = vpop.f32.mrf.mxu0
  %v744 = vadd.f32 %v458, %v743
  %745 = vmatmul.bf16.gmra.mxu0 %v660
  %v746 = vpop.f32.mrf.mxu0
  %v747 = vadd.f32 %v461, %v746
  %v748 = vpop.f32.mrf.mxu0
  %v749 = vadd.f32 %v463, %v748
  %750 = vdwg.mxu0
  %751 = vmatpush.bf16.msra.mxu0 0
  %752 = vmatpush.bf16.msra.mxu0 0
  %753 = vmatpush.bf16.msra.mxu0 %v601
  %754 = vmatpush.bf16.msra.mxu0 %v599
  %755 = vmatpush.bf16.msra.mxu0 %v597
  %756 = vmatpush.bf16.msra.mxu0 %v595
  %757 = vmatpush.bf16.msra.mxu0 %v593
  %758 = vmatpush.bf16.msra.mxu0 %v591
  %759 = vmatmul.bf16.gmra.mxu0 %v615
  %v760 = vpop.f32.mrf.mxu0
  %v761 = vadd.f32 %v475, %v760
  %v762 = vpop.f32.mrf.mxu0
  %v763 = vadd.f32 %v477, %v762
  %764 = vmatmul.bf16.gmra.mxu0 %v618
  %v765 = vpop.f32.mrf.mxu0
  %v766 = vadd.f32 %v480, %v765
  %v767 = vpop.f32.mrf.mxu0
  %v768 = vadd.f32 %v482, %v767
  %769 = vmatmul.bf16.gmra.mxu0 %v621
  %v770 = vpop.f32.mrf.mxu0
  %v771 = vadd.f32 %v485, %v770
  %v772 = vpop.f32.mrf.mxu0
  %v773 = vadd.f32 %v487, %v772
  %774 = vmatmul.bf16.gmra.mxu0 %v624
  %v775 = vpop.f32.mrf.mxu0
  %v776 = vadd.f32 %v490, %v775
  %v777 = vpop.f32.mrf.mxu0
  %v778 = vadd.f32 %v492, %v777
  %779 = vmatmul.bf16.gmra.mxu0 %v627
  %v780 = vpop.f32.mrf.mxu0
  %v781 = vadd.f32 %v495, %v780
  %v782 = vpop.f32.mrf.mxu0
  %v783 = vadd.f32 %v497, %v782
  %784 = vmatmul.bf16.gmra.mxu0 %v630
  %v785 = vpop.f32.mrf.mxu0
  %v786 = vadd.f32 %v500, %v785
  %v787 = vpop.f32.mrf.mxu0
  %v788 = vadd.f32 %v502, %v787
  %789 = vmatmul.bf16.gmra.mxu0 %v633
  %v790 = vpop.f32.mrf.mxu0
  %v791 = vadd.f32 %v505, %v790
  %v792 = vpop.f32.mrf.mxu0
  %v793 = vadd.f32 %v507, %v792
  %794 = vmatmul.bf16.gmra.mxu0 %v636
  %v795 = vpop.f32.mrf.mxu0
  %v796 = vadd.f32 %v510, %v795
  %v797 = vpop.f32.mrf.mxu0
  %v798 = vadd.f32 %v512, %v797
  %799 = vmatmul.bf16.gmra.mxu0 %v639
  %v800 = vpop.f32.mrf.mxu0
  %v801 = vadd.f32 %v515, %v800
  %v802 = vpop.f32.mrf.mxu0
  %v803 = vadd.f32 %v517, %v802
  %804 = vmatmul.bf16.gmra.mxu0 %v642
  %v805 = vpop.f32.mrf.mxu0
  %v806 = vadd.f32 %v520, %v805
  %v807 = vpop.f32.mrf.mxu0
  %v808 = vadd.f32 %v522, %v807
  %809 = vmatmul.bf16.gmra.mxu0 %v645
  %v810 = vpop.f32.mrf.mxu0
  %v811 = vadd.f32 %v525, %v810
  %v812 = vpop.f32.mrf.mxu0
  %v813 = vadd.f32 %v527, %v812
  %814 = vmatmul.bf16.gmra.mxu0 %v648
  %v815 = vpop.f32.mrf.mxu0
  %v816 = vadd.f32 %v530, %v815
  %v817 = vpop.f32.mrf.mxu0
  %v818 = vadd.f32 %v532, %v817
  %819 = vmatmul.bf16.gmra.mxu0 %v651
  %v820 = vpop.f32.mrf.mxu0
  %v821 = vadd.f32 %v535, %v820
  %v822 = vpop.f32.mrf.mxu0
  %v823 = vadd.f32 %v537, %v822
  %824 = vmatmul.bf16.gmra.mxu0 %v654
  %v825 = vpop.f32.mrf.mxu0
  %v826 = vadd.f32 %v540, %v825
  %v827 = vpop.f32.mrf.mxu0
  %v828 = vadd.f32 %v542, %v827
  %829 = vmatmul.bf16.gmra.mxu0 %v657
  %v830 = vpop.f32.mrf.mxu0
  %v831 = vadd.f32 %v545, %v830
  %v832 = vpop.f32.mrf.mxu0
  %v833 = vadd.f32 %v547, %v832
  %834 = vmatmul.bf16.gmra.mxu0 %v660
  %v835 = vpop.f32.mrf.mxu0
  %v836 = vadd.f32 %v550, %v835
  %v837 = vpop.f32.mrf.mxu0
  %v838 = vadd.f32 %v552, %v837
  %839 = vdwg.mxu0
  %vm840 = vcmask 1045504
  %v841 = vrot.slane %v48, 2
  %v842 = vrot.slane %v49, 2
  %v843 = vsel %vm840, %v841, %v842
  %v844 = vrot.slane %v50, 2
  %v845 = vsel %vm840, %v842, %v844
  %v846 = vrot.slane %v51, 2
  %v847 = vsel %vm840, %v844, %v846
  %v848 = vrot.slane %v52, 2
  %v849 = vsel %vm840, %v846, %v848
  %v850 = vrot.slane %v53, 2
  %v851 = vsel %vm840, %v848, %v850
  %v852 = vrot.slane %v54, 2
  %v853 = vsel %vm840, %v850, %v852
  %v854 = vrot.slane %v55, 2
  %v855 = vsel %vm840, %v852, %v854
  %v856 = vrot.slane %v56, 2
  %v857 = vsel %vm840, %v854, %v856
  %v858 = vrot.slane %v57, 2
  %v859 = vsel %vm840, %v856, %v858
  %v860 = vrot.slane %v58, 2
  %v861 = vsel %vm840, %v858, %v860
  %v862 = vrot.slane %v59, 2
  %v863 = vsel %vm840, %v860, %v862
  %v864 = vrot.slane %v60, 2
  %v865 = vsel %vm840, %v862, %v864
  %v866 = vrot.slane %v61, 2
  %v867 = vsel %vm840, %v864, %v866
  %v868 = vrot.slane %v62, 2
  %v869 = vsel %vm840, %v866, %v868
  %v870 = vrot.slane %v63, 2
  %v871 = vsel %vm840, %v868, %v870
  %v872 = vrot.slane %v64, 2
  %v873 = vsel %vm840, %v870, %v872
  %v874 = vrot.slane %v65, 2
  %v875 = vsel %vm840, %v872, %v874
  %v876 = vrot.slane %v66, 2
  %v877 = vsel %vm840, %v874, %v876
  %v878 = vrot.slane %v67, 2
  %v879 = vsel %vm840, %v876, %v878
  %v880 = vrot.slane %v68, 2
  %v881 = vsel %vm840, %v878, %v880
  %v882 = vrot.slane %v69, 2
  %v883 = vsel %vm840, %v880, %v882
  %v884 = vrot.slane %v70, 2
  %v885 = vsel %vm840, %v882, %v884
  %v886 = vrot.slane %v71, 2
  %v887 = vsel %vm840, %v884, %v886
  %v888 = vrot.slane %v72, 2
  %v889 = vsel %vm840, %v886, %v888
  %v890 = vrot.slane %v73, 2
  %v891 = vsel %vm840, %v888, %v890
  %v892 = vrot.slane %v74, 2
  %v893 = vsel %vm840, %v890, %v892
  %v894 = vrot.slane %v75, 2
  %v895 = vsel %vm840, %v892, %v894
  %v896 = vrot.slane %v76, 2
  %v897 = vsel %vm840, %v894, %v896
  %v898 = vrot.slane %v77, 2
  %v899 = vsel %vm840, %v896, %v898
  %v900 = vrot.slane %v78, 2
  %v901 = vsel %vm840, %v898, %v900
  %v902 = vrot.slane %v79, 2
  %v903 = vsel %vm840, %v900, %v902
  %v937 = vsel %vm840, %v902, %v841
  %v938 = vpack.c.bf16 %v845, %v843
  %v939 = vpack.c.bf16 %v849, %v847
  %v940 = vpack.c.bf16 %v853, %v851
  %v941 = vpack.c.bf16 %v857, %v855
  %v942 = vpack.c.bf16 %v861, %v859
  %v943 = vpack.c.bf16 %v865, %v863
  %v944 = vpack.c.bf16 %v869, %v867
  %v945 = vpack.c.bf16 %v873, %v871
  %v946 = vpack.c.bf16 %v877, %v875
  %v947 = vpack.c.bf16 %v881, %v879
  %v948 = vpack.c.bf16 %v885, %v883
  %v949 = vpack.c.bf16 %v889, %v887
  %v950 = vpack.c.bf16 %v893, %v891
  %v951 = vpack.c.bf16 %v897, %v895
  %v952 = vpack.c.bf16 %v901, %v899
  %v953 = vpack.c.bf16 %v937, %v903
  %s954 = scalar_lea.vmem %s1, 192
  %v955 = vld [vmem:[%s954] sm:$0xff]
  %v956 = vld [vmem:[%s954 + $0x8] sm:$0xff]
  %v957 = vld [vmem:[%s954 + $0x10] sm:$0xff]
  %v958 = vld [vmem:[%s954 + $0x18] sm:$0xff]
  %v959 = vld [vmem:[%s954 + $0x20] sm:$0xff]
  %v960 = vld [vmem:[%s954 + $0x28] sm:$0xff]
  %v961 = vld [vmem:[%s954 + $0x30] sm:$0xff]
  %v962 = vld [vmem:[%s954 + $0x38] sm:$0xff]
  %v963 = vld [vmem:[%s954 + $0x40] sm:$0xff]
  %v964 = vld [vmem:[%s954 + $0x48] sm:$0xff]
  %v965 = vld [vmem:[%s954 + $0x50] sm:$0xff]
  %v966 = vld [vmem:[%s954 + $0x58] sm:$0xff]
  %v979 = vunpack.c.l.b16 %v955
  %v980 = vunpack.c.h.b16 %v955
  %v981 = vunpack.c.l.b16 %v956
  %v982 = vunpack.c.h.b16 %v956
  %v983 = vunpack.c.l.b16 %v957
  %v984 = vunpack.c.h.b16 %v957
  %v985 = vunpack.c.l.b16 %v958
  %v986 = vunpack.c.h.b16 %v958
  %v987 = vunpack.c.l.b16 %v959
  %v988 = vunpack.c.h.b16 %v959
  %v989 = vunpack.c.l.b16 %v960
  %v990 = vunpack.c.h.b16 %v960
  %v991 = vunpack.c.l.b16 %v961
  %v992 = vunpack.c.h.b16 %v961
  %v993 = vunpack.c.l.b16 %v962
  %v994 = vunpack.c.h.b16 %v962
  %v995 = vunpack.c.l.b16 %v963
  %v996 = vunpack.c.h.b16 %v963
  %v997 = vunpack.c.l.b16 %v964
  %v998 = vunpack.c.h.b16 %v964
  %v999 = vunpack.c.l.b16 %v965
  %v1000 = vunpack.c.h.b16 %v965
  %v1001 = vunpack.c.l.b16 %v966
  %v1002 = vunpack.c.h.b16 %v966
  %v1003 = vpack.c.b16 %v981, %v979
  %v1004 = vpack.c.b16 %v982, %v980
  %v1005 = vpack.c.b16 %v985, %v983
  %v1006 = vpack.c.b16 %v986, %v984
  %v1007 = vpack.c.b16 %v989, %v987
  %v1008 = vpack.c.b16 %v990, %v988
  %v1009 = vpack.c.b16 %v993, %v991
  %v1010 = vpack.c.b16 %v994, %v992
  %v1011 = vpack.c.b16 %v997, %v995
  %v1012 = vpack.c.b16 %v998, %v996
  %v1013 = vpack.c.b16 %v1001, %v999
  %v1014 = vpack.c.b16 %v1002, %v1000
  %v1028 = vsel %vm327, %v938, 0
  %v1031 = vsel %vm327, %v939, 0
  %v1034 = vsel %vm327, %v940, 0
  %v1037 = vsel %vm327, %v941, 0
  %v1040 = vsel %vm327, %v942, 0
  %v1043 = vsel %vm327, %v943, 0
  %v1046 = vsel %vm327, %v944, 0
  %v1049 = vsel %vm327, %v945, 0
  %v1052 = vsel %vm327, %v946, 0
  %v1055 = vsel %vm327, %v947, 0
  %v1058 = vsel %vm327, %v948, 0
  %v1061 = vsel %vm327, %v949, 0
  %v1064 = vsel %vm327, %v950, 0
  %v1067 = vsel %vm327, %v951, 0
  %v1070 = vsel %vm327, %v952, 0
  %v1073 = vsel %vm327, %v953, 0
  %1075 = vmatpush.bf16.msra.mxu0 0
  %1076 = vmatpush.bf16.msra.mxu0 0
  %1077 = vmatpush.bf16.msra.mxu0 %v1013
  %1078 = vmatpush.bf16.msra.mxu0 %v1011
  %1079 = vmatpush.bf16.msra.mxu0 %v1009
  %1080 = vmatpush.bf16.msra.mxu0 %v1007
  %1081 = vmatpush.bf16.msra.mxu0 %v1005
  %1082 = vmatpush.bf16.msra.mxu0 %v1003
  %1083 = vmatmul.bf16.gmra.mxu0 %v1028
  %v1084 = vpop.f32.mrf.mxu0
  %v1085 = vadd.f32 0.0, %v1084
  %v1086 = vpop.f32.mrf.mxu0
  %v1087 = vadd.f32 0.0, %v1086
  %1088 = vmatmul.bf16.gmra.mxu0 %v1031
  %v1089 = vpop.f32.mrf.mxu0
  %v1090 = vadd.f32 0.0, %v1089
  %v1091 = vpop.f32.mrf.mxu0
  %v1092 = vadd.f32 0.0, %v1091
  %1093 = vmatmul.bf16.gmra.mxu0 %v1034
  %v1094 = vpop.f32.mrf.mxu0
  %v1095 = vadd.f32 0.0, %v1094
  %v1096 = vpop.f32.mrf.mxu0
  %v1097 = vadd.f32 0.0, %v1096
  %1098 = vmatmul.bf16.gmra.mxu0 %v1037
  %v1099 = vpop.f32.mrf.mxu0
  %v1100 = vadd.f32 0.0, %v1099
  %v1101 = vpop.f32.mrf.mxu0
  %v1102 = vadd.f32 0.0, %v1101
  %1103 = vmatmul.bf16.gmra.mxu0 %v1040
  %v1104 = vpop.f32.mrf.mxu0
  %v1105 = vadd.f32 0.0, %v1104
  %v1106 = vpop.f32.mrf.mxu0
  %v1107 = vadd.f32 0.0, %v1106
  %1108 = vmatmul.bf16.gmra.mxu0 %v1043
  %v1109 = vpop.f32.mrf.mxu0
  %v1110 = vadd.f32 0.0, %v1109
  %v1111 = vpop.f32.mrf.mxu0
  %v1112 = vadd.f32 0.0, %v1111
  %1113 = vmatmul.bf16.gmra.mxu0 %v1046
  %v1114 = vpop.f32.mrf.mxu0
  %v1115 = vadd.f32 0.0, %v1114
  %v1116 = vpop.f32.mrf.mxu0
  %v1117 = vadd.f32 0.0, %v1116
  %1118 = vmatmul.bf16.gmra.mxu0 %v1049
  %v1119 = vpop.f32.mrf.mxu0
  %v1120 = vadd.f32 0.0, %v1119
  %v1121 = vpop.f32.mrf.mxu0
  %v1122 = vadd.f32 0.0, %v1121
  %1123 = vmatmul.bf16.gmra.mxu0 %v1052
  %v1124 = vpop.f32.mrf.mxu0
  %v1125 = vadd.f32 0.0, %v1124
  %v1126 = vpop.f32.mrf.mxu0
  %v1127 = vadd.f32 0.0, %v1126
  %1128 = vmatmul.bf16.gmra.mxu0 %v1055
  %v1129 = vpop.f32.mrf.mxu0
  %v1130 = vadd.f32 0.0, %v1129
  %v1131 = vpop.f32.mrf.mxu0
  %v1132 = vadd.f32 0.0, %v1131
  %1133 = vmatmul.bf16.gmra.mxu0 %v1058
  %v1134 = vpop.f32.mrf.mxu0
  %v1135 = vadd.f32 0.0, %v1134
  %v1136 = vpop.f32.mrf.mxu0
  %v1137 = vadd.f32 0.0, %v1136
  %1138 = vmatmul.bf16.gmra.mxu0 %v1061
  %v1139 = vpop.f32.mrf.mxu0
  %v1140 = vadd.f32 0.0, %v1139
  %v1141 = vpop.f32.mrf.mxu0
  %v1142 = vadd.f32 0.0, %v1141
  %1143 = vmatmul.bf16.gmra.mxu0 %v1064
  %v1144 = vpop.f32.mrf.mxu0
  %v1145 = vadd.f32 0.0, %v1144
  %v1146 = vpop.f32.mrf.mxu0
  %v1147 = vadd.f32 0.0, %v1146
  %1148 = vmatmul.bf16.gmra.mxu0 %v1067
  %v1149 = vpop.f32.mrf.mxu0
  %v1150 = vadd.f32 0.0, %v1149
  %v1151 = vpop.f32.mrf.mxu0
  %v1152 = vadd.f32 0.0, %v1151
  %1153 = vmatmul.bf16.gmra.mxu0 %v1070
  %v1154 = vpop.f32.mrf.mxu0
  %v1155 = vadd.f32 0.0, %v1154
  %v1156 = vpop.f32.mrf.mxu0
  %v1157 = vadd.f32 0.0, %v1156
  %1158 = vmatmul.bf16.gmra.mxu0 %v1073
  %v1159 = vpop.f32.mrf.mxu0
  %v1160 = vadd.f32 0.0, %v1159
  %v1161 = vpop.f32.mrf.mxu0
  %v1162 = vadd.f32 0.0, %v1161
  %1163 = vdwg.mxu0
  %1164 = vmatpush.bf16.msra.mxu0 0
  %1165 = vmatpush.bf16.msra.mxu0 0
  %1166 = vmatpush.bf16.msra.mxu0 %v1014
  %1167 = vmatpush.bf16.msra.mxu0 %v1012
  %1168 = vmatpush.bf16.msra.mxu0 %v1010
  %1169 = vmatpush.bf16.msra.mxu0 %v1008
  %1170 = vmatpush.bf16.msra.mxu0 %v1006
  %1171 = vmatpush.bf16.msra.mxu0 %v1004
  %1172 = vmatmul.bf16.gmra.mxu0 %v1028
  %v1173 = vpop.f32.mrf.mxu0
  %v1174 = vadd.f32 0.0, %v1173
  %v1175 = vpop.f32.mrf.mxu0
  %v1176 = vadd.f32 0.0, %v1175
  %1177 = vmatmul.bf16.gmra.mxu0 %v1031
  %v1178 = vpop.f32.mrf.mxu0
  %v1179 = vadd.f32 0.0, %v1178
  %v1180 = vpop.f32.mrf.mxu0
  %v1181 = vadd.f32 0.0, %v1180
  %1182 = vmatmul.bf16.gmra.mxu0 %v1034
  %v1183 = vpop.f32.mrf.mxu0
  %v1184 = vadd.f32 0.0, %v1183
  %v1185 = vpop.f32.mrf.mxu0
  %v1186 = vadd.f32 0.0, %v1185
  %1187 = vmatmul.bf16.gmra.mxu0 %v1037
  %v1188 = vpop.f32.mrf.mxu0
  %v1189 = vadd.f32 0.0, %v1188
  %v1190 = vpop.f32.mrf.mxu0
  %v1191 = vadd.f32 0.0, %v1190
  %1192 = vmatmul.bf16.gmra.mxu0 %v1040
  %v1193 = vpop.f32.mrf.mxu0
  %v1194 = vadd.f32 0.0, %v1193
  %v1195 = vpop.f32.mrf.mxu0
  %v1196 = vadd.f32 0.0, %v1195
  %1197 = vmatmul.bf16.gmra.mxu0 %v1043
  %v1198 = vpop.f32.mrf.mxu0
  %v1199 = vadd.f32 0.0, %v1198
  %v1200 = vpop.f32.mrf.mxu0
  %v1201 = vadd.f32 0.0, %v1200
  %1202 = vmatmul.bf16.gmra.mxu0 %v1046
  %v1203 = vpop.f32.mrf.mxu0
  %v1204 = vadd.f32 0.0, %v1203
  %v1205 = vpop.f32.mrf.mxu0
  %v1206 = vadd.f32 0.0, %v1205
  %1207 = vmatmul.bf16.gmra.mxu0 %v1049
  %v1208 = vpop.f32.mrf.mxu0
  %v1209 = vadd.f32 0.0, %v1208
  %v1210 = vpop.f32.mrf.mxu0
  %v1211 = vadd.f32 0.0, %v1210
  %1212 = vmatmul.bf16.gmra.mxu0 %v1052
  %v1213 = vpop.f32.mrf.mxu0
  %v1214 = vadd.f32 0.0, %v1213
  %v1215 = vpop.f32.mrf.mxu0
  %v1216 = vadd.f32 0.0, %v1215
  %1217 = vmatmul.bf16.gmra.mxu0 %v1055
  %v1218 = vpop.f32.mrf.mxu0
  %v1219 = vadd.f32 0.0, %v1218
  %v1220 = vpop.f32.mrf.mxu0
  %v1221 = vadd.f32 0.0, %v1220
  %1222 = vmatmul.bf16.gmra.mxu0 %v1058
  %v1223 = vpop.f32.mrf.mxu0
  %v1224 = vadd.f32 0.0, %v1223
  %v1225 = vpop.f32.mrf.mxu0
  %v1226 = vadd.f32 0.0, %v1225
  %1227 = vmatmul.bf16.gmra.mxu0 %v1061
  %v1228 = vpop.f32.mrf.mxu0
  %v1229 = vadd.f32 0.0, %v1228
  %v1230 = vpop.f32.mrf.mxu0
  %v1231 = vadd.f32 0.0, %v1230
  %1232 = vmatmul.bf16.gmra.mxu0 %v1064
  %v1233 = vpop.f32.mrf.mxu0
  %v1234 = vadd.f32 0.0, %v1233
  %v1235 = vpop.f32.mrf.mxu0
  %v1236 = vadd.f32 0.0, %v1235
  %1237 = vmatmul.bf16.gmra.mxu0 %v1067
  %v1238 = vpop.f32.mrf.mxu0
  %v1239 = vadd.f32 0.0, %v1238
  %v1240 = vpop.f32.mrf.mxu0
  %v1241 = vadd.f32 0.0, %v1240
  %1242 = vmatmul.bf16.gmra.mxu0 %v1070
  %v1243 = vpop.f32.mrf.mxu0
  %v1244 = vadd.f32 0.0, %v1243
  %v1245 = vpop.f32.mrf.mxu0
  %v1246 = vadd.f32 0.0, %v1245
  %1247 = vmatmul.bf16.gmra.mxu0 %v1073
  %v1248 = vpop.f32.mrf.mxu0
  %v1249 = vadd.f32 0.0, %v1248
  %v1250 = vpop.f32.mrf.mxu0
  %v1251 = vadd.f32 0.0, %v1250
  %1252 = vdwg.mxu0
  %v1253 = vadd.f32 %v672, %v1085
  %v1254 = vadd.f32 %v761, %v1174
  %v1255 = vadd.f32 %v674, %v1087
  %v1256 = vadd.f32 %v763, %v1176
  %v1257 = vadd.f32 %v677, %v1090
  %v1258 = vadd.f32 %v766, %v1179
  %v1259 = vadd.f32 %v679, %v1092
  %v1260 = vadd.f32 %v768, %v1181
  %v1261 = vadd.f32 %v682, %v1095
  %v1262 = vadd.f32 %v771, %v1184
  %v1263 = vadd.f32 %v684, %v1097
  %v1264 = vadd.f32 %v773, %v1186
  %v1265 = vadd.f32 %v687, %v1100
  %v1266 = vadd.f32 %v776, %v1189
  %v1267 = vadd.f32 %v689, %v1102
  %v1268 = vadd.f32 %v778, %v1191
  %v1269 = vadd.f32 %v692, %v1105
  %v1270 = vadd.f32 %v781, %v1194
  %v1271 = vadd.f32 %v694, %v1107
  %v1272 = vadd.f32 %v783, %v1196
  %v1273 = vadd.f32 %v697, %v1110
  %v1274 = vadd.f32 %v786, %v1199
  %v1275 = vadd.f32 %v699, %v1112
  %v1276 = vadd.f32 %v788, %v1201
  %v1277 = vadd.f32 %v702, %v1115
  %v1278 = vadd.f32 %v791, %v1204
  %v1279 = vadd.f32 %v704, %v1117
  %v1280 = vadd.f32 %v793, %v1206
  %v1281 = vadd.f32 %v707, %v1120
  %v1282 = vadd.f32 %v796, %v1209
  %v1283 = vadd.f32 %v709, %v1122
  %v1284 = vadd.f32 %v798, %v1211
  %v1285 = vadd.f32 %v712, %v1125
  %v1286 = vadd.f32 %v801, %v1214
  %v1287 = vadd.f32 %v714, %v1127
  %v1288 = vadd.f32 %v803, %v1216
  %v1289 = vadd.f32 %v717, %v1130
  %v1290 = vadd.f32 %v806, %v1219
  %v1291 = vadd.f32 %v719, %v1132
  %v1292 = vadd.f32 %v808, %v1221
  %v1293 = vadd.f32 %v722, %v1135
  %v1294 = vadd.f32 %v811, %v1224
  %v1295 = vadd.f32 %v724, %v1137
  %v1296 = vadd.f32 %v813, %v1226
  %v1297 = vadd.f32 %v727, %v1140
  %v1298 = vadd.f32 %v816, %v1229
  %v1299 = vadd.f32 %v729, %v1142
  %v1300 = vadd.f32 %v818, %v1231
  %v1301 = vadd.f32 %v732, %v1145
  %v1302 = vadd.f32 %v821, %v1234
  %v1303 = vadd.f32 %v734, %v1147
  %v1304 = vadd.f32 %v823, %v1236
  %v1305 = vadd.f32 %v737, %v1150
  %v1306 = vadd.f32 %v826, %v1239
  %v1307 = vadd.f32 %v739, %v1152
  %v1308 = vadd.f32 %v828, %v1241
  %v1309 = vadd.f32 %v742, %v1155
  %v1310 = vadd.f32 %v831, %v1244
  %v1311 = vadd.f32 %v744, %v1157
  %v1312 = vadd.f32 %v833, %v1246
  %v1313 = vadd.f32 %v747, %v1160
  %v1314 = vadd.f32 %v836, %v1249
  %v1315 = vadd.f32 %v749, %v1162
  %v1316 = vadd.f32 %v838, %v1251
  %vm1317 = vcmask 1044480
  %v1318 = vrot.slane %v48, 3
  %v1319 = vrot.slane %v49, 3
  %v1320 = vsel %vm1317, %v1318, %v1319
  %v1321 = vrot.slane %v50, 3
  %v1322 = vsel %vm1317, %v1319, %v1321
  %v1323 = vrot.slane %v51, 3
  %v1324 = vsel %vm1317, %v1321, %v1323
  %v1325 = vrot.slane %v52, 3
  %v1326 = vsel %vm1317, %v1323, %v1325
  %v1327 = vrot.slane %v53, 3
  %v1328 = vsel %vm1317, %v1325, %v1327
  %v1329 = vrot.slane %v54, 3
  %v1330 = vsel %vm1317, %v1327, %v1329
  %v1331 = vrot.slane %v55, 3
  %v1332 = vsel %vm1317, %v1329, %v1331
  %v1333 = vrot.slane %v56, 3
  %v1334 = vsel %vm1317, %v1331, %v1333
  %v1335 = vrot.slane %v57, 3
  %v1336 = vsel %vm1317, %v1333, %v1335
  %v1337 = vrot.slane %v58, 3
  %v1338 = vsel %vm1317, %v1335, %v1337
  %v1339 = vrot.slane %v59, 3
  %v1340 = vsel %vm1317, %v1337, %v1339
  %v1341 = vrot.slane %v60, 3
  %v1342 = vsel %vm1317, %v1339, %v1341
  %v1343 = vrot.slane %v61, 3
  %v1344 = vsel %vm1317, %v1341, %v1343
  %v1345 = vrot.slane %v62, 3
  %v1346 = vsel %vm1317, %v1343, %v1345
  %v1347 = vrot.slane %v63, 3
  %v1348 = vsel %vm1317, %v1345, %v1347
  %v1349 = vrot.slane %v64, 3
  %v1350 = vsel %vm1317, %v1347, %v1349
  %v1351 = vrot.slane %v65, 3
  %v1352 = vsel %vm1317, %v1349, %v1351
  %v1353 = vrot.slane %v66, 3
  %v1354 = vsel %vm1317, %v1351, %v1353
  %v1355 = vrot.slane %v67, 3
  %v1356 = vsel %vm1317, %v1353, %v1355
  %v1357 = vrot.slane %v68, 3
  %v1358 = vsel %vm1317, %v1355, %v1357
  %v1359 = vrot.slane %v69, 3
  %v1360 = vsel %vm1317, %v1357, %v1359
  %v1361 = vrot.slane %v70, 3
  %v1362 = vsel %vm1317, %v1359, %v1361
  %v1363 = vrot.slane %v71, 3
  %v1364 = vsel %vm1317, %v1361, %v1363
  %v1365 = vrot.slane %v72, 3
  %v1366 = vsel %vm1317, %v1363, %v1365
  %v1367 = vrot.slane %v73, 3
  %v1368 = vsel %vm1317, %v1365, %v1367
  %v1369 = vrot.slane %v74, 3
  %v1370 = vsel %vm1317, %v1367, %v1369
  %v1371 = vrot.slane %v75, 3
  %v1372 = vsel %vm1317, %v1369, %v1371
  %v1373 = vrot.slane %v76, 3
  %v1374 = vsel %vm1317, %v1371, %v1373
  %v1375 = vrot.slane %v77, 3
  %v1376 = vsel %vm1317, %v1373, %v1375
  %v1377 = vrot.slane %v78, 3
  %v1378 = vsel %vm1317, %v1375, %v1377
  %v1379 = vrot.slane %v79, 3
  %v1380 = vsel %vm1317, %v1377, %v1379
  %v1414 = vsel %vm1317, %v1379, %v1318
  %v1415 = vpack.c.bf16 %v1322, %v1320
  %v1416 = vpack.c.bf16 %v1326, %v1324
  %v1417 = vpack.c.bf16 %v1330, %v1328
  %v1418 = vpack.c.bf16 %v1334, %v1332
  %v1419 = vpack.c.bf16 %v1338, %v1336
  %v1420 = vpack.c.bf16 %v1342, %v1340
  %v1421 = vpack.c.bf16 %v1346, %v1344
  %v1422 = vpack.c.bf16 %v1350, %v1348
  %v1423 = vpack.c.bf16 %v1354, %v1352
  %v1424 = vpack.c.bf16 %v1358, %v1356
  %v1425 = vpack.c.bf16 %v1362, %v1360
  %v1426 = vpack.c.bf16 %v1366, %v1364
  %v1427 = vpack.c.bf16 %v1370, %v1368
  %v1428 = vpack.c.bf16 %v1374, %v1372
  %v1429 = vpack.c.bf16 %v1378, %v1376
  %v1430 = vpack.c.bf16 %v1414, %v1380
  %s1431 = scalar_lea.vmem %s1, 288
  %v1432 = vld [vmem:[%s1431] sm:$0xff]
  %v1433 = vld [vmem:[%s1431 + $0x8] sm:$0xff]
  %v1434 = vld [vmem:[%s1431 + $0x10] sm:$0xff]
  %v1435 = vld [vmem:[%s1431 + $0x18] sm:$0xff]
  %v1436 = vld [vmem:[%s1431 + $0x20] sm:$0xff]
  %v1437 = vld [vmem:[%s1431 + $0x28] sm:$0xff]
  %v1438 = vld [vmem:[%s1431 + $0x30] sm:$0xff]
  %v1439 = vld [vmem:[%s1431 + $0x38] sm:$0xff]
  %v1440 = vld [vmem:[%s1431 + $0x40] sm:$0xff]
  %v1441 = vld [vmem:[%s1431 + $0x48] sm:$0xff]
  %v1442 = vld [vmem:[%s1431 + $0x50] sm:$0xff]
  %v1443 = vld [vmem:[%s1431 + $0x58] sm:$0xff]
  %v1456 = vunpack.c.l.b16 %v1432
  %v1457 = vunpack.c.h.b16 %v1432
  %v1458 = vunpack.c.l.b16 %v1433
  %v1459 = vunpack.c.h.b16 %v1433
  %v1460 = vunpack.c.l.b16 %v1434
  %v1461 = vunpack.c.h.b16 %v1434
  %v1462 = vunpack.c.l.b16 %v1435
  %v1463 = vunpack.c.h.b16 %v1435
  %v1464 = vunpack.c.l.b16 %v1436
  %v1465 = vunpack.c.h.b16 %v1436
  %v1466 = vunpack.c.l.b16 %v1437
  %v1467 = vunpack.c.h.b16 %v1437
  %v1468 = vunpack.c.l.b16 %v1438
  %v1469 = vunpack.c.h.b16 %v1438
  %v1470 = vunpack.c.l.b16 %v1439
  %v1471 = vunpack.c.h.b16 %v1439
  %v1472 = vunpack.c.l.b16 %v1440
  %v1473 = vunpack.c.h.b16 %v1440
  %v1474 = vunpack.c.l.b16 %v1441
  %v1475 = vunpack.c.h.b16 %v1441
  %v1476 = vunpack.c.l.b16 %v1442
  %v1477 = vunpack.c.h.b16 %v1442
  %v1478 = vunpack.c.l.b16 %v1443
  %v1479 = vunpack.c.h.b16 %v1443
  %v1480 = vpack.c.b16 %v1458, %v1456
  %v1481 = vpack.c.b16 %v1459, %v1457
  %v1482 = vpack.c.b16 %v1462, %v1460
  %v1483 = vpack.c.b16 %v1463, %v1461
  %v1484 = vpack.c.b16 %v1466, %v1464
  %v1485 = vpack.c.b16 %v1467, %v1465
  %v1486 = vpack.c.b16 %v1470, %v1468
  %v1487 = vpack.c.b16 %v1471, %v1469
  %v1488 = vpack.c.b16 %v1474, %v1472
  %v1489 = vpack.c.b16 %v1475, %v1473
  %v1490 = vpack.c.b16 %v1478, %v1476
  %v1491 = vpack.c.b16 %v1479, %v1477
  %v1505 = vsel %vm327, %v1415, 0
  %v1508 = vsel %vm327, %v1416, 0
  %v1511 = vsel %vm327, %v1417, 0
  %v1514 = vsel %vm327, %v1418, 0
  %v1517 = vsel %vm327, %v1419, 0
  %v1520 = vsel %vm327, %v1420, 0
  %v1523 = vsel %vm327, %v1421, 0
  %v1526 = vsel %vm327, %v1422, 0
  %v1529 = vsel %vm327, %v1423, 0
  %v1532 = vsel %vm327, %v1424, 0
  %v1535 = vsel %vm327, %v1425, 0
  %v1538 = vsel %vm327, %v1426, 0
  %v1541 = vsel %vm327, %v1427, 0
  %v1544 = vsel %vm327, %v1428, 0
  %v1547 = vsel %vm327, %v1429, 0
  %v1550 = vsel %vm327, %v1430, 0
  %1552 = vmatpush.bf16.msra.mxu0 0
  %1553 = vmatpush.bf16.msra.mxu0 0
  %1554 = vmatpush.bf16.msra.mxu0 %v1490
  %1555 = vmatpush.bf16.msra.mxu0 %v1488
  %1556 = vmatpush.bf16.msra.mxu0 %v1486
  %1557 = vmatpush.bf16.msra.mxu0 %v1484
  %1558 = vmatpush.bf16.msra.mxu0 %v1482
  %1559 = vmatpush.bf16.msra.mxu0 %v1480
  %1560 = vmatmul.bf16.gmra.mxu0 %v1505
  %v1561 = vpop.f32.mrf.mxu0
  %v1562 = vadd.f32 0.0, %v1561
  %v1563 = vpop.f32.mrf.mxu0
  %v1564 = vadd.f32 0.0, %v1563
  %1565 = vmatmul.bf16.gmra.mxu0 %v1508
  %v1566 = vpop.f32.mrf.mxu0
  %v1567 = vadd.f32 0.0, %v1566
  %v1568 = vpop.f32.mrf.mxu0
  %v1569 = vadd.f32 0.0, %v1568
  %1570 = vmatmul.bf16.gmra.mxu0 %v1511
  %v1571 = vpop.f32.mrf.mxu0
  %v1572 = vadd.f32 0.0, %v1571
  %v1573 = vpop.f32.mrf.mxu0
  %v1574 = vadd.f32 0.0, %v1573
  %1575 = vmatmul.bf16.gmra.mxu0 %v1514
  %v1576 = vpop.f32.mrf.mxu0
  %v1577 = vadd.f32 0.0, %v1576
  %v1578 = vpop.f32.mrf.mxu0
  %v1579 = vadd.f32 0.0, %v1578
  %1580 = vmatmul.bf16.gmra.mxu0 %v1517
  %v1581 = vpop.f32.mrf.mxu0
  %v1582 = vadd.f32 0.0, %v1581
  %v1583 = vpop.f32.mrf.mxu0
  %v1584 = vadd.f32 0.0, %v1583
  %1585 = vmatmul.bf16.gmra.mxu0 %v1520
  %v1586 = vpop.f32.mrf.mxu0
  %v1587 = vadd.f32 0.0, %v1586
  %v1588 = vpop.f32.mrf.mxu0
  %v1589 = vadd.f32 0.0, %v1588
  %1590 = vmatmul.bf16.gmra.mxu0 %v1523
  %v1591 = vpop.f32.mrf.mxu0
  %v1592 = vadd.f32 0.0, %v1591
  %v1593 = vpop.f32.mrf.mxu0
  %v1594 = vadd.f32 0.0, %v1593
  %1595 = vmatmul.bf16.gmra.mxu0 %v1526
  %v1596 = vpop.f32.mrf.mxu0
  %v1597 = vadd.f32 0.0, %v1596
  %v1598 = vpop.f32.mrf.mxu0
  %v1599 = vadd.f32 0.0, %v1598
  %1600 = vmatmul.bf16.gmra.mxu0 %v1529
  %v1601 = vpop.f32.mrf.mxu0
  %v1602 = vadd.f32 0.0, %v1601
  %v1603 = vpop.f32.mrf.mxu0
  %v1604 = vadd.f32 0.0, %v1603
  %1605 = vmatmul.bf16.gmra.mxu0 %v1532
  %v1606 = vpop.f32.mrf.mxu0
  %v1607 = vadd.f32 0.0, %v1606
  %v1608 = vpop.f32.mrf.mxu0
  %v1609 = vadd.f32 0.0, %v1608
  %1610 = vmatmul.bf16.gmra.mxu0 %v1535
  %v1611 = vpop.f32.mrf.mxu0
  %v1612 = vadd.f32 0.0, %v1611
  %v1613 = vpop.f32.mrf.mxu0
  %v1614 = vadd.f32 0.0, %v1613
  %1615 = vmatmul.bf16.gmra.mxu0 %v1538
  %v1616 = vpop.f32.mrf.mxu0
  %v1617 = vadd.f32 0.0, %v1616
  %v1618 = vpop.f32.mrf.mxu0
  %v1619 = vadd.f32 0.0, %v1618
  %1620 = vmatmul.bf16.gmra.mxu0 %v1541
  %v1621 = vpop.f32.mrf.mxu0
  %v1622 = vadd.f32 0.0, %v1621
  %v1623 = vpop.f32.mrf.mxu0
  %v1624 = vadd.f32 0.0, %v1623
  %1625 = vmatmul.bf16.gmra.mxu0 %v1544
  %v1626 = vpop.f32.mrf.mxu0
  %v1627 = vadd.f32 0.0, %v1626
  %v1628 = vpop.f32.mrf.mxu0
  %v1629 = vadd.f32 0.0, %v1628
  %1630 = vmatmul.bf16.gmra.mxu0 %v1547
  %v1631 = vpop.f32.mrf.mxu0
  %v1632 = vadd.f32 0.0, %v1631
  %v1633 = vpop.f32.mrf.mxu0
  %v1634 = vadd.f32 0.0, %v1633
  %1635 = vmatmul.bf16.gmra.mxu0 %v1550
  %v1636 = vpop.f32.mrf.mxu0
  %v1637 = vadd.f32 0.0, %v1636
  %v1638 = vpop.f32.mrf.mxu0
  %v1639 = vadd.f32 0.0, %v1638
  %1640 = vdwg.mxu0
  %1641 = vmatpush.bf16.msra.mxu0 0
  %1642 = vmatpush.bf16.msra.mxu0 0
  %1643 = vmatpush.bf16.msra.mxu0 %v1491
  %1644 = vmatpush.bf16.msra.mxu0 %v1489
  %1645 = vmatpush.bf16.msra.mxu0 %v1487
  %1646 = vmatpush.bf16.msra.mxu0 %v1485
  %1647 = vmatpush.bf16.msra.mxu0 %v1483
  %1648 = vmatpush.bf16.msra.mxu0 %v1481
  %1649 = vmatmul.bf16.gmra.mxu0 %v1505
  %v1650 = vpop.f32.mrf.mxu0
  %v1651 = vadd.f32 0.0, %v1650
  %v1652 = vpop.f32.mrf.mxu0
  %v1653 = vadd.f32 0.0, %v1652
  %1654 = vmatmul.bf16.gmra.mxu0 %v1508
  %v1655 = vpop.f32.mrf.mxu0
  %v1656 = vadd.f32 0.0, %v1655
  %v1657 = vpop.f32.mrf.mxu0
  %v1658 = vadd.f32 0.0, %v1657
  %1659 = vmatmul.bf16.gmra.mxu0 %v1511
  %v1660 = vpop.f32.mrf.mxu0
  %v1661 = vadd.f32 0.0, %v1660
  %v1662 = vpop.f32.mrf.mxu0
  %v1663 = vadd.f32 0.0, %v1662
  %1664 = vmatmul.bf16.gmra.mxu0 %v1514
  %v1665 = vpop.f32.mrf.mxu0
  %v1666 = vadd.f32 0.0, %v1665
  %v1667 = vpop.f32.mrf.mxu0
  %v1668 = vadd.f32 0.0, %v1667
  %1669 = vmatmul.bf16.gmra.mxu0 %v1517
  %v1670 = vpop.f32.mrf.mxu0
  %v1671 = vadd.f32 0.0, %v1670
  %v1672 = vpop.f32.mrf.mxu0
  %v1673 = vadd.f32 0.0, %v1672
  %1674 = vmatmul.bf16.gmra.mxu0 %v1520
  %v1675 = vpop.f32.mrf.mxu0
  %v1676 = vadd.f32 0.0, %v1675
  %v1677 = vpop.f32.mrf.mxu0
  %v1678 = vadd.f32 0.0, %v1677
  %1679 = vmatmul.bf16.gmra.mxu0 %v1523
  %v1680 = vpop.f32.mrf.mxu0
  %v1681 = vadd.f32 0.0, %v1680
  %v1682 = vpop.f32.mrf.mxu0
  %v1683 = vadd.f32 0.0, %v1682
  %1684 = vmatmul.bf16.gmra.mxu0 %v1526
  %v1685 = vpop.f32.mrf.mxu0
  %v1686 = vadd.f32 0.0, %v1685
  %v1687 = vpop.f32.mrf.mxu0
  %v1688 = vadd.f32 0.0, %v1687
  %1689 = vmatmul.bf16.gmra.mxu0 %v1529
  %v1690 = vpop.f32.mrf.mxu0
  %v1691 = vadd.f32 0.0, %v1690
  %v1692 = vpop.f32.mrf.mxu0
  %v1693 = vadd.f32 0.0, %v1692
  %1694 = vmatmul.bf16.gmra.mxu0 %v1532
  %v1695 = vpop.f32.mrf.mxu0
  %v1696 = vadd.f32 0.0, %v1695
  %v1697 = vpop.f32.mrf.mxu0
  %v1698 = vadd.f32 0.0, %v1697
  %1699 = vmatmul.bf16.gmra.mxu0 %v1535
  %v1700 = vpop.f32.mrf.mxu0
  %v1701 = vadd.f32 0.0, %v1700
  %v1702 = vpop.f32.mrf.mxu0
  %v1703 = vadd.f32 0.0, %v1702
  %1704 = vmatmul.bf16.gmra.mxu0 %v1538
  %v1705 = vpop.f32.mrf.mxu0
  %v1706 = vadd.f32 0.0, %v1705
  %v1707 = vpop.f32.mrf.mxu0
  %v1708 = vadd.f32 0.0, %v1707
  %1709 = vmatmul.bf16.gmra.mxu0 %v1541
  %v1710 = vpop.f32.mrf.mxu0
  %v1711 = vadd.f32 0.0, %v1710
  %v1712 = vpop.f32.mrf.mxu0
  %v1713 = vadd.f32 0.0, %v1712
  %1714 = vmatmul.bf16.gmra.mxu0 %v1544
  %v1715 = vpop.f32.mrf.mxu0
  %v1716 = vadd.f32 0.0, %v1715
  %v1717 = vpop.f32.mrf.mxu0
  %v1718 = vadd.f32 0.0, %v1717
  %1719 = vmatmul.bf16.gmra.mxu0 %v1547
  %v1720 = vpop.f32.mrf.mxu0
  %v1721 = vadd.f32 0.0, %v1720
  %v1722 = vpop.f32.mrf.mxu0
  %v1723 = vadd.f32 0.0, %v1722
  %1724 = vmatmul.bf16.gmra.mxu0 %v1550
  %v1725 = vpop.f32.mrf.mxu0
  %v1726 = vadd.f32 0.0, %v1725
  %v1727 = vpop.f32.mrf.mxu0
  %v1728 = vadd.f32 0.0, %v1727
  %1729 = vdwg.mxu0
  %v1730 = vadd.f32 %v1253, %v1562
  %v1731 = vadd.f32 %v1254, %v1651
  %v1732 = vadd.f32 %v1255, %v1564
  %v1733 = vadd.f32 %v1256, %v1653
  %v1734 = vadd.f32 %v1257, %v1567
  %v1735 = vadd.f32 %v1258, %v1656
  %v1736 = vadd.f32 %v1259, %v1569
  %v1737 = vadd.f32 %v1260, %v1658
  %v1738 = vadd.f32 %v1261, %v1572
  %v1739 = vadd.f32 %v1262, %v1661
  %v1740 = vadd.f32 %v1263, %v1574
  %v1741 = vadd.f32 %v1264, %v1663
  %v1742 = vadd.f32 %v1265, %v1577
  %v1743 = vadd.f32 %v1266, %v1666
  %v1744 = vadd.f32 %v1267, %v1579
  %v1745 = vadd.f32 %v1268, %v1668
  %v1746 = vadd.f32 %v1269, %v1582
  %v1747 = vadd.f32 %v1270, %v1671
  %v1748 = vadd.f32 %v1271, %v1584
  %v1749 = vadd.f32 %v1272, %v1673
  %v1750 = vadd.f32 %v1273, %v1587
  %v1751 = vadd.f32 %v1274, %v1676
  %v1752 = vadd.f32 %v1275, %v1589
  %v1753 = vadd.f32 %v1276, %v1678
  %v1754 = vadd.f32 %v1277, %v1592
  %v1755 = vadd.f32 %v1278, %v1681
  %v1756 = vadd.f32 %v1279, %v1594
  %v1757 = vadd.f32 %v1280, %v1683
  %v1758 = vadd.f32 %v1281, %v1597
  %v1759 = vadd.f32 %v1282, %v1686
  %v1760 = vadd.f32 %v1283, %v1599
  %v1761 = vadd.f32 %v1284, %v1688
  %v1762 = vadd.f32 %v1285, %v1602
  %v1763 = vadd.f32 %v1286, %v1691
  %v1764 = vadd.f32 %v1287, %v1604
  %v1765 = vadd.f32 %v1288, %v1693
  %v1766 = vadd.f32 %v1289, %v1607
  %v1767 = vadd.f32 %v1290, %v1696
  %v1768 = vadd.f32 %v1291, %v1609
  %v1769 = vadd.f32 %v1292, %v1698
  %v1770 = vadd.f32 %v1293, %v1612
  %v1771 = vadd.f32 %v1294, %v1701
  %v1772 = vadd.f32 %v1295, %v1614
  %v1773 = vadd.f32 %v1296, %v1703
  %v1774 = vadd.f32 %v1297, %v1617
  %v1775 = vadd.f32 %v1298, %v1706
  %v1776 = vadd.f32 %v1299, %v1619
  %v1777 = vadd.f32 %v1300, %v1708
  %v1778 = vadd.f32 %v1301, %v1622
  %v1779 = vadd.f32 %v1302, %v1711
  %v1780 = vadd.f32 %v1303, %v1624
  %v1781 = vadd.f32 %v1304, %v1713
  %v1782 = vadd.f32 %v1305, %v1627
  %v1783 = vadd.f32 %v1306, %v1716
  %v1784 = vadd.f32 %v1307, %v1629
  %v1785 = vadd.f32 %v1308, %v1718
  %v1786 = vadd.f32 %v1309, %v1632
  %v1787 = vadd.f32 %v1310, %v1721
  %v1788 = vadd.f32 %v1311, %v1634
  %v1789 = vadd.f32 %v1312, %v1723
  %v1790 = vadd.f32 %v1313, %v1637
  %v1791 = vadd.f32 %v1314, %v1726
  %v1792 = vadd.f32 %v1315, %v1639
  %v1793 = vadd.f32 %v1316, %v1728
  %vm1794 = vcmask 1043456
  %v1795 = vrot.slane %v48, 4
  %v1796 = vrot.slane %v49, 4
  %v1797 = vsel %vm1794, %v1795, %v1796
  %v1798 = vrot.slane %v50, 4
  %v1799 = vsel %vm1794, %v1796, %v1798
  %v1800 = vrot.slane %v51, 4
  %v1801 = vsel %vm1794, %v1798, %v1800
  %v1802 = vrot.slane %v52, 4
  %v1803 = vsel %vm1794, %v1800, %v1802
  %v1804 = vrot.slane %v53, 4
  %v1805 = vsel %vm1794, %v1802, %v1804
  %v1806 = vrot.slane %v54, 4
  %v1807 = vsel %vm1794, %v1804, %v1806
  %v1808 = vrot.slane %v55, 4
  %v1809 = vsel %vm1794, %v1806, %v1808
  %v1810 = vrot.slane %v56, 4
  %v1811 = vsel %vm1794, %v1808, %v1810
  %v1812 = vrot.slane %v57, 4
  %v1813 = vsel %vm1794, %v1810, %v1812
  %v1814 = vrot.slane %v58, 4
  %v1815 = vsel %vm1794, %v1812, %v1814
  %v1816 = vrot.slane %v59, 4
  %v1817 = vsel %vm1794, %v1814, %v1816
  %v1818 = vrot.slane %v60, 4
  %v1819 = vsel %vm1794, %v1816, %v1818
  %v1820 = vrot.slane %v61, 4
  %v1821 = vsel %vm1794, %v1818, %v1820
  %v1822 = vrot.slane %v62, 4
  %v1823 = vsel %vm1794, %v1820, %v1822
  %v1824 = vrot.slane %v63, 4
  %v1825 = vsel %vm1794, %v1822, %v1824
  %v1826 = vrot.slane %v64, 4
  %v1827 = vsel %vm1794, %v1824, %v1826
  %v1828 = vrot.slane %v65, 4
  %v1829 = vsel %vm1794, %v1826, %v1828
  %v1830 = vrot.slane %v66, 4
  %v1831 = vsel %vm1794, %v1828, %v1830
  %v1832 = vrot.slane %v67, 4
  %v1833 = vsel %vm1794, %v1830, %v1832
  %v1834 = vrot.slane %v68, 4
  %v1835 = vsel %vm1794, %v1832, %v1834
  %v1836 = vrot.slane %v69, 4
  %v1837 = vsel %vm1794, %v1834, %v1836
  %v1838 = vrot.slane %v70, 4
  %v1839 = vsel %vm1794, %v1836, %v1838
  %v1840 = vrot.slane %v71, 4
  %v1841 = vsel %vm1794, %v1838, %v1840
  %v1842 = vrot.slane %v72, 4
  %v1843 = vsel %vm1794, %v1840, %v1842
  %v1844 = vrot.slane %v73, 4
  %v1845 = vsel %vm1794, %v1842, %v1844
  %v1846 = vrot.slane %v74, 4
  %v1847 = vsel %vm1794, %v1844, %v1846
  %v1848 = vrot.slane %v75, 4
  %v1849 = vsel %vm1794, %v1846, %v1848
  %v1850 = vrot.slane %v76, 4
  %v1851 = vsel %vm1794, %v1848, %v1850
  %v1852 = vrot.slane %v77, 4
  %v1853 = vsel %vm1794, %v1850, %v1852
  %v1854 = vrot.slane %v78, 4
  %v1855 = vsel %vm1794, %v1852, %v1854
  %v1856 = vrot.slane %v79, 4
  %v1857 = vsel %vm1794, %v1854, %v1856
  %v1891 = vsel %vm1794, %v1856, %v1795
  %v1892 = vpack.c.bf16 %v1799, %v1797
  %v1893 = vpack.c.bf16 %v1803, %v1801
  %v1894 = vpack.c.bf16 %v1807, %v1805
  %v1895 = vpack.c.bf16 %v1811, %v1809
  %v1896 = vpack.c.bf16 %v1815, %v1813
  %v1897 = vpack.c.bf16 %v1819, %v1817
  %v1898 = vpack.c.bf16 %v1823, %v1821
  %v1899 = vpack.c.bf16 %v1827, %v1825
  %v1900 = vpack.c.bf16 %v1831, %v1829
  %v1901 = vpack.c.bf16 %v1835, %v1833
  %v1902 = vpack.c.bf16 %v1839, %v1837
  %v1903 = vpack.c.bf16 %v1843, %v1841
  %v1904 = vpack.c.bf16 %v1847, %v1845
  %v1905 = vpack.c.bf16 %v1851, %v1849
  %v1906 = vpack.c.bf16 %v1855, %v1853
  %v1907 = vpack.c.bf16 %v1891, %v1857
  %s1908 = scalar_lea.vmem %s1, 384
  %v1909 = vld [vmem:[%s1908] sm:$0xff]
  %v1910 = vld [vmem:[%s1908 + $0x8] sm:$0xff]
  %v1911 = vld [vmem:[%s1908 + $0x10] sm:$0xff]
  %v1912 = vld [vmem:[%s1908 + $0x18] sm:$0xff]
  %v1913 = vld [vmem:[%s1908 + $0x20] sm:$0xff]
  %v1914 = vld [vmem:[%s1908 + $0x28] sm:$0xff]
  %v1915 = vld [vmem:[%s1908 + $0x30] sm:$0xff]
  %v1916 = vld [vmem:[%s1908 + $0x38] sm:$0xff]
  %v1917 = vld [vmem:[%s1908 + $0x40] sm:$0xff]
  %v1918 = vld [vmem:[%s1908 + $0x48] sm:$0xff]
  %v1919 = vld [vmem:[%s1908 + $0x50] sm:$0xff]
  %v1920 = vld [vmem:[%s1908 + $0x58] sm:$0xff]
  %v1933 = vunpack.c.l.b16 %v1909
  %v1934 = vunpack.c.h.b16 %v1909
  %v1935 = vunpack.c.l.b16 %v1910
  %v1936 = vunpack.c.h.b16 %v1910
  %v1937 = vunpack.c.l.b16 %v1911
  %v1938 = vunpack.c.h.b16 %v1911
  %v1939 = vunpack.c.l.b16 %v1912
  %v1940 = vunpack.c.h.b16 %v1912
  %v1941 = vunpack.c.l.b16 %v1913
  %v1942 = vunpack.c.h.b16 %v1913
  %v1943 = vunpack.c.l.b16 %v1914
  %v1944 = vunpack.c.h.b16 %v1914
  %v1945 = vunpack.c.l.b16 %v1915
  %v1946 = vunpack.c.h.b16 %v1915
  %v1947 = vunpack.c.l.b16 %v1916
  %v1948 = vunpack.c.h.b16 %v1916
  %v1949 = vunpack.c.l.b16 %v1917
  %v1950 = vunpack.c.h.b16 %v1917
  %v1951 = vunpack.c.l.b16 %v1918
  %v1952 = vunpack.c.h.b16 %v1918
  %v1953 = vunpack.c.l.b16 %v1919
  %v1954 = vunpack.c.h.b16 %v1919
  %v1955 = vunpack.c.l.b16 %v1920
  %v1956 = vunpack.c.h.b16 %v1920
  %v1957 = vpack.c.b16 %v1935, %v1933
  %v1958 = vpack.c.b16 %v1936, %v1934
  %v1959 = vpack.c.b16 %v1939, %v1937
  %v1960 = vpack.c.b16 %v1940, %v1938
  %v1961 = vpack.c.b16 %v1943, %v1941
  %v1962 = vpack.c.b16 %v1944, %v1942
  %v1963 = vpack.c.b16 %v1947, %v1945
  %v1964 = vpack.c.b16 %v1948, %v1946
  %v1965 = vpack.c.b16 %v1951, %v1949
  %v1966 = vpack.c.b16 %v1952, %v1950
  %v1967 = vpack.c.b16 %v1955, %v1953
  %v1968 = vpack.c.b16 %v1956, %v1954
  %v1982 = vsel %vm327, %v1892, 0
  %v1985 = vsel %vm327, %v1893, 0
  %v1988 = vsel %vm327, %v1894, 0
  %v1991 = vsel %vm327, %v1895, 0
  %v1994 = vsel %vm327, %v1896, 0
  %v1997 = vsel %vm327, %v1897, 0
  %v2000 = vsel %vm327, %v1898, 0
  %v2003 = vsel %vm327, %v1899, 0
  %v2006 = vsel %vm327, %v1900, 0
  %v2009 = vsel %vm327, %v1901, 0
  %v2012 = vsel %vm327, %v1902, 0
  %v2015 = vsel %vm327, %v1903, 0
  %v2018 = vsel %vm327, %v1904, 0
  %v2021 = vsel %vm327, %v1905, 0
  %v2024 = vsel %vm327, %v1906, 0
  %v2027 = vsel %vm327, %v1907, 0
  %2029 = vmatpush.bf16.msra.mxu0 0
  %2030 = vmatpush.bf16.msra.mxu0 0
  %2031 = vmatpush.bf16.msra.mxu0 %v1967
  %2032 = vmatpush.bf16.msra.mxu0 %v1965
  %2033 = vmatpush.bf16.msra.mxu0 %v1963
  %2034 = vmatpush.bf16.msra.mxu0 %v1961
  %2035 = vmatpush.bf16.msra.mxu0 %v1959
  %2036 = vmatpush.bf16.msra.mxu0 %v1957
  %2037 = vmatmul.bf16.gmra.mxu0 %v1982
  %v2038 = vpop.f32.mrf.mxu0
  %v2039 = vadd.f32 0.0, %v2038
  %v2040 = vpop.f32.mrf.mxu0
  %v2041 = vadd.f32 0.0, %v2040
  %2042 = vmatmul.bf16.gmra.mxu0 %v1985
  %v2043 = vpop.f32.mrf.mxu0
  %v2044 = vadd.f32 0.0, %v2043
  %v2045 = vpop.f32.mrf.mxu0
  %v2046 = vadd.f32 0.0, %v2045
  %2047 = vmatmul.bf16.gmra.mxu0 %v1988
  %v2048 = vpop.f32.mrf.mxu0
  %v2049 = vadd.f32 0.0, %v2048
  %v2050 = vpop.f32.mrf.mxu0
  %v2051 = vadd.f32 0.0, %v2050
  %2052 = vmatmul.bf16.gmra.mxu0 %v1991
  %v2053 = vpop.f32.mrf.mxu0
  %v2054 = vadd.f32 0.0, %v2053
  %v2055 = vpop.f32.mrf.mxu0
  %v2056 = vadd.f32 0.0, %v2055
  %2057 = vmatmul.bf16.gmra.mxu0 %v1994
  %v2058 = vpop.f32.mrf.mxu0
  %v2059 = vadd.f32 0.0, %v2058
  %v2060 = vpop.f32.mrf.mxu0
  %v2061 = vadd.f32 0.0, %v2060
  %2062 = vmatmul.bf16.gmra.mxu0 %v1997
  %v2063 = vpop.f32.mrf.mxu0
  %v2064 = vadd.f32 0.0, %v2063
  %v2065 = vpop.f32.mrf.mxu0
  %v2066 = vadd.f32 0.0, %v2065
  %2067 = vmatmul.bf16.gmra.mxu0 %v2000
  %v2068 = vpop.f32.mrf.mxu0
  %v2069 = vadd.f32 0.0, %v2068
  %v2070 = vpop.f32.mrf.mxu0
  %v2071 = vadd.f32 0.0, %v2070
  %2072 = vmatmul.bf16.gmra.mxu0 %v2003
  %v2073 = vpop.f32.mrf.mxu0
  %v2074 = vadd.f32 0.0, %v2073
  %v2075 = vpop.f32.mrf.mxu0
  %v2076 = vadd.f32 0.0, %v2075
  %2077 = vmatmul.bf16.gmra.mxu0 %v2006
  %v2078 = vpop.f32.mrf.mxu0
  %v2079 = vadd.f32 0.0, %v2078
  %v2080 = vpop.f32.mrf.mxu0
  %v2081 = vadd.f32 0.0, %v2080
  %2082 = vmatmul.bf16.gmra.mxu0 %v2009
  %v2083 = vpop.f32.mrf.mxu0
  %v2084 = vadd.f32 0.0, %v2083
  %v2085 = vpop.f32.mrf.mxu0
  %v2086 = vadd.f32 0.0, %v2085
  %2087 = vmatmul.bf16.gmra.mxu0 %v2012
  %v2088 = vpop.f32.mrf.mxu0
  %v2089 = vadd.f32 0.0, %v2088
  %v2090 = vpop.f32.mrf.mxu0
  %v2091 = vadd.f32 0.0, %v2090
  %2092 = vmatmul.bf16.gmra.mxu0 %v2015
  %v2093 = vpop.f32.mrf.mxu0
  %v2094 = vadd.f32 0.0, %v2093
  %v2095 = vpop.f32.mrf.mxu0
  %v2096 = vadd.f32 0.0, %v2095
  %2097 = vmatmul.bf16.gmra.mxu0 %v2018
  %v2098 = vpop.f32.mrf.mxu0
  %v2099 = vadd.f32 0.0, %v2098
  %v2100 = vpop.f32.mrf.mxu0
  %v2101 = vadd.f32 0.0, %v2100
  %2102 = vmatmul.bf16.gmra.mxu0 %v2021
  %v2103 = vpop.f32.mrf.mxu0
  %v2104 = vadd.f32 0.0, %v2103
  %v2105 = vpop.f32.mrf.mxu0
  %v2106 = vadd.f32 0.0, %v2105
  %2107 = vmatmul.bf16.gmra.mxu0 %v2024
  %v2108 = vpop.f32.mrf.mxu0
  %v2109 = vadd.f32 0.0, %v2108
  %v2110 = vpop.f32.mrf.mxu0
  %v2111 = vadd.f32 0.0, %v2110
  %2112 = vmatmul.bf16.gmra.mxu0 %v2027
  %v2113 = vpop.f32.mrf.mxu0
  %v2114 = vadd.f32 0.0, %v2113
  %v2115 = vpop.f32.mrf.mxu0
  %v2116 = vadd.f32 0.0, %v2115
  %2117 = vdwg.mxu0
  %2118 = vmatpush.bf16.msra.mxu0 0
  %2119 = vmatpush.bf16.msra.mxu0 0
  %2120 = vmatpush.bf16.msra.mxu0 %v1968
  %2121 = vmatpush.bf16.msra.mxu0 %v1966
  %2122 = vmatpush.bf16.msra.mxu0 %v1964
  %2123 = vmatpush.bf16.msra.mxu0 %v1962
  %2124 = vmatpush.bf16.msra.mxu0 %v1960
  %2125 = vmatpush.bf16.msra.mxu0 %v1958
  %2126 = vmatmul.bf16.gmra.mxu0 %v1982
  %v2127 = vpop.f32.mrf.mxu0
  %v2128 = vadd.f32 0.0, %v2127
  %v2129 = vpop.f32.mrf.mxu0
  %v2130 = vadd.f32 0.0, %v2129
  %2131 = vmatmul.bf16.gmra.mxu0 %v1985
  %v2132 = vpop.f32.mrf.mxu0
  %v2133 = vadd.f32 0.0, %v2132
  %v2134 = vpop.f32.mrf.mxu0
  %v2135 = vadd.f32 0.0, %v2134
  %2136 = vmatmul.bf16.gmra.mxu0 %v1988
  %v2137 = vpop.f32.mrf.mxu0
  %v2138 = vadd.f32 0.0, %v2137
  %v2139 = vpop.f32.mrf.mxu0
  %v2140 = vadd.f32 0.0, %v2139
  %2141 = vmatmul.bf16.gmra.mxu0 %v1991
  %v2142 = vpop.f32.mrf.mxu0
  %v2143 = vadd.f32 0.0, %v2142
  %v2144 = vpop.f32.mrf.mxu0
  %v2145 = vadd.f32 0.0, %v2144
  %2146 = vmatmul.bf16.gmra.mxu0 %v1994
  %v2147 = vpop.f32.mrf.mxu0
  %v2148 = vadd.f32 0.0, %v2147
  %v2149 = vpop.f32.mrf.mxu0
  %v2150 = vadd.f32 0.0, %v2149
  %2151 = vmatmul.bf16.gmra.mxu0 %v1997
  %v2152 = vpop.f32.mrf.mxu0
  %v2153 = vadd.f32 0.0, %v2152
  %v2154 = vpop.f32.mrf.mxu0
  %v2155 = vadd.f32 0.0, %v2154
  %2156 = vmatmul.bf16.gmra.mxu0 %v2000
  %v2157 = vpop.f32.mrf.mxu0
  %v2158 = vadd.f32 0.0, %v2157
  %v2159 = vpop.f32.mrf.mxu0
  %v2160 = vadd.f32 0.0, %v2159
  %2161 = vmatmul.bf16.gmra.mxu0 %v2003
  %v2162 = vpop.f32.mrf.mxu0
  %v2163 = vadd.f32 0.0, %v2162
  %v2164 = vpop.f32.mrf.mxu0
  %v2165 = vadd.f32 0.0, %v2164
  %2166 = vmatmul.bf16.gmra.mxu0 %v2006
  %v2167 = vpop.f32.mrf.mxu0
  %v2168 = vadd.f32 0.0, %v2167
  %v2169 = vpop.f32.mrf.mxu0
  %v2170 = vadd.f32 0.0, %v2169
  %2171 = vmatmul.bf16.gmra.mxu0 %v2009
  %v2172 = vpop.f32.mrf.mxu0
  %v2173 = vadd.f32 0.0, %v2172
  %v2174 = vpop.f32.mrf.mxu0
  %v2175 = vadd.f32 0.0, %v2174
  %2176 = vmatmul.bf16.gmra.mxu0 %v2012
  %v2177 = vpop.f32.mrf.mxu0
  %v2178 = vadd.f32 0.0, %v2177
  %v2179 = vpop.f32.mrf.mxu0
  %v2180 = vadd.f32 0.0, %v2179
  %2181 = vmatmul.bf16.gmra.mxu0 %v2015
  %v2182 = vpop.f32.mrf.mxu0
  %v2183 = vadd.f32 0.0, %v2182
  %v2184 = vpop.f32.mrf.mxu0
  %v2185 = vadd.f32 0.0, %v2184
  %2186 = vmatmul.bf16.gmra.mxu0 %v2018
  %v2187 = vpop.f32.mrf.mxu0
  %v2188 = vadd.f32 0.0, %v2187
  %v2189 = vpop.f32.mrf.mxu0
  %v2190 = vadd.f32 0.0, %v2189
  %2191 = vmatmul.bf16.gmra.mxu0 %v2021
  %v2192 = vpop.f32.mrf.mxu0
  %v2193 = vadd.f32 0.0, %v2192
  %v2194 = vpop.f32.mrf.mxu0
  %v2195 = vadd.f32 0.0, %v2194
  %2196 = vmatmul.bf16.gmra.mxu0 %v2024
  %v2197 = vpop.f32.mrf.mxu0
  %v2198 = vadd.f32 0.0, %v2197
  %v2199 = vpop.f32.mrf.mxu0
  %v2200 = vadd.f32 0.0, %v2199
  %2201 = vmatmul.bf16.gmra.mxu0 %v2027
  %v2202 = vpop.f32.mrf.mxu0
  %v2203 = vadd.f32 0.0, %v2202
  %v2204 = vpop.f32.mrf.mxu0
  %v2205 = vadd.f32 0.0, %v2204
  %2206 = vdwg.mxu0
  %v2207 = vadd.f32 %v1730, %v2039
  %v2208 = vadd.f32 %v1731, %v2128
  %v2209 = vadd.f32 %v1732, %v2041
  %v2210 = vadd.f32 %v1733, %v2130
  %v2211 = vadd.f32 %v1734, %v2044
  %v2212 = vadd.f32 %v1735, %v2133
  %v2213 = vadd.f32 %v1736, %v2046
  %v2214 = vadd.f32 %v1737, %v2135
  %v2215 = vadd.f32 %v1738, %v2049
  %v2216 = vadd.f32 %v1739, %v2138
  %v2217 = vadd.f32 %v1740, %v2051
  %v2218 = vadd.f32 %v1741, %v2140
  %v2219 = vadd.f32 %v1742, %v2054
  %v2220 = vadd.f32 %v1743, %v2143
  %v2221 = vadd.f32 %v1744, %v2056
  %v2222 = vadd.f32 %v1745, %v2145
  %v2223 = vadd.f32 %v1746, %v2059
  %v2224 = vadd.f32 %v1747, %v2148
  %v2225 = vadd.f32 %v1748, %v2061
  %v2226 = vadd.f32 %v1749, %v2150
  %v2227 = vadd.f32 %v1750, %v2064
  %v2228 = vadd.f32 %v1751, %v2153
  %v2229 = vadd.f32 %v1752, %v2066
  %v2230 = vadd.f32 %v1753, %v2155
  %v2231 = vadd.f32 %v1754, %v2069
  %v2232 = vadd.f32 %v1755, %v2158
  %v2233 = vadd.f32 %v1756, %v2071
  %v2234 = vadd.f32 %v1757, %v2160
  %v2235 = vadd.f32 %v1758, %v2074
  %v2236 = vadd.f32 %v1759, %v2163
  %v2237 = vadd.f32 %v1760, %v2076
  %v2238 = vadd.f32 %v1761, %v2165
  %v2239 = vadd.f32 %v1762, %v2079
  %v2240 = vadd.f32 %v1763, %v2168
  %v2241 = vadd.f32 %v1764, %v2081
  %v2242 = vadd.f32 %v1765, %v2170
  %v2243 = vadd.f32 %v1766, %v2084
  %v2244 = vadd.f32 %v1767, %v2173
  %v2245 = vadd.f32 %v1768, %v2086
  %v2246 = vadd.f32 %v1769, %v2175
  %v2247 = vadd.f32 %v1770, %v2089
  %v2248 = vadd.f32 %v1771, %v2178
  %v2249 = vadd.f32 %v1772, %v2091
  %v2250 = vadd.f32 %v1773, %v2180
  %v2251 = vadd.f32 %v1774, %v2094
  %v2252 = vadd.f32 %v1775, %v2183
  %v2253 = vadd.f32 %v1776, %v2096
  %v2254 = vadd.f32 %v1777, %v2185
  %v2255 = vadd.f32 %v1778, %v2099
  %v2256 = vadd.f32 %v1779, %v2188
  %v2257 = vadd.f32 %v1780, %v2101
  %v2258 = vadd.f32 %v1781, %v2190
  %v2259 = vadd.f32 %v1782, %v2104
  %v2260 = vadd.f32 %v1783, %v2193
  %v2261 = vadd.f32 %v1784, %v2106
  %v2262 = vadd.f32 %v1785, %v2195
  %v2263 = vadd.f32 %v1786, %v2109
  %v2264 = vadd.f32 %v1787, %v2198
  %v2265 = vadd.f32 %v1788, %v2111
  %v2266 = vadd.f32 %v1789, %v2200
  %v2267 = vadd.f32 %v1790, %v2114
  %v2268 = vadd.f32 %v1791, %v2203
  %v2269 = vadd.f32 %v1792, %v2116
  %v2270 = vadd.f32 %v1793, %v2205
  %v2271 = vld [vmem:[%s2] sm:$0x3]
  %v2273 = vperm.slane %v2271, 0
  %v2274 = vperm.slane %v2271, 1
  %v2277 = vadd.f32 %v2207, %v2273
  %v2278 = vadd.f32 %v2208, %v2274
  %v2279 = vadd.f32 %v2209, %v2273
  %v2280 = vadd.f32 %v2210, %v2274
  %v2281 = vadd.f32 %v2211, %v2273
  %v2282 = vadd.f32 %v2212, %v2274
  %v2283 = vadd.f32 %v2213, %v2273
  %v2284 = vadd.f32 %v2214, %v2274
  %v2285 = vadd.f32 %v2215, %v2273
  %v2286 = vadd.f32 %v2216, %v2274
  %v2287 = vadd.f32 %v2217, %v2273
  %v2288 = vadd.f32 %v2218, %v2274
  %v2289 = vadd.f32 %v2219, %v2273
  %v2290 = vadd.f32 %v2220, %v2274
  %v2291 = vadd.f32 %v2221, %v2273
  %v2292 = vadd.f32 %v2222, %v2274
  %v2293 = vadd.f32 %v2223, %v2273
  %v2294 = vadd.f32 %v2224, %v2274
  %v2295 = vadd.f32 %v2225, %v2273
  %v2296 = vadd.f32 %v2226, %v2274
  %v2297 = vadd.f32 %v2227, %v2273
  %v2298 = vadd.f32 %v2228, %v2274
  %v2299 = vadd.f32 %v2229, %v2273
  %v2300 = vadd.f32 %v2230, %v2274
  %v2301 = vadd.f32 %v2231, %v2273
  %v2302 = vadd.f32 %v2232, %v2274
  %v2303 = vadd.f32 %v2233, %v2273
  %v2304 = vadd.f32 %v2234, %v2274
  %v2305 = vadd.f32 %v2235, %v2273
  %v2306 = vadd.f32 %v2236, %v2274
  %v2307 = vadd.f32 %v2237, %v2273
  %v2308 = vadd.f32 %v2238, %v2274
  %v2309 = vadd.f32 %v2239, %v2273
  %v2310 = vadd.f32 %v2240, %v2274
  %v2311 = vadd.f32 %v2241, %v2273
  %v2312 = vadd.f32 %v2242, %v2274
  %v2313 = vadd.f32 %v2243, %v2273
  %v2314 = vadd.f32 %v2244, %v2274
  %v2315 = vadd.f32 %v2245, %v2273
  %v2316 = vadd.f32 %v2246, %v2274
  %v2317 = vadd.f32 %v2247, %v2273
  %v2318 = vadd.f32 %v2248, %v2274
  %v2319 = vadd.f32 %v2249, %v2273
  %v2320 = vadd.f32 %v2250, %v2274
  %v2321 = vadd.f32 %v2251, %v2273
  %v2322 = vadd.f32 %v2252, %v2274
  %v2323 = vadd.f32 %v2253, %v2273
  %v2324 = vadd.f32 %v2254, %v2274
  %v2325 = vadd.f32 %v2255, %v2273
  %v2326 = vadd.f32 %v2256, %v2274
  %v2327 = vadd.f32 %v2257, %v2273
  %v2328 = vadd.f32 %v2258, %v2274
  %v2329 = vadd.f32 %v2259, %v2273
  %v2330 = vadd.f32 %v2260, %v2274
  %v2331 = vadd.f32 %v2261, %v2273
  %v2332 = vadd.f32 %v2262, %v2274
  %v2333 = vadd.f32 %v2263, %v2273
  %v2334 = vadd.f32 %v2264, %v2274
  %v2335 = vadd.f32 %v2265, %v2273
  %v2336 = vadd.f32 %v2266, %v2274
  %v2337 = vadd.f32 %v2267, %v2273
  %v2338 = vadd.f32 %v2268, %v2274
  %v2339 = vadd.f32 %v2269, %v2273
  %v2340 = vadd.f32 %v2270, %v2274
  %v2341 = vmax.f32 %v2277, 0.0
  %v2342 = vmax.f32 %v2278, 0.0
  %v2343 = vmax.f32 %v2279, 0.0
  %v2344 = vmax.f32 %v2280, 0.0
  %v2345 = vmax.f32 %v2281, 0.0
  %v2346 = vmax.f32 %v2282, 0.0
  %v2347 = vmax.f32 %v2283, 0.0
  %v2348 = vmax.f32 %v2284, 0.0
  %v2349 = vmax.f32 %v2285, 0.0
  %v2350 = vmax.f32 %v2286, 0.0
  %v2351 = vmax.f32 %v2287, 0.0
  %v2352 = vmax.f32 %v2288, 0.0
  %v2353 = vmax.f32 %v2289, 0.0
  %v2354 = vmax.f32 %v2290, 0.0
  %v2355 = vmax.f32 %v2291, 0.0
  %v2356 = vmax.f32 %v2292, 0.0
  %v2357 = vmax.f32 %v2293, 0.0
  %v2358 = vmax.f32 %v2294, 0.0
  %v2359 = vmax.f32 %v2295, 0.0
  %v2360 = vmax.f32 %v2296, 0.0
  %v2361 = vmax.f32 %v2297, 0.0
  %v2362 = vmax.f32 %v2298, 0.0
  %v2363 = vmax.f32 %v2299, 0.0
  %v2364 = vmax.f32 %v2300, 0.0
  %v2365 = vmax.f32 %v2301, 0.0
  %v2366 = vmax.f32 %v2302, 0.0
  %v2367 = vmax.f32 %v2303, 0.0
  %v2368 = vmax.f32 %v2304, 0.0
  %v2369 = vmax.f32 %v2305, 0.0
  %v2370 = vmax.f32 %v2306, 0.0
  %v2371 = vmax.f32 %v2307, 0.0
  %v2372 = vmax.f32 %v2308, 0.0
  %v2373 = vmax.f32 %v2309, 0.0
  %v2374 = vmax.f32 %v2310, 0.0
  %v2375 = vmax.f32 %v2311, 0.0
  %v2376 = vmax.f32 %v2312, 0.0
  %v2377 = vmax.f32 %v2313, 0.0
  %v2378 = vmax.f32 %v2314, 0.0
  %v2379 = vmax.f32 %v2315, 0.0
  %v2380 = vmax.f32 %v2316, 0.0
  %v2381 = vmax.f32 %v2317, 0.0
  %v2382 = vmax.f32 %v2318, 0.0
  %v2383 = vmax.f32 %v2319, 0.0
  %v2384 = vmax.f32 %v2320, 0.0
  %v2385 = vmax.f32 %v2321, 0.0
  %v2386 = vmax.f32 %v2322, 0.0
  %v2387 = vmax.f32 %v2323, 0.0
  %v2388 = vmax.f32 %v2324, 0.0
  %v2389 = vmax.f32 %v2325, 0.0
  %v2390 = vmax.f32 %v2326, 0.0
  %v2391 = vmax.f32 %v2327, 0.0
  %v2392 = vmax.f32 %v2328, 0.0
  %v2393 = vmax.f32 %v2329, 0.0
  %v2394 = vmax.f32 %v2330, 0.0
  %v2395 = vmax.f32 %v2331, 0.0
  %v2396 = vmax.f32 %v2332, 0.0
  %v2397 = vmax.f32 %v2333, 0.0
  %v2398 = vmax.f32 %v2334, 0.0
  %v2399 = vmax.f32 %v2335, 0.0
  %v2400 = vmax.f32 %v2336, 0.0
  %v2401 = vmax.f32 %v2337, 0.0
  %v2402 = vmax.f32 %v2338, 0.0
  %v2403 = vmax.f32 %v2339, 0.0
  %v2404 = vmax.f32 %v2340, 0.0
  %v2469 = vrot.slane %v2341, 1
  %v2470 = vrot.slane %v2343, 1
  %v2471 = vsel %vm140, %v2469, %v2470
  %v2472 = vrot.slane %v2342, 1
  %v2473 = vrot.slane %v2344, 1
  %v2474 = vsel %vm140, %v2472, %v2473
  %v2475 = vrot.slane %v2345, 1
  %v2476 = vsel %vm140, %v2470, %v2475
  %v2477 = vrot.slane %v2346, 1
  %v2478 = vsel %vm140, %v2473, %v2477
  %v2479 = vrot.slane %v2347, 1
  %v2480 = vsel %vm140, %v2475, %v2479
  %v2481 = vrot.slane %v2348, 1
  %v2482 = vsel %vm140, %v2477, %v2481
  %v2483 = vrot.slane %v2349, 1
  %v2484 = vsel %vm140, %v2479, %v2483
  %v2485 = vrot.slane %v2350, 1
  %v2486 = vsel %vm140, %v2481, %v2485
  %v2487 = vrot.slane %v2351, 1
  %v2488 = vsel %vm140, %v2483, %v2487
  %v2489 = vrot.slane %v2352, 1
  %v2490 = vsel %vm140, %v2485, %v2489
  %v2491 = vrot.slane %v2353, 1
  %v2492 = vsel %vm140, %v2487, %v2491
  %v2493 = vrot.slane %v2354, 1
  %v2494 = vsel %vm140, %v2489, %v2493
  %v2495 = vrot.slane %v2355, 1
  %v2496 = vsel %vm140, %v2491, %v2495
  %v2497 = vrot.slane %v2356, 1
  %v2498 = vsel %vm140, %v2493, %v2497
  %v2499 = vrot.slane %v2357, 1
  %v2500 = vsel %vm140, %v2495, %v2499
  %v2501 = vrot.slane %v2358, 1
  %v2502 = vsel %vm140, %v2497, %v2501
  %v2503 = vrot.slane %v2359, 1
  %v2504 = vsel %vm140, %v2499, %v2503
  %v2505 = vrot.slane %v2360, 1
  %v2506 = vsel %vm140, %v2501, %v2505
  %v2507 = vrot.slane %v2361, 1
  %v2508 = vsel %vm140, %v2503, %v2507
  %v2509 = vrot.slane %v2362, 1
  %v2510 = vsel %vm140, %v2505, %v2509
  %v2511 = vrot.slane %v2363, 1
  %v2512 = vsel %vm140, %v2507, %v2511
  %v2513 = vrot.slane %v2364, 1
  %v2514 = vsel %vm140, %v2509, %v2513
  %v2515 = vrot.slane %v2365, 1
  %v2516 = vsel %vm140, %v2511, %v2515
  %v2517 = vrot.slane %v2366, 1
  %v2518 = vsel %vm140, %v2513, %v2517
  %v2519 = vrot.slane %v2367, 1
  %v2520 = vsel %vm140, %v2515, %v2519
  %v2521 = vrot.slane %v2368, 1
  %v2522 = vsel %vm140, %v2517, %v2521
  %v2523 = vrot.slane %v2369, 1
  %v2524 = vsel %vm140, %v2519, %v2523
  %v2525 = vrot.slane %v2370, 1
  %v2526 = vsel %vm140, %v2521, %v2525
  %v2527 = vrot.slane %v2371, 1
  %v2528 = vsel %vm140, %v2523, %v2527
  %v2529 = vrot.slane %v2372, 1
  %v2530 = vsel %vm140, %v2525, %v2529
  %v2531 = vrot.slane %v2373, 1
  %v2532 = vsel %vm140, %v2527, %v2531
  %v2533 = vrot.slane %v2374, 1
  %v2534 = vsel %vm140, %v2529, %v2533
  %v2535 = vrot.slane %v2375, 1
  %v2536 = vsel %vm140, %v2531, %v2535
  %v2537 = vrot.slane %v2376, 1
  %v2538 = vsel %vm140, %v2533, %v2537
  %v2539 = vrot.slane %v2377, 1
  %v2540 = vsel %vm140, %v2535, %v2539
  %v2541 = vrot.slane %v2378, 1
  %v2542 = vsel %vm140, %v2537, %v2541
  %v2543 = vrot.slane %v2379, 1
  %v2544 = vsel %vm140, %v2539, %v2543
  %v2545 = vrot.slane %v2380, 1
  %v2546 = vsel %vm140, %v2541, %v2545
  %v2547 = vrot.slane %v2381, 1
  %v2548 = vsel %vm140, %v2543, %v2547
  %v2549 = vrot.slane %v2382, 1
  %v2550 = vsel %vm140, %v2545, %v2549
  %v2551 = vrot.slane %v2383, 1
  %v2552 = vsel %vm140, %v2547, %v2551
  %v2553 = vrot.slane %v2384, 1
  %v2554 = vsel %vm140, %v2549, %v2553
  %v2555 = vrot.slane %v2385, 1
  %v2556 = vsel %vm140, %v2551, %v2555
  %v2557 = vrot.slane %v2386, 1
  %v2558 = vsel %vm140, %v2553, %v2557
  %v2559 = vrot.slane %v2387, 1
  %v2560 = vsel %vm140, %v2555, %v2559
  %v2561 = vrot.slane %v2388, 1
  %v2562 = vsel %vm140, %v2557, %v2561
  %v2563 = vrot.slane %v2389, 1
  %v2564 = vsel %vm140, %v2559, %v2563
  %v2565 = vrot.slane %v2390, 1
  %v2566 = vsel %vm140, %v2561, %v2565
  %v2567 = vrot.slane %v2391, 1
  %v2568 = vsel %vm140, %v2563, %v2567
  %v2569 = vrot.slane %v2392, 1
  %v2570 = vsel %vm140, %v2565, %v2569
  %v2571 = vrot.slane %v2393, 1
  %v2572 = vsel %vm140, %v2567, %v2571
  %v2573 = vrot.slane %v2394, 1
  %v2574 = vsel %vm140, %v2569, %v2573
  %v2575 = vrot.slane %v2395, 1
  %v2576 = vsel %vm140, %v2571, %v2575
  %v2577 = vrot.slane %v2396, 1
  %v2578 = vsel %vm140, %v2573, %v2577
  %v2579 = vrot.slane %v2397, 1
  %v2580 = vsel %vm140, %v2575, %v2579
  %v2581 = vrot.slane %v2398, 1
  %v2582 = vsel %vm140, %v2577, %v2581
  %v2583 = vrot.slane %v2399, 1
  %v2584 = vsel %vm140, %v2579, %v2583
  %v2585 = vrot.slane %v2400, 1
  %v2586 = vsel %vm140, %v2581, %v2585
  %v2587 = vrot.slane %v2401, 1
  %v2588 = vsel %vm140, %v2583, %v2587
  %v2589 = vrot.slane %v2402, 1
  %v2590 = vsel %vm140, %v2585, %v2589
  %v2591 = vrot.slane %v2403, 1
  %v2592 = vsel %vm140, %v2587, %v2591
  %v2593 = vrot.slane %v2404, 1
  %v2594 = vsel %vm140, %v2589, %v2593
  %v2661 = vsel %vm140, %v2591, %v2469
  %v2662 = vsel %vm140, %v2593, %v2472
  %v2663 = vmax.f32 %v2341, %v2471
  %v2664 = vmax.f32 %v2342, %v2474
  %v2665 = vmax.f32 %v2343, %v2476
  %v2666 = vmax.f32 %v2344, %v2478
  %v2667 = vmax.f32 %v2345, %v2480
  %v2668 = vmax.f32 %v2346, %v2482
  %v2669 = vmax.f32 %v2347, %v2484
  %v2670 = vmax.f32 %v2348, %v2486
  %v2671 = vmax.f32 %v2349, %v2488
  %v2672 = vmax.f32 %v2350, %v2490
  %v2673 = vmax.f32 %v2351, %v2492
  %v2674 = vmax.f32 %v2352, %v2494
  %v2675 = vmax.f32 %v2353, %v2496
  %v2676 = vmax.f32 %v2354, %v2498
  %v2677 = vmax.f32 %v2355, %v2500
  %v2678 = vmax.f32 %v2356, %v2502
  %v2679 = vmax.f32 %v2357, %v2504
  %v2680 = vmax.f32 %v2358, %v2506
  %v2681 = vmax.f32 %v2359, %v2508
  %v2682 = vmax.f32 %v2360, %v2510
  %v2683 = vmax.f32 %v2361, %v2512
  %v2684 = vmax.f32 %v2362, %v2514
  %v2685 = vmax.f32 %v2363, %v2516
  %v2686 = vmax.f32 %v2364, %v2518
  %v2687 = vmax.f32 %v2365, %v2520
  %v2688 = vmax.f32 %v2366, %v2522
  %v2689 = vmax.f32 %v2367, %v2524
  %v2690 = vmax.f32 %v2368, %v2526
  %v2691 = vmax.f32 %v2369, %v2528
  %v2692 = vmax.f32 %v2370, %v2530
  %v2693 = vmax.f32 %v2371, %v2532
  %v2694 = vmax.f32 %v2372, %v2534
  %v2695 = vmax.f32 %v2373, %v2536
  %v2696 = vmax.f32 %v2374, %v2538
  %v2697 = vmax.f32 %v2375, %v2540
  %v2698 = vmax.f32 %v2376, %v2542
  %v2699 = vmax.f32 %v2377, %v2544
  %v2700 = vmax.f32 %v2378, %v2546
  %v2701 = vmax.f32 %v2379, %v2548
  %v2702 = vmax.f32 %v2380, %v2550
  %v2703 = vmax.f32 %v2381, %v2552
  %v2704 = vmax.f32 %v2382, %v2554
  %v2705 = vmax.f32 %v2383, %v2556
  %v2706 = vmax.f32 %v2384, %v2558
  %v2707 = vmax.f32 %v2385, %v2560
  %v2708 = vmax.f32 %v2386, %v2562
  %v2709 = vmax.f32 %v2387, %v2564
  %v2710 = vmax.f32 %v2388, %v2566
  %v2711 = vmax.f32 %v2389, %v2568
  %v2712 = vmax.f32 %v2390, %v2570
  %v2713 = vmax.f32 %v2391, %v2572
  %v2714 = vmax.f32 %v2392, %v2574
  %v2715 = vmax.f32 %v2393, %v2576
  %v2716 = vmax.f32 %v2394, %v2578
  %v2717 = vmax.f32 %v2395, %v2580
  %v2718 = vmax.f32 %v2396, %v2582
  %v2719 = vmax.f32 %v2397, %v2584
  %v2720 = vmax.f32 %v2398, %v2586
  %v2721 = vmax.f32 %v2399, %v2588
  %v2722 = vmax.f32 %v2400, %v2590
  %v2723 = vmax.f32 %v2401, %v2592
  %v2724 = vmax.f32 %v2402, %v2594
  %v2725 = vmax.f32 %v2403, %v2661
  %v2726 = vmax.f32 %v2404, %v2662
  %v2727 = vpack.c.bf16 %v2665, %v2663
  %v2728 = vpack.c.bf16 %v2666, %v2664
  %v2729 = vpack.c.bf16 %v2669, %v2667
  %v2730 = vpack.c.bf16 %v2670, %v2668
  %v2731 = vpack.c.bf16 %v2673, %v2671
  %v2732 = vpack.c.bf16 %v2674, %v2672
  %v2733 = vpack.c.bf16 %v2677, %v2675
  %v2734 = vpack.c.bf16 %v2678, %v2676
  %v2735 = vpack.c.bf16 %v2681, %v2679
  %v2736 = vpack.c.bf16 %v2682, %v2680
  %v2737 = vpack.c.bf16 %v2685, %v2683
  %v2738 = vpack.c.bf16 %v2686, %v2684
  %v2739 = vpack.c.bf16 %v2689, %v2687
  %v2740 = vpack.c.bf16 %v2690, %v2688
  %v2741 = vpack.c.bf16 %v2693, %v2691
  %v2742 = vpack.c.bf16 %v2694, %v2692
  %v2743 = vpack.c.bf16 %v2697, %v2695
  %v2744 = vpack.c.bf16 %v2698, %v2696
  %v2745 = vpack.c.bf16 %v2701, %v2699
  %v2746 = vpack.c.bf16 %v2702, %v2700
  %v2747 = vpack.c.bf16 %v2705, %v2703
  %v2748 = vpack.c.bf16 %v2706, %v2704
  %v2749 = vpack.c.bf16 %v2709, %v2707
  %v2750 = vpack.c.bf16 %v2710, %v2708
  %v2751 = vpack.c.bf16 %v2713, %v2711
  %v2752 = vpack.c.bf16 %v2714, %v2712
  %v2753 = vpack.c.bf16 %v2717, %v2715
  %v2754 = vpack.c.bf16 %v2718, %v2716
  %v2755 = vpack.c.bf16 %v2721, %v2719
  %v2756 = vpack.c.bf16 %v2722, %v2720
  %v2757 = vpack.c.bf16 %v2725, %v2723
  %v2758 = vpack.c.bf16 %v2726, %v2724
  %v2759 = vld [vmem:[%s3] sm:$0xf]
  %v2760 = vld [vmem:[%s3 + $0x4] sm:$0xf]
  %v2761 = vld [vmem:[%s3 + $0x8] sm:$0xf]
  %v2762 = vld [vmem:[%s3 + $0xc] sm:$0xf]
  %v2763 = vld [vmem:[%s3 + $0x10] sm:$0xf]
  %v2764 = vld [vmem:[%s3 + $0x14] sm:$0xf]
  %v2765 = vld [vmem:[%s3 + $0x18] sm:$0xf]
  %v2766 = vld [vmem:[%s3 + $0x1c] sm:$0xf]
  %v2767 = vld [vmem:[%s3 + $0x20] sm:$0xf]
  %v2768 = vld [vmem:[%s3 + $0x24] sm:$0xf]
  %v2769 = vld [vmem:[%s3 + $0x28] sm:$0xf]
  %v2770 = vld [vmem:[%s3 + $0x2c] sm:$0xf]
  %v2771 = vld [vmem:[%s3 + $0x30] sm:$0xf]
  %v2772 = vld [vmem:[%s3 + $0x34] sm:$0xf]
  %v2773 = vld [vmem:[%s3 + $0x38] sm:$0xf]
  %v2774 = vld [vmem:[%s3 + $0x3c] sm:$0xf]
  %v2775 = vld [vmem:[%s3 + $0x40] sm:$0xf]
  %v2776 = vld [vmem:[%s3 + $0x44] sm:$0xf]
  %v2777 = vld [vmem:[%s3 + $0x48] sm:$0xf]
  %v2778 = vld [vmem:[%s3 + $0x4c] sm:$0xf]
  %v2779 = vld [vmem:[%s3 + $0x50] sm:$0xf]
  %v2801 = vunpack.c.l.b16 %v2759
  %v2802 = vunpack.c.l.b16 %v2760
  %v2803 = vunpack.c.l.b16 %v2761
  %v2804 = vunpack.c.l.b16 %v2762
  %v2805 = vunpack.c.l.b16 %v2763
  %v2806 = vunpack.c.l.b16 %v2764
  %v2807 = vunpack.c.l.b16 %v2765
  %v2808 = vunpack.c.l.b16 %v2766
  %v2809 = vunpack.c.l.b16 %v2767
  %v2810 = vunpack.c.l.b16 %v2768
  %v2811 = vunpack.c.l.b16 %v2769
  %v2812 = vunpack.c.l.b16 %v2770
  %v2813 = vunpack.c.l.b16 %v2771
  %v2814 = vunpack.c.l.b16 %v2772
  %v2815 = vunpack.c.l.b16 %v2773
  %v2816 = vunpack.c.l.b16 %v2774
  %v2817 = vunpack.c.l.b16 %v2775
  %v2818 = vunpack.c.l.b16 %v2776
  %v2819 = vunpack.c.l.b16 %v2777
  %v2820 = vunpack.c.l.b16 %v2778
  %v2821 = vunpack.c.l.b16 %v2779
  %v2822 = vpack.c.b16 %v2802, %v2801
  %v2823 = vpack.c.b16 %v2804, %v2803
  %v2824 = vpack.c.b16 %v2806, %v2805
  %v2825 = vpack.c.b16 %v2808, %v2807
  %v2826 = vpack.c.b16 %v2810, %v2809
  %v2827 = vpack.c.b16 %v2812, %v2811
  %v2828 = vpack.c.b16 %v2814, %v2813
  %v2829 = vpack.c.b16 %v2816, %v2815
  %v2830 = vpack.c.b16 %v2818, %v2817
  %v2831 = vpack.c.b16 %v2820, %v2819
  %v2832 = vpack.c.b16 %v2821, %v2821
  %vm2843 = vcmask 326656
  %v2845 = vsel %vm2843, %v2728, 0
  %v2848 = vsel %vm2843, %v2730, 0
  %v2851 = vsel %vm2843, %v2732, 0
  %v2854 = vsel %vm2843, %v2734, 0
  %v2857 = vsel %vm2843, %v2736, 0
  %v2860 = vsel %vm2843, %v2738, 0
  %v2863 = vsel %vm2843, %v2740, 0
  %v2866 = vsel %vm2843, %v2742, 0
  %v2869 = vsel %vm2843, %v2744, 0
  %v2872 = vsel %vm2843, %v2746, 0
  %v2875 = vsel %vm2843, %v2748, 0
  %v2878 = vsel %vm2843, %v2750, 0
  %v2881 = vsel %vm2843, %v2752, 0
  %v2884 = vsel %vm2843, %v2754, 0
  %v2887 = vsel %vm2843, %v2756, 0
  %v2890 = vsel %vm2843, %v2758, 0
  %v2893 = vsel %vm1794, %v2832, 0
  %2895 = vmatpush.bf16.msra.mxu0 %v2829
  %2896 = vmatpush.bf16.msra.mxu0 %v2828
  %2897 = vmatpush.bf16.msra.mxu0 %v2827
  %2898 = vmatpush.bf16.msra.mxu0 %v2826
  %2899 = vmatpush.bf16.msra.mxu0 %v2825
  %2900 = vmatpush.bf16.msra.mxu0 %v2824
  %2901 = vmatpush.bf16.msra.mxu0 %v2823
  %2902 = vmatpush.bf16.msra.mxu0 %v2822
  %2903 = vmatmul.bf16.gmra.mxu0 %v2727
  %v2904 = vpop.f32.mrf.mxu0
  %v2905 = vadd.f32 0.0, %v2904
  %v2906 = vpop.f32.mrf.mxu0
  %v2907 = vadd.f32 0.0, %v2906
  %2908 = vmatmul.bf16.gmra.mxu0 %v2729
  %v2909 = vpop.f32.mrf.mxu0
  %v2910 = vadd.f32 0.0, %v2909
  %v2911 = vpop.f32.mrf.mxu0
  %v2912 = vadd.f32 0.0, %v2911
  %2913 = vmatmul.bf16.gmra.mxu0 %v2731
  %v2914 = vpop.f32.mrf.mxu0
  %v2915 = vadd.f32 0.0, %v2914
  %v2916 = vpop.f32.mrf.mxu0
  %v2917 = vadd.f32 0.0, %v2916
  %2918 = vmatmul.bf16.gmra.mxu0 %v2733
  %v2919 = vpop.f32.mrf.mxu0
  %v2920 = vadd.f32 0.0, %v2919
  %v2921 = vpop.f32.mrf.mxu0
  %v2922 = vadd.f32 0.0, %v2921
  %2923 = vmatmul.bf16.gmra.mxu0 %v2735
  %v2924 = vpop.f32.mrf.mxu0
  %v2925 = vadd.f32 0.0, %v2924
  %v2926 = vpop.f32.mrf.mxu0
  %v2927 = vadd.f32 0.0, %v2926
  %2928 = vmatmul.bf16.gmra.mxu0 %v2737
  %v2929 = vpop.f32.mrf.mxu0
  %v2930 = vadd.f32 0.0, %v2929
  %v2931 = vpop.f32.mrf.mxu0
  %v2932 = vadd.f32 0.0, %v2931
  %2933 = vmatmul.bf16.gmra.mxu0 %v2739
  %v2934 = vpop.f32.mrf.mxu0
  %v2935 = vadd.f32 0.0, %v2934
  %v2936 = vpop.f32.mrf.mxu0
  %v2937 = vadd.f32 0.0, %v2936
  %2938 = vmatmul.bf16.gmra.mxu0 %v2741
  %v2939 = vpop.f32.mrf.mxu0
  %v2940 = vadd.f32 0.0, %v2939
  %v2941 = vpop.f32.mrf.mxu0
  %v2942 = vadd.f32 0.0, %v2941
  %2943 = vmatmul.bf16.gmra.mxu0 %v2743
  %v2944 = vpop.f32.mrf.mxu0
  %v2945 = vadd.f32 0.0, %v2944
  %v2946 = vpop.f32.mrf.mxu0
  %v2947 = vadd.f32 0.0, %v2946
  %2948 = vmatmul.bf16.gmra.mxu0 %v2745
  %v2949 = vpop.f32.mrf.mxu0
  %v2950 = vadd.f32 0.0, %v2949
  %v2951 = vpop.f32.mrf.mxu0
  %v2952 = vadd.f32 0.0, %v2951
  %2953 = vmatmul.bf16.gmra.mxu0 %v2747
  %v2954 = vpop.f32.mrf.mxu0
  %v2955 = vadd.f32 0.0, %v2954
  %v2956 = vpop.f32.mrf.mxu0
  %v2957 = vadd.f32 0.0, %v2956
  %2958 = vmatmul.bf16.gmra.mxu0 %v2749
  %v2959 = vpop.f32.mrf.mxu0
  %v2960 = vadd.f32 0.0, %v2959
  %v2961 = vpop.f32.mrf.mxu0
  %v2962 = vadd.f32 0.0, %v2961
  %2963 = vmatmul.bf16.gmra.mxu0 %v2751
  %v2964 = vpop.f32.mrf.mxu0
  %v2965 = vadd.f32 0.0, %v2964
  %v2966 = vpop.f32.mrf.mxu0
  %v2967 = vadd.f32 0.0, %v2966
  %2968 = vmatmul.bf16.gmra.mxu0 %v2753
  %v2969 = vpop.f32.mrf.mxu0
  %v2970 = vadd.f32 0.0, %v2969
  %v2971 = vpop.f32.mrf.mxu0
  %v2972 = vadd.f32 0.0, %v2971
  %2973 = vmatmul.bf16.gmra.mxu0 %v2755
  %v2974 = vpop.f32.mrf.mxu0
  %v2975 = vadd.f32 0.0, %v2974
  %v2976 = vpop.f32.mrf.mxu0
  %v2977 = vadd.f32 0.0, %v2976
  %2978 = vmatmul.bf16.gmra.mxu0 %v2757
  %v2979 = vpop.f32.mrf.mxu0
  %v2980 = vadd.f32 0.0, %v2979
  %v2981 = vpop.f32.mrf.mxu0
  %v2982 = vadd.f32 0.0, %v2981
  %2983 = vdwg.mxu0
  %2984 = vmatpush.bf16.msra.mxu0 0
  %2985 = vmatpush.bf16.msra.mxu0 0
  %2986 = vmatpush.bf16.msra.mxu0 0
  %2987 = vmatpush.bf16.msra.mxu0 0
  %2988 = vmatpush.bf16.msra.mxu0 0
  %2989 = vmatpush.bf16.msra.mxu0 %v2893
  %2990 = vmatpush.bf16.msra.mxu0 %v2831
  %2991 = vmatpush.bf16.msra.mxu0 %v2830
  %2992 = vmatmul.bf16.gmra.mxu0 %v2845
  %v2993 = vpop.f32.mrf.mxu0
  %v2994 = vadd.f32 %v2905, %v2993
  %v2995 = vpop.f32.mrf.mxu0
  %v2996 = vadd.f32 %v2907, %v2995
  %2997 = vmatmul.bf16.gmra.mxu0 %v2848
  %v2998 = vpop.f32.mrf.mxu0
  %v2999 = vadd.f32 %v2910, %v2998
  %v3000 = vpop.f32.mrf.mxu0
  %v3001 = vadd.f32 %v2912, %v3000
  %3002 = vmatmul.bf16.gmra.mxu0 %v2851
  %v3003 = vpop.f32.mrf.mxu0
  %v3004 = vadd.f32 %v2915, %v3003
  %v3005 = vpop.f32.mrf.mxu0
  %v3006 = vadd.f32 %v2917, %v3005
  %3007 = vmatmul.bf16.gmra.mxu0 %v2854
  %v3008 = vpop.f32.mrf.mxu0
  %v3009 = vadd.f32 %v2920, %v3008
  %v3010 = vpop.f32.mrf.mxu0
  %v3011 = vadd.f32 %v2922, %v3010
  %3012 = vmatmul.bf16.gmra.mxu0 %v2857
  %v3013 = vpop.f32.mrf.mxu0
  %v3014 = vadd.f32 %v2925, %v3013
  %v3015 = vpop.f32.mrf.mxu0
  %v3016 = vadd.f32 %v2927, %v3015
  %3017 = vmatmul.bf16.gmra.mxu0 %v2860
  %v3018 = vpop.f32.mrf.mxu0
  %v3019 = vadd.f32 %v2930, %v3018
  %v3020 = vpop.f32.mrf.mxu0
  %v3021 = vadd.f32 %v2932, %v3020
  %3022 = vmatmul.bf16.gmra.mxu0 %v2863
  %v3023 = vpop.f32.mrf.mxu0
  %v3024 = vadd.f32 %v2935, %v3023
  %v3025 = vpop.f32.mrf.mxu0
  %v3026 = vadd.f32 %v2937, %v3025
  %3027 = vmatmul.bf16.gmra.mxu0 %v2866
  %v3028 = vpop.f32.mrf.mxu0
  %v3029 = vadd.f32 %v2940, %v3028
  %v3030 = vpop.f32.mrf.mxu0
  %v3031 = vadd.f32 %v2942, %v3030
  %3032 = vmatmul.bf16.gmra.mxu0 %v2869
  %v3033 = vpop.f32.mrf.mxu0
  %v3034 = vadd.f32 %v2945, %v3033
  %v3035 = vpop.f32.mrf.mxu0
  %v3036 = vadd.f32 %v2947, %v3035
  %3037 = vmatmul.bf16.gmra.mxu0 %v2872
  %v3038 = vpop.f32.mrf.mxu0
  %v3039 = vadd.f32 %v2950, %v3038
  %v3040 = vpop.f32.mrf.mxu0
  %v3041 = vadd.f32 %v2952, %v3040
  %3042 = vmatmul.bf16.gmra.mxu0 %v2875
  %v3043 = vpop.f32.mrf.mxu0
  %v3044 = vadd.f32 %v2955, %v3043
  %v3045 = vpop.f32.mrf.mxu0
  %v3046 = vadd.f32 %v2957, %v3045
  %3047 = vmatmul.bf16.gmra.mxu0 %v2878
  %v3048 = vpop.f32.mrf.mxu0
  %v3049 = vadd.f32 %v2960, %v3048
  %v3050 = vpop.f32.mrf.mxu0
  %v3051 = vadd.f32 %v2962, %v3050
  %3052 = vmatmul.bf16.gmra.mxu0 %v2881
  %v3053 = vpop.f32.mrf.mxu0
  %v3054 = vadd.f32 %v2965, %v3053
  %v3055 = vpop.f32.mrf.mxu0
  %v3056 = vadd.f32 %v2967, %v3055
  %3057 = vmatmul.bf16.gmra.mxu0 %v2884
  %v3058 = vpop.f32.mrf.mxu0
  %v3059 = vadd.f32 %v2970, %v3058
  %v3060 = vpop.f32.mrf.mxu0
  %v3061 = vadd.f32 %v2972, %v3060
  %3062 = vmatmul.bf16.gmra.mxu0 %v2887
  %v3063 = vpop.f32.mrf.mxu0
  %v3064 = vadd.f32 %v2975, %v3063
  %v3065 = vpop.f32.mrf.mxu0
  %v3066 = vadd.f32 %v2977, %v3065
  %3067 = vmatmul.bf16.gmra.mxu0 %v2890
  %v3068 = vpop.f32.mrf.mxu0
  %v3069 = vadd.f32 %v2980, %v3068
  %v3070 = vpop.f32.mrf.mxu0
  %v3071 = vadd.f32 %v2982, %v3070
  %3072 = vdwg.mxu0
  %s3073 = scalar_lea.vmem %s3, 84
  %v3074 = vld [vmem:[%s3073] sm:$0xf]
  %v3075 = vld [vmem:[%s3073 + $0x4] sm:$0xf]
  %v3076 = vld [vmem:[%s3073 + $0x8] sm:$0xf]
  %v3077 = vld [vmem:[%s3073 + $0xc] sm:$0xf]
  %v3078 = vld [vmem:[%s3073 + $0x10] sm:$0xf]
  %v3079 = vld [vmem:[%s3073 + $0x14] sm:$0xf]
  %v3080 = vld [vmem:[%s3073 + $0x18] sm:$0xf]
  %v3081 = vld [vmem:[%s3073 + $0x1c] sm:$0xf]
  %v3082 = vld [vmem:[%s3073 + $0x20] sm:$0xf]
  %v3083 = vld [vmem:[%s3073 + $0x24] sm:$0xf]
  %v3084 = vld [vmem:[%s3073 + $0x28] sm:$0xf]
  %v3085 = vld [vmem:[%s3073 + $0x2c] sm:$0xf]
  %v3086 = vld [vmem:[%s3073 + $0x30] sm:$0xf]
  %v3087 = vld [vmem:[%s3073 + $0x34] sm:$0xf]
  %v3088 = vld [vmem:[%s3073 + $0x38] sm:$0xf]
  %v3089 = vld [vmem:[%s3073 + $0x3c] sm:$0xf]
  %v3090 = vld [vmem:[%s3073 + $0x40] sm:$0xf]
  %v3091 = vld [vmem:[%s3073 + $0x44] sm:$0xf]
  %v3092 = vld [vmem:[%s3073 + $0x48] sm:$0xf]
  %v3093 = vld [vmem:[%s3073 + $0x4c] sm:$0xf]
  %v3094 = vld [vmem:[%s3073 + $0x50] sm:$0xf]
  %v3116 = vunpack.c.l.b16 %v3074
  %v3117 = vunpack.c.l.b16 %v3075
  %v3118 = vunpack.c.l.b16 %v3076
  %v3119 = vunpack.c.l.b16 %v3077
  %v3120 = vunpack.c.l.b16 %v3078
  %v3121 = vunpack.c.l.b16 %v3079
  %v3122 = vunpack.c.l.b16 %v3080
  %v3123 = vunpack.c.l.b16 %v3081
  %v3124 = vunpack.c.l.b16 %v3082
  %v3125 = vunpack.c.l.b16 %v3083
  %v3126 = vunpack.c.l.b16 %v3084
  %v3127 = vunpack.c.l.b16 %v3085
  %v3128 = vunpack.c.l.b16 %v3086
  %v3129 = vunpack.c.l.b16 %v3087
  %v3130 = vunpack.c.l.b16 %v3088
  %v3131 = vunpack.c.l.b16 %v3089
  %v3132 = vunpack.c.l.b16 %v3090
  %v3133 = vunpack.c.l.b16 %v3091
  %v3134 = vunpack.c.l.b16 %v3092
  %v3135 = vunpack.c.l.b16 %v3093
  %v3136 = vunpack.c.l.b16 %v3094
  %v3137 = vpack.c.b16 %v3117, %v3116
  %v3138 = vpack.c.b16 %v3119, %v3118
  %v3139 = vpack.c.b16 %v3121, %v3120
  %v3140 = vpack.c.b16 %v3123, %v3122
  %v3141 = vpack.c.b16 %v3125, %v3124
  %v3142 = vpack.c.b16 %v3127, %v3126
  %v3143 = vpack.c.b16 %v3129, %v3128
  %v3144 = vpack.c.b16 %v3131, %v3130
  %v3145 = vpack.c.b16 %v3133, %v3132
  %v3146 = vpack.c.b16 %v3135, %v3134
  %v3147 = vpack.c.b16 %v3136, %v3136
  %v3159 = vsel %vm1794, %v3147, 0
  %3161 = vmatpush.bf16.msra.mxu0 %v3144
  %3162 = vmatpush.bf16.msra.mxu0 %v3143
  %3163 = vmatpush.bf16.msra.mxu0 %v3142
  %3164 = vmatpush.bf16.msra.mxu0 %v3141
  %3165 = vmatpush.bf16.msra.mxu0 %v3140
  %3166 = vmatpush.bf16.msra.mxu0 %v3139
  %3167 = vmatpush.bf16.msra.mxu0 %v3138
  %3168 = vmatpush.bf16.msra.mxu0 %v3137
  %3169 = vmatmul.bf16.gmra.mxu0 %v2727
  %v3170 = vpop.f32.mrf.mxu0
  %v3171 = vadd.f32 0.0, %v3170
  %v3172 = vpop.f32.mrf.mxu0
  %v3173 = vadd.f32 0.0, %v3172
  %3174 = vmatmul.bf16.gmra.mxu0 %v2729
  %v3175 = vpop.f32.mrf.mxu0
  %v3176 = vadd.f32 0.0, %v3175
  %v3177 = vpop.f32.mrf.mxu0
  %v3178 = vadd.f32 0.0, %v3177
  %3179 = vmatmul.bf16.gmra.mxu0 %v2731
  %v3180 = vpop.f32.mrf.mxu0
  %v3181 = vadd.f32 0.0, %v3180
  %v3182 = vpop.f32.mrf.mxu0
  %v3183 = vadd.f32 0.0, %v3182
  %3184 = vmatmul.bf16.gmra.mxu0 %v2733
  %v3185 = vpop.f32.mrf.mxu0
  %v3186 = vadd.f32 0.0, %v3185
  %v3187 = vpop.f32.mrf.mxu0
  %v3188 = vadd.f32 0.0, %v3187
  %3189 = vmatmul.bf16.gmra.mxu0 %v2735
  %v3190 = vpop.f32.mrf.mxu0
  %v3191 = vadd.f32 0.0, %v3190
  %v3192 = vpop.f32.mrf.mxu0
  %v3193 = vadd.f32 0.0, %v3192
  %3194 = vmatmul.bf16.gmra.mxu0 %v2737
  %v3195 = vpop.f32.mrf.mxu0
  %v3196 = vadd.f32 0.0, %v3195
  %v3197 = vpop.f32.mrf.mxu0
  %v3198 = vadd.f32 0.0, %v3197
  %3199 = vmatmul.bf16.gmra.mxu0 %v2739
  %v3200 = vpop.f32.mrf.mxu0
  %v3201 = vadd.f32 0.0, %v3200
  %v3202 = vpop.f32.mrf.mxu0
  %v3203 = vadd.f32 0.0, %v3202
  %3204 = vmatmul.bf16.gmra.mxu0 %v2741
  %v3205 = vpop.f32.mrf.mxu0
  %v3206 = vadd.f32 0.0, %v3205
  %v3207 = vpop.f32.mrf.mxu0
  %v3208 = vadd.f32 0.0, %v3207
  %3209 = vmatmul.bf16.gmra.mxu0 %v2743
  %v3210 = vpop.f32.mrf.mxu0
  %v3211 = vadd.f32 0.0, %v3210
  %v3212 = vpop.f32.mrf.mxu0
  %v3213 = vadd.f32 0.0, %v3212
  %3214 = vmatmul.bf16.gmra.mxu0 %v2745
  %v3215 = vpop.f32.mrf.mxu0
  %v3216 = vadd.f32 0.0, %v3215
  %v3217 = vpop.f32.mrf.mxu0
  %v3218 = vadd.f32 0.0, %v3217
  %3219 = vmatmul.bf16.gmra.mxu0 %v2747
  %v3220 = vpop.f32.mrf.mxu0
  %v3221 = vadd.f32 0.0, %v3220
  %v3222 = vpop.f32.mrf.mxu0
  %v3223 = vadd.f32 0.0, %v3222
  %3224 = vmatmul.bf16.gmra.mxu0 %v2749
  %v3225 = vpop.f32.mrf.mxu0
  %v3226 = vadd.f32 0.0, %v3225
  %v3227 = vpop.f32.mrf.mxu0
  %v3228 = vadd.f32 0.0, %v3227
  %3229 = vmatmul.bf16.gmra.mxu0 %v2751
  %v3230 = vpop.f32.mrf.mxu0
  %v3231 = vadd.f32 0.0, %v3230
  %v3232 = vpop.f32.mrf.mxu0
  %v3233 = vadd.f32 0.0, %v3232
  %3234 = vmatmul.bf16.gmra.mxu0 %v2753
  %v3235 = vpop.f32.mrf.mxu0
  %v3236 = vadd.f32 0.0, %v3235
  %v3237 = vpop.f32.mrf.mxu0
  %v3238 = vadd.f32 0.0, %v3237
  %3239 = vmatmul.bf16.gmra.mxu0 %v2755
  %v3240 = vpop.f32.mrf.mxu0
  %v3241 = vadd.f32 0.0, %v3240
  %v3242 = vpop.f32.mrf.mxu0
  %v3243 = vadd.f32 0.0, %v3242
  %3244 = vmatmul.bf16.gmra.mxu0 %v2757
  %v3245 = vpop.f32.mrf.mxu0
  %v3246 = vadd.f32 0.0, %v3245
  %v3247 = vpop.f32.mrf.mxu0
  %v3248 = vadd.f32 0.0, %v3247
  %3249 = vdwg.mxu0
  %3250 = vmatpush.bf16.msra.mxu0 0
  %3251 = vmatpush.bf16.msra.mxu0 0
  %3252 = vmatpush.bf16.msra.mxu0 0
  %3253 = vmatpush.bf16.msra.mxu0 0
  %3254 = vmatpush.bf16.msra.mxu0 0
  %3255 = vmatpush.bf16.msra.mxu0 %v3159
  %3256 = vmatpush.bf16.msra.mxu0 %v3146
  %3257 = vmatpush.bf16.msra.mxu0 %v3145
  %3258 = vmatmul.bf16.gmra.mxu0 %v2845
  %v3259 = vpop.f32.mrf.mxu0
  %v3260 = vadd.f32 %v3171, %v3259
  %v3261 = vpop.f32.mrf.mxu0
  %v3262 = vadd.f32 %v3173, %v3261
  %3263 = vmatmul.bf16.gmra.mxu0 %v2848
  %v3264 = vpop.f32.mrf.mxu0
  %v3265 = vadd.f32 %v3176, %v3264
  %v3266 = vpop.f32.mrf.mxu0
  %v3267 = vadd.f32 %v3178, %v3266
  %3268 = vmatmul.bf16.gmra.mxu0 %v2851
  %v3269 = vpop.f32.mrf.mxu0
  %v3270 = vadd.f32 %v3181, %v3269
  %v3271 = vpop.f32.mrf.mxu0
  %v3272 = vadd.f32 %v3183, %v3271
  %3273 = vmatmul.bf16.gmra.mxu0 %v2854
  %v3274 = vpop.f32.mrf.mxu0
  %v3275 = vadd.f32 %v3186, %v3274
  %v3276 = vpop.f32.mrf.mxu0
  %v3277 = vadd.f32 %v3188, %v3276
  %3278 = vmatmul.bf16.gmra.mxu0 %v2857
  %v3279 = vpop.f32.mrf.mxu0
  %v3280 = vadd.f32 %v3191, %v3279
  %v3281 = vpop.f32.mrf.mxu0
  %v3282 = vadd.f32 %v3193, %v3281
  %3283 = vmatmul.bf16.gmra.mxu0 %v2860
  %v3284 = vpop.f32.mrf.mxu0
  %v3285 = vadd.f32 %v3196, %v3284
  %v3286 = vpop.f32.mrf.mxu0
  %v3287 = vadd.f32 %v3198, %v3286
  %3288 = vmatmul.bf16.gmra.mxu0 %v2863
  %v3289 = vpop.f32.mrf.mxu0
  %v3290 = vadd.f32 %v3201, %v3289
  %v3291 = vpop.f32.mrf.mxu0
  %v3292 = vadd.f32 %v3203, %v3291
  %3293 = vmatmul.bf16.gmra.mxu0 %v2866
  %v3294 = vpop.f32.mrf.mxu0
  %v3295 = vadd.f32 %v3206, %v3294
  %v3296 = vpop.f32.mrf.mxu0
  %v3297 = vadd.f32 %v3208, %v3296
  %3298 = vmatmul.bf16.gmra.mxu0 %v2869
  %v3299 = vpop.f32.mrf.mxu0
  %v3300 = vadd.f32 %v3211, %v3299
  %v3301 = vpop.f32.mrf.mxu0
  %v3302 = vadd.f32 %v3213, %v3301
  %3303 = vmatmul.bf16.gmra.mxu0 %v2872
  %v3304 = vpop.f32.mrf.mxu0
  %v3305 = vadd.f32 %v3216, %v3304
  %v3306 = vpop.f32.mrf.mxu0
  %v3307 = vadd.f32 %v3218, %v3306
  %3308 = vmatmul.bf16.gmra.mxu0 %v2875
  %v3309 = vpop.f32.mrf.mxu0
  %v3310 = vadd.f32 %v3221, %v3309
  %v3311 = vpop.f32.mrf.mxu0
  %v3312 = vadd.f32 %v3223, %v3311
  %3313 = vmatmul.bf16.gmra.mxu0 %v2878
  %v3314 = vpop.f32.mrf.mxu0
  %v3315 = vadd.f32 %v3226, %v3314
  %v3316 = vpop.f32.mrf.mxu0
  %v3317 = vadd.f32 %v3228, %v3316
  %3318 = vmatmul.bf16.gmra.mxu0 %v2881
  %v3319 = vpop.f32.mrf.mxu0
  %v3320 = vadd.f32 %v3231, %v3319
  %v3321 = vpop.f32.mrf.mxu0
  %v3322 = vadd.f32 %v3233, %v3321
  %3323 = vmatmul.bf16.gmra.mxu0 %v2884
  %v3324 = vpop.f32.mrf.mxu0
  %v3325 = vadd.f32 %v3236, %v3324
  %v3326 = vpop.f32.mrf.mxu0
  %v3327 = vadd.f32 %v3238, %v3326
  %3328 = vmatmul.bf16.gmra.mxu0 %v2887
  %v3329 = vpop.f32.mrf.mxu0
  %v3330 = vadd.f32 %v3241, %v3329
  %v3331 = vpop.f32.mrf.mxu0
  %v3332 = vadd.f32 %v3243, %v3331
  %3333 = vmatmul.bf16.gmra.mxu0 %v2890
  %v3334 = vpop.f32.mrf.mxu0
  %v3335 = vadd.f32 %v3246, %v3334
  %v3336 = vpop.f32.mrf.mxu0
  %v3337 = vadd.f32 %v3248, %v3336
  %3338 = vdwg.mxu0
  %v3339 = vmax.f32 %v2994, %v3260
  %v3340 = vmax.f32 %v2996, %v3262
  %v3341 = vmax.f32 %v2999, %v3265
  %v3342 = vmax.f32 %v3001, %v3267
  %v3343 = vmax.f32 %v3004, %v3270
  %v3344 = vmax.f32 %v3006, %v3272
  %v3345 = vmax.f32 %v3009, %v3275
  %v3346 = vmax.f32 %v3011, %v3277
  %v3347 = vmax.f32 %v3014, %v3280
  %v3348 = vmax.f32 %v3016, %v3282
  %v3349 = vmax.f32 %v3019, %v3285
  %v3350 = vmax.f32 %v3021, %v3287
  %v3351 = vmax.f32 %v3024, %v3290
  %v3352 = vmax.f32 %v3026, %v3292
  %v3353 = vmax.f32 %v3029, %v3295
  %v3354 = vmax.f32 %v3031, %v3297
  %v3355 = vmax.f32 %v3034, %v3300
  %v3356 = vmax.f32 %v3036, %v3302
  %v3357 = vmax.f32 %v3039, %v3305
  %v3358 = vmax.f32 %v3041, %v3307
  %v3359 = vmax.f32 %v3044, %v3310
  %v3360 = vmax.f32 %v3046, %v3312
  %v3361 = vmax.f32 %v3049, %v3315
  %v3362 = vmax.f32 %v3051, %v3317
  %v3363 = vmax.f32 %v3054, %v3320
  %v3364 = vmax.f32 %v3056, %v3322
  %v3365 = vmax.f32 %v3059, %v3325
  %v3366 = vmax.f32 %v3061, %v3327
  %v3367 = vmax.f32 %v3064, %v3330
  %v3368 = vmax.f32 %v3066, %v3332
  %v3369 = vmax.f32 %v3069, %v3335
  %v3370 = vmax.f32 %v3071, %v3337
  %v3371 = vpack.c.bf16 %v3340, %v3339
  %v3372 = vpack.c.bf16 %v3342, %v3341
  %v3373 = vpack.c.bf16 %v3344, %v3343
  %v3374 = vpack.c.bf16 %v3346, %v3345
  %v3375 = vpack.c.bf16 %v3348, %v3347
  %v3376 = vpack.c.bf16 %v3350, %v3349
  %v3377 = vpack.c.bf16 %v3352, %v3351
  %v3378 = vpack.c.bf16 %v3354, %v3353
  %v3379 = vpack.c.bf16 %v3356, %v3355
  %v3380 = vpack.c.bf16 %v3358, %v3357
  %v3381 = vpack.c.bf16 %v3360, %v3359
  %v3382 = vpack.c.bf16 %v3362, %v3361
  %v3383 = vpack.c.bf16 %v3364, %v3363
  %v3384 = vpack.c.bf16 %v3366, %v3365
  %v3385 = vpack.c.bf16 %v3368, %v3367
  %v3386 = vpack.c.bf16 %v3370, %v3369
  %v3387 = vld [vmem:[%s4] sm:$0xff]
  %v3388 = vld [vmem:[%s4 + $0x8] sm:$0xff]
  %v3389 = vld [vmem:[%s4 + $0x10] sm:$0xff]
  %v3390 = vld [vmem:[%s4 + $0x18] sm:$0xff]
  %v3391 = vld [vmem:[%s4 + $0x20] sm:$0xff]
  %v3392 = vld [vmem:[%s4 + $0x28] sm:$0xff]
  %v3393 = vld [vmem:[%s4 + $0x30] sm:$0xff]
  %v3394 = vld [vmem:[%s4 + $0x38] sm:$0xff]
  %v3395 = vld [vmem:[%s4 + $0x40] sm:$0xff]
  %v3396 = vld [vmem:[%s4 + $0x48] sm:$0xff]
  %v3397 = vld [vmem:[%s4 + $0x50] sm:$0x33]
  %v3430 = vrot.slane %v3339, 2
  %v3431 = vrot.slane %v3340, 2
  %v3432 = vsel %vm840, %v3430, %v3431
  %v3433 = vrot.slane %v3341, 2
  %v3434 = vsel %vm840, %v3431, %v3433
  %v3435 = vrot.slane %v3342, 2
  %v3436 = vsel %vm840, %v3433, %v3435
  %v3437 = vrot.slane %v3343, 2
  %v3438 = vsel %vm840, %v3435, %v3437
  %v3439 = vrot.slane %v3344, 2
  %v3440 = vsel %vm840, %v3437, %v3439
  %v3441 = vrot.slane %v3345, 2
  %v3442 = vsel %vm840, %v3439, %v3441
  %v3443 = vrot.slane %v3346, 2
  %v3444 = vsel %vm840, %v3441, %v3443
  %v3445 = vrot.slane %v3347, 2
  %v3446 = vsel %vm840, %v3443, %v3445
  %v3447 = vrot.slane %v3348, 2
  %v3448 = vsel %vm840, %v3445, %v3447
  %v3449 = vrot.slane %v3349, 2
  %v3450 = vsel %vm840, %v3447, %v3449
  %v3451 = vrot.slane %v3350, 2
  %v3452 = vsel %vm840, %v3449, %v3451
  %v3453 = vrot.slane %v3351, 2
  %v3454 = vsel %vm840, %v3451, %v3453
  %v3455 = vrot.slane %v3352, 2
  %v3456 = vsel %vm840, %v3453, %v3455
  %v3457 = vrot.slane %v3353, 2
  %v3458 = vsel %vm840, %v3455, %v3457
  %v3459 = vrot.slane %v3354, 2
  %v3460 = vsel %vm840, %v3457, %v3459
  %v3461 = vrot.slane %v3355, 2
  %v3462 = vsel %vm840, %v3459, %v3461
  %v3463 = vrot.slane %v3356, 2
  %v3464 = vsel %vm840, %v3461, %v3463
  %v3465 = vrot.slane %v3357, 2
  %v3466 = vsel %vm840, %v3463, %v3465
  %v3467 = vrot.slane %v3358, 2
  %v3468 = vsel %vm840, %v3465, %v3467
  %v3469 = vrot.slane %v3359, 2
  %v3470 = vsel %vm840, %v3467, %v3469
  %v3471 = vrot.slane %v3360, 2
  %v3472 = vsel %vm840, %v3469, %v3471
  %v3473 = vrot.slane %v3361, 2
  %v3474 = vsel %vm840, %v3471, %v3473
  %v3475 = vrot.slane %v3362, 2
  %v3476 = vsel %vm840, %v3473, %v3475
  %v3477 = vrot.slane %v3363, 2
  %v3478 = vsel %vm840, %v3475, %v3477
  %v3479 = vrot.slane %v3364, 2
  %v3480 = vsel %vm840, %v3477, %v3479
  %v3481 = vrot.slane %v3365, 2
  %v3482 = vsel %vm840, %v3479, %v3481
  %v3483 = vrot.slane %v3366, 2
  %v3484 = vsel %vm840, %v3481, %v3483
  %v3485 = vrot.slane %v3367, 2
  %v3486 = vsel %vm840, %v3483, %v3485
  %v3487 = vrot.slane %v3368, 2
  %v3488 = vsel %vm840, %v3485, %v3487
  %v3489 = vrot.slane %v3369, 2
  %v3490 = vsel %vm840, %v3487, %v3489
  %v3491 = vrot.slane %v3370, 2
  %v3492 = vsel %vm840, %v3489, %v3491
  %v3526 = vsel %vm840, %v3491, %v3430
  %v3527 = vpack.c.bf16 %v3434, %v3432
  %v3528 = vpack.c.bf16 %v3438, %v3436
  %v3529 = vpack.c.bf16 %v3442, %v3440
  %v3530 = vpack.c.bf16 %v3446, %v3444
  %v3531 = vpack.c.bf16 %v3450, %v3448
  %v3532 = vpack.c.bf16 %v3454, %v3452
  %v3533 = vpack.c.bf16 %v3458, %v3456
  %v3534 = vpack.c.bf16 %v3462, %v3460
  %v3535 = vpack.c.bf16 %v3466, %v3464
  %v3536 = vpack.c.bf16 %v3470, %v3468
  %v3537 = vpack.c.bf16 %v3474, %v3472
  %v3538 = vpack.c.bf16 %v3478, %v3476
  %v3539 = vpack.c.bf16 %v3482, %v3480
  %v3540 = vpack.c.bf16 %v3486, %v3484
  %v3541 = vpack.c.bf16 %v3490, %v3488
  %v3542 = vpack.c.bf16 %v3526, %v3492
  %s3543 = scalar_lea.vmem %s4, 88
  %v3544 = vld [vmem:[%s3543] sm:$0xff]
  %v3545 = vld [vmem:[%s3543 + $0x8] sm:$0xff]
  %v3546 = vld [vmem:[%s3543 + $0x10] sm:$0xff]
  %v3547 = vld [vmem:[%s3543 + $0x18] sm:$0xff]
  %v3548 = vld [vmem:[%s3543 + $0x20] sm:$0xff]
  %v3549 = vld [vmem:[%s3543 + $0x28] sm:$0xff]
  %v3550 = vld [vmem:[%s3543 + $0x30] sm:$0xff]
  %v3551 = vld [vmem:[%s3543 + $0x38] sm:$0xff]
  %v3552 = vld [vmem:[%s3543 + $0x40] sm:$0xff]
  %v3553 = vld [vmem:[%s3543 + $0x48] sm:$0xff]
  %v3554 = vld [vmem:[%s3543 + $0x50] sm:$0x33]
  %v3566 = vunpack.c.l.b16 %v3544
  %v3567 = vunpack.c.h.b16 %v3544
  %v3568 = vunpack.c.l.b16 %v3545
  %v3569 = vunpack.c.h.b16 %v3545
  %v3570 = vunpack.c.l.b16 %v3546
  %v3571 = vunpack.c.h.b16 %v3546
  %v3572 = vunpack.c.l.b16 %v3547
  %v3573 = vunpack.c.h.b16 %v3547
  %v3574 = vunpack.c.l.b16 %v3548
  %v3575 = vunpack.c.h.b16 %v3548
  %v3576 = vunpack.c.l.b16 %v3549
  %v3577 = vunpack.c.h.b16 %v3549
  %v3578 = vunpack.c.l.b16 %v3550
  %v3579 = vunpack.c.h.b16 %v3550
  %v3580 = vunpack.c.l.b16 %v3551
  %v3581 = vunpack.c.h.b16 %v3551
  %v3582 = vunpack.c.l.b16 %v3552
  %v3583 = vunpack.c.h.b16 %v3552
  %v3584 = vunpack.c.l.b16 %v3553
  %v3585 = vunpack.c.h.b16 %v3553
  %v3586 = vunpack.c.l.b16 %v3554
  %v3587 = vunpack.c.h.b16 %v3554
  %v3588 = vpack.c.b16 %v3568, %v3566
  %v3589 = vpack.c.b16 %v3569, %v3567
  %v3590 = vpack.c.b16 %v3572, %v3570
  %v3591 = vpack.c.b16 %v3573, %v3571
  %v3592 = vpack.c.b16 %v3576, %v3574
  %v3593 = vpack.c.b16 %v3577, %v3575
  %v3594 = vpack.c.b16 %v3580, %v3578
  %v3595 = vpack.c.b16 %v3581, %v3579
  %v3596 = vpack.c.b16 %v3584, %v3582
  %v3597 = vpack.c.b16 %v3585, %v3583
  %v3598 = vpack.c.b16 %v3586, %v3586
  %v3599 = vpack.c.b16 %v3587, %v3587
  %vm3610 = vcmask 687104
  %v3612 = vsel %vm3610, %v3527, 0
  %v3615 = vsel %vm3610, %v3528, 0
  %v3618 = vsel %vm3610, %v3529, 0
  %v3621 = vsel %vm3610, %v3530, 0
  %v3624 = vsel %vm3610, %v3531, 0
  %v3627 = vsel %vm3610, %v3532, 0
  %v3630 = vsel %vm3610, %v3533, 0
  %v3633 = vsel %vm3610, %v3534, 0
  %v3636 = vsel %vm3610, %v3535, 0
  %v3639 = vsel %vm3610, %v3536, 0
  %v3642 = vsel %vm3610, %v3537, 0
  %v3645 = vsel %vm3610, %v3538, 0
  %v3648 = vsel %vm3610, %v3539, 0
  %v3651 = vsel %vm3610, %v3540, 0
  %v3654 = vsel %vm3610, %v3541, 0
  %v3657 = vsel %vm3610, %v3542, 0
  %vm3659 = vcmask 1041408
  %v3661 = vsel %vm3659, %v3598, 0
  %v3664 = vsel %vm3659, %v3599, 0
  %3666 = vmatpush.bf16.msra.mxu0 0
  %3667 = vmatpush.bf16.msra.mxu0 0
  %3668 = vmatpush.bf16.msra.mxu0 %v3661
  %3669 = vmatpush.bf16.msra.mxu0 %v3596
  %3670 = vmatpush.bf16.msra.mxu0 %v3594
  %3671 = vmatpush.bf16.msra.mxu0 %v3592
  %3672 = vmatpush.bf16.msra.mxu0 %v3590
  %3673 = vmatpush.bf16.msra.mxu0 %v3588
  %3674 = vmatmul.bf16.gmra.mxu0 %v3612
  %v3675 = vpop.f32.mrf.mxu0
  %v3676 = vadd.f32 0.0, %v3675
  %v3677 = vpop.f32.mrf.mxu0
  %v3678 = vadd.f32 0.0, %v3677
  %3679 = vmatmul.bf16.gmra.mxu0 %v3615
  %v3680 = vpop.f32.mrf.mxu0
  %v3681 = vadd.f32 0.0, %v3680
  %v3682 = vpop.f32.mrf.mxu0
  %v3683 = vadd.f32 0.0, %v3682
  %3684 = vmatmul.bf16.gmra.mxu0 %v3618
  %v3685 = vpop.f32.mrf.mxu0
  %v3686 = vadd.f32 0.0, %v3685
  %v3687 = vpop.f32.mrf.mxu0
  %v3688 = vadd.f32 0.0, %v3687
  %3689 = vmatmul.bf16.gmra.mxu0 %v3621
  %v3690 = vpop.f32.mrf.mxu0
  %v3691 = vadd.f32 0.0, %v3690
  %v3692 = vpop.f32.mrf.mxu0
  %v3693 = vadd.f32 0.0, %v3692
  %3694 = vmatmul.bf16.gmra.mxu0 %v3624
  %v3695 = vpop.f32.mrf.mxu0
  %v3696 = vadd.f32 0.0, %v3695
  %v3697 = vpop.f32.mrf.mxu0
  %v3698 = vadd.f32 0.0, %v3697
  %3699 = vmatmul.bf16.gmra.mxu0 %v3627
  %v3700 = vpop.f32.mrf.mxu0
  %v3701 = vadd.f32 0.0, %v3700
  %v3702 = vpop.f32.mrf.mxu0
  %v3703 = vadd.f32 0.0, %v3702
  %3704 = vmatmul.bf16.gmra.mxu0 %v3630
  %v3705 = vpop.f32.mrf.mxu0
  %v3706 = vadd.f32 0.0, %v3705
  %v3707 = vpop.f32.mrf.mxu0
  %v3708 = vadd.f32 0.0, %v3707
  %3709 = vmatmul.bf16.gmra.mxu0 %v3633
  %v3710 = vpop.f32.mrf.mxu0
  %v3711 = vadd.f32 0.0, %v3710
  %v3712 = vpop.f32.mrf.mxu0
  %v3713 = vadd.f32 0.0, %v3712
  %3714 = vmatmul.bf16.gmra.mxu0 %v3636
  %v3715 = vpop.f32.mrf.mxu0
  %v3716 = vadd.f32 0.0, %v3715
  %v3717 = vpop.f32.mrf.mxu0
  %v3718 = vadd.f32 0.0, %v3717
  %3719 = vmatmul.bf16.gmra.mxu0 %v3639
  %v3720 = vpop.f32.mrf.mxu0
  %v3721 = vadd.f32 0.0, %v3720
  %v3722 = vpop.f32.mrf.mxu0
  %v3723 = vadd.f32 0.0, %v3722
  %3724 = vmatmul.bf16.gmra.mxu0 %v3642
  %v3725 = vpop.f32.mrf.mxu0
  %v3726 = vadd.f32 0.0, %v3725
  %v3727 = vpop.f32.mrf.mxu0
  %v3728 = vadd.f32 0.0, %v3727
  %3729 = vmatmul.bf16.gmra.mxu0 %v3645
  %v3730 = vpop.f32.mrf.mxu0
  %v3731 = vadd.f32 0.0, %v3730
  %v3732 = vpop.f32.mrf.mxu0
  %v3733 = vadd.f32 0.0, %v3732
  %3734 = vmatmul.bf16.gmra.mxu0 %v3648
  %v3735 = vpop.f32.mrf.mxu0
  %v3736 = vadd.f32 0.0, %v3735
  %v3737 = vpop.f32.mrf.mxu0
  %v3738 = vadd.f32 0.0, %v3737
  %3739 = vmatmul.bf16.gmra.mxu0 %v3651
  %v3740 = vpop.f32.mrf.mxu0
  %v3741 = vadd.f32 0.0, %v3740
  %v3742 = vpop.f32.mrf.mxu0
  %v3743 = vadd.f32 0.0, %v3742
  %3744 = vmatmul.bf16.gmra.mxu0 %v3654
  %v3745 = vpop.f32.mrf.mxu0
  %v3746 = vadd.f32 0.0, %v3745
  %v3747 = vpop.f32.mrf.mxu0
  %v3748 = vadd.f32 0.0, %v3747
  %3749 = vmatmul.bf16.gmra.mxu0 %v3657
  %v3750 = vpop.f32.mrf.mxu0
  %v3751 = vadd.f32 0.0, %v3750
  %v3752 = vpop.f32.mrf.mxu0
  %v3753 = vadd.f32 0.0, %v3752
  %3754 = vdwg.mxu0
  %3755 = vmatpush.bf16.msra.mxu0 0
  %3756 = vmatpush.bf16.msra.mxu0 0
  %3757 = vmatpush.bf16.msra.mxu0 %v3664
  %3758 = vmatpush.bf16.msra.mxu0 %v3597
  %3759 = vmatpush.bf16.msra.mxu0 %v3595
  %3760 = vmatpush.bf16.msra.mxu0 %v3593
  %3761 = vmatpush.bf16.msra.mxu0 %v3591
  %3762 = vmatpush.bf16.msra.mxu0 %v3589
  %3763 = vmatmul.bf16.gmra.mxu0 %v3612
  %v3764 = vpop.f32.mrf.mxu0
  %v3765 = vadd.f32 0.0, %v3764
  %v3766 = vpop.f32.mrf.mxu0
  %v3767 = vadd.f32 0.0, %v3766
  %3768 = vmatmul.bf16.gmra.mxu0 %v3615
  %v3769 = vpop.f32.mrf.mxu0
  %v3770 = vadd.f32 0.0, %v3769
  %v3771 = vpop.f32.mrf.mxu0
  %v3772 = vadd.f32 0.0, %v3771
  %3773 = vmatmul.bf16.gmra.mxu0 %v3618
  %v3774 = vpop.f32.mrf.mxu0
  %v3775 = vadd.f32 0.0, %v3774
  %v3776 = vpop.f32.mrf.mxu0
  %v3777 = vadd.f32 0.0, %v3776
  %3778 = vmatmul.bf16.gmra.mxu0 %v3621
  %v3779 = vpop.f32.mrf.mxu0
  %v3780 = vadd.f32 0.0, %v3779
  %v3781 = vpop.f32.mrf.mxu0
  %v3782 = vadd.f32 0.0, %v3781
  %3783 = vmatmul.bf16.gmra.mxu0 %v3624
  %v3784 = vpop.f32.mrf.mxu0
  %v3785 = vadd.f32 0.0, %v3784
  %v3786 = vpop.f32.mrf.mxu0
  %v3787 = vadd.f32 0.0, %v3786
  %3788 = vmatmul.bf16.gmra.mxu0 %v3627
  %v3789 = vpop.f32.mrf.mxu0
  %v3790 = vadd.f32 0.0, %v3789
  %v3791 = vpop.f32.mrf.mxu0
  %v3792 = vadd.f32 0.0, %v3791
  %3793 = vmatmul.bf16.gmra.mxu0 %v3630
  %v3794 = vpop.f32.mrf.mxu0
  %v3795 = vadd.f32 0.0, %v3794
  %v3796 = vpop.f32.mrf.mxu0
  %v3797 = vadd.f32 0.0, %v3796
  %3798 = vmatmul.bf16.gmra.mxu0 %v3633
  %v3799 = vpop.f32.mrf.mxu0
  %v3800 = vadd.f32 0.0, %v3799
  %v3801 = vpop.f32.mrf.mxu0
  %v3802 = vadd.f32 0.0, %v3801
  %3803 = vmatmul.bf16.gmra.mxu0 %v3636
  %v3804 = vpop.f32.mrf.mxu0
  %v3805 = vadd.f32 0.0, %v3804
  %v3806 = vpop.f32.mrf.mxu0
  %v3807 = vadd.f32 0.0, %v3806
  %3808 = vmatmul.bf16.gmra.mxu0 %v3639
  %v3809 = vpop.f32.mrf.mxu0
  %v3810 = vadd.f32 0.0, %v3809
  %v3811 = vpop.f32.mrf.mxu0
  %v3812 = vadd.f32 0.0, %v3811
  %3813 = vmatmul.bf16.gmra.mxu0 %v3642
  %v3814 = vpop.f32.mrf.mxu0
  %v3815 = vadd.f32 0.0, %v3814
  %v3816 = vpop.f32.mrf.mxu0
  %v3817 = vadd.f32 0.0, %v3816
  %3818 = vmatmul.bf16.gmra.mxu0 %v3645
  %v3819 = vpop.f32.mrf.mxu0
  %v3820 = vadd.f32 0.0, %v3819
  %v3821 = vpop.f32.mrf.mxu0
  %v3822 = vadd.f32 0.0, %v3821
  %3823 = vmatmul.bf16.gmra.mxu0 %v3648
  %v3824 = vpop.f32.mrf.mxu0
  %v3825 = vadd.f32 0.0, %v3824
  %v3826 = vpop.f32.mrf.mxu0
  %v3827 = vadd.f32 0.0, %v3826
  %3828 = vmatmul.bf16.gmra.mxu0 %v3651
  %v3829 = vpop.f32.mrf.mxu0
  %v3830 = vadd.f32 0.0, %v3829
  %v3831 = vpop.f32.mrf.mxu0
  %v3832 = vadd.f32 0.0, %v3831
  %3833 = vmatmul.bf16.gmra.mxu0 %v3654
  %v3834 = vpop.f32.mrf.mxu0
  %v3835 = vadd.f32 0.0, %v3834
  %v3836 = vpop.f32.mrf.mxu0
  %v3837 = vadd.f32 0.0, %v3836
  %3838 = vmatmul.bf16.gmra.mxu0 %v3657
  %v3839 = vpop.f32.mrf.mxu0
  %v3840 = vadd.f32 0.0, %v3839
  %v3841 = vpop.f32.mrf.mxu0
  %v3842 = vadd.f32 0.0, %v3841
  %3843 = vdwg.mxu0
  %v3855 = vunpack.c.l.b16 %v3387
  %v3856 = vunpack.c.h.b16 %v3387
  %v3857 = vunpack.c.l.b16 %v3388
  %v3858 = vunpack.c.h.b16 %v3388
  %v3859 = vunpack.c.l.b16 %v3389
  %v3860 = vunpack.c.h.b16 %v3389
  %v3861 = vunpack.c.l.b16 %v3390
  %v3862 = vunpack.c.h.b16 %v3390
  %v3863 = vunpack.c.l.b16 %v3391
  %v3864 = vunpack.c.h.b16 %v3391
  %v3865 = vunpack.c.l.b16 %v3392
  %v3866 = vunpack.c.h.b16 %v3392
  %v3867 = vunpack.c.l.b16 %v3393
  %v3868 = vunpack.c.h.b16 %v3393
  %v3869 = vunpack.c.l.b16 %v3394
  %v3870 = vunpack.c.h.b16 %v3394
  %v3871 = vunpack.c.l.b16 %v3395
  %v3872 = vunpack.c.h.b16 %v3395
  %v3873 = vunpack.c.l.b16 %v3396
  %v3874 = vunpack.c.h.b16 %v3396
  %v3875 = vunpack.c.l.b16 %v3397
  %v3876 = vunpack.c.h.b16 %v3397
  %v3877 = vpack.c.b16 %v3857, %v3855
  %v3878 = vpack.c.b16 %v3858, %v3856
  %v3879 = vpack.c.b16 %v3861, %v3859
  %v3880 = vpack.c.b16 %v3862, %v3860
  %v3881 = vpack.c.b16 %v3865, %v3863
  %v3882 = vpack.c.b16 %v3866, %v3864
  %v3883 = vpack.c.b16 %v3869, %v3867
  %v3884 = vpack.c.b16 %v3870, %v3868
  %v3885 = vpack.c.b16 %v3873, %v3871
  %v3886 = vpack.c.b16 %v3874, %v3872
  %v3887 = vpack.c.b16 %v3875, %v3875
  %v3888 = vpack.c.b16 %v3876, %v3876
  %v3900 = vsel %vm3610, %v3371, 0
  %v3903 = vsel %vm3610, %v3372, 0
  %v3906 = vsel %vm3610, %v3373, 0
  %v3909 = vsel %vm3610, %v3374, 0
  %v3912 = vsel %vm3610, %v3375, 0
  %v3915 = vsel %vm3610, %v3376, 0
  %v3918 = vsel %vm3610, %v3377, 0
  %v3921 = vsel %vm3610, %v3378, 0
  %v3924 = vsel %vm3610, %v3379, 0
  %v3927 = vsel %vm3610, %v3380, 0
  %v3930 = vsel %vm3610, %v3381, 0
  %v3933 = vsel %vm3610, %v3382, 0
  %v3936 = vsel %vm3610, %v3383, 0
  %v3939 = vsel %vm3610, %v3384, 0
  %v3942 = vsel %vm3610, %v3385, 0
  %v3945 = vsel %vm3610, %v3386, 0
  %v3948 = vsel %vm3659, %v3887, 0
  %v3951 = vsel %vm3659, %v3888, 0
  %3953 = vmatpush.bf16.msra.mxu0 0
  %3954 = vmatpush.bf16.msra.mxu0 0
  %3955 = vmatpush.bf16.msra.mxu0 %v3948
  %3956 = vmatpush.bf16.msra.mxu0 %v3885
  %3957 = vmatpush.bf16.msra.mxu0 %v3883
  %3958 = vmatpush.bf16.msra.mxu0 %v3881
  %3959 = vmatpush.bf16.msra.mxu0 %v3879
  %3960 = vmatpush.bf16.msra.mxu0 %v3877
  %3961 = vmatmul.bf16.gmra.mxu0 %v3900
  %v3962 = vpop.f32.mrf.mxu0
  %v3963 = vadd.f32 %v3676, %v3962
  %v3964 = vpop.f32.mrf.mxu0
  %v3965 = vadd.f32 %v3678, %v3964
  %3966 = vmatmul.bf16.gmra.mxu0 %v3903
  %v3967 = vpop.f32.mrf.mxu0
  %v3968 = vadd.f32 %v3681, %v3967
  %v3969 = vpop.f32.mrf.mxu0
  %v3970 = vadd.f32 %v3683, %v3969
  %3971 = vmatmul.bf16.gmra.mxu0 %v3906
  %v3972 = vpop.f32.mrf.mxu0
  %v3973 = vadd.f32 %v3686, %v3972
  %v3974 = vpop.f32.mrf.mxu0
  %v3975 = vadd.f32 %v3688, %v3974
  %3976 = vmatmul.bf16.gmra.mxu0 %v3909
  %v3977 = vpop.f32.mrf.mxu0
  %v3978 = vadd.f32 %v3691, %v3977
  %v3979 = vpop.f32.mrf.mxu0
  %v3980 = vadd.f32 %v3693, %v3979
  %3981 = vmatmul.bf16.gmra.mxu0 %v3912
  %v3982 = vpop.f32.mrf.mxu0
  %v3983 = vadd.f32 %v3696, %v3982
  %v3984 = vpop.f32.mrf.mxu0
  %v3985 = vadd.f32 %v3698, %v3984
  %3986 = vmatmul.bf16.gmra.mxu0 %v3915
  %v3987 = vpop.f32.mrf.mxu0
  %v3988 = vadd.f32 %v3701, %v3987
  %v3989 = vpop.f32.mrf.mxu0
  %v3990 = vadd.f32 %v3703, %v3989
  %3991 = vmatmul.bf16.gmra.mxu0 %v3918
  %v3992 = vpop.f32.mrf.mxu0
  %v3993 = vadd.f32 %v3706, %v3992
  %v3994 = vpop.f32.mrf.mxu0
  %v3995 = vadd.f32 %v3708, %v3994
  %3996 = vmatmul.bf16.gmra.mxu0 %v3921
  %v3997 = vpop.f32.mrf.mxu0
  %v3998 = vadd.f32 %v3711, %v3997
  %v3999 = vpop.f32.mrf.mxu0
  %v4000 = vadd.f32 %v3713, %v3999
  %4001 = vmatmul.bf16.gmra.mxu0 %v3924
  %v4002 = vpop.f32.mrf.mxu0
  %v4003 = vadd.f32 %v3716, %v4002
  %v4004 = vpop.f32.mrf.mxu0
  %v4005 = vadd.f32 %v3718, %v4004
  %4006 = vmatmul.bf16.gmra.mxu0 %v3927
  %v4007 = vpop.f32.mrf.mxu0
  %v4008 = vadd.f32 %v3721, %v4007
  %v4009 = vpop.f32.mrf.mxu0
  %v4010 = vadd.f32 %v3723, %v4009
  %4011 = vmatmul.bf16.gmra.mxu0 %v3930
  %v4012 = vpop.f32.mrf.mxu0
  %v4013 = vadd.f32 %v3726, %v4012
  %v4014 = vpop.f32.mrf.mxu0
  %v4015 = vadd.f32 %v3728, %v4014
  %4016 = vmatmul.bf16.gmra.mxu0 %v3933
  %v4017 = vpop.f32.mrf.mxu0
  %v4018 = vadd.f32 %v3731, %v4017
  %v4019 = vpop.f32.mrf.mxu0
  %v4020 = vadd.f32 %v3733, %v4019
  %4021 = vmatmul.bf16.gmra.mxu0 %v3936
  %v4022 = vpop.f32.mrf.mxu0
  %v4023 = vadd.f32 %v3736, %v4022
  %v4024 = vpop.f32.mrf.mxu0
  %v4025 = vadd.f32 %v3738, %v4024
  %4026 = vmatmul.bf16.gmra.mxu0 %v3939
  %v4027 = vpop.f32.mrf.mxu0
  %v4028 = vadd.f32 %v3741, %v4027
  %v4029 = vpop.f32.mrf.mxu0
  %v4030 = vadd.f32 %v3743, %v4029
  %4031 = vmatmul.bf16.gmra.mxu0 %v3942
  %v4032 = vpop.f32.mrf.mxu0
  %v4033 = vadd.f32 %v3746, %v4032
  %v4034 = vpop.f32.mrf.mxu0
  %v4035 = vadd.f32 %v3748, %v4034
  %4036 = vmatmul.bf16.gmra.mxu0 %v3945
  %v4037 = vpop.f32.mrf.mxu0
  %v4038 = vadd.f32 %v3751, %v4037
  %v4039 = vpop.f32.mrf.mxu0
  %v4040 = vadd.f32 %v3753, %v4039
  %4041 = vdwg.mxu0
  %4042 = vmatpush.bf16.msra.mxu0 0
  %4043 = vmatpush.bf16.msra.mxu0 0
  %4044 = vmatpush.bf16.msra.mxu0 %v3951
  %4045 = vmatpush.bf16.msra.mxu0 %v3886
  %4046 = vmatpush.bf16.msra.mxu0 %v3884
  %4047 = vmatpush.bf16.msra.mxu0 %v3882
  %4048 = vmatpush.bf16.msra.mxu0 %v3880
  %4049 = vmatpush.bf16.msra.mxu0 %v3878
  %4050 = vmatmul.bf16.gmra.mxu0 %v3900
  %v4051 = vpop.f32.mrf.mxu0
  %v4052 = vadd.f32 %v3765, %v4051
  %v4053 = vpop.f32.mrf.mxu0
  %v4054 = vadd.f32 %v3767, %v4053
  %4055 = vmatmul.bf16.gmra.mxu0 %v3903
  %v4056 = vpop.f32.mrf.mxu0
  %v4057 = vadd.f32 %v3770, %v4056
  %v4058 = vpop.f32.mrf.mxu0
  %v4059 = vadd.f32 %v3772, %v4058
  %4060 = vmatmul.bf16.gmra.mxu0 %v3906
  %v4061 = vpop.f32.mrf.mxu0
  %v4062 = vadd.f32 %v3775, %v4061
  %v4063 = vpop.f32.mrf.mxu0
  %v4064 = vadd.f32 %v3777, %v4063
  %4065 = vmatmul.bf16.gmra.mxu0 %v3909
  %v4066 = vpop.f32.mrf.mxu0
  %v4067 = vadd.f32 %v3780, %v4066
  %v4068 = vpop.f32.mrf.mxu0
  %v4069 = vadd.f32 %v3782, %v4068
  %4070 = vmatmul.bf16.gmra.mxu0 %v3912
  %v4071 = vpop.f32.mrf.mxu0
  %v4072 = vadd.f32 %v3785, %v4071
  %v4073 = vpop.f32.mrf.mxu0
  %v4074 = vadd.f32 %v3787, %v4073
  %4075 = vmatmul.bf16.gmra.mxu0 %v3915
  %v4076 = vpop.f32.mrf.mxu0
  %v4077 = vadd.f32 %v3790, %v4076
  %v4078 = vpop.f32.mrf.mxu0
  %v4079 = vadd.f32 %v3792, %v4078
  %4080 = vmatmul.bf16.gmra.mxu0 %v3918
  %v4081 = vpop.f32.mrf.mxu0
  %v4082 = vadd.f32 %v3795, %v4081
  %v4083 = vpop.f32.mrf.mxu0
  %v4084 = vadd.f32 %v3797, %v4083
  %4085 = vmatmul.bf16.gmra.mxu0 %v3921
  %v4086 = vpop.f32.mrf.mxu0
  %v4087 = vadd.f32 %v3800, %v4086
  %v4088 = vpop.f32.mrf.mxu0
  %v4089 = vadd.f32 %v3802, %v4088
  %4090 = vmatmul.bf16.gmra.mxu0 %v3924
  %v4091 = vpop.f32.mrf.mxu0
  %v4092 = vadd.f32 %v3805, %v4091
  %v4093 = vpop.f32.mrf.mxu0
  %v4094 = vadd.f32 %v3807, %v4093
  %4095 = vmatmul.bf16.gmra.mxu0 %v3927
  %v4096 = vpop.f32.mrf.mxu0
  %v4097 = vadd.f32 %v3810, %v4096
  %v4098 = vpop.f32.mrf.mxu0
  %v4099 = vadd.f32 %v3812, %v4098
  %4100 = vmatmul.bf16.gmra.mxu0 %v3930
  %v4101 = vpop.f32.mrf.mxu0
  %v4102 = vadd.f32 %v3815, %v4101
  %v4103 = vpop.f32.mrf.mxu0
  %v4104 = vadd.f32 %v3817, %v4103
  %4105 = vmatmul.bf16.gmra.mxu0 %v3933
  %v4106 = vpop.f32.mrf.mxu0
  %v4107 = vadd.f32 %v3820, %v4106
  %v4108 = vpop.f32.mrf.mxu0
  %v4109 = vadd.f32 %v3822, %v4108
  %4110 = vmatmul.bf16.gmra.mxu0 %v3936
  %v4111 = vpop.f32.mrf.mxu0
  %v4112 = vadd.f32 %v3825, %v4111
  %v4113 = vpop.f32.mrf.mxu0
  %v4114 = vadd.f32 %v3827, %v4113
  %4115 = vmatmul.bf16.gmra.mxu0 %v3939
  %v4116 = vpop.f32.mrf.mxu0
  %v4117 = vadd.f32 %v3830, %v4116
  %v4118 = vpop.f32.mrf.mxu0
  %v4119 = vadd.f32 %v3832, %v4118
  %4120 = vmatmul.bf16.gmra.mxu0 %v3942
  %v4121 = vpop.f32.mrf.mxu0
  %v4122 = vadd.f32 %v3835, %v4121
  %v4123 = vpop.f32.mrf.mxu0
  %v4124 = vadd.f32 %v3837, %v4123
  %4125 = vmatmul.bf16.gmra.mxu0 %v3945
  %v4126 = vpop.f32.mrf.mxu0
  %v4127 = vadd.f32 %v3840, %v4126
  %v4128 = vpop.f32.mrf.mxu0
  %v4129 = vadd.f32 %v3842, %v4128
  %4130 = vdwg.mxu0
  %v4131 = vrot.slane %v3339, 4
  %v4132 = vrot.slane %v3340, 4
  %v4133 = vsel %vm1794, %v4131, %v4132
  %v4134 = vrot.slane %v3341, 4
  %v4135 = vsel %vm1794, %v4132, %v4134
  %v4136 = vrot.slane %v3342, 4
  %v4137 = vsel %vm1794, %v4134, %v4136
  %v4138 = vrot.slane %v3343, 4
  %v4139 = vsel %vm1794, %v4136, %v4138
  %v4140 = vrot.slane %v3344, 4
  %v4141 = vsel %vm1794, %v4138, %v4140
  %v4142 = vrot.slane %v3345, 4
  %v4143 = vsel %vm1794, %v4140, %v4142
  %v4144 = vrot.slane %v3346, 4
  %v4145 = vsel %vm1794, %v4142, %v4144
  %v4146 = vrot.slane %v3347, 4
  %v4147 = vsel %vm1794, %v4144, %v4146
  %v4148 = vrot.slane %v3348, 4
  %v4149 = vsel %vm1794, %v4146, %v4148
  %v4150 = vrot.slane %v3349, 4
  %v4151 = vsel %vm1794, %v4148, %v4150
  %v4152 = vrot.slane %v3350, 4
  %v4153 = vsel %vm1794, %v4150, %v4152
  %v4154 = vrot.slane %v3351, 4
  %v4155 = vsel %vm1794, %v4152, %v4154
  %v4156 = vrot.slane %v3352, 4
  %v4157 = vsel %vm1794, %v4154, %v4156
  %v4158 = vrot.slane %v3353, 4
  %v4159 = vsel %vm1794, %v4156, %v4158
  %v4160 = vrot.slane %v3354, 4
  %v4161 = vsel %vm1794, %v4158, %v4160
  %v4162 = vrot.slane %v3355, 4
  %v4163 = vsel %vm1794, %v4160, %v4162
  %v4164 = vrot.slane %v3356, 4
  %v4165 = vsel %vm1794, %v4162, %v4164
  %v4166 = vrot.slane %v3357, 4
  %v4167 = vsel %vm1794, %v4164, %v4166
  %v4168 = vrot.slane %v3358, 4
  %v4169 = vsel %vm1794, %v4166, %v4168
  %v4170 = vrot.slane %v3359, 4
  %v4171 = vsel %vm1794, %v4168, %v4170
  %v4172 = vrot.slane %v3360, 4
  %v4173 = vsel %vm1794, %v4170, %v4172
  %v4174 = vrot.slane %v3361, 4
  %v4175 = vsel %vm1794, %v4172, %v4174
  %v4176 = vrot.slane %v3362, 4
  %v4177 = vsel %vm1794, %v4174, %v4176
  %v4178 = vrot.slane %v3363, 4
  %v4179 = vsel %vm1794, %v4176, %v4178
  %v4180 = vrot.slane %v3364, 4
  %v4181 = vsel %vm1794, %v4178, %v4180
  %v4182 = vrot.slane %v3365, 4
  %v4183 = vsel %vm1794, %v4180, %v4182
  %v4184 = vrot.slane %v3366, 4
  %v4185 = vsel %vm1794, %v4182, %v4184
  %v4186 = vrot.slane %v3367, 4
  %v4187 = vsel %vm1794, %v4184, %v4186
  %v4188 = vrot.slane %v3368, 4
  %v4189 = vsel %vm1794, %v4186, %v4188
  %v4190 = vrot.slane %v3369, 4
  %v4191 = vsel %vm1794, %v4188, %v4190
  %v4192 = vrot.slane %v3370, 4
  %v4193 = vsel %vm1794, %v4190, %v4192
  %v4227 = vsel %vm1794, %v4192, %v4131
  %v4228 = vpack.c.bf16 %v4135, %v4133
  %v4229 = vpack.c.bf16 %v4139, %v4137
  %v4230 = vpack.c.bf16 %v4143, %v4141
  %v4231 = vpack.c.bf16 %v4147, %v4145
  %v4232 = vpack.c.bf16 %v4151, %v4149
  %v4233 = vpack.c.bf16 %v4155, %v4153
  %v4234 = vpack.c.bf16 %v4159, %v4157
  %v4235 = vpack.c.bf16 %v4163, %v4161
  %v4236 = vpack.c.bf16 %v4167, %v4165
  %v4237 = vpack.c.bf16 %v4171, %v4169
  %v4238 = vpack.c.bf16 %v4175, %v4173
  %v4239 = vpack.c.bf16 %v4179, %v4177
  %v4240 = vpack.c.bf16 %v4183, %v4181
  %v4241 = vpack.c.bf16 %v4187, %v4185
  %v4242 = vpack.c.bf16 %v4191, %v4189
  %v4243 = vpack.c.bf16 %v4227, %v4193
  %s4244 = scalar_lea.vmem %s4, 176
  %v4245 = vld [vmem:[%s4244] sm:$0xff]
  %v4246 = vld [vmem:[%s4244 + $0x8] sm:$0xff]
  %v4247 = vld [vmem:[%s4244 + $0x10] sm:$0xff]
  %v4248 = vld [vmem:[%s4244 + $0x18] sm:$0xff]
  %v4249 = vld [vmem:[%s4244 + $0x20] sm:$0xff]
  %v4250 = vld [vmem:[%s4244 + $0x28] sm:$0xff]
  %v4251 = vld [vmem:[%s4244 + $0x30] sm:$0xff]
  %v4252 = vld [vmem:[%s4244 + $0x38] sm:$0xff]
  %v4253 = vld [vmem:[%s4244 + $0x40] sm:$0xff]
  %v4254 = vld [vmem:[%s4244 + $0x48] sm:$0xff]
  %v4255 = vld [vmem:[%s4244 + $0x50] sm:$0x33]
  %v4267 = vunpack.c.l.b16 %v4245
  %v4268 = vunpack.c.h.b16 %v4245
  %v4269 = vunpack.c.l.b16 %v4246
  %v4270 = vunpack.c.h.b16 %v4246
  %v4271 = vunpack.c.l.b16 %v4247
  %v4272 = vunpack.c.h.b16 %v4247
  %v4273 = vunpack.c.l.b16 %v4248
  %v4274 = vunpack.c.h.b16 %v4248
  %v4275 = vunpack.c.l.b16 %v4249
  %v4276 = vunpack.c.h.b16 %v4249
  %v4277 = vunpack.c.l.b16 %v4250
  %v4278 = vunpack.c.h.b16 %v4250
  %v4279 = vunpack.c.l.b16 %v4251
  %v4280 = vunpack.c.h.b16 %v4251
  %v4281 = vunpack.c.l.b16 %v4252
  %v4282 = vunpack.c.h.b16 %v4252
  %v4283 = vunpack.c.l.b16 %v4253
  %v4284 = vunpack.c.h.b16 %v4253
  %v4285 = vunpack.c.l.b16 %v4254
  %v4286 = vunpack.c.h.b16 %v4254
  %v4287 = vunpack.c.l.b16 %v4255
  %v4288 = vunpack.c.h.b16 %v4255
  %v4289 = vpack.c.b16 %v4269, %v4267
  %v4290 = vpack.c.b16 %v4270, %v4268
  %v4291 = vpack.c.b16 %v4273, %v4271
  %v4292 = vpack.c.b16 %v4274, %v4272
  %v4293 = vpack.c.b16 %v4277, %v4275
  %v4294 = vpack.c.b16 %v4278, %v4276
  %v4295 = vpack.c.b16 %v4281, %v4279
  %v4296 = vpack.c.b16 %v4282, %v4280
  %v4297 = vpack.c.b16 %v4285, %v4283
  %v4298 = vpack.c.b16 %v4286, %v4284
  %v4299 = vpack.c.b16 %v4287, %v4287
  %v4300 = vpack.c.b16 %v4288, %v4288
  %v4312 = vsel %vm3610, %v4228, 0
  %v4315 = vsel %vm3610, %v4229, 0
  %v4318 = vsel %vm3610, %v4230, 0
  %v4321 = vsel %vm3610, %v4231, 0
  %v4324 = vsel %vm3610, %v4232, 0
  %v4327 = vsel %vm3610, %v4233, 0
  %v4330 = vsel %vm3610, %v4234, 0
  %v4333 = vsel %vm3610, %v4235, 0
  %v4336 = vsel %vm3610, %v4236, 0
  %v4339 = vsel %vm3610, %v4237, 0
  %v4342 = vsel %vm3610, %v4238, 0
  %v4345 = vsel %vm3610, %v4239, 0
  %v4348 = vsel %vm3610, %v4240, 0
  %v4351 = vsel %vm3610, %v4241, 0
  %v4354 = vsel %vm3610, %v4242, 0
  %v4357 = vsel %vm3610, %v4243, 0
  %v4360 = vsel %vm3659, %v4299, 0
  %v4363 = vsel %vm3659, %v4300, 0
  %4365 = vmatpush.bf16.msra.mxu0 0
  %4366 = vmatpush.bf16.msra.mxu0 0
  %4367 = vmatpush.bf16.msra.mxu0 %v4360
  %4368 = vmatpush.bf16.msra.mxu0 %v4297
  %4369 = vmatpush.bf16.msra.mxu0 %v4295
  %4370 = vmatpush.bf16.msra.mxu0 %v4293
  %4371 = vmatpush.bf16.msra.mxu0 %v4291
  %4372 = vmatpush.bf16.msra.mxu0 %v4289
  %4373 = vmatmul.bf16.gmra.mxu0 %v4312
  %v4374 = vpop.f32.mrf.mxu0
  %v4375 = vadd.f32 0.0, %v4374
  %v4376 = vpop.f32.mrf.mxu0
  %v4377 = vadd.f32 0.0, %v4376
  %4378 = vmatmul.bf16.gmra.mxu0 %v4315
  %v4379 = vpop.f32.mrf.mxu0
  %v4380 = vadd.f32 0.0, %v4379
  %v4381 = vpop.f32.mrf.mxu0
  %v4382 = vadd.f32 0.0, %v4381
  %4383 = vmatmul.bf16.gmra.mxu0 %v4318
  %v4384 = vpop.f32.mrf.mxu0
  %v4385 = vadd.f32 0.0, %v4384
  %v4386 = vpop.f32.mrf.mxu0
  %v4387 = vadd.f32 0.0, %v4386
  %4388 = vmatmul.bf16.gmra.mxu0 %v4321
  %v4389 = vpop.f32.mrf.mxu0
  %v4390 = vadd.f32 0.0, %v4389
  %v4391 = vpop.f32.mrf.mxu0
  %v4392 = vadd.f32 0.0, %v4391
  %4393 = vmatmul.bf16.gmra.mxu0 %v4324
  %v4394 = vpop.f32.mrf.mxu0
  %v4395 = vadd.f32 0.0, %v4394
  %v4396 = vpop.f32.mrf.mxu0
  %v4397 = vadd.f32 0.0, %v4396
  %4398 = vmatmul.bf16.gmra.mxu0 %v4327
  %v4399 = vpop.f32.mrf.mxu0
  %v4400 = vadd.f32 0.0, %v4399
  %v4401 = vpop.f32.mrf.mxu0
  %v4402 = vadd.f32 0.0, %v4401
  %4403 = vmatmul.bf16.gmra.mxu0 %v4330
  %v4404 = vpop.f32.mrf.mxu0
  %v4405 = vadd.f32 0.0, %v4404
  %v4406 = vpop.f32.mrf.mxu0
  %v4407 = vadd.f32 0.0, %v4406
  %4408 = vmatmul.bf16.gmra.mxu0 %v4333
  %v4409 = vpop.f32.mrf.mxu0
  %v4410 = vadd.f32 0.0, %v4409
  %v4411 = vpop.f32.mrf.mxu0
  %v4412 = vadd.f32 0.0, %v4411
  %4413 = vmatmul.bf16.gmra.mxu0 %v4336
  %v4414 = vpop.f32.mrf.mxu0
  %v4415 = vadd.f32 0.0, %v4414
  %v4416 = vpop.f32.mrf.mxu0
  %v4417 = vadd.f32 0.0, %v4416
  %4418 = vmatmul.bf16.gmra.mxu0 %v4339
  %v4419 = vpop.f32.mrf.mxu0
  %v4420 = vadd.f32 0.0, %v4419
  %v4421 = vpop.f32.mrf.mxu0
  %v4422 = vadd.f32 0.0, %v4421
  %4423 = vmatmul.bf16.gmra.mxu0 %v4342
  %v4424 = vpop.f32.mrf.mxu0
  %v4425 = vadd.f32 0.0, %v4424
  %v4426 = vpop.f32.mrf.mxu0
  %v4427 = vadd.f32 0.0, %v4426
  %4428 = vmatmul.bf16.gmra.mxu0 %v4345
  %v4429 = vpop.f32.mrf.mxu0
  %v4430 = vadd.f32 0.0, %v4429
  %v4431 = vpop.f32.mrf.mxu0
  %v4432 = vadd.f32 0.0, %v4431
  %4433 = vmatmul.bf16.gmra.mxu0 %v4348
  %v4434 = vpop.f32.mrf.mxu0
  %v4435 = vadd.f32 0.0, %v4434
  %v4436 = vpop.f32.mrf.mxu0
  %v4437 = vadd.f32 0.0, %v4436
  %4438 = vmatmul.bf16.gmra.mxu0 %v4351
  %v4439 = vpop.f32.mrf.mxu0
  %v4440 = vadd.f32 0.0, %v4439
  %v4441 = vpop.f32.mrf.mxu0
  %v4442 = vadd.f32 0.0, %v4441
  %4443 = vmatmul.bf16.gmra.mxu0 %v4354
  %v4444 = vpop.f32.mrf.mxu0
  %v4445 = vadd.f32 0.0, %v4444
  %v4446 = vpop.f32.mrf.mxu0
  %v4447 = vadd.f32 0.0, %v4446
  %4448 = vmatmul.bf16.gmra.mxu0 %v4357
  %v4449 = vpop.f32.mrf.mxu0
  %v4450 = vadd.f32 0.0, %v4449
  %v4451 = vpop.f32.mrf.mxu0
  %v4452 = vadd.f32 0.0, %v4451
  %4453 = vdwg.mxu0
  %4454 = vmatpush.bf16.msra.mxu0 0
  %4455 = vmatpush.bf16.msra.mxu0 0
  %4456 = vmatpush.bf16.msra.mxu0 %v4363
  %4457 = vmatpush.bf16.msra.mxu0 %v4298
  %4458 = vmatpush.bf16.msra.mxu0 %v4296
  %4459 = vmatpush.bf16.msra.mxu0 %v4294
  %4460 = vmatpush.bf16.msra.mxu0 %v4292
  %4461 = vmatpush.bf16.msra.mxu0 %v4290
  %4462 = vmatmul.bf16.gmra.mxu0 %v4312
  %v4463 = vpop.f32.mrf.mxu0
  %v4464 = vadd.f32 0.0, %v4463
  %v4465 = vpop.f32.mrf.mxu0
  %v4466 = vadd.f32 0.0, %v4465
  %4467 = vmatmul.bf16.gmra.mxu0 %v4315
  %v4468 = vpop.f32.mrf.mxu0
  %v4469 = vadd.f32 0.0, %v4468
  %v4470 = vpop.f32.mrf.mxu0
  %v4471 = vadd.f32 0.0, %v4470
  %4472 = vmatmul.bf16.gmra.mxu0 %v4318
  %v4473 = vpop.f32.mrf.mxu0
  %v4474 = vadd.f32 0.0, %v4473
  %v4475 = vpop.f32.mrf.mxu0
  %v4476 = vadd.f32 0.0, %v4475
  %4477 = vmatmul.bf16.gmra.mxu0 %v4321
  %v4478 = vpop.f32.mrf.mxu0
  %v4479 = vadd.f32 0.0, %v4478
  %v4480 = vpop.f32.mrf.mxu0
  %v4481 = vadd.f32 0.0, %v4480
  %4482 = vmatmul.bf16.gmra.mxu0 %v4324
  %v4483 = vpop.f32.mrf.mxu0
  %v4484 = vadd.f32 0.0, %v4483
  %v4485 = vpop.f32.mrf.mxu0
  %v4486 = vadd.f32 0.0, %v4485
  %4487 = vmatmul.bf16.gmra.mxu0 %v4327
  %v4488 = vpop.f32.mrf.mxu0
  %v4489 = vadd.f32 0.0, %v4488
  %v4490 = vpop.f32.mrf.mxu0
  %v4491 = vadd.f32 0.0, %v4490
  %4492 = vmatmul.bf16.gmra.mxu0 %v4330
  %v4493 = vpop.f32.mrf.mxu0
  %v4494 = vadd.f32 0.0, %v4493
  %v4495 = vpop.f32.mrf.mxu0
  %v4496 = vadd.f32 0.0, %v4495
  %4497 = vmatmul.bf16.gmra.mxu0 %v4333
  %v4498 = vpop.f32.mrf.mxu0
  %v4499 = vadd.f32 0.0, %v4498
  %v4500 = vpop.f32.mrf.mxu0
  %v4501 = vadd.f32 0.0, %v4500
  %4502 = vmatmul.bf16.gmra.mxu0 %v4336
  %v4503 = vpop.f32.mrf.mxu0
  %v4504 = vadd.f32 0.0, %v4503
  %v4505 = vpop.f32.mrf.mxu0
  %v4506 = vadd.f32 0.0, %v4505
  %4507 = vmatmul.bf16.gmra.mxu0 %v4339
  %v4508 = vpop.f32.mrf.mxu0
  %v4509 = vadd.f32 0.0, %v4508
  %v4510 = vpop.f32.mrf.mxu0
  %v4511 = vadd.f32 0.0, %v4510
  %4512 = vmatmul.bf16.gmra.mxu0 %v4342
  %v4513 = vpop.f32.mrf.mxu0
  %v4514 = vadd.f32 0.0, %v4513
  %v4515 = vpop.f32.mrf.mxu0
  %v4516 = vadd.f32 0.0, %v4515
  %4517 = vmatmul.bf16.gmra.mxu0 %v4345
  %v4518 = vpop.f32.mrf.mxu0
  %v4519 = vadd.f32 0.0, %v4518
  %v4520 = vpop.f32.mrf.mxu0
  %v4521 = vadd.f32 0.0, %v4520
  %4522 = vmatmul.bf16.gmra.mxu0 %v4348
  %v4523 = vpop.f32.mrf.mxu0
  %v4524 = vadd.f32 0.0, %v4523
  %v4525 = vpop.f32.mrf.mxu0
  %v4526 = vadd.f32 0.0, %v4525
  %4527 = vmatmul.bf16.gmra.mxu0 %v4351
  %v4528 = vpop.f32.mrf.mxu0
  %v4529 = vadd.f32 0.0, %v4528
  %v4530 = vpop.f32.mrf.mxu0
  %v4531 = vadd.f32 0.0, %v4530
  %4532 = vmatmul.bf16.gmra.mxu0 %v4354
  %v4533 = vpop.f32.mrf.mxu0
  %v4534 = vadd.f32 0.0, %v4533
  %v4535 = vpop.f32.mrf.mxu0
  %v4536 = vadd.f32 0.0, %v4535
  %4537 = vmatmul.bf16.gmra.mxu0 %v4357
  %v4538 = vpop.f32.mrf.mxu0
  %v4539 = vadd.f32 0.0, %v4538
  %v4540 = vpop.f32.mrf.mxu0
  %v4541 = vadd.f32 0.0, %v4540
  %4542 = vdwg.mxu0
  %v4543 = vadd.f32 %v3963, %v4375
  %v4544 = vadd.f32 %v4052, %v4464
  %v4545 = vadd.f32 %v3965, %v4377
  %v4546 = vadd.f32 %v4054, %v4466
  %v4547 = vadd.f32 %v3968, %v4380
  %v4548 = vadd.f32 %v4057, %v4469
  %v4549 = vadd.f32 %v3970, %v4382
  %v4550 = vadd.f32 %v4059, %v4471
  %v4551 = vadd.f32 %v3973, %v4385
  %v4552 = vadd.f32 %v4062, %v4474
  %v4553 = vadd.f32 %v3975, %v4387
  %v4554 = vadd.f32 %v4064, %v4476
  %v4555 = vadd.f32 %v3978, %v4390
  %v4556 = vadd.f32 %v4067, %v4479
  %v4557 = vadd.f32 %v3980, %v4392
  %v4558 = vadd.f32 %v4069, %v4481
  %v4559 = vadd.f32 %v3983, %v4395
  %v4560 = vadd.f32 %v4072, %v4484
  %v4561 = vadd.f32 %v3985, %v4397
  %v4562 = vadd.f32 %v4074, %v4486
  %v4563 = vadd.f32 %v3988, %v4400
  %v4564 = vadd.f32 %v4077, %v4489
  %v4565 = vadd.f32 %v3990, %v4402
  %v4566 = vadd.f32 %v4079, %v4491
  %v4567 = vadd.f32 %v3993, %v4405
  %v4568 = vadd.f32 %v4082, %v4494
  %v4569 = vadd.f32 %v3995, %v4407
  %v4570 = vadd.f32 %v4084, %v4496
  %v4571 = vadd.f32 %v3998, %v4410
  %v4572 = vadd.f32 %v4087, %v4499
  %v4573 = vadd.f32 %v4000, %v4412
  %v4574 = vadd.f32 %v4089, %v4501
  %v4575 = vadd.f32 %v4003, %v4415
  %v4576 = vadd.f32 %v4092, %v4504
  %v4577 = vadd.f32 %v4005, %v4417
  %v4578 = vadd.f32 %v4094, %v4506
  %v4579 = vadd.f32 %v4008, %v4420
  %v4580 = vadd.f32 %v4097, %v4509
  %v4581 = vadd.f32 %v4010, %v4422
  %v4582 = vadd.f32 %v4099, %v4511
  %v4583 = vadd.f32 %v4013, %v4425
  %v4584 = vadd.f32 %v4102, %v4514
  %v4585 = vadd.f32 %v4015, %v4427
  %v4586 = vadd.f32 %v4104, %v4516
  %v4587 = vadd.f32 %v4018, %v4430
  %v4588 = vadd.f32 %v4107, %v4519
  %v4589 = vadd.f32 %v4020, %v4432
  %v4590 = vadd.f32 %v4109, %v4521
  %v4591 = vadd.f32 %v4023, %v4435
  %v4592 = vadd.f32 %v4112, %v4524
  %v4593 = vadd.f32 %v4025, %v4437
  %v4594 = vadd.f32 %v4114, %v4526
  %v4595 = vadd.f32 %v4028, %v4440
  %v4596 = vadd.f32 %v4117, %v4529
  %v4597 = vadd.f32 %v4030, %v4442
  %v4598 = vadd.f32 %v4119, %v4531
  %v4599 = vadd.f32 %v4033, %v4445
  %v4600 = vadd.f32 %v4122, %v4534
  %v4601 = vadd.f32 %v4035, %v4447
  %v4602 = vadd.f32 %v4124, %v4536
  %v4603 = vadd.f32 %v4038, %v4450
  %v4604 = vadd.f32 %v4127, %v4539
  %v4605 = vadd.f32 %v4040, %v4452
  %v4606 = vadd.f32 %v4129, %v4541
  %v4607 = vrot.slane %v3339, 6
  %v4608 = vrot.slane %v3340, 6
  %v4609 = vsel %vm3659, %v4607, %v4608
  %v4610 = vrot.slane %v3341, 6
  %v4611 = vsel %vm3659, %v4608, %v4610
  %v4612 = vrot.slane %v3342, 6
  %v4613 = vsel %vm3659, %v4610, %v4612
  %v4614 = vrot.slane %v3343, 6
  %v4615 = vsel %vm3659, %v4612, %v4614
  %v4616 = vrot.slane %v3344, 6
  %v4617 = vsel %vm3659, %v4614, %v4616
  %v4618 = vrot.slane %v3345, 6
  %v4619 = vsel %vm3659, %v4616, %v4618
  %v4620 = vrot.slane %v3346, 6
  %v4621 = vsel %vm3659, %v4618, %v4620
  %v4622 = vrot.slane %v3347, 6
  %v4623 = vsel %vm3659, %v4620, %v4622
  %v4624 = vrot.slane %v3348, 6
  %v4625 = vsel %vm3659, %v4622, %v4624
  %v4626 = vrot.slane %v3349, 6
  %v4627 = vsel %vm3659, %v4624, %v4626
  %v4628 = vrot.slane %v3350, 6
  %v4629 = vsel %vm3659, %v4626, %v4628
  %v4630 = vrot.slane %v3351, 6
  %v4631 = vsel %vm3659, %v4628, %v4630
  %v4632 = vrot.slane %v3352, 6
  %v4633 = vsel %vm3659, %v4630, %v4632
  %v4634 = vrot.slane %v3353, 6
  %v4635 = vsel %vm3659, %v4632, %v4634
  %v4636 = vrot.slane %v3354, 6
  %v4637 = vsel %vm3659, %v4634, %v4636
  %v4638 = vrot.slane %v3355, 6
  %v4639 = vsel %vm3659, %v4636, %v4638
  %v4640 = vrot.slane %v3356, 6
  %v4641 = vsel %vm3659, %v4638, %v4640
  %v4642 = vrot.slane %v3357, 6
  %v4643 = vsel %vm3659, %v4640, %v4642
  %v4644 = vrot.slane %v3358, 6
  %v4645 = vsel %vm3659, %v4642, %v4644
  %v4646 = vrot.slane %v3359, 6
  %v4647 = vsel %vm3659, %v4644, %v4646
  %v4648 = vrot.slane %v3360, 6
  %v4649 = vsel %vm3659, %v4646, %v4648
  %v4650 = vrot.slane %v3361, 6
  %v4651 = vsel %vm3659, %v4648, %v4650
  %v4652 = vrot.slane %v3362, 6
  %v4653 = vsel %vm3659, %v4650, %v4652
  %v4654 = vrot.slane %v3363, 6
  %v4655 = vsel %vm3659, %v4652, %v4654
  %v4656 = vrot.slane %v3364, 6
  %v4657 = vsel %vm3659, %v4654, %v4656
  %v4658 = vrot.slane %v3365, 6
  %v4659 = vsel %vm3659, %v4656, %v4658
  %v4660 = vrot.slane %v3366, 6
  %v4661 = vsel %vm3659, %v4658, %v4660
  %v4662 = vrot.slane %v3367, 6
  %v4663 = vsel %vm3659, %v4660, %v4662
  %v4664 = vrot.slane %v3368, 6
  %v4665 = vsel %vm3659, %v4662, %v4664
  %v4666 = vrot.slane %v3369, 6
  %v4667 = vsel %vm3659, %v4664, %v4666
  %v4668 = vrot.slane %v3370, 6
  %v4669 = vsel %vm3659, %v4666, %v4668
  %v4703 = vsel %vm3659, %v4668, %v4607
  %v4704 = vpack.c.bf16 %v4611, %v4609
  %v4705 = vpack.c.bf16 %v4615, %v4613
  %v4706 = vpack.c.bf16 %v4619, %v4617
  %v4707 = vpack.c.bf16 %v4623, %v4621
  %v4708 = vpack.c.bf16 %v4627, %v4625
  %v4709 = vpack.c.bf16 %v4631, %v4629
  %v4710 = vpack.c.bf16 %v4635, %v4633
  %v4711 = vpack.c.bf16 %v4639, %v4637
  %v4712 = vpack.c.bf16 %v4643, %v4641
  %v4713 = vpack.c.bf16 %v4647, %v4645
  %v4714 = vpack.c.bf16 %v4651, %v4649
  %v4715 = vpack.c.bf16 %v4655, %v4653
  %v4716 = vpack.c.bf16 %v4659, %v4657
  %v4717 = vpack.c.bf16 %v4663, %v4661
  %v4718 = vpack.c.bf16 %v4667, %v4665
  %v4719 = vpack.c.bf16 %v4703, %v4669
  %s4720 = scalar_lea.vmem %s4, 264
  %v4721 = vld [vmem:[%s4720] sm:$0xff]
  %v4722 = vld [vmem:[%s4720 + $0x8] sm:$0xff]
  %v4723 = vld [vmem:[%s4720 + $0x10] sm:$0xff]
  %v4724 = vld [vmem:[%s4720 + $0x18] sm:$0xff]
  %v4725 = vld [vmem:[%s4720 + $0x20] sm:$0xff]
  %v4726 = vld [vmem:[%s4720 + $0x28] sm:$0xff]
  %v4727 = vld [vmem:[%s4720 + $0x30] sm:$0xff]
  %v4728 = vld [vmem:[%s4720 + $0x38] sm:$0xff]
  %v4729 = vld [vmem:[%s4720 + $0x40] sm:$0xff]
  %v4730 = vld [vmem:[%s4720 + $0x48] sm:$0xff]
  %v4731 = vld [vmem:[%s4720 + $0x50] sm:$0x33]
  %v4743 = vunpack.c.l.b16 %v4721
  %v4744 = vunpack.c.h.b16 %v4721
  %v4745 = vunpack.c.l.b16 %v4722
  %v4746 = vunpack.c.h.b16 %v4722
  %v4747 = vunpack.c.l.b16 %v4723
  %v4748 = vunpack.c.h.b16 %v4723
  %v4749 = vunpack.c.l.b16 %v4724
  %v4750 = vunpack.c.h.b16 %v4724
  %v4751 = vunpack.c.l.b16 %v4725
  %v4752 = vunpack.c.h.b16 %v4725
  %v4753 = vunpack.c.l.b16 %v4726
  %v4754 = vunpack.c.h.b16 %v4726
  %v4755 = vunpack.c.l.b16 %v4727
  %v4756 = vunpack.c.h.b16 %v4727
  %v4757 = vunpack.c.l.b16 %v4728
  %v4758 = vunpack.c.h.b16 %v4728
  %v4759 = vunpack.c.l.b16 %v4729
  %v4760 = vunpack.c.h.b16 %v4729
  %v4761 = vunpack.c.l.b16 %v4730
  %v4762 = vunpack.c.h.b16 %v4730
  %v4763 = vunpack.c.l.b16 %v4731
  %v4764 = vunpack.c.h.b16 %v4731
  %v4765 = vpack.c.b16 %v4745, %v4743
  %v4766 = vpack.c.b16 %v4746, %v4744
  %v4767 = vpack.c.b16 %v4749, %v4747
  %v4768 = vpack.c.b16 %v4750, %v4748
  %v4769 = vpack.c.b16 %v4753, %v4751
  %v4770 = vpack.c.b16 %v4754, %v4752
  %v4771 = vpack.c.b16 %v4757, %v4755
  %v4772 = vpack.c.b16 %v4758, %v4756
  %v4773 = vpack.c.b16 %v4761, %v4759
  %v4774 = vpack.c.b16 %v4762, %v4760
  %v4775 = vpack.c.b16 %v4763, %v4763
  %v4776 = vpack.c.b16 %v4764, %v4764
  %v4788 = vsel %vm3610, %v4704, 0
  %v4791 = vsel %vm3610, %v4705, 0
  %v4794 = vsel %vm3610, %v4706, 0
  %v4797 = vsel %vm3610, %v4707, 0
  %v4800 = vsel %vm3610, %v4708, 0
  %v4803 = vsel %vm3610, %v4709, 0
  %v4806 = vsel %vm3610, %v4710, 0
  %v4809 = vsel %vm3610, %v4711, 0
  %v4812 = vsel %vm3610, %v4712, 0
  %v4815 = vsel %vm3610, %v4713, 0
  %v4818 = vsel %vm3610, %v4714, 0
  %v4821 = vsel %vm3610, %v4715, 0
  %v4824 = vsel %vm3610, %v4716, 0
  %v4827 = vsel %vm3610, %v4717, 0
  %v4830 = vsel %vm3610, %v4718, 0
  %v4833 = vsel %vm3610, %v4719, 0
  %v4836 = vsel %vm3659, %v4775, 0
  %v4839 = vsel %vm3659, %v4776, 0
  %4841 = vmatpush.bf16.msra.mxu0 0
  %4842 = vmatpush.bf16.msra.mxu0 0
  %4843 = vmatpush.bf16.msra.mxu0 %v4836
  %4844 = vmatpush.bf16.msra.mxu0 %v4773
  %4845 = vmatpush.bf16.msra.mxu0 %v4771
  %4846 = vmatpush.bf16.msra.mxu0 %v4769
  %4847 = vmatpush.bf16.msra.mxu0 %v4767
  %4848 = vmatpush.bf16.msra.mxu0 %v4765
  %4849 = vmatmul.bf16.gmra.mxu0 %v4788
  %v4850 = vpop.f32.mrf.mxu0
  %v4851 = vadd.f32 0.0, %v4850
  %v4852 = vpop.f32.mrf.mxu0
  %v4853 = vadd.f32 0.0, %v4852
  %4854 = vmatmul.bf16.gmra.mxu0 %v4791
  %v4855 = vpop.f32.mrf.mxu0
  %v4856 = vadd.f32 0.0, %v4855
  %v4857 = vpop.f32.mrf.mxu0
  %v4858 = vadd.f32 0.0, %v4857
  %4859 = vmatmul.bf16.gmra.mxu0 %v4794
  %v4860 = vpop.f32.mrf.mxu0
  %v4861 = vadd.f32 0.0, %v4860
  %v4862 = vpop.f32.mrf.mxu0
  %v4863 = vadd.f32 0.0, %v4862
  %4864 = vmatmul.bf16.gmra.mxu0 %v4797
  %v4865 = vpop.f32.mrf.mxu0
  %v4866 = vadd.f32 0.0, %v4865
  %v4867 = vpop.f32.mrf.mxu0
  %v4868 = vadd.f32 0.0, %v4867
  %4869 = vmatmul.bf16.gmra.mxu0 %v4800
  %v4870 = vpop.f32.mrf.mxu0
  %v4871 = vadd.f32 0.0, %v4870
  %v4872 = vpop.f32.mrf.mxu0
  %v4873 = vadd.f32 0.0, %v4872
  %4874 = vmatmul.bf16.gmra.mxu0 %v4803
  %v4875 = vpop.f32.mrf.mxu0
  %v4876 = vadd.f32 0.0, %v4875
  %v4877 = vpop.f32.mrf.mxu0
  %v4878 = vadd.f32 0.0, %v4877
  %4879 = vmatmul.bf16.gmra.mxu0 %v4806
  %v4880 = vpop.f32.mrf.mxu0
  %v4881 = vadd.f32 0.0, %v4880
  %v4882 = vpop.f32.mrf.mxu0
  %v4883 = vadd.f32 0.0, %v4882
  %4884 = vmatmul.bf16.gmra.mxu0 %v4809
  %v4885 = vpop.f32.mrf.mxu0
  %v4886 = vadd.f32 0.0, %v4885
  %v4887 = vpop.f32.mrf.mxu0
  %v4888 = vadd.f32 0.0, %v4887
  %4889 = vmatmul.bf16.gmra.mxu0 %v4812
  %v4890 = vpop.f32.mrf.mxu0
  %v4891 = vadd.f32 0.0, %v4890
  %v4892 = vpop.f32.mrf.mxu0
  %v4893 = vadd.f32 0.0, %v4892
  %4894 = vmatmul.bf16.gmra.mxu0 %v4815
  %v4895 = vpop.f32.mrf.mxu0
  %v4896 = vadd.f32 0.0, %v4895
  %v4897 = vpop.f32.mrf.mxu0
  %v4898 = vadd.f32 0.0, %v4897
  %4899 = vmatmul.bf16.gmra.mxu0 %v4818
  %v4900 = vpop.f32.mrf.mxu0
  %v4901 = vadd.f32 0.0, %v4900
  %v4902 = vpop.f32.mrf.mxu0
  %v4903 = vadd.f32 0.0, %v4902
  %4904 = vmatmul.bf16.gmra.mxu0 %v4821
  %v4905 = vpop.f32.mrf.mxu0
  %v4906 = vadd.f32 0.0, %v4905
  %v4907 = vpop.f32.mrf.mxu0
  %v4908 = vadd.f32 0.0, %v4907
  %4909 = vmatmul.bf16.gmra.mxu0 %v4824
  %v4910 = vpop.f32.mrf.mxu0
  %v4911 = vadd.f32 0.0, %v4910
  %v4912 = vpop.f32.mrf.mxu0
  %v4913 = vadd.f32 0.0, %v4912
  %4914 = vmatmul.bf16.gmra.mxu0 %v4827
  %v4915 = vpop.f32.mrf.mxu0
  %v4916 = vadd.f32 0.0, %v4915
  %v4917 = vpop.f32.mrf.mxu0
  %v4918 = vadd.f32 0.0, %v4917
  %4919 = vmatmul.bf16.gmra.mxu0 %v4830
  %v4920 = vpop.f32.mrf.mxu0
  %v4921 = vadd.f32 0.0, %v4920
  %v4922 = vpop.f32.mrf.mxu0
  %v4923 = vadd.f32 0.0, %v4922
  %4924 = vmatmul.bf16.gmra.mxu0 %v4833
  %v4925 = vpop.f32.mrf.mxu0
  %v4926 = vadd.f32 0.0, %v4925
  %v4927 = vpop.f32.mrf.mxu0
  %v4928 = vadd.f32 0.0, %v4927
  %4929 = vdwg.mxu0
  %4930 = vmatpush.bf16.msra.mxu0 0
  %4931 = vmatpush.bf16.msra.mxu0 0
  %4932 = vmatpush.bf16.msra.mxu0 %v4839
  %4933 = vmatpush.bf16.msra.mxu0 %v4774
  %4934 = vmatpush.bf16.msra.mxu0 %v4772
  %4935 = vmatpush.bf16.msra.mxu0 %v4770
  %4936 = vmatpush.bf16.msra.mxu0 %v4768
  %4937 = vmatpush.bf16.msra.mxu0 %v4766
  %4938 = vmatmul.bf16.gmra.mxu0 %v4788
  %v4939 = vpop.f32.mrf.mxu0
  %v4940 = vadd.f32 0.0, %v4939
  %v4941 = vpop.f32.mrf.mxu0
  %v4942 = vadd.f32 0.0, %v4941
  %4943 = vmatmul.bf16.gmra.mxu0 %v4791
  %v4944 = vpop.f32.mrf.mxu0
  %v4945 = vadd.f32 0.0, %v4944
  %v4946 = vpop.f32.mrf.mxu0
  %v4947 = vadd.f32 0.0, %v4946
  %4948 = vmatmul.bf16.gmra.mxu0 %v4794
  %v4949 = vpop.f32.mrf.mxu0
  %v4950 = vadd.f32 0.0, %v4949
  %v4951 = vpop.f32.mrf.mxu0
  %v4952 = vadd.f32 0.0, %v4951
  %4953 = vmatmul.bf16.gmra.mxu0 %v4797
  %v4954 = vpop.f32.mrf.mxu0
  %v4955 = vadd.f32 0.0, %v4954
  %v4956 = vpop.f32.mrf.mxu0
  %v4957 = vadd.f32 0.0, %v4956
  %4958 = vmatmul.bf16.gmra.mxu0 %v4800
  %v4959 = vpop.f32.mrf.mxu0
  %v4960 = vadd.f32 0.0, %v4959
  %v4961 = vpop.f32.mrf.mxu0
  %v4962 = vadd.f32 0.0, %v4961
  %4963 = vmatmul.bf16.gmra.mxu0 %v4803
  %v4964 = vpop.f32.mrf.mxu0
  %v4965 = vadd.f32 0.0, %v4964
  %v4966 = vpop.f32.mrf.mxu0
  %v4967 = vadd.f32 0.0, %v4966
  %4968 = vmatmul.bf16.gmra.mxu0 %v4806
  %v4969 = vpop.f32.mrf.mxu0
  %v4970 = vadd.f32 0.0, %v4969
  %v4971 = vpop.f32.mrf.mxu0
  %v4972 = vadd.f32 0.0, %v4971
  %4973 = vmatmul.bf16.gmra.mxu0 %v4809
  %v4974 = vpop.f32.mrf.mxu0
  %v4975 = vadd.f32 0.0, %v4974
  %v4976 = vpop.f32.mrf.mxu0
  %v4977 = vadd.f32 0.0, %v4976
  %4978 = vmatmul.bf16.gmra.mxu0 %v4812
  %v4979 = vpop.f32.mrf.mxu0
  %v4980 = vadd.f32 0.0, %v4979
  %v4981 = vpop.f32.mrf.mxu0
  %v4982 = vadd.f32 0.0, %v4981
  %4983 = vmatmul.bf16.gmra.mxu0 %v4815
  %v4984 = vpop.f32.mrf.mxu0
  %v4985 = vadd.f32 0.0, %v4984
  %v4986 = vpop.f32.mrf.mxu0
  %v4987 = vadd.f32 0.0, %v4986
  %4988 = vmatmul.bf16.gmra.mxu0 %v4818
  %v4989 = vpop.f32.mrf.mxu0
  %v4990 = vadd.f32 0.0, %v4989
  %v4991 = vpop.f32.mrf.mxu0
  %v4992 = vadd.f32 0.0, %v4991
  %4993 = vmatmul.bf16.gmra.mxu0 %v4821
  %v4994 = vpop.f32.mrf.mxu0
  %v4995 = vadd.f32 0.0, %v4994
  %v4996 = vpop.f32.mrf.mxu0
  %v4997 = vadd.f32 0.0, %v4996
  %4998 = vmatmul.bf16.gmra.mxu0 %v4824
  %v4999 = vpop.f32.mrf.mxu0
  %v5000 = vadd.f32 0.0, %v4999
  %v5001 = vpop.f32.mrf.mxu0
  %v5002 = vadd.f32 0.0, %v5001
  %5003 = vmatmul.bf16.gmra.mxu0 %v4827
  %v5004 = vpop.f32.mrf.mxu0
  %v5005 = vadd.f32 0.0, %v5004
  %v5006 = vpop.f32.mrf.mxu0
  %v5007 = vadd.f32 0.0, %v5006
  %5008 = vmatmul.bf16.gmra.mxu0 %v4830
  %v5009 = vpop.f32.mrf.mxu0
  %v5010 = vadd.f32 0.0, %v5009
  %v5011 = vpop.f32.mrf.mxu0
  %v5012 = vadd.f32 0.0, %v5011
  %5013 = vmatmul.bf16.gmra.mxu0 %v4833
  %v5014 = vpop.f32.mrf.mxu0
  %v5015 = vadd.f32 0.0, %v5014
  %v5016 = vpop.f32.mrf.mxu0
  %v5017 = vadd.f32 0.0, %v5016
  %5018 = vdwg.mxu0
  %v5019 = vadd.f32 %v4543, %v4851
  %v5020 = vadd.f32 %v4544, %v4940
  %v5021 = vadd.f32 %v4545, %v4853
  %v5022 = vadd.f32 %v4546, %v4942
  %v5023 = vadd.f32 %v4547, %v4856
  %v5024 = vadd.f32 %v4548, %v4945
  %v5025 = vadd.f32 %v4549, %v4858
  %v5026 = vadd.f32 %v4550, %v4947
  %v5027 = vadd.f32 %v4551, %v4861
  %v5028 = vadd.f32 %v4552, %v4950
  %v5029 = vadd.f32 %v4553, %v4863
  %v5030 = vadd.f32 %v4554, %v4952
  %v5031 = vadd.f32 %v4555, %v4866
  %v5032 = vadd.f32 %v4556, %v4955
  %v5033 = vadd.f32 %v4557, %v4868
  %v5034 = vadd.f32 %v4558, %v4957
  %v5035 = vadd.f32 %v4559, %v4871
  %v5036 = vadd.f32 %v4560, %v4960
  %v5037 = vadd.f32 %v4561, %v4873
  %v5038 = vadd.f32 %v4562, %v4962
  %v5039 = vadd.f32 %v4563, %v4876
  %v5040 = vadd.f32 %v4564, %v4965
  %v5041 = vadd.f32 %v4565, %v4878
  %v5042 = vadd.f32 %v4566, %v4967
  %v5043 = vadd.f32 %v4567, %v4881
  %v5044 = vadd.f32 %v4568, %v4970
  %v5045 = vadd.f32 %v4569, %v4883
  %v5046 = vadd.f32 %v4570, %v4972
  %v5047 = vadd.f32 %v4571, %v4886
  %v5048 = vadd.f32 %v4572, %v4975
  %v5049 = vadd.f32 %v4573, %v4888
  %v5050 = vadd.f32 %v4574, %v4977
  %v5051 = vadd.f32 %v4575, %v4891
  %v5052 = vadd.f32 %v4576, %v4980
  %v5053 = vadd.f32 %v4577, %v4893
  %v5054 = vadd.f32 %v4578, %v4982
  %v5055 = vadd.f32 %v4579, %v4896
  %v5056 = vadd.f32 %v4580, %v4985
  %v5057 = vadd.f32 %v4581, %v4898
  %v5058 = vadd.f32 %v4582, %v4987
  %v5059 = vadd.f32 %v4583, %v4901
  %v5060 = vadd.f32 %v4584, %v4990
  %v5061 = vadd.f32 %v4585, %v4903
  %v5062 = vadd.f32 %v4586, %v4992
  %v5063 = vadd.f32 %v4587, %v4906
  %v5064 = vadd.f32 %v4588, %v4995
  %v5065 = vadd.f32 %v4589, %v4908
  %v5066 = vadd.f32 %v4590, %v4997
  %v5067 = vadd.f32 %v4591, %v4911
  %v5068 = vadd.f32 %v4592, %v5000
  %v5069 = vadd.f32 %v4593, %v4913
  %v5070 = vadd.f32 %v4594, %v5002
  %v5071 = vadd.f32 %v4595, %v4916
  %v5072 = vadd.f32 %v4596, %v5005
  %v5073 = vadd.f32 %v4597, %v4918
  %v5074 = vadd.f32 %v4598, %v5007
  %v5075 = vadd.f32 %v4599, %v4921
  %v5076 = vadd.f32 %v4600, %v5010
  %v5077 = vadd.f32 %v4601, %v4923
  %v5078 = vadd.f32 %v4602, %v5012
  %v5079 = vadd.f32 %v4603, %v4926
  %v5080 = vadd.f32 %v4604, %v5015
  %v5081 = vadd.f32 %v4605, %v4928
  %v5082 = vadd.f32 %v4606, %v5017
  %v5083 = vpack.c.bf16 %v3341, %v3340
  %v5084 = vpack.c.bf16 %v3343, %v3342
  %v5085 = vpack.c.bf16 %v3345, %v3344
  %v5086 = vpack.c.bf16 %v3347, %v3346
  %v5087 = vpack.c.bf16 %v3349, %v3348
  %v5088 = vpack.c.bf16 %v3351, %v3350
  %v5089 = vpack.c.bf16 %v3353, %v3352
  %v5090 = vpack.c.bf16 %v3355, %v3354
  %v5091 = vpack.c.bf16 %v3357, %v3356
  %v5092 = vpack.c.bf16 %v3359, %v3358
  %v5093 = vpack.c.bf16 %v3361, %v3360
  %v5094 = vpack.c.bf16 %v3363, %v3362
  %v5095 = vpack.c.bf16 %v3365, %v3364
  %v5096 = vpack.c.bf16 %v3367, %v3366
  %v5097 = vpack.c.bf16 %v3369, %v3368
  %v5098 = vpack.c.bf16 %v3339, %v3370
  %s5099 = scalar_lea.vmem %s4, 352
  %v5100 = vld [vmem:[%s5099] sm:$0xff]
  %v5101 = vld [vmem:[%s5099 + $0x8] sm:$0xff]
  %v5102 = vld [vmem:[%s5099 + $0x10] sm:$0xff]
  %v5103 = vld [vmem:[%s5099 + $0x18] sm:$0xff]
  %v5104 = vld [vmem:[%s5099 + $0x20] sm:$0xff]
  %v5105 = vld [vmem:[%s5099 + $0x28] sm:$0xff]
  %v5106 = vld [vmem:[%s5099 + $0x30] sm:$0xff]
  %v5107 = vld [vmem:[%s5099 + $0x38] sm:$0xff]
  %v5108 = vld [vmem:[%s5099 + $0x40] sm:$0xff]
  %v5109 = vld [vmem:[%s5099 + $0x48] sm:$0xff]
  %v5110 = vld [vmem:[%s5099 + $0x50] sm:$0x33]
  %v5122 = vunpack.c.l.b16 %v5100
  %v5123 = vunpack.c.h.b16 %v5100
  %v5124 = vunpack.c.l.b16 %v5101
  %v5125 = vunpack.c.h.b16 %v5101
  %v5126 = vunpack.c.l.b16 %v5102
  %v5127 = vunpack.c.h.b16 %v5102
  %v5128 = vunpack.c.l.b16 %v5103
  %v5129 = vunpack.c.h.b16 %v5103
  %v5130 = vunpack.c.l.b16 %v5104
  %v5131 = vunpack.c.h.b16 %v5104
  %v5132 = vunpack.c.l.b16 %v5105
  %v5133 = vunpack.c.h.b16 %v5105
  %v5134 = vunpack.c.l.b16 %v5106
  %v5135 = vunpack.c.h.b16 %v5106
  %v5136 = vunpack.c.l.b16 %v5107
  %v5137 = vunpack.c.h.b16 %v5107
  %v5138 = vunpack.c.l.b16 %v5108
  %v5139 = vunpack.c.h.b16 %v5108
  %v5140 = vunpack.c.l.b16 %v5109
  %v5141 = vunpack.c.h.b16 %v5109
  %v5142 = vunpack.c.l.b16 %v5110
  %v5143 = vunpack.c.h.b16 %v5110
  %v5144 = vpack.c.b16 %v5124, %v5122
  %v5145 = vpack.c.b16 %v5125, %v5123
  %v5146 = vpack.c.b16 %v5128, %v5126
  %v5147 = vpack.c.b16 %v5129, %v5127
  %v5148 = vpack.c.b16 %v5132, %v5130
  %v5149 = vpack.c.b16 %v5133, %v5131
  %v5150 = vpack.c.b16 %v5136, %v5134
  %v5151 = vpack.c.b16 %v5137, %v5135
  %v5152 = vpack.c.b16 %v5140, %v5138
  %v5153 = vpack.c.b16 %v5141, %v5139
  %v5154 = vpack.c.b16 %v5142, %v5142
  %v5155 = vpack.c.b16 %v5143, %v5143
  %v5167 = vsel %vm3610, %v5083, 0
  %v5170 = vsel %vm3610, %v5084, 0
  %v5173 = vsel %vm3610, %v5085, 0
  %v5176 = vsel %vm3610, %v5086, 0
  %v5179 = vsel %vm3610, %v5087, 0
  %v5182 = vsel %vm3610, %v5088, 0
  %v5185 = vsel %vm3610, %v5089, 0
  %v5188 = vsel %vm3610, %v5090, 0
  %v5191 = vsel %vm3610, %v5091, 0
  %v5194 = vsel %vm3610, %v5092, 0
  %v5197 = vsel %vm3610, %v5093, 0
  %v5200 = vsel %vm3610, %v5094, 0
  %v5203 = vsel %vm3610, %v5095, 0
  %v5206 = vsel %vm3610, %v5096, 0
  %v5209 = vsel %vm3610, %v5097, 0
  %v5212 = vsel %vm3610, %v5098, 0
  %v5215 = vsel %vm3659, %v5154, 0
  %v5218 = vsel %vm3659, %v5155, 0
  %5220 = vmatpush.bf16.msra.mxu0 0
  %5221 = vmatpush.bf16.msra.mxu0 0
  %5222 = vmatpush.bf16.msra.mxu0 %v5215
  %5223 = vmatpush.bf16.msra.mxu0 %v5152
  %5224 = vmatpush.bf16.msra.mxu0 %v5150
  %5225 = vmatpush.bf16.msra.mxu0 %v5148
  %5226 = vmatpush.bf16.msra.mxu0 %v5146
  %5227 = vmatpush.bf16.msra.mxu0 %v5144
  %5228 = vmatmul.bf16.gmra.mxu0 %v5167
  %v5229 = vpop.f32.mrf.mxu0
  %v5230 = vadd.f32 0.0, %v5229
  %v5231 = vpop.f32.mrf.mxu0
  %v5232 = vadd.f32 0.0, %v5231
  %5233 = vmatmul.bf16.gmra.mxu0 %v5170
  %v5234 = vpop.f32.mrf.mxu0
  %v5235 = vadd.f32 0.0, %v5234
  %v5236 = vpop.f32.mrf.mxu0
  %v5237 = vadd.f32 0.0, %v5236
  %5238 = vmatmul.bf16.gmra.mxu0 %v5173
  %v5239 = vpop.f32.mrf.mxu0
  %v5240 = vadd.f32 0.0, %v5239
  %v5241 = vpop.f32.mrf.mxu0
  %v5242 = vadd.f32 0.0, %v5241
  %5243 = vmatmul.bf16.gmra.mxu0 %v5176
  %v5244 = vpop.f32.mrf.mxu0
  %v5245 = vadd.f32 0.0, %v5244
  %v5246 = vpop.f32.mrf.mxu0
  %v5247 = vadd.f32 0.0, %v5246
  %5248 = vmatmul.bf16.gmra.mxu0 %v5179
  %v5249 = vpop.f32.mrf.mxu0
  %v5250 = vadd.f32 0.0, %v5249
  %v5251 = vpop.f32.mrf.mxu0
  %v5252 = vadd.f32 0.0, %v5251
  %5253 = vmatmul.bf16.gmra.mxu0 %v5182
  %v5254 = vpop.f32.mrf.mxu0
  %v5255 = vadd.f32 0.0, %v5254
  %v5256 = vpop.f32.mrf.mxu0
  %v5257 = vadd.f32 0.0, %v5256
  %5258 = vmatmul.bf16.gmra.mxu0 %v5185
  %v5259 = vpop.f32.mrf.mxu0
  %v5260 = vadd.f32 0.0, %v5259
  %v5261 = vpop.f32.mrf.mxu0
  %v5262 = vadd.f32 0.0, %v5261
  %5263 = vmatmul.bf16.gmra.mxu0 %v5188
  %v5264 = vpop.f32.mrf.mxu0
  %v5265 = vadd.f32 0.0, %v5264
  %v5266 = vpop.f32.mrf.mxu0
  %v5267 = vadd.f32 0.0, %v5266
  %5268 = vmatmul.bf16.gmra.mxu0 %v5191
  %v5269 = vpop.f32.mrf.mxu0
  %v5270 = vadd.f32 0.0, %v5269
  %v5271 = vpop.f32.mrf.mxu0
  %v5272 = vadd.f32 0.0, %v5271
  %5273 = vmatmul.bf16.gmra.mxu0 %v5194
  %v5274 = vpop.f32.mrf.mxu0
  %v5275 = vadd.f32 0.0, %v5274
  %v5276 = vpop.f32.mrf.mxu0
  %v5277 = vadd.f32 0.0, %v5276
  %5278 = vmatmul.bf16.gmra.mxu0 %v5197
  %v5279 = vpop.f32.mrf.mxu0
  %v5280 = vadd.f32 0.0, %v5279
  %v5281 = vpop.f32.mrf.mxu0
  %v5282 = vadd.f32 0.0, %v5281
  %5283 = vmatmul.bf16.gmra.mxu0 %v5200
  %v5284 = vpop.f32.mrf.mxu0
  %v5285 = vadd.f32 0.0, %v5284
  %v5286 = vpop.f32.mrf.mxu0
  %v5287 = vadd.f32 0.0, %v5286
  %5288 = vmatmul.bf16.gmra.mxu0 %v5203
  %v5289 = vpop.f32.mrf.mxu0
  %v5290 = vadd.f32 0.0, %v5289
  %v5291 = vpop.f32.mrf.mxu0
  %v5292 = vadd.f32 0.0, %v5291
  %5293 = vmatmul.bf16.gmra.mxu0 %v5206
  %v5294 = vpop.f32.mrf.mxu0
  %v5295 = vadd.f32 0.0, %v5294
  %v5296 = vpop.f32.mrf.mxu0
  %v5297 = vadd.f32 0.0, %v5296
  %5298 = vmatmul.bf16.gmra.mxu0 %v5209
  %v5299 = vpop.f32.mrf.mxu0
  %v5300 = vadd.f32 0.0, %v5299
  %v5301 = vpop.f32.mrf.mxu0
  %v5302 = vadd.f32 0.0, %v5301
  %5303 = vmatmul.bf16.gmra.mxu0 %v5212
  %v5304 = vpop.f32.mrf.mxu0
  %v5305 = vadd.f32 0.0, %v5304
  %v5306 = vpop.f32.mrf.mxu0
  %v5307 = vadd.f32 0.0, %v5306
  %5308 = vdwg.mxu0
  %5309 = vmatpush.bf16.msra.mxu0 0
  %5310 = vmatpush.bf16.msra.mxu0 0
  %5311 = vmatpush.bf16.msra.mxu0 %v5218
  %5312 = vmatpush.bf16.msra.mxu0 %v5153
  %5313 = vmatpush.bf16.msra.mxu0 %v5151
  %5314 = vmatpush.bf16.msra.mxu0 %v5149
  %5315 = vmatpush.bf16.msra.mxu0 %v5147
  %5316 = vmatpush.bf16.msra.mxu0 %v5145
  %5317 = vmatmul.bf16.gmra.mxu0 %v5167
  %v5318 = vpop.f32.mrf.mxu0
  %v5319 = vadd.f32 0.0, %v5318
  %v5320 = vpop.f32.mrf.mxu0
  %v5321 = vadd.f32 0.0, %v5320
  %5322 = vmatmul.bf16.gmra.mxu0 %v5170
  %v5323 = vpop.f32.mrf.mxu0
  %v5324 = vadd.f32 0.0, %v5323
  %v5325 = vpop.f32.mrf.mxu0
  %v5326 = vadd.f32 0.0, %v5325
  %5327 = vmatmul.bf16.gmra.mxu0 %v5173
  %v5328 = vpop.f32.mrf.mxu0
  %v5329 = vadd.f32 0.0, %v5328
  %v5330 = vpop.f32.mrf.mxu0
  %v5331 = vadd.f32 0.0, %v5330
  %5332 = vmatmul.bf16.gmra.mxu0 %v5176
  %v5333 = vpop.f32.mrf.mxu0
  %v5334 = vadd.f32 0.0, %v5333
  %v5335 = vpop.f32.mrf.mxu0
  %v5336 = vadd.f32 0.0, %v5335
  %5337 = vmatmul.bf16.gmra.mxu0 %v5179
  %v5338 = vpop.f32.mrf.mxu0
  %v5339 = vadd.f32 0.0, %v5338
  %v5340 = vpop.f32.mrf.mxu0
  %v5341 = vadd.f32 0.0, %v5340
  %5342 = vmatmul.bf16.gmra.mxu0 %v5182
  %v5343 = vpop.f32.mrf.mxu0
  %v5344 = vadd.f32 0.0, %v5343
  %v5345 = vpop.f32.mrf.mxu0
  %v5346 = vadd.f32 0.0, %v5345
  %5347 = vmatmul.bf16.gmra.mxu0 %v5185
  %v5348 = vpop.f32.mrf.mxu0
  %v5349 = vadd.f32 0.0, %v5348
  %v5350 = vpop.f32.mrf.mxu0
  %v5351 = vadd.f32 0.0, %v5350
  %5352 = vmatmul.bf16.gmra.mxu0 %v5188
  %v5353 = vpop.f32.mrf.mxu0
  %v5354 = vadd.f32 0.0, %v5353
  %v5355 = vpop.f32.mrf.mxu0
  %v5356 = vadd.f32 0.0, %v5355
  %5357 = vmatmul.bf16.gmra.mxu0 %v5191
  %v5358 = vpop.f32.mrf.mxu0
  %v5359 = vadd.f32 0.0, %v5358
  %v5360 = vpop.f32.mrf.mxu0
  %v5361 = vadd.f32 0.0, %v5360
  %5362 = vmatmul.bf16.gmra.mxu0 %v5194
  %v5363 = vpop.f32.mrf.mxu0
  %v5364 = vadd.f32 0.0, %v5363
  %v5365 = vpop.f32.mrf.mxu0
  %v5366 = vadd.f32 0.0, %v5365
  %5367 = vmatmul.bf16.gmra.mxu0 %v5197
  %v5368 = vpop.f32.mrf.mxu0
  %v5369 = vadd.f32 0.0, %v5368
  %v5370 = vpop.f32.mrf.mxu0
  %v5371 = vadd.f32 0.0, %v5370
  %5372 = vmatmul.bf16.gmra.mxu0 %v5200
  %v5373 = vpop.f32.mrf.mxu0
  %v5374 = vadd.f32 0.0, %v5373
  %v5375 = vpop.f32.mrf.mxu0
  %v5376 = vadd.f32 0.0, %v5375
  %5377 = vmatmul.bf16.gmra.mxu0 %v5203
  %v5378 = vpop.f32.mrf.mxu0
  %v5379 = vadd.f32 0.0, %v5378
  %v5380 = vpop.f32.mrf.mxu0
  %v5381 = vadd.f32 0.0, %v5380
  %5382 = vmatmul.bf16.gmra.mxu0 %v5206
  %v5383 = vpop.f32.mrf.mxu0
  %v5384 = vadd.f32 0.0, %v5383
  %v5385 = vpop.f32.mrf.mxu0
  %v5386 = vadd.f32 0.0, %v5385
  %5387 = vmatmul.bf16.gmra.mxu0 %v5209
  %v5388 = vpop.f32.mrf.mxu0
  %v5389 = vadd.f32 0.0, %v5388
  %v5390 = vpop.f32.mrf.mxu0
  %v5391 = vadd.f32 0.0, %v5390
  %5392 = vmatmul.bf16.gmra.mxu0 %v5212
  %v5393 = vpop.f32.mrf.mxu0
  %v5394 = vadd.f32 0.0, %v5393
  %v5395 = vpop.f32.mrf.mxu0
  %v5396 = vadd.f32 0.0, %v5395
  %5397 = vdwg.mxu0
  %v5398 = vadd.f32 %v5019, %v5230
  %v5399 = vadd.f32 %v5020, %v5319
  %v5400 = vadd.f32 %v5021, %v5232
  %v5401 = vadd.f32 %v5022, %v5321
  %v5402 = vadd.f32 %v5023, %v5235
  %v5403 = vadd.f32 %v5024, %v5324
  %v5404 = vadd.f32 %v5025, %v5237
  %v5405 = vadd.f32 %v5026, %v5326
  %v5406 = vadd.f32 %v5027, %v5240
  %v5407 = vadd.f32 %v5028, %v5329
  %v5408 = vadd.f32 %v5029, %v5242
  %v5409 = vadd.f32 %v5030, %v5331
  %v5410 = vadd.f32 %v5031, %v5245
  %v5411 = vadd.f32 %v5032, %v5334
  %v5412 = vadd.f32 %v5033, %v5247
  %v5413 = vadd.f32 %v5034, %v5336
  %v5414 = vadd.f32 %v5035, %v5250
  %v5415 = vadd.f32 %v5036, %v5339
  %v5416 = vadd.f32 %v5037, %v5252
  %v5417 = vadd.f32 %v5038, %v5341
  %v5418 = vadd.f32 %v5039, %v5255
  %v5419 = vadd.f32 %v5040, %v5344
  %v5420 = vadd.f32 %v5041, %v5257
  %v5421 = vadd.f32 %v5042, %v5346
  %v5422 = vadd.f32 %v5043, %v5260
  %v5423 = vadd.f32 %v5044, %v5349
  %v5424 = vadd.f32 %v5045, %v5262
  %v5425 = vadd.f32 %v5046, %v5351
  %v5426 = vadd.f32 %v5047, %v5265
  %v5427 = vadd.f32 %v5048, %v5354
  %v5428 = vadd.f32 %v5049, %v5267
  %v5429 = vadd.f32 %v5050, %v5356
  %v5430 = vadd.f32 %v5051, %v5270
  %v5431 = vadd.f32 %v5052, %v5359
  %v5432 = vadd.f32 %v5053, %v5272
  %v5433 = vadd.f32 %v5054, %v5361
  %v5434 = vadd.f32 %v5055, %v5275
  %v5435 = vadd.f32 %v5056, %v5364
  %v5436 = vadd.f32 %v5057, %v5277
  %v5437 = vadd.f32 %v5058, %v5366
  %v5438 = vadd.f32 %v5059, %v5280
  %v5439 = vadd.f32 %v5060, %v5369
  %v5440 = vadd.f32 %v5061, %v5282
  %v5441 = vadd.f32 %v5062, %v5371
  %v5442 = vadd.f32 %v5063, %v5285
  %v5443 = vadd.f32 %v5064, %v5374
  %v5444 = vadd.f32 %v5065, %v5287
  %v5445 = vadd.f32 %v5066, %v5376
  %v5446 = vadd.f32 %v5067, %v5290
  %v5447 = vadd.f32 %v5068, %v5379
  %v5448 = vadd.f32 %v5069, %v5292
  %v5449 = vadd.f32 %v5070, %v5381
  %v5450 = vadd.f32 %v5071, %v5295
  %v5451 = vadd.f32 %v5072, %v5384
  %v5452 = vadd.f32 %v5073, %v5297
  %v5453 = vadd.f32 %v5074, %v5386
  %v5454 = vadd.f32 %v5075, %v5300
  %v5455 = vadd.f32 %v5076, %v5389
  %v5456 = vadd.f32 %v5077, %v5302
  %v5457 = vadd.f32 %v5078, %v5391
  %v5458 = vadd.f32 %v5079, %v5305
  %v5459 = vadd.f32 %v5080, %v5394
  %v5460 = vadd.f32 %v5081, %v5307
  %v5461 = vadd.f32 %v5082, %v5396
  %v5462 = vld [vmem:[%s5] sm:$0x3]
  %v5464 = vperm.slane %v5462, 0
  %v5465 = vperm.slane %v5462, 1
  %v5468 = vadd.f32 %v5398, %v5464
  %v5469 = vadd.f32 %v5399, %v5465
  %v5470 = vadd.f32 %v5400, %v5464
  %v5471 = vadd.f32 %v5401, %v5465
  %v5472 = vadd.f32 %v5402, %v5464
  %v5473 = vadd.f32 %v5403, %v5465
  %v5474 = vadd.f32 %v5404, %v5464
  %v5475 = vadd.f32 %v5405, %v5465
  %v5476 = vadd.f32 %v5406, %v5464
  %v5477 = vadd.f32 %v5407, %v5465
  %v5478 = vadd.f32 %v5408, %v5464
  %v5479 = vadd.f32 %v5409, %v5465
  %v5480 = vadd.f32 %v5410, %v5464
  %v5481 = vadd.f32 %v5411, %v5465
  %v5482 = vadd.f32 %v5412, %v5464
  %v5483 = vadd.f32 %v5413, %v5465
  %v5484 = vadd.f32 %v5414, %v5464
  %v5485 = vadd.f32 %v5415, %v5465
  %v5486 = vadd.f32 %v5416, %v5464
  %v5487 = vadd.f32 %v5417, %v5465
  %v5488 = vadd.f32 %v5418, %v5464
  %v5489 = vadd.f32 %v5419, %v5465
  %v5490 = vadd.f32 %v5420, %v5464
  %v5491 = vadd.f32 %v5421, %v5465
  %v5492 = vadd.f32 %v5422, %v5464
  %v5493 = vadd.f32 %v5423, %v5465
  %v5494 = vadd.f32 %v5424, %v5464
  %v5495 = vadd.f32 %v5425, %v5465
  %v5496 = vadd.f32 %v5426, %v5464
  %v5497 = vadd.f32 %v5427, %v5465
  %v5498 = vadd.f32 %v5428, %v5464
  %v5499 = vadd.f32 %v5429, %v5465
  %v5500 = vadd.f32 %v5430, %v5464
  %v5501 = vadd.f32 %v5431, %v5465
  %v5502 = vadd.f32 %v5432, %v5464
  %v5503 = vadd.f32 %v5433, %v5465
  %v5504 = vadd.f32 %v5434, %v5464
  %v5505 = vadd.f32 %v5435, %v5465
  %v5506 = vadd.f32 %v5436, %v5464
  %v5507 = vadd.f32 %v5437, %v5465
  %v5508 = vadd.f32 %v5438, %v5464
  %v5509 = vadd.f32 %v5439, %v5465
  %v5510 = vadd.f32 %v5440, %v5464
  %v5511 = vadd.f32 %v5441, %v5465
  %v5512 = vadd.f32 %v5442, %v5464
  %v5513 = vadd.f32 %v5443, %v5465
  %v5514 = vadd.f32 %v5444, %v5464
  %v5515 = vadd.f32 %v5445, %v5465
  %v5516 = vadd.f32 %v5446, %v5464
  %v5517 = vadd.f32 %v5447, %v5465
  %v5518 = vadd.f32 %v5448, %v5464
  %v5519 = vadd.f32 %v5449, %v5465
  %v5520 = vadd.f32 %v5450, %v5464
  %v5521 = vadd.f32 %v5451, %v5465
  %v5522 = vadd.f32 %v5452, %v5464
  %v5523 = vadd.f32 %v5453, %v5465
  %v5524 = vadd.f32 %v5454, %v5464
  %v5525 = vadd.f32 %v5455, %v5465
  %v5526 = vadd.f32 %v5456, %v5464
  %v5527 = vadd.f32 %v5457, %v5465
  %v5528 = vadd.f32 %v5458, %v5464
  %v5529 = vadd.f32 %v5459, %v5465
  %v5530 = vadd.f32 %v5460, %v5464
  %v5531 = vadd.f32 %v5461, %v5465
  %v5532 = vmax.f32 %v5468, 0.0
  %v5533 = vmax.f32 %v5469, 0.0
  %v5534 = vmax.f32 %v5470, 0.0
  %v5535 = vmax.f32 %v5471, 0.0
  %v5536 = vmax.f32 %v5472, 0.0
  %v5537 = vmax.f32 %v5473, 0.0
  %v5538 = vmax.f32 %v5474, 0.0
  %v5539 = vmax.f32 %v5475, 0.0
  %v5540 = vmax.f32 %v5476, 0.0
  %v5541 = vmax.f32 %v5477, 0.0
  %v5542 = vmax.f32 %v5478, 0.0
  %v5543 = vmax.f32 %v5479, 0.0
  %v5544 = vmax.f32 %v5480, 0.0
  %v5545 = vmax.f32 %v5481, 0.0
  %v5546 = vmax.f32 %v5482, 0.0
  %v5547 = vmax.f32 %v5483, 0.0
  %v5548 = vmax.f32 %v5484, 0.0
  %v5549 = vmax.f32 %v5485, 0.0
  %v5550 = vmax.f32 %v5486, 0.0
  %v5551 = vmax.f32 %v5487, 0.0
  %v5552 = vmax.f32 %v5488, 0.0
  %v5553 = vmax.f32 %v5489, 0.0
  %v5554 = vmax.f32 %v5490, 0.0
  %v5555 = vmax.f32 %v5491, 0.0
  %v5556 = vmax.f32 %v5492, 0.0
  %v5557 = vmax.f32 %v5493, 0.0
  %v5558 = vmax.f32 %v5494, 0.0
  %v5559 = vmax.f32 %v5495, 0.0
  %v5560 = vmax.f32 %v5496, 0.0
  %v5561 = vmax.f32 %v5497, 0.0
  %v5562 = vmax.f32 %v5498, 0.0
  %v5563 = vmax.f32 %v5499, 0.0
  %v5564 = vmax.f32 %v5500, 0.0
  %v5565 = vmax.f32 %v5501, 0.0
  %v5566 = vmax.f32 %v5502, 0.0
  %v5567 = vmax.f32 %v5503, 0.0
  %v5568 = vmax.f32 %v5504, 0.0
  %v5569 = vmax.f32 %v5505, 0.0
  %v5570 = vmax.f32 %v5506, 0.0
  %v5571 = vmax.f32 %v5507, 0.0
  %v5572 = vmax.f32 %v5508, 0.0
  %v5573 = vmax.f32 %v5509, 0.0
  %v5574 = vmax.f32 %v5510, 0.0
  %v5575 = vmax.f32 %v5511, 0.0
  %v5576 = vmax.f32 %v5512, 0.0
  %v5577 = vmax.f32 %v5513, 0.0
  %v5578 = vmax.f32 %v5514, 0.0
  %v5579 = vmax.f32 %v5515, 0.0
  %v5580 = vmax.f32 %v5516, 0.0
  %v5581 = vmax.f32 %v5517, 0.0
  %v5582 = vmax.f32 %v5518, 0.0
  %v5583 = vmax.f32 %v5519, 0.0
  %v5584 = vmax.f32 %v5520, 0.0
  %v5585 = vmax.f32 %v5521, 0.0
  %v5586 = vmax.f32 %v5522, 0.0
  %v5587 = vmax.f32 %v5523, 0.0
  %v5588 = vmax.f32 %v5524, 0.0
  %v5589 = vmax.f32 %v5525, 0.0
  %v5590 = vmax.f32 %v5526, 0.0
  %v5591 = vmax.f32 %v5527, 0.0
  %v5592 = vmax.f32 %v5528, 0.0
  %v5593 = vmax.f32 %v5529, 0.0
  %v5594 = vmax.f32 %v5530, 0.0
  %v5595 = vmax.f32 %v5531, 0.0
  %v5660 = vrot.slane %v5532, 2
  %v5661 = vrot.slane %v5534, 2
  %v5662 = vsel %vm840, %v5660, %v5661
  %v5663 = vrot.slane %v5533, 2
  %v5664 = vrot.slane %v5535, 2
  %v5665 = vsel %vm840, %v5663, %v5664
  %v5666 = vrot.slane %v5536, 2
  %v5667 = vsel %vm840, %v5661, %v5666
  %v5668 = vrot.slane %v5537, 2
  %v5669 = vsel %vm840, %v5664, %v5668
  %v5670 = vrot.slane %v5538, 2
  %v5671 = vsel %vm840, %v5666, %v5670
  %v5672 = vrot.slane %v5539, 2
  %v5673 = vsel %vm840, %v5668, %v5672
  %v5674 = vrot.slane %v5540, 2
  %v5675 = vsel %vm840, %v5670, %v5674
  %v5676 = vrot.slane %v5541, 2
  %v5677 = vsel %vm840, %v5672, %v5676
  %v5678 = vrot.slane %v5542, 2
  %v5679 = vsel %vm840, %v5674, %v5678
  %v5680 = vrot.slane %v5543, 2
  %v5681 = vsel %vm840, %v5676, %v5680
  %v5682 = vrot.slane %v5544, 2
  %v5683 = vsel %vm840, %v5678, %v5682
  %v5684 = vrot.slane %v5545, 2
  %v5685 = vsel %vm840, %v5680, %v5684
  %v5686 = vrot.slane %v5546, 2
  %v5687 = vsel %vm840, %v5682, %v5686
  %v5688 = vrot.slane %v5547, 2
  %v5689 = vsel %vm840, %v5684, %v5688
  %v5690 = vrot.slane %v5548, 2
  %v5691 = vsel %vm840, %v5686, %v5690
  %v5692 = vrot.slane %v5549, 2
  %v5693 = vsel %vm840, %v5688, %v5692
  %v5694 = vrot.slane %v5550, 2
  %v5695 = vsel %vm840, %v5690, %v5694
  %v5696 = vrot.slane %v5551, 2
  %v5697 = vsel %vm840, %v5692, %v5696
  %v5698 = vrot.slane %v5552, 2
  %v5699 = vsel %vm840, %v5694, %v5698
  %v5700 = vrot.slane %v5553, 2
  %v5701 = vsel %vm840, %v5696, %v5700
  %v5702 = vrot.slane %v5554, 2
  %v5703 = vsel %vm840, %v5698, %v5702
  %v5704 = vrot.slane %v5555, 2
  %v5705 = vsel %vm840, %v5700, %v5704
  %v5706 = vrot.slane %v5556, 2
  %v5707 = vsel %vm840, %v5702, %v5706
  %v5708 = vrot.slane %v5557, 2
  %v5709 = vsel %vm840, %v5704, %v5708
  %v5710 = vrot.slane %v5558, 2
  %v5711 = vsel %vm840, %v5706, %v5710
  %v5712 = vrot.slane %v5559, 2
  %v5713 = vsel %vm840, %v5708, %v5712
  %v5714 = vrot.slane %v5560, 2
  %v5715 = vsel %vm840, %v5710, %v5714
  %v5716 = vrot.slane %v5561, 2
  %v5717 = vsel %vm840, %v5712, %v5716
  %v5718 = vrot.slane %v5562, 2
  %v5719 = vsel %vm840, %v5714, %v5718
  %v5720 = vrot.slane %v5563, 2
  %v5721 = vsel %vm840, %v5716, %v5720
  %v5722 = vrot.slane %v5564, 2
  %v5723 = vsel %vm840, %v5718, %v5722
  %v5724 = vrot.slane %v5565, 2
  %v5725 = vsel %vm840, %v5720, %v5724
  %v5726 = vrot.slane %v5566, 2
  %v5727 = vsel %vm840, %v5722, %v5726
  %v5728 = vrot.slane %v5567, 2
  %v5729 = vsel %vm840, %v5724, %v5728
  %v5730 = vrot.slane %v5568, 2
  %v5731 = vsel %vm840, %v5726, %v5730
  %v5732 = vrot.slane %v5569, 2
  %v5733 = vsel %vm840, %v5728, %v5732
  %v5734 = vrot.slane %v5570, 2
  %v5735 = vsel %vm840, %v5730, %v5734
  %v5736 = vrot.slane %v5571, 2
  %v5737 = vsel %vm840, %v5732, %v5736
  %v5738 = vrot.slane %v5572, 2
  %v5739 = vsel %vm840, %v5734, %v5738
  %v5740 = vrot.slane %v5573, 2
  %v5741 = vsel %vm840, %v5736, %v5740
  %v5742 = vrot.slane %v5574, 2
  %v5743 = vsel %vm840, %v5738, %v5742
  %v5744 = vrot.slane %v5575, 2
  %v5745 = vsel %vm840, %v5740, %v5744
  %v5746 = vrot.slane %v5576, 2
  %v5747 = vsel %vm840, %v5742, %v5746
  %v5748 = vrot.slane %v5577, 2
  %v5749 = vsel %vm840, %v5744, %v5748
  %v5750 = vrot.slane %v5578, 2
  %v5751 = vsel %vm840, %v5746, %v5750
  %v5752 = vrot.slane %v5579, 2
  %v5753 = vsel %vm840, %v5748, %v5752
  %v5754 = vrot.slane %v5580, 2
  %v5755 = vsel %vm840, %v5750, %v5754
  %v5756 = vrot.slane %v5581, 2
  %v5757 = vsel %vm840, %v5752, %v5756
  %v5758 = vrot.slane %v5582, 2
  %v5759 = vsel %vm840, %v5754, %v5758
  %v5760 = vrot.slane %v5583, 2
  %v5761 = vsel %vm840, %v5756, %v5760
  %v5762 = vrot.slane %v5584, 2
  %v5763 = vsel %vm840, %v5758, %v5762
  %v5764 = vrot.slane %v5585, 2
  %v5765 = vsel %vm840, %v5760, %v5764
  %v5766 = vrot.slane %v5586, 2
  %v5767 = vsel %vm840, %v5762, %v5766
  %v5768 = vrot.slane %v5587, 2
  %v5769 = vsel %vm840, %v5764, %v5768
  %v5770 = vrot.slane %v5588, 2
  %v5771 = vsel %vm840, %v5766, %v5770
  %v5772 = vrot.slane %v5589, 2
  %v5773 = vsel %vm840, %v5768, %v5772
  %v5774 = vrot.slane %v5590, 2
  %v5775 = vsel %vm840, %v5770, %v5774
  %v5776 = vrot.slane %v5591, 2
  %v5777 = vsel %vm840, %v5772, %v5776
  %v5778 = vrot.slane %v5592, 2
  %v5779 = vsel %vm840, %v5774, %v5778
  %v5780 = vrot.slane %v5593, 2
  %v5781 = vsel %vm840, %v5776, %v5780
  %v5782 = vrot.slane %v5594, 2
  %v5783 = vsel %vm840, %v5778, %v5782
  %v5784 = vrot.slane %v5595, 2
  %v5785 = vsel %vm840, %v5780, %v5784
  %v5852 = vsel %vm840, %v5782, %v5660
  %v5853 = vsel %vm840, %v5784, %v5663
  %v5854 = vmax.f32 %v5532, %v5662
  %v5855 = vmax.f32 %v5533, %v5665
  %v5856 = vmax.f32 %v5534, %v5667
  %v5857 = vmax.f32 %v5535, %v5669
  %v5858 = vmax.f32 %v5536, %v5671
  %v5859 = vmax.f32 %v5537, %v5673
  %v5860 = vmax.f32 %v5538, %v5675
  %v5861 = vmax.f32 %v5539, %v5677
  %v5862 = vmax.f32 %v5540, %v5679
  %v5863 = vmax.f32 %v5541, %v5681
  %v5864 = vmax.f32 %v5542, %v5683
  %v5865 = vmax.f32 %v5543, %v5685
  %v5866 = vmax.f32 %v5544, %v5687
  %v5867 = vmax.f32 %v5545, %v5689
  %v5868 = vmax.f32 %v5546, %v5691
  %v5869 = vmax.f32 %v5547, %v5693
  %v5870 = vmax.f32 %v5548, %v5695
  %v5871 = vmax.f32 %v5549, %v5697
  %v5872 = vmax.f32 %v5550, %v5699
  %v5873 = vmax.f32 %v5551, %v5701
  %v5874 = vmax.f32 %v5552, %v5703
  %v5875 = vmax.f32 %v5553, %v5705
  %v5876 = vmax.f32 %v5554, %v5707
  %v5877 = vmax.f32 %v5555, %v5709
  %v5878 = vmax.f32 %v5556, %v5711
  %v5879 = vmax.f32 %v5557, %v5713
  %v5880 = vmax.f32 %v5558, %v5715
  %v5881 = vmax.f32 %v5559, %v5717
  %v5882 = vmax.f32 %v5560, %v5719
  %v5883 = vmax.f32 %v5561, %v5721
  %v5884 = vmax.f32 %v5562, %v5723
  %v5885 = vmax.f32 %v5563, %v5725
  %v5886 = vmax.f32 %v5564, %v5727
  %v5887 = vmax.f32 %v5565, %v5729
  %v5888 = vmax.f32 %v5566, %v5731
  %v5889 = vmax.f32 %v5567, %v5733
  %v5890 = vmax.f32 %v5568, %v5735
  %v5891 = vmax.f32 %v5569, %v5737
  %v5892 = vmax.f32 %v5570, %v5739
  %v5893 = vmax.f32 %v5571, %v5741
  %v5894 = vmax.f32 %v5572, %v5743
  %v5895 = vmax.f32 %v5573, %v5745
  %v5896 = vmax.f32 %v5574, %v5747
  %v5897 = vmax.f32 %v5575, %v5749
  %v5898 = vmax.f32 %v5576, %v5751
  %v5899 = vmax.f32 %v5577, %v5753
  %v5900 = vmax.f32 %v5578, %v5755
  %v5901 = vmax.f32 %v5579, %v5757
  %v5902 = vmax.f32 %v5580, %v5759
  %v5903 = vmax.f32 %v5581, %v5761
  %v5904 = vmax.f32 %v5582, %v5763
  %v5905 = vmax.f32 %v5583, %v5765
  %v5906 = vmax.f32 %v5584, %v5767
  %v5907 = vmax.f32 %v5585, %v5769
  %v5908 = vmax.f32 %v5586, %v5771
  %v5909 = vmax.f32 %v5587, %v5773
  %v5910 = vmax.f32 %v5588, %v5775
  %v5911 = vmax.f32 %v5589, %v5777
  %v5912 = vmax.f32 %v5590, %v5779
  %v5913 = vmax.f32 %v5591, %v5781
  %v5914 = vmax.f32 %v5592, %v5783
  %v5915 = vmax.f32 %v5593, %v5785
  %v5916 = vmax.f32 %v5594, %v5852
  %v5917 = vmax.f32 %v5595, %v5853
  %v5918 = vpack.c.bf16 %v5856, %v5854
  %v5919 = vpack.c.bf16 %v5857, %v5855
  %v5920 = vpack.c.bf16 %v5860, %v5858
  %v5921 = vpack.c.bf16 %v5861, %v5859
  %v5922 = vpack.c.bf16 %v5864, %v5862
  %v5923 = vpack.c.bf16 %v5865, %v5863
  %v5924 = vpack.c.bf16 %v5868, %v5866
  %v5925 = vpack.c.bf16 %v5869, %v5867
  %v5926 = vpack.c.bf16 %v5872, %v5870
  %v5927 = vpack.c.bf16 %v5873, %v5871
  %v5928 = vpack.c.bf16 %v5876, %v5874
  %v5929 = vpack.c.bf16 %v5877, %v5875
  %v5930 = vpack.c.bf16 %v5880, %v5878
  %v5931 = vpack.c.bf16 %v5881, %v5879
  %v5932 = vpack.c.bf16 %v5884, %v5882
  %v5933 = vpack.c.bf16 %v5885, %v5883
  %v5934 = vpack.c.bf16 %v5888, %v5886
  %v5935 = vpack.c.bf16 %v5889, %v5887
  %v5936 = vpack.c.bf16 %v5892, %v5890
  %v5937 = vpack.c.bf16 %v5893, %v5891
  %v5938 = vpack.c.bf16 %v5896, %v5894
  %v5939 = vpack.c.bf16 %v5897, %v5895
  %v5940 = vpack.c.bf16 %v5900, %v5898
  %v5941 = vpack.c.bf16 %v5901, %v5899
  %v5942 = vpack.c.bf16 %v5904, %v5902
  %v5943 = vpack.c.bf16 %v5905, %v5903
  %v5944 = vpack.c.bf16 %v5908, %v5906
  %v5945 = vpack.c.bf16 %v5909, %v5907
  %v5946 = vpack.c.bf16 %v5912, %v5910
  %v5947 = vpack.c.bf16 %v5913, %v5911
  %v5948 = vpack.c.bf16 %v5916, %v5914
  %v5949 = vpack.c.bf16 %v5917, %v5915
  %v5950 = vld [vmem:[%s6] sm:$0xf]
  %v5951 = vld [vmem:[%s6 + $0x4] sm:$0xf]
  %v5952 = vld [vmem:[%s6 + $0x8] sm:$0xf]
  %v5953 = vld [vmem:[%s6 + $0xc] sm:$0xf]
  %v5954 = vld [vmem:[%s6 + $0x10] sm:$0xf]
  %v5955 = vld [vmem:[%s6 + $0x14] sm:$0xf]
  %v5956 = vld [vmem:[%s6 + $0x18] sm:$0xf]
  %v5957 = vld [vmem:[%s6 + $0x1c] sm:$0xf]
  %v5958 = vld [vmem:[%s6 + $0x20] sm:$0xf]
  %v5959 = vld [vmem:[%s6 + $0x24] sm:$0xf]
  %v5960 = vld [vmem:[%s6 + $0x28] sm:$0xf]
  %v5961 = vld [vmem:[%s6 + $0x2c] sm:$0xf]
  %v5962 = vld [vmem:[%s6 + $0x30] sm:$0xf]
  %v5963 = vld [vmem:[%s6 + $0x34] sm:$0xf]
  %v5964 = vld [vmem:[%s6 + $0x38] sm:$0xf]
  %v5965 = vld [vmem:[%s6 + $0x3c] sm:$0xf]
  %v5966 = vld [vmem:[%s6 + $0x40] sm:$0xf]
  %v5967 = vld [vmem:[%s6 + $0x44] sm:$0xf]
  %v5968 = vld [vmem:[%s6 + $0x48] sm:$0xf]
  %v5969 = vld [vmem:[%s6 + $0x4c] sm:$0xf]
  %v5990 = vunpack.c.l.b16 %v5950
  %v5991 = vunpack.c.l.b16 %v5951
  %v5992 = vunpack.c.l.b16 %v5952
  %v5993 = vunpack.c.l.b16 %v5953
  %v5994 = vunpack.c.l.b16 %v5954
  %v5995 = vunpack.c.l.b16 %v5955
  %v5996 = vunpack.c.l.b16 %v5956
  %v5997 = vunpack.c.l.b16 %v5957
  %v5998 = vunpack.c.l.b16 %v5958
  %v5999 = vunpack.c.l.b16 %v5959
  %v6000 = vunpack.c.l.b16 %v5960
  %v6001 = vunpack.c.l.b16 %v5961
  %v6002 = vunpack.c.l.b16 %v5962
  %v6003 = vunpack.c.l.b16 %v5963
  %v6004 = vunpack.c.l.b16 %v5964
  %v6005 = vunpack.c.l.b16 %v5965
  %v6006 = vunpack.c.l.b16 %v5966
  %v6007 = vunpack.c.l.b16 %v5967
  %v6008 = vunpack.c.l.b16 %v5968
  %v6009 = vunpack.c.l.b16 %v5969
  %v6010 = vpack.c.b16 %v5991, %v5990
  %v6011 = vpack.c.b16 %v5993, %v5992
  %v6012 = vpack.c.b16 %v5995, %v5994
  %v6013 = vpack.c.b16 %v5997, %v5996
  %v6014 = vpack.c.b16 %v5999, %v5998
  %v6015 = vpack.c.b16 %v6001, %v6000
  %v6016 = vpack.c.b16 %v6003, %v6002
  %v6017 = vpack.c.b16 %v6005, %v6004
  %v6018 = vpack.c.b16 %v6007, %v6006
  %v6019 = vpack.c.b16 %v6009, %v6008
  %vm6030 = vcmask 261120
  %v6032 = vsel %vm6030, %v5919, 0
  %v6035 = vsel %vm6030, %v5921, 0
  %v6038 = vsel %vm6030, %v5923, 0
  %v6041 = vsel %vm6030, %v5925, 0
  %v6044 = vsel %vm6030, %v5927, 0
  %v6047 = vsel %vm6030, %v5929, 0
  %v6050 = vsel %vm6030, %v5931, 0
  %v6053 = vsel %vm6030, %v5933, 0
  %v6056 = vsel %vm6030, %v5935, 0
  %v6059 = vsel %vm6030, %v5937, 0
  %v6062 = vsel %vm6030, %v5939, 0
  %v6065 = vsel %vm6030, %v5941, 0
  %v6068 = vsel %vm6030, %v5943, 0
  %v6071 = vsel %vm6030, %v5945, 0
  %v6074 = vsel %vm6030, %v5947, 0
  %v6077 = vsel %vm6030, %v5949, 0
  %6079 = vmatpush.bf16.msra.mxu0 %v6017
  %6080 = vmatpush.bf16.msra.mxu0 %v6016
  %6081 = vmatpush.bf16.msra.mxu0 %v6015
  %6082 = vmatpush.bf16.msra.mxu0 %v6014
  %6083 = vmatpush.bf16.msra.mxu0 %v6013
  %6084 = vmatpush.bf16.msra.mxu0 %v6012
  %6085 = vmatpush.bf16.msra.mxu0 %v6011
  %6086 = vmatpush.bf16.msra.mxu0 %v6010
  %6087 = vmatmul.bf16.gmra.mxu0 %v5918
  %v6088 = vpop.f32.mrf.mxu0
  %v6089 = vadd.f32 0.0, %v6088
  %v6090 = vpop.f32.mrf.mxu0
  %v6091 = vadd.f32 0.0, %v6090
  %6092 = vmatmul.bf16.gmra.mxu0 %v5920
  %v6093 = vpop.f32.mrf.mxu0
  %v6094 = vadd.f32 0.0, %v6093
  %v6095 = vpop.f32.mrf.mxu0
  %v6096 = vadd.f32 0.0, %v6095
  %6097 = vmatmul.bf16.gmra.mxu0 %v5922
  %v6098 = vpop.f32.mrf.mxu0
  %v6099 = vadd.f32 0.0, %v6098
  %v6100 = vpop.f32.mrf.mxu0
  %v6101 = vadd.f32 0.0, %v6100
  %6102 = vmatmul.bf16.gmra.mxu0 %v5924
  %v6103 = vpop.f32.mrf.mxu0
  %v6104 = vadd.f32 0.0, %v6103
  %v6105 = vpop.f32.mrf.mxu0
  %v6106 = vadd.f32 0.0, %v6105
  %6107 = vmatmul.bf16.gmra.mxu0 %v5926
  %v6108 = vpop.f32.mrf.mxu0
  %v6109 = vadd.f32 0.0, %v6108
  %v6110 = vpop.f32.mrf.mxu0
  %v6111 = vadd.f32 0.0, %v6110
  %6112 = vmatmul.bf16.gmra.mxu0 %v5928
  %v6113 = vpop.f32.mrf.mxu0
  %v6114 = vadd.f32 0.0, %v6113
  %v6115 = vpop.f32.mrf.mxu0
  %v6116 = vadd.f32 0.0, %v6115
  %6117 = vmatmul.bf16.gmra.mxu0 %v5930
  %v6118 = vpop.f32.mrf.mxu0
  %v6119 = vadd.f32 0.0, %v6118
  %v6120 = vpop.f32.mrf.mxu0
  %v6121 = vadd.f32 0.0, %v6120
  %6122 = vmatmul.bf16.gmra.mxu0 %v5932
  %v6123 = vpop.f32.mrf.mxu0
  %v6124 = vadd.f32 0.0, %v6123
  %v6125 = vpop.f32.mrf.mxu0
  %v6126 = vadd.f32 0.0, %v6125
  %6127 = vmatmul.bf16.gmra.mxu0 %v5934
  %v6128 = vpop.f32.mrf.mxu0
  %v6129 = vadd.f32 0.0, %v6128
  %v6130 = vpop.f32.mrf.mxu0
  %v6131 = vadd.f32 0.0, %v6130
  %6132 = vmatmul.bf16.gmra.mxu0 %v5936
  %v6133 = vpop.f32.mrf.mxu0
  %v6134 = vadd.f32 0.0, %v6133
  %v6135 = vpop.f32.mrf.mxu0
  %v6136 = vadd.f32 0.0, %v6135
  %6137 = vmatmul.bf16.gmra.mxu0 %v5938
  %v6138 = vpop.f32.mrf.mxu0
  %v6139 = vadd.f32 0.0, %v6138
  %v6140 = vpop.f32.mrf.mxu0
  %v6141 = vadd.f32 0.0, %v6140
  %6142 = vmatmul.bf16.gmra.mxu0 %v5940
  %v6143 = vpop.f32.mrf.mxu0
  %v6144 = vadd.f32 0.0, %v6143
  %v6145 = vpop.f32.mrf.mxu0
  %v6146 = vadd.f32 0.0, %v6145
  %6147 = vmatmul.bf16.gmra.mxu0 %v5942
  %v6148 = vpop.f32.mrf.mxu0
  %v6149 = vadd.f32 0.0, %v6148
  %v6150 = vpop.f32.mrf.mxu0
  %v6151 = vadd.f32 0.0, %v6150
  %6152 = vmatmul.bf16.gmra.mxu0 %v5944
  %v6153 = vpop.f32.mrf.mxu0
  %v6154 = vadd.f32 0.0, %v6153
  %v6155 = vpop.f32.mrf.mxu0
  %v6156 = vadd.f32 0.0, %v6155
  %6157 = vmatmul.bf16.gmra.mxu0 %v5946
  %v6158 = vpop.f32.mrf.mxu0
  %v6159 = vadd.f32 0.0, %v6158
  %v6160 = vpop.f32.mrf.mxu0
  %v6161 = vadd.f32 0.0, %v6160
  %6162 = vmatmul.bf16.gmra.mxu0 %v5948
  %v6163 = vpop.f32.mrf.mxu0
  %v6164 = vadd.f32 0.0, %v6163
  %v6165 = vpop.f32.mrf.mxu0
  %v6166 = vadd.f32 0.0, %v6165
  %6167 = vdwg.mxu0
  %6168 = vmatpush.bf16.msra.mxu0 0
  %6169 = vmatpush.bf16.msra.mxu0 0
  %6170 = vmatpush.bf16.msra.mxu0 0
  %6171 = vmatpush.bf16.msra.mxu0 0
  %6172 = vmatpush.bf16.msra.mxu0 0
  %6173 = vmatpush.bf16.msra.mxu0 0
  %6174 = vmatpush.bf16.msra.mxu0 %v6019
  %6175 = vmatpush.bf16.msra.mxu0 %v6018
  %6176 = vmatmul.bf16.gmra.mxu0 %v6032
  %v6177 = vpop.f32.mrf.mxu0
  %v6178 = vadd.f32 %v6089, %v6177
  %v6179 = vpop.f32.mrf.mxu0
  %v6180 = vadd.f32 %v6091, %v6179
  %6181 = vmatmul.bf16.gmra.mxu0 %v6035
  %v6182 = vpop.f32.mrf.mxu0
  %v6183 = vadd.f32 %v6094, %v6182
  %v6184 = vpop.f32.mrf.mxu0
  %v6185 = vadd.f32 %v6096, %v6184
  %6186 = vmatmul.bf16.gmra.mxu0 %v6038
  %v6187 = vpop.f32.mrf.mxu0
  %v6188 = vadd.f32 %v6099, %v6187
  %v6189 = vpop.f32.mrf.mxu0
  %v6190 = vadd.f32 %v6101, %v6189
  %6191 = vmatmul.bf16.gmra.mxu0 %v6041
  %v6192 = vpop.f32.mrf.mxu0
  %v6193 = vadd.f32 %v6104, %v6192
  %v6194 = vpop.f32.mrf.mxu0
  %v6195 = vadd.f32 %v6106, %v6194
  %6196 = vmatmul.bf16.gmra.mxu0 %v6044
  %v6197 = vpop.f32.mrf.mxu0
  %v6198 = vadd.f32 %v6109, %v6197
  %v6199 = vpop.f32.mrf.mxu0
  %v6200 = vadd.f32 %v6111, %v6199
  %6201 = vmatmul.bf16.gmra.mxu0 %v6047
  %v6202 = vpop.f32.mrf.mxu0
  %v6203 = vadd.f32 %v6114, %v6202
  %v6204 = vpop.f32.mrf.mxu0
  %v6205 = vadd.f32 %v6116, %v6204
  %6206 = vmatmul.bf16.gmra.mxu0 %v6050
  %v6207 = vpop.f32.mrf.mxu0
  %v6208 = vadd.f32 %v6119, %v6207
  %v6209 = vpop.f32.mrf.mxu0
  %v6210 = vadd.f32 %v6121, %v6209
  %6211 = vmatmul.bf16.gmra.mxu0 %v6053
  %v6212 = vpop.f32.mrf.mxu0
  %v6213 = vadd.f32 %v6124, %v6212
  %v6214 = vpop.f32.mrf.mxu0
  %v6215 = vadd.f32 %v6126, %v6214
  %6216 = vmatmul.bf16.gmra.mxu0 %v6056
  %v6217 = vpop.f32.mrf.mxu0
  %v6218 = vadd.f32 %v6129, %v6217
  %v6219 = vpop.f32.mrf.mxu0
  %v6220 = vadd.f32 %v6131, %v6219
  %6221 = vmatmul.bf16.gmra.mxu0 %v6059
  %v6222 = vpop.f32.mrf.mxu0
  %v6223 = vadd.f32 %v6134, %v6222
  %v6224 = vpop.f32.mrf.mxu0
  %v6225 = vadd.f32 %v6136, %v6224
  %6226 = vmatmul.bf16.gmra.mxu0 %v6062
  %v6227 = vpop.f32.mrf.mxu0
  %v6228 = vadd.f32 %v6139, %v6227
  %v6229 = vpop.f32.mrf.mxu0
  %v6230 = vadd.f32 %v6141, %v6229
  %6231 = vmatmul.bf16.gmra.mxu0 %v6065
  %v6232 = vpop.f32.mrf.mxu0
  %v6233 = vadd.f32 %v6144, %v6232
  %v6234 = vpop.f32.mrf.mxu0
  %v6235 = vadd.f32 %v6146, %v6234
  %6236 = vmatmul.bf16.gmra.mxu0 %v6068
  %v6237 = vpop.f32.mrf.mxu0
  %v6238 = vadd.f32 %v6149, %v6237
  %v6239 = vpop.f32.mrf.mxu0
  %v6240 = vadd.f32 %v6151, %v6239
  %6241 = vmatmul.bf16.gmra.mxu0 %v6071
  %v6242 = vpop.f32.mrf.mxu0
  %v6243 = vadd.f32 %v6154, %v6242
  %v6244 = vpop.f32.mrf.mxu0
  %v6245 = vadd.f32 %v6156, %v6244
  %6246 = vmatmul.bf16.gmra.mxu0 %v6074
  %v6247 = vpop.f32.mrf.mxu0
  %v6248 = vadd.f32 %v6159, %v6247
  %v6249 = vpop.f32.mrf.mxu0
  %v6250 = vadd.f32 %v6161, %v6249
  %6251 = vmatmul.bf16.gmra.mxu0 %v6077
  %v6252 = vpop.f32.mrf.mxu0
  %v6253 = vadd.f32 %v6164, %v6252
  %v6254 = vpop.f32.mrf.mxu0
  %v6255 = vadd.f32 %v6166, %v6254
  %6256 = vdwg.mxu0
  %s6257 = scalar_lea.vmem %s6, 80
  %v6258 = vld [vmem:[%s6257] sm:$0xf]
  %v6259 = vld [vmem:[%s6257 + $0x4] sm:$0xf]
  %v6260 = vld [vmem:[%s6257 + $0x8] sm:$0xf]
  %v6261 = vld [vmem:[%s6257 + $0xc] sm:$0xf]
  %v6262 = vld [vmem:[%s6257 + $0x10] sm:$0xf]
  %v6263 = vld [vmem:[%s6257 + $0x14] sm:$0xf]
  %v6264 = vld [vmem:[%s6257 + $0x18] sm:$0xf]
  %v6265 = vld [vmem:[%s6257 + $0x1c] sm:$0xf]
  %v6266 = vld [vmem:[%s6257 + $0x20] sm:$0xf]
  %v6267 = vld [vmem:[%s6257 + $0x24] sm:$0xf]
  %v6268 = vld [vmem:[%s6257 + $0x28] sm:$0xf]
  %v6269 = vld [vmem:[%s6257 + $0x2c] sm:$0xf]
  %v6270 = vld [vmem:[%s6257 + $0x30] sm:$0xf]
  %v6271 = vld [vmem:[%s6257 + $0x34] sm:$0xf]
  %v6272 = vld [vmem:[%s6257 + $0x38] sm:$0xf]
  %v6273 = vld [vmem:[%s6257 + $0x3c] sm:$0xf]
  %v6274 = vld [vmem:[%s6257 + $0x40] sm:$0xf]
  %v6275 = vld [vmem:[%s6257 + $0x44] sm:$0xf]
  %v6276 = vld [vmem:[%s6257 + $0x48] sm:$0xf]
  %v6277 = vld [vmem:[%s6257 + $0x4c] sm:$0xf]
  %v6298 = vunpack.c.l.b16 %v6258
  %v6299 = vunpack.c.l.b16 %v6259
  %v6300 = vunpack.c.l.b16 %v6260
  %v6301 = vunpack.c.l.b16 %v6261
  %v6302 = vunpack.c.l.b16 %v6262
  %v6303 = vunpack.c.l.b16 %v6263
  %v6304 = vunpack.c.l.b16 %v6264
  %v6305 = vunpack.c.l.b16 %v6265
  %v6306 = vunpack.c.l.b16 %v6266
  %v6307 = vunpack.c.l.b16 %v6267
  %v6308 = vunpack.c.l.b16 %v6268
  %v6309 = vunpack.c.l.b16 %v6269
  %v6310 = vunpack.c.l.b16 %v6270
  %v6311 = vunpack.c.l.b16 %v6271
  %v6312 = vunpack.c.l.b16 %v6272
  %v6313 = vunpack.c.l.b16 %v6273
  %v6314 = vunpack.c.l.b16 %v6274
  %v6315 = vunpack.c.l.b16 %v6275
  %v6316 = vunpack.c.l.b16 %v6276
  %v6317 = vunpack.c.l.b16 %v6277
  %v6318 = vpack.c.b16 %v6299, %v6298
  %v6319 = vpack.c.b16 %v6301, %v6300
  %v6320 = vpack.c.b16 %v6303, %v6302
  %v6321 = vpack.c.b16 %v6305, %v6304
  %v6322 = vpack.c.b16 %v6307, %v6306
  %v6323 = vpack.c.b16 %v6309, %v6308
  %v6324 = vpack.c.b16 %v6311, %v6310
  %v6325 = vpack.c.b16 %v6313, %v6312
  %v6326 = vpack.c.b16 %v6315, %v6314
  %v6327 = vpack.c.b16 %v6317, %v6316
  %6338 = vmatpush.bf16.msra.mxu0 %v6325
  %6339 = vmatpush.bf16.msra.mxu0 %v6324
  %6340 = vmatpush.bf16.msra.mxu0 %v6323
  %6341 = vmatpush.bf16.msra.mxu0 %v6322
  %6342 = vmatpush.bf16.msra.mxu0 %v6321
  %6343 = vmatpush.bf16.msra.mxu0 %v6320
  %6344 = vmatpush.bf16.msra.mxu0 %v6319
  %6345 = vmatpush.bf16.msra.mxu0 %v6318
  %6346 = vmatmul.bf16.gmra.mxu0 %v5918
  %v6347 = vpop.f32.mrf.mxu0
  %v6348 = vadd.f32 0.0, %v6347
  %v6349 = vpop.f32.mrf.mxu0
  %v6350 = vadd.f32 0.0, %v6349
  %6351 = vmatmul.bf16.gmra.mxu0 %v5920
  %v6352 = vpop.f32.mrf.mxu0
  %v6353 = vadd.f32 0.0, %v6352
  %v6354 = vpop.f32.mrf.mxu0
  %v6355 = vadd.f32 0.0, %v6354
  %6356 = vmatmul.bf16.gmra.mxu0 %v5922
  %v6357 = vpop.f32.mrf.mxu0
  %v6358 = vadd.f32 0.0, %v6357
  %v6359 = vpop.f32.mrf.mxu0
  %v6360 = vadd.f32 0.0, %v6359
  %6361 = vmatmul.bf16.gmra.mxu0 %v5924
  %v6362 = vpop.f32.mrf.mxu0
  %v6363 = vadd.f32 0.0, %v6362
  %v6364 = vpop.f32.mrf.mxu0
  %v6365 = vadd.f32 0.0, %v6364
  %6366 = vmatmul.bf16.gmra.mxu0 %v5926
  %v6367 = vpop.f32.mrf.mxu0
  %v6368 = vadd.f32 0.0, %v6367
  %v6369 = vpop.f32.mrf.mxu0
  %v6370 = vadd.f32 0.0, %v6369
  %6371 = vmatmul.bf16.gmra.mxu0 %v5928
  %v6372 = vpop.f32.mrf.mxu0
  %v6373 = vadd.f32 0.0, %v6372
  %v6374 = vpop.f32.mrf.mxu0
  %v6375 = vadd.f32 0.0, %v6374
  %6376 = vmatmul.bf16.gmra.mxu0 %v5930
  %v6377 = vpop.f32.mrf.mxu0
  %v6378 = vadd.f32 0.0, %v6377
  %v6379 = vpop.f32.mrf.mxu0
  %v6380 = vadd.f32 0.0, %v6379
  %6381 = vmatmul.bf16.gmra.mxu0 %v5932
  %v6382 = vpop.f32.mrf.mxu0
  %v6383 = vadd.f32 0.0, %v6382
  %v6384 = vpop.f32.mrf.mxu0
  %v6385 = vadd.f32 0.0, %v6384
  %6386 = vmatmul.bf16.gmra.mxu0 %v5934
  %v6387 = vpop.f32.mrf.mxu0
  %v6388 = vadd.f32 0.0, %v6387
  %v6389 = vpop.f32.mrf.mxu0
  %v6390 = vadd.f32 0.0, %v6389
  %6391 = vmatmul.bf16.gmra.mxu0 %v5936
  %v6392 = vpop.f32.mrf.mxu0
  %v6393 = vadd.f32 0.0, %v6392
  %v6394 = vpop.f32.mrf.mxu0
  %v6395 = vadd.f32 0.0, %v6394
  %6396 = vmatmul.bf16.gmra.mxu0 %v5938
  %v6397 = vpop.f32.mrf.mxu0
  %v6398 = vadd.f32 0.0, %v6397
  %v6399 = vpop.f32.mrf.mxu0
  %v6400 = vadd.f32 0.0, %v6399
  %6401 = vmatmul.bf16.gmra.mxu0 %v5940
  %v6402 = vpop.f32.mrf.mxu0
  %v6403 = vadd.f32 0.0, %v6402
  %v6404 = vpop.f32.mrf.mxu0
  %v6405 = vadd.f32 0.0, %v6404
  %6406 = vmatmul.bf16.gmra.mxu0 %v5942
  %v6407 = vpop.f32.mrf.mxu0
  %v6408 = vadd.f32 0.0, %v6407
  %v6409 = vpop.f32.mrf.mxu0
  %v6410 = vadd.f32 0.0, %v6409
  %6411 = vmatmul.bf16.gmra.mxu0 %v5944
  %v6412 = vpop.f32.mrf.mxu0
  %v6413 = vadd.f32 0.0, %v6412
  %v6414 = vpop.f32.mrf.mxu0
  %v6415 = vadd.f32 0.0, %v6414
  %6416 = vmatmul.bf16.gmra.mxu0 %v5946
  %v6417 = vpop.f32.mrf.mxu0
  %v6418 = vadd.f32 0.0, %v6417
  %v6419 = vpop.f32.mrf.mxu0
  %v6420 = vadd.f32 0.0, %v6419
  %6421 = vmatmul.bf16.gmra.mxu0 %v5948
  %v6422 = vpop.f32.mrf.mxu0
  %v6423 = vadd.f32 0.0, %v6422
  %v6424 = vpop.f32.mrf.mxu0
  %v6425 = vadd.f32 0.0, %v6424
  %6426 = vdwg.mxu0
  %6427 = vmatpush.bf16.msra.mxu0 0
  %6428 = vmatpush.bf16.msra.mxu0 0
  %6429 = vmatpush.bf16.msra.mxu0 0
  %6430 = vmatpush.bf16.msra.mxu0 0
  %6431 = vmatpush.bf16.msra.mxu0 0
  %6432 = vmatpush.bf16.msra.mxu0 0
  %6433 = vmatpush.bf16.msra.mxu0 %v6327
  %6434 = vmatpush.bf16.msra.mxu0 %v6326
  %6435 = vmatmul.bf16.gmra.mxu0 %v6032
  %v6436 = vpop.f32.mrf.mxu0
  %v6437 = vadd.f32 %v6348, %v6436
  %v6438 = vpop.f32.mrf.mxu0
  %v6439 = vadd.f32 %v6350, %v6438
  %6440 = vmatmul.bf16.gmra.mxu0 %v6035
  %v6441 = vpop.f32.mrf.mxu0
  %v6442 = vadd.f32 %v6353, %v6441
  %v6443 = vpop.f32.mrf.mxu0
  %v6444 = vadd.f32 %v6355, %v6443
  %6445 = vmatmul.bf16.gmra.mxu0 %v6038
  %v6446 = vpop.f32.mrf.mxu0
  %v6447 = vadd.f32 %v6358, %v6446
  %v6448 = vpop.f32.mrf.mxu0
  %v6449 = vadd.f32 %v6360, %v6448
  %6450 = vmatmul.bf16.gmra.mxu0 %v6041
  %v6451 = vpop.f32.mrf.mxu0
  %v6452 = vadd.f32 %v6363, %v6451
  %v6453 = vpop.f32.mrf.mxu0
  %v6454 = vadd.f32 %v6365, %v6453
  %6455 = vmatmul.bf16.gmra.mxu0 %v6044
  %v6456 = vpop.f32.mrf.mxu0
  %v6457 = vadd.f32 %v6368, %v6456
  %v6458 = vpop.f32.mrf.mxu0
  %v6459 = vadd.f32 %v6370, %v6458
  %6460 = vmatmul.bf16.gmra.mxu0 %v6047
  %v6461 = vpop.f32.mrf.mxu0
  %v6462 = vadd.f32 %v6373, %v6461
  %v6463 = vpop.f32.mrf.mxu0
  %v6464 = vadd.f32 %v6375, %v6463
  %6465 = vmatmul.bf16.gmra.mxu0 %v6050
  %v6466 = vpop.f32.mrf.mxu0
  %v6467 = vadd.f32 %v6378, %v6466
  %v6468 = vpop.f32.mrf.mxu0
  %v6469 = vadd.f32 %v6380, %v6468
  %6470 = vmatmul.bf16.gmra.mxu0 %v6053
  %v6471 = vpop.f32.mrf.mxu0
  %v6472 = vadd.f32 %v6383, %v6471
  %v6473 = vpop.f32.mrf.mxu0
  %v6474 = vadd.f32 %v6385, %v6473
  %6475 = vmatmul.bf16.gmra.mxu0 %v6056
  %v6476 = vpop.f32.mrf.mxu0
  %v6477 = vadd.f32 %v6388, %v6476
  %v6478 = vpop.f32.mrf.mxu0
  %v6479 = vadd.f32 %v6390, %v6478
  %6480 = vmatmul.bf16.gmra.mxu0 %v6059
  %v6481 = vpop.f32.mrf.mxu0
  %v6482 = vadd.f32 %v6393, %v6481
  %v6483 = vpop.f32.mrf.mxu0
  %v6484 = vadd.f32 %v6395, %v6483
  %6485 = vmatmul.bf16.gmra.mxu0 %v6062
  %v6486 = vpop.f32.mrf.mxu0
  %v6487 = vadd.f32 %v6398, %v6486
  %v6488 = vpop.f32.mrf.mxu0
  %v6489 = vadd.f32 %v6400, %v6488
  %6490 = vmatmul.bf16.gmra.mxu0 %v6065
  %v6491 = vpop.f32.mrf.mxu0
  %v6492 = vadd.f32 %v6403, %v6491
  %v6493 = vpop.f32.mrf.mxu0
  %v6494 = vadd.f32 %v6405, %v6493
  %6495 = vmatmul.bf16.gmra.mxu0 %v6068
  %v6496 = vpop.f32.mrf.mxu0
  %v6497 = vadd.f32 %v6408, %v6496
  %v6498 = vpop.f32.mrf.mxu0
  %v6499 = vadd.f32 %v6410, %v6498
  %6500 = vmatmul.bf16.gmra.mxu0 %v6071
  %v6501 = vpop.f32.mrf.mxu0
  %v6502 = vadd.f32 %v6413, %v6501
  %v6503 = vpop.f32.mrf.mxu0
  %v6504 = vadd.f32 %v6415, %v6503
  %6505 = vmatmul.bf16.gmra.mxu0 %v6074
  %v6506 = vpop.f32.mrf.mxu0
  %v6507 = vadd.f32 %v6418, %v6506
  %v6508 = vpop.f32.mrf.mxu0
  %v6509 = vadd.f32 %v6420, %v6508
  %6510 = vmatmul.bf16.gmra.mxu0 %v6077
  %v6511 = vpop.f32.mrf.mxu0
  %v6512 = vadd.f32 %v6423, %v6511
  %v6513 = vpop.f32.mrf.mxu0
  %v6514 = vadd.f32 %v6425, %v6513
  %6515 = vdwg.mxu0
  %v6516 = vmax.f32 %v6178, %v6437
  %v6517 = vmax.f32 %v6180, %v6439
  %v6518 = vmax.f32 %v6183, %v6442
  %v6519 = vmax.f32 %v6185, %v6444
  %v6520 = vmax.f32 %v6188, %v6447
  %v6521 = vmax.f32 %v6190, %v6449
  %v6522 = vmax.f32 %v6193, %v6452
  %v6523 = vmax.f32 %v6195, %v6454
  %v6524 = vmax.f32 %v6198, %v6457
  %v6525 = vmax.f32 %v6200, %v6459
  %v6526 = vmax.f32 %v6203, %v6462
  %v6527 = vmax.f32 %v6205, %v6464
  %v6528 = vmax.f32 %v6208, %v6467
  %v6529 = vmax.f32 %v6210, %v6469
  %v6530 = vmax.f32 %v6213, %v6472
  %v6531 = vmax.f32 %v6215, %v6474
  %v6532 = vmax.f32 %v6218, %v6477
  %v6533 = vmax.f32 %v6220, %v6479
  %v6534 = vmax.f32 %v6223, %v6482
  %v6535 = vmax.f32 %v6225, %v6484
  %v6536 = vmax.f32 %v6228, %v6487
  %v6537 = vmax.f32 %v6230, %v6489
  %v6538 = vmax.f32 %v6233, %v6492
  %v6539 = vmax.f32 %v6235, %v6494
  %v6540 = vmax.f32 %v6238, %v6497
  %v6541 = vmax.f32 %v6240, %v6499
  %v6542 = vmax.f32 %v6243, %v6502
  %v6543 = vmax.f32 %v6245, %v6504
  %v6544 = vmax.f32 %v6248, %v6507
  %v6545 = vmax.f32 %v6250, %v6509
  %v6546 = vmax.f32 %v6253, %v6512
  %v6547 = vmax.f32 %v6255, %v6514
  %v6548 = vpack.c.bf16 %v6517, %v6516
  %v6549 = vpack.c.bf16 %v6519, %v6518
  %v6550 = vpack.c.bf16 %v6521, %v6520
  %v6551 = vpack.c.bf16 %v6523, %v6522
  %v6552 = vpack.c.bf16 %v6525, %v6524
  %v6553 = vpack.c.bf16 %v6527, %v6526
  %v6554 = vpack.c.bf16 %v6529, %v6528
  %v6555 = vpack.c.bf16 %v6531, %v6530
  %v6556 = vpack.c.bf16 %v6533, %v6532
  %v6557 = vpack.c.bf16 %v6535, %v6534
  %v6558 = vpack.c.bf16 %v6537, %v6536
  %v6559 = vpack.c.bf16 %v6539, %v6538
  %v6560 = vpack.c.bf16 %v6541, %v6540
  %v6561 = vpack.c.bf16 %v6543, %v6542
  %v6562 = vpack.c.bf16 %v6545, %v6544
  %v6563 = vpack.c.bf16 %v6547, %v6546
  %v6564 = vld [vmem:[%s7] sm:$0xf]
  %v6565 = vld [vmem:[%s7 + $0x4] sm:$0xf]
  %v6566 = vld [vmem:[%s7 + $0x8] sm:$0xf]
  %v6567 = vld [vmem:[%s7 + $0xc] sm:$0xf]
  %v6568 = vld [vmem:[%s7 + $0x10] sm:$0xf]
  %v6569 = vld [vmem:[%s7 + $0x14] sm:$0xf]
  %v6570 = vld [vmem:[%s7 + $0x18] sm:$0xf]
  %v6571 = vld [vmem:[%s7 + $0x1c] sm:$0xf]
  %v6572 = vld [vmem:[%s7 + $0x20] sm:$0xf]
  %v6573 = vld [vmem:[%s7 + $0x24] sm:$0xf]
  %v6606 = vrot.slane %v6516, 4
  %v6607 = vrot.slane %v6517, 4
  %v6608 = vsel %vm1794, %v6606, %v6607
  %v6609 = vrot.slane %v6518, 4
  %v6610 = vsel %vm1794, %v6607, %v6609
  %v6611 = vrot.slane %v6519, 4
  %v6612 = vsel %vm1794, %v6609, %v6611
  %v6613 = vrot.slane %v6520, 4
  %v6614 = vsel %vm1794, %v6611, %v6613
  %v6615 = vrot.slane %v6521, 4
  %v6616 = vsel %vm1794, %v6613, %v6615
  %v6617 = vrot.slane %v6522, 4
  %v6618 = vsel %vm1794, %v6615, %v6617
  %v6619 = vrot.slane %v6523, 4
  %v6620 = vsel %vm1794, %v6617, %v6619
  %v6621 = vrot.slane %v6524, 4
  %v6622 = vsel %vm1794, %v6619, %v6621
  %v6623 = vrot.slane %v6525, 4
  %v6624 = vsel %vm1794, %v6621, %v6623
  %v6625 = vrot.slane %v6526, 4
  %v6626 = vsel %vm1794, %v6623, %v6625
  %v6627 = vrot.slane %v6527, 4
  %v6628 = vsel %vm1794, %v6625, %v6627
  %v6629 = vrot.slane %v6528, 4
  %v6630 = vsel %vm1794, %v6627, %v6629
  %v6631 = vrot.slane %v6529, 4
  %v6632 = vsel %vm1794, %v6629, %v6631
  %v6633 = vrot.slane %v6530, 4
  %v6634 = vsel %vm1794, %v6631, %v6633
  %v6635 = vrot.slane %v6531, 4
  %v6636 = vsel %vm1794, %v6633, %v6635
  %v6637 = vrot.slane %v6532, 4
  %v6638 = vsel %vm1794, %v6635, %v6637
  %v6639 = vrot.slane %v6533, 4
  %v6640 = vsel %vm1794, %v6637, %v6639
  %v6641 = vrot.slane %v6534, 4
  %v6642 = vsel %vm1794, %v6639, %v6641
  %v6643 = vrot.slane %v6535, 4
  %v6644 = vsel %vm1794, %v6641, %v6643
  %v6645 = vrot.slane %v6536, 4
  %v6646 = vsel %vm1794, %v6643, %v6645
  %v6647 = vrot.slane %v6537, 4
  %v6648 = vsel %vm1794, %v6645, %v6647
  %v6649 = vrot.slane %v6538, 4
  %v6650 = vsel %vm1794, %v6647, %v6649
  %v6651 = vrot.slane %v6539, 4
  %v6652 = vsel %vm1794, %v6649, %v6651
  %v6653 = vrot.slane %v6540, 4
  %v6654 = vsel %vm1794, %v6651, %v6653
  %v6655 = vrot.slane %v6541, 4
  %v6656 = vsel %vm1794, %v6653, %v6655
  %v6657 = vrot.slane %v6542, 4
  %v6658 = vsel %vm1794, %v6655, %v6657
  %v6659 = vrot.slane %v6543, 4
  %v6660 = vsel %vm1794, %v6657, %v6659
  %v6661 = vrot.slane %v6544, 4
  %v6662 = vsel %vm1794, %v6659, %v6661
  %v6663 = vrot.slane %v6545, 4
  %v6664 = vsel %vm1794, %v6661, %v6663
  %v6665 = vrot.slane %v6546, 4
  %v6666 = vsel %vm1794, %v6663, %v6665
  %v6667 = vrot.slane %v6547, 4
  %v6668 = vsel %vm1794, %v6665, %v6667
  %v6702 = vsel %vm1794, %v6667, %v6606
  %v6703 = vpack.c.bf16 %v6610, %v6608
  %v6704 = vpack.c.bf16 %v6614, %v6612
  %v6705 = vpack.c.bf16 %v6618, %v6616
  %v6706 = vpack.c.bf16 %v6622, %v6620
  %v6707 = vpack.c.bf16 %v6626, %v6624
  %v6708 = vpack.c.bf16 %v6630, %v6628
  %v6709 = vpack.c.bf16 %v6634, %v6632
  %v6710 = vpack.c.bf16 %v6638, %v6636
  %v6711 = vpack.c.bf16 %v6642, %v6640
  %v6712 = vpack.c.bf16 %v6646, %v6644
  %v6713 = vpack.c.bf16 %v6650, %v6648
  %v6714 = vpack.c.bf16 %v6654, %v6652
  %v6715 = vpack.c.bf16 %v6658, %v6656
  %v6716 = vpack.c.bf16 %v6662, %v6660
  %v6717 = vpack.c.bf16 %v6666, %v6664
  %v6718 = vpack.c.bf16 %v6702, %v6668
  %s6719 = scalar_lea.vmem %s7, 40
  %v6720 = vld [vmem:[%s6719] sm:$0xf]
  %v6721 = vld [vmem:[%s6719 + $0x4] sm:$0xf]
  %v6722 = vld [vmem:[%s6719 + $0x8] sm:$0xf]
  %v6723 = vld [vmem:[%s6719 + $0xc] sm:$0xf]
  %v6724 = vld [vmem:[%s6719 + $0x10] sm:$0xf]
  %v6725 = vld [vmem:[%s6719 + $0x14] sm:$0xf]
  %v6726 = vld [vmem:[%s6719 + $0x18] sm:$0xf]
  %v6727 = vld [vmem:[%s6719 + $0x1c] sm:$0xf]
  %v6728 = vld [vmem:[%s6719 + $0x20] sm:$0xf]
  %v6729 = vld [vmem:[%s6719 + $0x24] sm:$0xf]
  %v6740 = vunpack.c.l.b16 %v6720
  %v6741 = vunpack.c.l.b16 %v6721
  %v6742 = vunpack.c.l.b16 %v6722
  %v6743 = vunpack.c.l.b16 %v6723
  %v6744 = vunpack.c.l.b16 %v6724
  %v6745 = vunpack.c.l.b16 %v6725
  %v6746 = vunpack.c.l.b16 %v6726
  %v6747 = vunpack.c.l.b16 %v6727
  %v6748 = vunpack.c.l.b16 %v6728
  %v6749 = vunpack.c.l.b16 %v6729
  %v6750 = vpack.c.b16 %v6741, %v6740
  %v6751 = vpack.c.b16 %v6743, %v6742
  %v6752 = vpack.c.b16 %v6745, %v6744
  %v6753 = vpack.c.b16 %v6747, %v6746
  %v6754 = vpack.c.b16 %v6749, %v6748
  %vm6760 = vcmask 654336
  %v6762 = vsel %vm6760, %v6703, 0
  %v6765 = vsel %vm6760, %v6704, 0
  %v6768 = vsel %vm6760, %v6705, 0
  %v6771 = vsel %vm6760, %v6706, 0
  %v6774 = vsel %vm6760, %v6707, 0
  %v6777 = vsel %vm6760, %v6708, 0
  %v6780 = vsel %vm6760, %v6709, 0
  %v6783 = vsel %vm6760, %v6710, 0
  %v6786 = vsel %vm6760, %v6711, 0
  %v6789 = vsel %vm6760, %v6712, 0
  %v6792 = vsel %vm6760, %v6713, 0
  %v6795 = vsel %vm6760, %v6714, 0
  %v6798 = vsel %vm6760, %v6715, 0
  %v6801 = vsel %vm6760, %v6716, 0
  %v6804 = vsel %vm6760, %v6717, 0
  %v6807 = vsel %vm6760, %v6718, 0
  %6809 = vmatpush.bf16.msra.mxu0 0
  %6810 = vmatpush.bf16.msra.mxu0 0
  %6811 = vmatpush.bf16.msra.mxu0 0
  %6812 = vmatpush.bf16.msra.mxu0 %v6754
  %6813 = vmatpush.bf16.msra.mxu0 %v6753
  %6814 = vmatpush.bf16.msra.mxu0 %v6752
  %6815 = vmatpush.bf16.msra.mxu0 %v6751
  %6816 = vmatpush.bf16.msra.mxu0 %v6750
  %6817 = vmatmul.bf16.gmra.mxu0 %v6762
  %v6818 = vpop.f32.mrf.mxu0
  %v6819 = vadd.f32 0.0, %v6818
  %v6820 = vpop.f32.mrf.mxu0
  %v6821 = vadd.f32 0.0, %v6820
  %6822 = vmatmul.bf16.gmra.mxu0 %v6765
  %v6823 = vpop.f32.mrf.mxu0
  %v6824 = vadd.f32 0.0, %v6823
  %v6825 = vpop.f32.mrf.mxu0
  %v6826 = vadd.f32 0.0, %v6825
  %6827 = vmatmul.bf16.gmra.mxu0 %v6768
  %v6828 = vpop.f32.mrf.mxu0
  %v6829 = vadd.f32 0.0, %v6828
  %v6830 = vpop.f32.mrf.mxu0
  %v6831 = vadd.f32 0.0, %v6830
  %6832 = vmatmul.bf16.gmra.mxu0 %v6771
  %v6833 = vpop.f32.mrf.mxu0
  %v6834 = vadd.f32 0.0, %v6833
  %v6835 = vpop.f32.mrf.mxu0
  %v6836 = vadd.f32 0.0, %v6835
  %6837 = vmatmul.bf16.gmra.mxu0 %v6774
  %v6838 = vpop.f32.mrf.mxu0
  %v6839 = vadd.f32 0.0, %v6838
  %v6840 = vpop.f32.mrf.mxu0
  %v6841 = vadd.f32 0.0, %v6840
  %6842 = vmatmul.bf16.gmra.mxu0 %v6777
  %v6843 = vpop.f32.mrf.mxu0
  %v6844 = vadd.f32 0.0, %v6843
  %v6845 = vpop.f32.mrf.mxu0
  %v6846 = vadd.f32 0.0, %v6845
  %6847 = vmatmul.bf16.gmra.mxu0 %v6780
  %v6848 = vpop.f32.mrf.mxu0
  %v6849 = vadd.f32 0.0, %v6848
  %v6850 = vpop.f32.mrf.mxu0
  %v6851 = vadd.f32 0.0, %v6850
  %6852 = vmatmul.bf16.gmra.mxu0 %v6783
  %v6853 = vpop.f32.mrf.mxu0
  %v6854 = vadd.f32 0.0, %v6853
  %v6855 = vpop.f32.mrf.mxu0
  %v6856 = vadd.f32 0.0, %v6855
  %6857 = vmatmul.bf16.gmra.mxu0 %v6786
  %v6858 = vpop.f32.mrf.mxu0
  %v6859 = vadd.f32 0.0, %v6858
  %v6860 = vpop.f32.mrf.mxu0
  %v6861 = vadd.f32 0.0, %v6860
  %6862 = vmatmul.bf16.gmra.mxu0 %v6789
  %v6863 = vpop.f32.mrf.mxu0
  %v6864 = vadd.f32 0.0, %v6863
  %v6865 = vpop.f32.mrf.mxu0
  %v6866 = vadd.f32 0.0, %v6865
  %6867 = vmatmul.bf16.gmra.mxu0 %v6792
  %v6868 = vpop.f32.mrf.mxu0
  %v6869 = vadd.f32 0.0, %v6868
  %v6870 = vpop.f32.mrf.mxu0
  %v6871 = vadd.f32 0.0, %v6870
  %6872 = vmatmul.bf16.gmra.mxu0 %v6795
  %v6873 = vpop.f32.mrf.mxu0
  %v6874 = vadd.f32 0.0, %v6873
  %v6875 = vpop.f32.mrf.mxu0
  %v6876 = vadd.f32 0.0, %v6875
  %6877 = vmatmul.bf16.gmra.mxu0 %v6798
  %v6878 = vpop.f32.mrf.mxu0
  %v6879 = vadd.f32 0.0, %v6878
  %v6880 = vpop.f32.mrf.mxu0
  %v6881 = vadd.f32 0.0, %v6880
  %6882 = vmatmul.bf16.gmra.mxu0 %v6801
  %v6883 = vpop.f32.mrf.mxu0
  %v6884 = vadd.f32 0.0, %v6883
  %v6885 = vpop.f32.mrf.mxu0
  %v6886 = vadd.f32 0.0, %v6885
  %6887 = vmatmul.bf16.gmra.mxu0 %v6804
  %v6888 = vpop.f32.mrf.mxu0
  %v6889 = vadd.f32 0.0, %v6888
  %v6890 = vpop.f32.mrf.mxu0
  %v6891 = vadd.f32 0.0, %v6890
  %6892 = vmatmul.bf16.gmra.mxu0 %v6807
  %v6893 = vpop.f32.mrf.mxu0
  %v6894 = vadd.f32 0.0, %v6893
  %v6895 = vpop.f32.mrf.mxu0
  %v6896 = vadd.f32 0.0, %v6895
  %6897 = vdwg.mxu0
  %v6908 = vunpack.c.l.b16 %v6564
  %v6909 = vunpack.c.l.b16 %v6565
  %v6910 = vunpack.c.l.b16 %v6566
  %v6911 = vunpack.c.l.b16 %v6567
  %v6912 = vunpack.c.l.b16 %v6568
  %v6913 = vunpack.c.l.b16 %v6569
  %v6914 = vunpack.c.l.b16 %v6570
  %v6915 = vunpack.c.l.b16 %v6571
  %v6916 = vunpack.c.l.b16 %v6572
  %v6917 = vunpack.c.l.b16 %v6573
  %v6918 = vpack.c.b16 %v6909, %v6908
  %v6919 = vpack.c.b16 %v6911, %v6910
  %v6920 = vpack.c.b16 %v6913, %v6912
  %v6921 = vpack.c.b16 %v6915, %v6914
  %v6922 = vpack.c.b16 %v6917, %v6916
  %v6929 = vsel %vm6760, %v6548, 0
  %v6932 = vsel %vm6760, %v6549, 0
  %v6935 = vsel %vm6760, %v6550, 0
  %v6938 = vsel %vm6760, %v6551, 0
  %v6941 = vsel %vm6760, %v6552, 0
  %v6944 = vsel %vm6760, %v6553, 0
  %v6947 = vsel %vm6760, %v6554, 0
  %v6950 = vsel %vm6760, %v6555, 0
  %v6953 = vsel %vm6760, %v6556, 0
  %v6956 = vsel %vm6760, %v6557, 0
  %v6959 = vsel %vm6760, %v6558, 0
  %v6962 = vsel %vm6760, %v6559, 0
  %v6965 = vsel %vm6760, %v6560, 0
  %v6968 = vsel %vm6760, %v6561, 0
  %v6971 = vsel %vm6760, %v6562, 0
  %v6974 = vsel %vm6760, %v6563, 0
  %6976 = vmatpush.bf16.msra.mxu0 0
  %6977 = vmatpush.bf16.msra.mxu0 0
  %6978 = vmatpush.bf16.msra.mxu0 0
  %6979 = vmatpush.bf16.msra.mxu0 %v6922
  %6980 = vmatpush.bf16.msra.mxu0 %v6921
  %6981 = vmatpush.bf16.msra.mxu0 %v6920
  %6982 = vmatpush.bf16.msra.mxu0 %v6919
  %6983 = vmatpush.bf16.msra.mxu0 %v6918
  %6984 = vmatmul.bf16.gmra.mxu0 %v6929
  %v6985 = vpop.f32.mrf.mxu0
  %v6986 = vadd.f32 %v6819, %v6985
  %v6987 = vpop.f32.mrf.mxu0
  %v6988 = vadd.f32 %v6821, %v6987
  %6989 = vmatmul.bf16.gmra.mxu0 %v6932
  %v6990 = vpop.f32.mrf.mxu0
  %v6991 = vadd.f32 %v6824, %v6990
  %v6992 = vpop.f32.mrf.mxu0
  %v6993 = vadd.f32 %v6826, %v6992
  %6994 = vmatmul.bf16.gmra.mxu0 %v6935
  %v6995 = vpop.f32.mrf.mxu0
  %v6996 = vadd.f32 %v6829, %v6995
  %v6997 = vpop.f32.mrf.mxu0
  %v6998 = vadd.f32 %v6831, %v6997
  %6999 = vmatmul.bf16.gmra.mxu0 %v6938
  %v7000 = vpop.f32.mrf.mxu0
  %v7001 = vadd.f32 %v6834, %v7000
  %v7002 = vpop.f32.mrf.mxu0
  %v7003 = vadd.f32 %v6836, %v7002
  %7004 = vmatmul.bf16.gmra.mxu0 %v6941
  %v7005 = vpop.f32.mrf.mxu0
  %v7006 = vadd.f32 %v6839, %v7005
  %v7007 = vpop.f32.mrf.mxu0
  %v7008 = vadd.f32 %v6841, %v7007
  %7009 = vmatmul.bf16.gmra.mxu0 %v6944
  %v7010 = vpop.f32.mrf.mxu0
  %v7011 = vadd.f32 %v6844, %v7010
  %v7012 = vpop.f32.mrf.mxu0
  %v7013 = vadd.f32 %v6846, %v7012
  %7014 = vmatmul.bf16.gmra.mxu0 %v6947
  %v7015 = vpop.f32.mrf.mxu0
  %v7016 = vadd.f32 %v6849, %v7015
  %v7017 = vpop.f32.mrf.mxu0
  %v7018 = vadd.f32 %v6851, %v7017
  %7019 = vmatmul.bf16.gmra.mxu0 %v6950
  %v7020 = vpop.f32.mrf.mxu0
  %v7021 = vadd.f32 %v6854, %v7020
  %v7022 = vpop.f32.mrf.mxu0
  %v7023 = vadd.f32 %v6856, %v7022
  %7024 = vmatmul.bf16.gmra.mxu0 %v6953
  %v7025 = vpop.f32.mrf.mxu0
  %v7026 = vadd.f32 %v6859, %v7025
  %v7027 = vpop.f32.mrf.mxu0
  %v7028 = vadd.f32 %v6861, %v7027
  %7029 = vmatmul.bf16.gmra.mxu0 %v6956
  %v7030 = vpop.f32.mrf.mxu0
  %v7031 = vadd.f32 %v6864, %v7030
  %v7032 = vpop.f32.mrf.mxu0
  %v7033 = vadd.f32 %v6866, %v7032
  %7034 = vmatmul.bf16.gmra.mxu0 %v6959
  %v7035 = vpop.f32.mrf.mxu0
  %v7036 = vadd.f32 %v6869, %v7035
  %v7037 = vpop.f32.mrf.mxu0
  %v7038 = vadd.f32 %v6871, %v7037
  %7039 = vmatmul.bf16.gmra.mxu0 %v6962
  %v7040 = vpop.f32.mrf.mxu0
  %v7041 = vadd.f32 %v6874, %v7040
  %v7042 = vpop.f32.mrf.mxu0
  %v7043 = vadd.f32 %v6876, %v7042
  %7044 = vmatmul.bf16.gmra.mxu0 %v6965
  %v7045 = vpop.f32.mrf.mxu0
  %v7046 = vadd.f32 %v6879, %v7045
  %v7047 = vpop.f32.mrf.mxu0
  %v7048 = vadd.f32 %v6881, %v7047
  %7049 = vmatmul.bf16.gmra.mxu0 %v6968
  %v7050 = vpop.f32.mrf.mxu0
  %v7051 = vadd.f32 %v6884, %v7050
  %v7052 = vpop.f32.mrf.mxu0
  %v7053 = vadd.f32 %v6886, %v7052
  %7054 = vmatmul.bf16.gmra.mxu0 %v6971
  %v7055 = vpop.f32.mrf.mxu0
  %v7056 = vadd.f32 %v6889, %v7055
  %v7057 = vpop.f32.mrf.mxu0
  %v7058 = vadd.f32 %v6891, %v7057
  %7059 = vmatmul.bf16.gmra.mxu0 %v6974
  %v7060 = vpop.f32.mrf.mxu0
  %v7061 = vadd.f32 %v6894, %v7060
  %v7062 = vpop.f32.mrf.mxu0
  %v7063 = vadd.f32 %v6896, %v7062
  %7064 = vdwg.mxu0
  %v7065 = vpack.c.bf16 %v6518, %v6517
  %v7066 = vpack.c.bf16 %v6520, %v6519
  %v7067 = vpack.c.bf16 %v6522, %v6521
  %v7068 = vpack.c.bf16 %v6524, %v6523
  %v7069 = vpack.c.bf16 %v6526, %v6525
  %v7070 = vpack.c.bf16 %v6528, %v6527
  %v7071 = vpack.c.bf16 %v6530, %v6529
  %v7072 = vpack.c.bf16 %v6532, %v6531
  %v7073 = vpack.c.bf16 %v6534, %v6533
  %v7074 = vpack.c.bf16 %v6536, %v6535
  %v7075 = vpack.c.bf16 %v6538, %v6537
  %v7076 = vpack.c.bf16 %v6540, %v6539
  %v7077 = vpack.c.bf16 %v6542, %v6541
  %v7078 = vpack.c.bf16 %v6544, %v6543
  %v7079 = vpack.c.bf16 %v6546, %v6545
  %v7080 = vpack.c.bf16 %v6516, %v6547
  %s7081 = scalar_lea.vmem %s7, 80
  %v7082 = vld [vmem:[%s7081] sm:$0xf]
  %v7083 = vld [vmem:[%s7081 + $0x4] sm:$0xf]
  %v7084 = vld [vmem:[%s7081 + $0x8] sm:$0xf]
  %v7085 = vld [vmem:[%s7081 + $0xc] sm:$0xf]
  %v7086 = vld [vmem:[%s7081 + $0x10] sm:$0xf]
  %v7087 = vld [vmem:[%s7081 + $0x14] sm:$0xf]
  %v7088 = vld [vmem:[%s7081 + $0x18] sm:$0xf]
  %v7089 = vld [vmem:[%s7081 + $0x1c] sm:$0xf]
  %v7090 = vld [vmem:[%s7081 + $0x20] sm:$0xf]
  %v7091 = vld [vmem:[%s7081 + $0x24] sm:$0xf]
  %v7102 = vunpack.c.l.b16 %v7082
  %v7103 = vunpack.c.l.b16 %v7083
  %v7104 = vunpack.c.l.b16 %v7084
  %v7105 = vunpack.c.l.b16 %v7085
  %v7106 = vunpack.c.l.b16 %v7086
  %v7107 = vunpack.c.l.b16 %v7087
  %v7108 = vunpack.c.l.b16 %v7088
  %v7109 = vunpack.c.l.b16 %v7089
  %v7110 = vunpack.c.l.b16 %v7090
  %v7111 = vunpack.c.l.b16 %v7091
  %v7112 = vpack.c.b16 %v7103, %v7102
  %v7113 = vpack.c.b16 %v7105, %v7104
  %v7114 = vpack.c.b16 %v7107, %v7106
  %v7115 = vpack.c.b16 %v7109, %v7108
  %v7116 = vpack.c.b16 %v7111, %v7110
  %v7123 = vsel %vm6760, %v7065, 0
  %v7126 = vsel %vm6760, %v7066, 0
  %v7129 = vsel %vm6760, %v7067, 0
  %v7132 = vsel %vm6760, %v7068, 0
  %v7135 = vsel %vm6760, %v7069, 0
  %v7138 = vsel %vm6760, %v7070, 0
  %v7141 = vsel %vm6760, %v7071, 0
  %v7144 = vsel %vm6760, %v7072, 0
  %v7147 = vsel %vm6760, %v7073, 0
  %v7150 = vsel %vm6760, %v7074, 0
  %v7153 = vsel %vm6760, %v7075, 0
  %v7156 = vsel %vm6760, %v7076, 0
  %v7159 = vsel %vm6760, %v7077, 0
  %v7162 = vsel %vm6760, %v7078, 0
  %v7165 = vsel %vm6760, %v7079, 0
  %v7168 = vsel %vm6760, %v7080, 0
  %7170 = vmatpush.bf16.msra.mxu0 0
  %7171 = vmatpush.bf16.msra.mxu0 0
  %7172 = vmatpush.bf16.msra.mxu0 0
  %7173 = vmatpush.bf16.msra.mxu0 %v7116
  %7174 = vmatpush.bf16.msra.mxu0 %v7115
  %7175 = vmatpush.bf16.msra.mxu0 %v7114
  %7176 = vmatpush.bf16.msra.mxu0 %v7113
  %7177 = vmatpush.bf16.msra.mxu0 %v7112
  %7178 = vmatmul.bf16.gmra.mxu0 %v7123
  %v7179 = vpop.f32.mrf.mxu0
  %v7180 = vadd.f32 0.0, %v7179
  %v7181 = vpop.f32.mrf.mxu0
  %v7182 = vadd.f32 0.0, %v7181
  %7183 = vmatmul.bf16.gmra.mxu0 %v7126
  %v7184 = vpop.f32.mrf.mxu0
  %v7185 = vadd.f32 0.0, %v7184
  %v7186 = vpop.f32.mrf.mxu0
  %v7187 = vadd.f32 0.0, %v7186
  %7188 = vmatmul.bf16.gmra.mxu0 %v7129
  %v7189 = vpop.f32.mrf.mxu0
  %v7190 = vadd.f32 0.0, %v7189
  %v7191 = vpop.f32.mrf.mxu0
  %v7192 = vadd.f32 0.0, %v7191
  %7193 = vmatmul.bf16.gmra.mxu0 %v7132
  %v7194 = vpop.f32.mrf.mxu0
  %v7195 = vadd.f32 0.0, %v7194
  %v7196 = vpop.f32.mrf.mxu0
  %v7197 = vadd.f32 0.0, %v7196
  %7198 = vmatmul.bf16.gmra.mxu0 %v7135
  %v7199 = vpop.f32.mrf.mxu0
  %v7200 = vadd.f32 0.0, %v7199
  %v7201 = vpop.f32.mrf.mxu0
  %v7202 = vadd.f32 0.0, %v7201
  %7203 = vmatmul.bf16.gmra.mxu0 %v7138
  %v7204 = vpop.f32.mrf.mxu0
  %v7205 = vadd.f32 0.0, %v7204
  %v7206 = vpop.f32.mrf.mxu0
  %v7207 = vadd.f32 0.0, %v7206
  %7208 = vmatmul.bf16.gmra.mxu0 %v7141
  %v7209 = vpop.f32.mrf.mxu0
  %v7210 = vadd.f32 0.0, %v7209
  %v7211 = vpop.f32.mrf.mxu0
  %v7212 = vadd.f32 0.0, %v7211
  %7213 = vmatmul.bf16.gmra.mxu0 %v7144
  %v7214 = vpop.f32.mrf.mxu0
  %v7215 = vadd.f32 0.0, %v7214
  %v7216 = vpop.f32.mrf.mxu0
  %v7217 = vadd.f32 0.0, %v7216
  %7218 = vmatmul.bf16.gmra.mxu0 %v7147
  %v7219 = vpop.f32.mrf.mxu0
  %v7220 = vadd.f32 0.0, %v7219
  %v7221 = vpop.f32.mrf.mxu0
  %v7222 = vadd.f32 0.0, %v7221
  %7223 = vmatmul.bf16.gmra.mxu0 %v7150
  %v7224 = vpop.f32.mrf.mxu0
  %v7225 = vadd.f32 0.0, %v7224
  %v7226 = vpop.f32.mrf.mxu0
  %v7227 = vadd.f32 0.0, %v7226
  %7228 = vmatmul.bf16.gmra.mxu0 %v7153
  %v7229 = vpop.f32.mrf.mxu0
  %v7230 = vadd.f32 0.0, %v7229
  %v7231 = vpop.f32.mrf.mxu0
  %v7232 = vadd.f32 0.0, %v7231
  %7233 = vmatmul.bf16.gmra.mxu0 %v7156
  %v7234 = vpop.f32.mrf.mxu0
  %v7235 = vadd.f32 0.0, %v7234
  %v7236 = vpop.f32.mrf.mxu0
  %v7237 = vadd.f32 0.0, %v7236
  %7238 = vmatmul.bf16.gmra.mxu0 %v7159
  %v7239 = vpop.f32.mrf.mxu0
  %v7240 = vadd.f32 0.0, %v7239
  %v7241 = vpop.f32.mrf.mxu0
  %v7242 = vadd.f32 0.0, %v7241
  %7243 = vmatmul.bf16.gmra.mxu0 %v7162
  %v7244 = vpop.f32.mrf.mxu0
  %v7245 = vadd.f32 0.0, %v7244
  %v7246 = vpop.f32.mrf.mxu0
  %v7247 = vadd.f32 0.0, %v7246
  %7248 = vmatmul.bf16.gmra.mxu0 %v7165
  %v7249 = vpop.f32.mrf.mxu0
  %v7250 = vadd.f32 0.0, %v7249
  %v7251 = vpop.f32.mrf.mxu0
  %v7252 = vadd.f32 0.0, %v7251
  %7253 = vmatmul.bf16.gmra.mxu0 %v7168
  %v7254 = vpop.f32.mrf.mxu0
  %v7255 = vadd.f32 0.0, %v7254
  %v7256 = vpop.f32.mrf.mxu0
  %v7257 = vadd.f32 0.0, %v7256
  %7258 = vdwg.mxu0
  %v7259 = vadd.f32 %v6986, %v7180
  %v7260 = vadd.f32 %v6988, %v7182
  %v7261 = vadd.f32 %v6991, %v7185
  %v7262 = vadd.f32 %v6993, %v7187
  %v7263 = vadd.f32 %v6996, %v7190
  %v7264 = vadd.f32 %v6998, %v7192
  %v7265 = vadd.f32 %v7001, %v7195
  %v7266 = vadd.f32 %v7003, %v7197
  %v7267 = vadd.f32 %v7006, %v7200
  %v7268 = vadd.f32 %v7008, %v7202
  %v7269 = vadd.f32 %v7011, %v7205
  %v7270 = vadd.f32 %v7013, %v7207
  %v7271 = vadd.f32 %v7016, %v7210
  %v7272 = vadd.f32 %v7018, %v7212
  %v7273 = vadd.f32 %v7021, %v7215
  %v7274 = vadd.f32 %v7023, %v7217
  %v7275 = vadd.f32 %v7026, %v7220
  %v7276 = vadd.f32 %v7028, %v7222
  %v7277 = vadd.f32 %v7031, %v7225
  %v7278 = vadd.f32 %v7033, %v7227
  %v7279 = vadd.f32 %v7036, %v7230
  %v7280 = vadd.f32 %v7038, %v7232
  %v7281 = vadd.f32 %v7041, %v7235
  %v7282 = vadd.f32 %v7043, %v7237
  %v7283 = vadd.f32 %v7046, %v7240
  %v7284 = vadd.f32 %v7048, %v7242
  %v7285 = vadd.f32 %v7051, %v7245
  %v7286 = vadd.f32 %v7053, %v7247
  %v7287 = vadd.f32 %v7056, %v7250
  %v7288 = vadd.f32 %v7058, %v7252
  %v7289 = vadd.f32 %v7061, %v7255
  %v7290 = vadd.f32 %v7063, %v7257
  %v7291 = vpack.c.bf16 %v6612, %v6610
  %v7292 = vpack.c.bf16 %v6616, %v6614
  %v7293 = vpack.c.bf16 %v6620, %v6618
  %v7294 = vpack.c.bf16 %v6624, %v6622
  %v7295 = vpack.c.bf16 %v6628, %v6626
  %v7296 = vpack.c.bf16 %v6632, %v6630
  %v7297 = vpack.c.bf16 %v6636, %v6634
  %v7298 = vpack.c.bf16 %v6640, %v6638
  %v7299 = vpack.c.bf16 %v6644, %v6642
  %v7300 = vpack.c.bf16 %v6648, %v6646
  %v7301 = vpack.c.bf16 %v6652, %v6650
  %v7302 = vpack.c.bf16 %v6656, %v6654
  %v7303 = vpack.c.bf16 %v6660, %v6658
  %v7304 = vpack.c.bf16 %v6664, %v6662
  %v7305 = vpack.c.bf16 %v6668, %v6666
  %v7306 = vpack.c.bf16 %v6608, %v6702
  %s7307 = scalar_lea.vmem %s7, 120
  %v7308 = vld [vmem:[%s7307] sm:$0xf]
  %v7309 = vld [vmem:[%s7307 + $0x4] sm:$0xf]
  %v7310 = vld [vmem:[%s7307 + $0x8] sm:$0xf]
  %v7311 = vld [vmem:[%s7307 + $0xc] sm:$0xf]
  %v7312 = vld [vmem:[%s7307 + $0x10] sm:$0xf]
  %v7313 = vld [vmem:[%s7307 + $0x14] sm:$0xf]
  %v7314 = vld [vmem:[%s7307 + $0x18] sm:$0xf]
  %v7315 = vld [vmem:[%s7307 + $0x1c] sm:$0xf]
  %v7316 = vld [vmem:[%s7307 + $0x20] sm:$0xf]
  %v7317 = vld [vmem:[%s7307 + $0x24] sm:$0xf]
  %v7328 = vunpack.c.l.b16 %v7308
  %v7329 = vunpack.c.l.b16 %v7309
  %v7330 = vunpack.c.l.b16 %v7310
  %v7331 = vunpack.c.l.b16 %v7311
  %v7332 = vunpack.c.l.b16 %v7312
  %v7333 = vunpack.c.l.b16 %v7313
  %v7334 = vunpack.c.l.b16 %v7314
  %v7335 = vunpack.c.l.b16 %v7315
  %v7336 = vunpack.c.l.b16 %v7316
  %v7337 = vunpack.c.l.b16 %v7317
  %v7338 = vpack.c.b16 %v7329, %v7328
  %v7339 = vpack.c.b16 %v7331, %v7330
  %v7340 = vpack.c.b16 %v7333, %v7332
  %v7341 = vpack.c.b16 %v7335, %v7334
  %v7342 = vpack.c.b16 %v7337, %v7336
  %v7349 = vsel %vm6760, %v7291, 0
  %v7352 = vsel %vm6760, %v7292, 0
  %v7355 = vsel %vm6760, %v7293, 0
  %v7358 = vsel %vm6760, %v7294, 0
  %v7361 = vsel %vm6760, %v7295, 0
  %v7364 = vsel %vm6760, %v7296, 0
  %v7367 = vsel %vm6760, %v7297, 0
  %v7370 = vsel %vm6760, %v7298, 0
  %v7373 = vsel %vm6760, %v7299, 0
  %v7376 = vsel %vm6760, %v7300, 0
  %v7379 = vsel %vm6760, %v7301, 0
  %v7382 = vsel %vm6760, %v7302, 0
  %v7385 = vsel %vm6760, %v7303, 0
  %v7388 = vsel %vm6760, %v7304, 0
  %v7391 = vsel %vm6760, %v7305, 0
  %v7394 = vsel %vm6760, %v7306, 0
  %7396 = vmatpush.bf16.msra.mxu0 0
  %7397 = vmatpush.bf16.msra.mxu0 0
  %7398 = vmatpush.bf16.msra.mxu0 0
  %7399 = vmatpush.bf16.msra.mxu0 %v7342
  %7400 = vmatpush.bf16.msra.mxu0 %v7341
  %7401 = vmatpush.bf16.msra.mxu0 %v7340
  %7402 = vmatpush.bf16.msra.mxu0 %v7339
  %7403 = vmatpush.bf16.msra.mxu0 %v7338
  %7404 = vmatmul.bf16.gmra.mxu0 %v7349
  %v7405 = vpop.f32.mrf.mxu0
  %v7406 = vadd.f32 0.0, %v7405
  %v7407 = vpop.f32.mrf.mxu0
  %v7408 = vadd.f32 0.0, %v7407
  %7409 = vmatmul.bf16.gmra.mxu0 %v7352
  %v7410 = vpop.f32.mrf.mxu0
  %v7411 = vadd.f32 0.0, %v7410
  %v7412 = vpop.f32.mrf.mxu0
  %v7413 = vadd.f32 0.0, %v7412
  %7414 = vmatmul.bf16.gmra.mxu0 %v7355
  %v7415 = vpop.f32.mrf.mxu0
  %v7416 = vadd.f32 0.0, %v7415
  %v7417 = vpop.f32.mrf.mxu0
  %v7418 = vadd.f32 0.0, %v7417
  %7419 = vmatmul.bf16.gmra.mxu0 %v7358
  %v7420 = vpop.f32.mrf.mxu0
  %v7421 = vadd.f32 0.0, %v7420
  %v7422 = vpop.f32.mrf.mxu0
  %v7423 = vadd.f32 0.0, %v7422
  %7424 = vmatmul.bf16.gmra.mxu0 %v7361
  %v7425 = vpop.f32.mrf.mxu0
  %v7426 = vadd.f32 0.0, %v7425
  %v7427 = vpop.f32.mrf.mxu0
  %v7428 = vadd.f32 0.0, %v7427
  %7429 = vmatmul.bf16.gmra.mxu0 %v7364
  %v7430 = vpop.f32.mrf.mxu0
  %v7431 = vadd.f32 0.0, %v7430
  %v7432 = vpop.f32.mrf.mxu0
  %v7433 = vadd.f32 0.0, %v7432
  %7434 = vmatmul.bf16.gmra.mxu0 %v7367
  %v7435 = vpop.f32.mrf.mxu0
  %v7436 = vadd.f32 0.0, %v7435
  %v7437 = vpop.f32.mrf.mxu0
  %v7438 = vadd.f32 0.0, %v7437
  %7439 = vmatmul.bf16.gmra.mxu0 %v7370
  %v7440 = vpop.f32.mrf.mxu0
  %v7441 = vadd.f32 0.0, %v7440
  %v7442 = vpop.f32.mrf.mxu0
  %v7443 = vadd.f32 0.0, %v7442
  %7444 = vmatmul.bf16.gmra.mxu0 %v7373
  %v7445 = vpop.f32.mrf.mxu0
  %v7446 = vadd.f32 0.0, %v7445
  %v7447 = vpop.f32.mrf.mxu0
  %v7448 = vadd.f32 0.0, %v7447
  %7449 = vmatmul.bf16.gmra.mxu0 %v7376
  %v7450 = vpop.f32.mrf.mxu0
  %v7451 = vadd.f32 0.0, %v7450
  %v7452 = vpop.f32.mrf.mxu0
  %v7453 = vadd.f32 0.0, %v7452
  %7454 = vmatmul.bf16.gmra.mxu0 %v7379
  %v7455 = vpop.f32.mrf.mxu0
  %v7456 = vadd.f32 0.0, %v7455
  %v7457 = vpop.f32.mrf.mxu0
  %v7458 = vadd.f32 0.0, %v7457
  %7459 = vmatmul.bf16.gmra.mxu0 %v7382
  %v7460 = vpop.f32.mrf.mxu0
  %v7461 = vadd.f32 0.0, %v7460
  %v7462 = vpop.f32.mrf.mxu0
  %v7463 = vadd.f32 0.0, %v7462
  %7464 = vmatmul.bf16.gmra.mxu0 %v7385
  %v7465 = vpop.f32.mrf.mxu0
  %v7466 = vadd.f32 0.0, %v7465
  %v7467 = vpop.f32.mrf.mxu0
  %v7468 = vadd.f32 0.0, %v7467
  %7469 = vmatmul.bf16.gmra.mxu0 %v7388
  %v7470 = vpop.f32.mrf.mxu0
  %v7471 = vadd.f32 0.0, %v7470
  %v7472 = vpop.f32.mrf.mxu0
  %v7473 = vadd.f32 0.0, %v7472
  %7474 = vmatmul.bf16.gmra.mxu0 %v7391
  %v7475 = vpop.f32.mrf.mxu0
  %v7476 = vadd.f32 0.0, %v7475
  %v7477 = vpop.f32.mrf.mxu0
  %v7478 = vadd.f32 0.0, %v7477
  %7479 = vmatmul.bf16.gmra.mxu0 %v7394
  %v7480 = vpop.f32.mrf.mxu0
  %v7481 = vadd.f32 0.0, %v7480
  %v7482 = vpop.f32.mrf.mxu0
  %v7483 = vadd.f32 0.0, %v7482
  %7484 = vdwg.mxu0
  %v7485 = vadd.f32 %v7259, %v7406
  %v7486 = vadd.f32 %v7260, %v7408
  %v7487 = vadd.f32 %v7261, %v7411
  %v7488 = vadd.f32 %v7262, %v7413
  %v7489 = vadd.f32 %v7263, %v7416
  %v7490 = vadd.f32 %v7264, %v7418
  %v7491 = vadd.f32 %v7265, %v7421
  %v7492 = vadd.f32 %v7266, %v7423
  %v7493 = vadd.f32 %v7267, %v7426
  %v7494 = vadd.f32 %v7268, %v7428
  %v7495 = vadd.f32 %v7269, %v7431
  %v7496 = vadd.f32 %v7270, %v7433
  %v7497 = vadd.f32 %v7271, %v7436
  %v7498 = vadd.f32 %v7272, %v7438
  %v7499 = vadd.f32 %v7273, %v7441
  %v7500 = vadd.f32 %v7274, %v7443
  %v7501 = vadd.f32 %v7275, %v7446
  %v7502 = vadd.f32 %v7276, %v7448
  %v7503 = vadd.f32 %v7277, %v7451
  %v7504 = vadd.f32 %v7278, %v7453
  %v7505 = vadd.f32 %v7279, %v7456
  %v7506 = vadd.f32 %v7280, %v7458
  %v7507 = vadd.f32 %v7281, %v7461
  %v7508 = vadd.f32 %v7282, %v7463
  %v7509 = vadd.f32 %v7283, %v7466
  %v7510 = vadd.f32 %v7284, %v7468
  %v7511 = vadd.f32 %v7285, %v7471
  %v7512 = vadd.f32 %v7286, %v7473
  %v7513 = vadd.f32 %v7287, %v7476
  %v7514 = vadd.f32 %v7288, %v7478
  %v7515 = vadd.f32 %v7289, %v7481
  %v7516 = vadd.f32 %v7290, %v7483
  %s7517 = scalar_lea.vmem %s7, 160
  %v7518 = vld [vmem:[%s7517] sm:$0xf]
  %v7519 = vld [vmem:[%s7517 + $0x4] sm:$0xf]
  %v7520 = vld [vmem:[%s7517 + $0x8] sm:$0xf]
  %v7521 = vld [vmem:[%s7517 + $0xc] sm:$0xf]
  %v7522 = vld [vmem:[%s7517 + $0x10] sm:$0xf]
  %v7523 = vld [vmem:[%s7517 + $0x14] sm:$0xf]
  %v7524 = vld [vmem:[%s7517 + $0x18] sm:$0xf]
  %v7525 = vld [vmem:[%s7517 + $0x1c] sm:$0xf]
  %v7526 = vld [vmem:[%s7517 + $0x20] sm:$0xf]
  %v7527 = vld [vmem:[%s7517 + $0x24] sm:$0xf]
  %v7538 = vunpack.c.l.b16 %v7518
  %v7539 = vunpack.c.l.b16 %v7519
  %v7540 = vunpack.c.l.b16 %v7520
  %v7541 = vunpack.c.l.b16 %v7521
  %v7542 = vunpack.c.l.b16 %v7522
  %v7543 = vunpack.c.l.b16 %v7523
  %v7544 = vunpack.c.l.b16 %v7524
  %v7545 = vunpack.c.l.b16 %v7525
  %v7546 = vunpack.c.l.b16 %v7526
  %v7547 = vunpack.c.l.b16 %v7527
  %v7548 = vpack.c.b16 %v7539, %v7538
  %v7549 = vpack.c.b16 %v7541, %v7540
  %v7550 = vpack.c.b16 %v7543, %v7542
  %v7551 = vpack.c.b16 %v7545, %v7544
  %v7552 = vpack.c.b16 %v7547, %v7546
  %7558 = vmatpush.bf16.msra.mxu0 0
  %7559 = vmatpush.bf16.msra.mxu0 0
  %7560 = vmatpush.bf16.msra.mxu0 0
  %7561 = vmatpush.bf16.msra.mxu0 %v7552
  %7562 = vmatpush.bf16.msra.mxu0 %v7551
  %7563 = vmatpush.bf16.msra.mxu0 %v7550
  %7564 = vmatpush.bf16.msra.mxu0 %v7549
  %7565 = vmatpush.bf16.msra.mxu0 %v7548
  %7566 = vmatmul.bf16.gmra.mxu0 %v6932
  %v7567 = vpop.f32.mrf.mxu0
  %v7568 = vadd.f32 0.0, %v7567
  %v7569 = vpop.f32.mrf.mxu0
  %v7570 = vadd.f32 0.0, %v7569
  %7571 = vmatmul.bf16.gmra.mxu0 %v6935
  %v7572 = vpop.f32.mrf.mxu0
  %v7573 = vadd.f32 0.0, %v7572
  %v7574 = vpop.f32.mrf.mxu0
  %v7575 = vadd.f32 0.0, %v7574
  %7576 = vmatmul.bf16.gmra.mxu0 %v6938
  %v7577 = vpop.f32.mrf.mxu0
  %v7578 = vadd.f32 0.0, %v7577
  %v7579 = vpop.f32.mrf.mxu0
  %v7580 = vadd.f32 0.0, %v7579
  %7581 = vmatmul.bf16.gmra.mxu0 %v6941
  %v7582 = vpop.f32.mrf.mxu0
  %v7583 = vadd.f32 0.0, %v7582
  %v7584 = vpop.f32.mrf.mxu0
  %v7585 = vadd.f32 0.0, %v7584
  %7586 = vmatmul.bf16.gmra.mxu0 %v6944
  %v7587 = vpop.f32.mrf.mxu0
  %v7588 = vadd.f32 0.0, %v7587
  %v7589 = vpop.f32.mrf.mxu0
  %v7590 = vadd.f32 0.0, %v7589
  %7591 = vmatmul.bf16.gmra.mxu0 %v6947
  %v7592 = vpop.f32.mrf.mxu0
  %v7593 = vadd.f32 0.0, %v7592
  %v7594 = vpop.f32.mrf.mxu0
  %v7595 = vadd.f32 0.0, %v7594
  %7596 = vmatmul.bf16.gmra.mxu0 %v6950
  %v7597 = vpop.f32.mrf.mxu0
  %v7598 = vadd.f32 0.0, %v7597
  %v7599 = vpop.f32.mrf.mxu0
  %v7600 = vadd.f32 0.0, %v7599
  %7601 = vmatmul.bf16.gmra.mxu0 %v6953
  %v7602 = vpop.f32.mrf.mxu0
  %v7603 = vadd.f32 0.0, %v7602
  %v7604 = vpop.f32.mrf.mxu0
  %v7605 = vadd.f32 0.0, %v7604
  %7606 = vmatmul.bf16.gmra.mxu0 %v6956
  %v7607 = vpop.f32.mrf.mxu0
  %v7608 = vadd.f32 0.0, %v7607
  %v7609 = vpop.f32.mrf.mxu0
  %v7610 = vadd.f32 0.0, %v7609
  %7611 = vmatmul.bf16.gmra.mxu0 %v6959
  %v7612 = vpop.f32.mrf.mxu0
  %v7613 = vadd.f32 0.0, %v7612
  %v7614 = vpop.f32.mrf.mxu0
  %v7615 = vadd.f32 0.0, %v7614
  %7616 = vmatmul.bf16.gmra.mxu0 %v6962
  %v7617 = vpop.f32.mrf.mxu0
  %v7618 = vadd.f32 0.0, %v7617
  %v7619 = vpop.f32.mrf.mxu0
  %v7620 = vadd.f32 0.0, %v7619
  %7621 = vmatmul.bf16.gmra.mxu0 %v6965
  %v7622 = vpop.f32.mrf.mxu0
  %v7623 = vadd.f32 0.0, %v7622
  %v7624 = vpop.f32.mrf.mxu0
  %v7625 = vadd.f32 0.0, %v7624
  %7626 = vmatmul.bf16.gmra.mxu0 %v6968
  %v7627 = vpop.f32.mrf.mxu0
  %v7628 = vadd.f32 0.0, %v7627
  %v7629 = vpop.f32.mrf.mxu0
  %v7630 = vadd.f32 0.0, %v7629
  %7631 = vmatmul.bf16.gmra.mxu0 %v6971
  %v7632 = vpop.f32.mrf.mxu0
  %v7633 = vadd.f32 0.0, %v7632
  %v7634 = vpop.f32.mrf.mxu0
  %v7635 = vadd.f32 0.0, %v7634
  %7636 = vmatmul.bf16.gmra.mxu0 %v6974
  %v7637 = vpop.f32.mrf.mxu0
  %v7638 = vadd.f32 0.0, %v7637
  %v7639 = vpop.f32.mrf.mxu0
  %v7640 = vadd.f32 0.0, %v7639
  %7641 = vmatmul.bf16.gmra.mxu0 %v6929
  %v7642 = vpop.f32.mrf.mxu0
  %v7643 = vadd.f32 0.0, %v7642
  %v7644 = vpop.f32.mrf.mxu0
  %v7645 = vadd.f32 0.0, %v7644
  %7646 = vdwg.mxu0
  %v7647 = vadd.f32 %v7485, %v7568
  %v7648 = vadd.f32 %v7486, %v7570
  %v7649 = vadd.f32 %v7487, %v7573
  %v7650 = vadd.f32 %v7488, %v7575
  %v7651 = vadd.f32 %v7489, %v7578
  %v7652 = vadd.f32 %v7490, %v7580
  %v7653 = vadd.f32 %v7491, %v7583
  %v7654 = vadd.f32 %v7492, %v7585
  %v7655 = vadd.f32 %v7493, %v7588
  %v7656 = vadd.f32 %v7494, %v7590
  %v7657 = vadd.f32 %v7495, %v7593
  %v7658 = vadd.f32 %v7496, %v7595
  %v7659 = vadd.f32 %v7497, %v7598
  %v7660 = vadd.f32 %v7498, %v7600
  %v7661 = vadd.f32 %v7499, %v7603
  %v7662 = vadd.f32 %v7500, %v7605
  %v7663 = vadd.f32 %v7501, %v7608
  %v7664 = vadd.f32 %v7502, %v7610
  %v7665 = vadd.f32 %v7503, %v7613
  %v7666 = vadd.f32 %v7504, %v7615
  %v7667 = vadd.f32 %v7505, %v7618
  %v7668 = vadd.f32 %v7506, %v7620
  %v7669 = vadd.f32 %v7507, %v7623
  %v7670 = vadd.f32 %v7508, %v7625
  %v7671 = vadd.f32 %v7509, %v7628
  %v7672 = vadd.f32 %v7510, %v7630
  %v7673 = vadd.f32 %v7511, %v7633
  %v7674 = vadd.f32 %v7512, %v7635
  %v7675 = vadd.f32 %v7513, %v7638
  %v7676 = vadd.f32 %v7514, %v7640
  %v7677 = vadd.f32 %v7515, %v7643
  %v7678 = vadd.f32 %v7516, %v7645
  %v7679 = vld [vmem:[%s8] sm:$0x1]
  %v7681 = vperm.slane %v7679, 0
  %v7683 = vadd.f32 %v7647, %v7681
  %v7684 = vadd.f32 %v7648, %v7681
  %v7685 = vadd.f32 %v7649, %v7681
  %v7686 = vadd.f32 %v7650, %v7681
  %v7687 = vadd.f32 %v7651, %v7681
  %v7688 = vadd.f32 %v7652, %v7681
  %v7689 = vadd.f32 %v7653, %v7681
  %v7690 = vadd.f32 %v7654, %v7681
  %v7691 = vadd.f32 %v7655, %v7681
  %v7692 = vadd.f32 %v7656, %v7681
  %v7693 = vadd.f32 %v7657, %v7681
  %v7694 = vadd.f32 %v7658, %v7681
  %v7695 = vadd.f32 %v7659, %v7681
  %v7696 = vadd.f32 %v7660, %v7681
  %v7697 = vadd.f32 %v7661, %v7681
  %v7698 = vadd.f32 %v7662, %v7681
  %v7699 = vadd.f32 %v7663, %v7681
  %v7700 = vadd.f32 %v7664, %v7681
  %v7701 = vadd.f32 %v7665, %v7681
  %v7702 = vadd.f32 %v7666, %v7681
  %v7703 = vadd.f32 %v7667, %v7681
  %v7704 = vadd.f32 %v7668, %v7681
  %v7705 = vadd.f32 %v7669, %v7681
  %v7706 = vadd.f32 %v7670, %v7681
  %v7707 = vadd.f32 %v7671, %v7681
  %v7708 = vadd.f32 %v7672, %v7681
  %v7709 = vadd.f32 %v7673, %v7681
  %v7710 = vadd.f32 %v7674, %v7681
  %v7711 = vadd.f32 %v7675, %v7681
  %v7712 = vadd.f32 %v7676, %v7681
  %v7713 = vadd.f32 %v7677, %v7681
  %v7714 = vadd.f32 %v7678, %v7681
  %v7715 = vmax.f32 %v7683, 0.0
  %v7716 = vmax.f32 %v7684, 0.0
  %v7717 = vmax.f32 %v7685, 0.0
  %v7718 = vmax.f32 %v7686, 0.0
  %v7719 = vmax.f32 %v7687, 0.0
  %v7720 = vmax.f32 %v7688, 0.0
  %v7721 = vmax.f32 %v7689, 0.0
  %v7722 = vmax.f32 %v7690, 0.0
  %v7723 = vmax.f32 %v7691, 0.0
  %v7724 = vmax.f32 %v7692, 0.0
  %v7725 = vmax.f32 %v7693, 0.0
  %v7726 = vmax.f32 %v7694, 0.0
  %v7727 = vmax.f32 %v7695, 0.0
  %v7728 = vmax.f32 %v7696, 0.0
  %v7729 = vmax.f32 %v7697, 0.0
  %v7730 = vmax.f32 %v7698, 0.0
  %v7731 = vmax.f32 %v7699, 0.0
  %v7732 = vmax.f32 %v7700, 0.0
  %v7733 = vmax.f32 %v7701, 0.0
  %v7734 = vmax.f32 %v7702, 0.0
  %v7735 = vmax.f32 %v7703, 0.0
  %v7736 = vmax.f32 %v7704, 0.0
  %v7737 = vmax.f32 %v7705, 0.0
  %v7738 = vmax.f32 %v7706, 0.0
  %v7739 = vmax.f32 %v7707, 0.0
  %v7740 = vmax.f32 %v7708, 0.0
  %v7741 = vmax.f32 %v7709, 0.0
  %v7742 = vmax.f32 %v7710, 0.0
  %v7743 = vmax.f32 %v7711, 0.0
  %v7744 = vmax.f32 %v7712, 0.0
  %v7745 = vmax.f32 %v7713, 0.0
  %v7746 = vmax.f32 %v7714, 0.0
  %v7747 = vpack.c.bf16 %v7716, %v7715
  %v7748 = vpack.c.bf16 %v7718, %v7717
  %v7749 = vpack.c.bf16 %v7720, %v7719
  %v7750 = vpack.c.bf16 %v7722, %v7721
  %v7751 = vpack.c.bf16 %v7724, %v7723
  %v7752 = vpack.c.bf16 %v7726, %v7725
  %v7753 = vpack.c.bf16 %v7728, %v7727
  %v7754 = vpack.c.bf16 %v7730, %v7729
  %v7755 = vpack.c.bf16 %v7732, %v7731
  %v7756 = vpack.c.bf16 %v7734, %v7733
  %v7757 = vpack.c.bf16 %v7736, %v7735
  %v7758 = vpack.c.bf16 %v7738, %v7737
  %v7759 = vpack.c.bf16 %v7740, %v7739
  %v7760 = vpack.c.bf16 %v7742, %v7741
  %v7761 = vpack.c.bf16 %v7744, %v7743
  %v7762 = vpack.c.bf16 %v7746, %v7745
  %v7763 = vld [vmem:[%s13] sm:$0xff]
  %v7765 = vunpack.c.l.b16 %v7763
  %v7766 = vunpack.c.h.b16 %v7763
  %v7767 = vpack.c.b16 %v7765, %v7765
  %v7768 = vpack.c.b16 %v7766, %v7766
  %7771 = vmatpush.bf16.msra.mxu0 %v7754
  %7772 = vmatpush.bf16.msra.mxu0 %v7753
  %7773 = vmatpush.bf16.msra.mxu0 %v7752
  %7774 = vmatpush.bf16.msra.mxu0 %v7751
  %7775 = vmatpush.bf16.msra.mxu0 %v7750
  %7776 = vmatpush.bf16.msra.mxu0 %v7749
  %7777 = vmatpush.bf16.msra.mxu0 %v7748
  %7778 = vmatpush.bf16.msra.mxu0 %v7747
  %7779 = vmatmul.bf16.gmra.mxu0 %v7767
  %v7780 = vpop.f32.mrf.mxu0
  %v7781 = vadd.f32 0.0, %v7780
  %v7782 = vpop.f32.mrf.mxu0
  %7783 = vdwg.mxu0
  %7784 = vmatpush.bf16.msra.mxu0 %v7762
  %7785 = vmatpush.bf16.msra.mxu0 %v7761
  %7786 = vmatpush.bf16.msra.mxu0 %v7760
  %7787 = vmatpush.bf16.msra.mxu0 %v7759
  %7788 = vmatpush.bf16.msra.mxu0 %v7758
  %7789 = vmatpush.bf16.msra.mxu0 %v7757
  %7790 = vmatpush.bf16.msra.mxu0 %v7756
  %7791 = vmatpush.bf16.msra.mxu0 %v7755
  %7792 = vmatmul.bf16.gmra.mxu0 %v7768
  %v7793 = vpop.f32.mrf.mxu0
  %v7794 = vadd.f32 %v7781, %v7793
  %v7795 = vpop.f32.mrf.mxu0
  %7796 = vdwg.mxu0
  %v7797 = vpack.c.bf16 %v7794, %v7794
  %v7798 = vld [vmem:[%s9] sm:$0xf]
  %v7799 = vld [vmem:[%s9 + $0x4] sm:$0xf]
  %v7800 = vld [vmem:[%s9 + $0x8] sm:$0xf]
  %v7801 = vld [vmem:[%s9 + $0xc] sm:$0xf]
  %v7802 = vld [vmem:[%s9 + $0x10] sm:$0xf]
  %v7803 = vld [vmem:[%s9 + $0x14] sm:$0xf]
  %v7804 = vld [vmem:[%s9 + $0x18] sm:$0xf]
  %v7805 = vld [vmem:[%s9 + $0x1c] sm:$0xf]
  %v7806 = vld [vmem:[%s9 + $0x20] sm:$0xf]
  %v7807 = vld [vmem:[%s9 + $0x24] sm:$0xf]
  %v7808 = vld [vmem:[%s9 + $0x28] sm:$0xf]
  %v7809 = vld [vmem:[%s9 + $0x2c] sm:$0xf]
  %v7810 = vld [vmem:[%s9 + $0x30] sm:$0xf]
  %v7811 = vld [vmem:[%s9 + $0x34] sm:$0xf]
  %v7812 = vld [vmem:[%s9 + $0x38] sm:$0xf]
  %v7813 = vld [vmem:[%s9 + $0x3c] sm:$0xf]
  %v7814 = vld [vmem:[%s10] sm:$0x1]
  %v7816 = vperm.slane %v7814, 0
  %v7834 = vunpack.c.l.b16 %v7798
  %v7835 = vunpack.c.l.b16 %v7799
  %v7836 = vunpack.c.l.b16 %v7800
  %v7837 = vunpack.c.l.b16 %v7801
  %v7838 = vunpack.c.l.b16 %v7802
  %v7839 = vunpack.c.l.b16 %v7803
  %v7840 = vunpack.c.l.b16 %v7804
  %v7841 = vunpack.c.l.b16 %v7805
  %v7842 = vunpack.c.l.b16 %v7806
  %v7843 = vunpack.c.l.b16 %v7807
  %v7844 = vunpack.c.l.b16 %v7808
  %v7845 = vunpack.c.l.b16 %v7809
  %v7846 = vunpack.c.l.b16 %v7810
  %v7847 = vunpack.c.l.b16 %v7811
  %v7848 = vunpack.c.l.b16 %v7812
  %v7849 = vunpack.c.l.b16 %v7813
  %v7850 = vpack.c.b16 %v7835, %v7834
  %v7851 = vpack.c.b16 %v7837, %v7836
  %v7852 = vpack.c.b16 %v7839, %v7838
  %v7853 = vpack.c.b16 %v7841, %v7840
  %v7854 = vpack.c.b16 %v7843, %v7842
  %v7855 = vpack.c.b16 %v7845, %v7844
  %v7856 = vpack.c.b16 %v7847, %v7846
  %v7857 = vpack.c.b16 %v7849, %v7848
  %7866 = vmatpush.bf16.msra.mxu0 %v7857
  %7867 = vmatpush.bf16.msra.mxu0 %v7856
  %7868 = vmatpush.bf16.msra.mxu0 %v7855
  %7869 = vmatpush.bf16.msra.mxu0 %v7854
  %7870 = vmatpush.bf16.msra.mxu0 %v7853
  %7871 = vmatpush.bf16.msra.mxu0 %v7852
  %7872 = vmatpush.bf16.msra.mxu0 %v7851
  %7873 = vmatpush.bf16.msra.mxu0 %v7850
  %7874 = vmatmul.bf16.gmra.mxu0 %v7797
  %v7875 = vpop.f32.mrf.mxu0
  %v7876 = vadd.f32 %v7816, %v7875
  %v7877 = vpop.f32.mrf.mxu0
  %7878 = vdwg.mxu0
  %v7879 = vmax.f32 %v7876, 0.0
  %v7880 = vpack.c.bf16 %v7879, %v7879
  %v7881 = vld [vmem:[%s11] sm:$0xf]
  %v7882 = vld [vmem:[%s11 + $0x4] sm:$0xf]
  %v7883 = vld [vmem:[%s11 + $0x8] sm:$0xf]
  %v7884 = vld [vmem:[%s11 + $0xc] sm:$0xf]
  %v7885 = vld [vmem:[%s11 + $0x10] sm:$0xf]
  %v7886 = vld [vmem:[%s11 + $0x14] sm:$0xf]
  %v7887 = vld [vmem:[%s11 + $0x18] sm:$0xf]
  %v7888 = vld [vmem:[%s11 + $0x1c] sm:$0xf]
  %v7889 = vld [vmem:[%s11 + $0x20] sm:$0xf]
  %v7890 = vld [vmem:[%s11 + $0x24] sm:$0xf]
  %v7891 = vld [vmem:[%s11 + $0x28] sm:$0xf]
  %v7892 = vld [vmem:[%s11 + $0x2c] sm:$0xf]
  %v7893 = vld [vmem:[%s11 + $0x30] sm:$0xf]
  %v7894 = vld [vmem:[%s11 + $0x34] sm:$0xf]
  %v7895 = vld [vmem:[%s11 + $0x38] sm:$0xf]
  %v7896 = vld [vmem:[%s11 + $0x3c] sm:$0xf]
  %v7897 = vld [vmem:[%s12] sm:$0x1]
  %v7899 = vperm.slane %v7897, 0
  %v7917 = vunpack.c.l.b16 %v7881
  %v7918 = vunpack.c.l.b16 %v7882
  %v7919 = vunpack.c.l.b16 %v7883
  %v7920 = vunpack.c.l.b16 %v7884
  %v7921 = vunpack.c.l.b16 %v7885
  %v7922 = vunpack.c.l.b16 %v7886
  %v7923 = vunpack.c.l.b16 %v7887
  %v7924 = vunpack.c.l.b16 %v7888
  %v7925 = vunpack.c.l.b16 %v7889
  %v7926 = vunpack.c.l.b16 %v7890
  %v7927 = vunpack.c.l.b16 %v7891
  %v7928 = vunpack.c.l.b16 %v7892
  %v7929 = vunpack.c.l.b16 %v7893
  %v7930 = vunpack.c.l.b16 %v7894
  %v7931 = vunpack.c.l.b16 %v7895
  %v7932 = vunpack.c.l.b16 %v7896
  %v7933 = vpack.c.b16 %v7918, %v7917
  %v7934 = vpack.c.b16 %v7920, %v7919
  %v7935 = vpack.c.b16 %v7922, %v7921
  %v7936 = vpack.c.b16 %v7924, %v7923
  %v7937 = vpack.c.b16 %v7926, %v7925
  %v7938 = vpack.c.b16 %v7928, %v7927
  %v7939 = vpack.c.b16 %v7930, %v7929
  %v7940 = vpack.c.b16 %v7932, %v7931
  %7949 = vmatpush.bf16.msra.mxu0 %v7940
  %7950 = vmatpush.bf16.msra.mxu0 %v7939
  %7951 = vmatpush.bf16.msra.mxu0 %v7938
  %7952 = vmatpush.bf16.msra.mxu0 %v7937
  %7953 = vmatpush.bf16.msra.mxu0 %v7936
  %7954 = vmatpush.bf16.msra.mxu0 %v7935
  %7955 = vmatpush.bf16.msra.mxu0 %v7934
  %7956 = vmatpush.bf16.msra.mxu0 %v7933
  %7957 = vmatmul.bf16.gmra.mxu0 %v7880
  %v7958 = vpop.f32.mrf.mxu0
  %v7959 = vadd.f32 %v7899, %v7958
  %v7960 = vpop.f32.mrf.mxu0
  %7961 = vdwg.mxu0
  %7962 = vst [vmem:[%s14] sm:$0xff] %v7959
  // Predicated region
  $region58: #{lenet_forward.1} parent=0 // pred_check
    _
  $region59: #{lenet_forward.1} parent=0 // pred_check_branch
    %7964 = sbr.rel (0) target = $region61
  $region60: #{lenet_forward.1} parent=0 // pred_region
    _
  $region61: #{lenet_forward.1} parent=0 // pred_fallthru
    _
  // Predicated region
  $region62: #{lenet_forward.1} parent=0 // pred_check
    _
  $region63: #{lenet_forward.1} parent=0 // pred_check_branch
    %7966 = sbr.rel (0) target = $region65
  $region64: #{lenet_forward.1} parent=0 // pred_region
    _
  $region65: #{lenet_forward.1} parent=0 // pred_fallthru
    _

</llo_original>
